<compile_context>
chip_gen: v7x
topology: tpu7x:2x2x1
jax: 0.10.0
libtpu: 0.0.40
codegen_flags: <defaults>
</compile_context>

<pallas_src>
import functools

import jax
import jax.numpy as jnp
from jax.experimental import pallas as pl
from jax.experimental.pallas import tpu as pltpu

NHIDDEN = 128   # SPADE's nhidden
EPS = 1e-5      # InstanceNorm2d default eps


# ----------------------------------------------------------------------------
# Glue helpers (data movement only)
# ----------------------------------------------------------------------------
def nearest_resize_nchw(src, H, W):
    """PyTorch F.interpolate(mode='nearest', size=[H, W]) on NCHW input."""
    Hs, Ws = src.shape[2], src.shape[3]
    rows = (jnp.arange(H) * Hs) // H
    cols = (jnp.arange(W) * Ws) // W
    return src[:, :, rows][:, :, :, cols]


def _pick_tile_rows(H, W, C, Cin, B, budget_bytes=24 << 20):
    """Largest row tile that (a) satisfies layout constraints (th%4==0, th|H,
    lane-dense th*W), (b) fits a conservative per-tile VMEM budget, and
    (c) leaves >= 2 grid steps when possible (feed both v7x TensorCores)."""
    def est_bytes(th):
        M = th * W
        return ((th + 2) * (W + 2) * NHIDDEN * 2        # hidden scratch (bf16)
                + 3 * (th + 4) * (W + 2) * Cin * 2      # src scratch + 2x input bufs
                + 4 * C * M * 4                         # x + out, double buffered
                + 8 * M * NHIDDEN * 4)                  # f32 matmul / relayout temps

    cands = [th for th in range(4, H + 1, 4)
             if H % th == 0 and ((th * W) % 128 == 0 or th == H)]
    if not cands:
        raise ValueError(f"no valid row tile for H={H}, W={W}")
    fitting = [th for th in cands if est_bytes(th) <= budget_bytes] or [min(cands)]
    multi = [th for th in fitting if B * (H // th) >= 2]
    return max(multi or fitting)


# ----------------------------------------------------------------------------
# Fused Pallas kernel
# ----------------------------------------------------------------------------
def _spade_fused_kernel(x_ref, mean_ref, inv_ref, src_body_ref, src_halo_ref,
                        w1_ref, b1_ref, wgb_ref, bgb_ref, out_ref,
                        src_sc, actv_sc, *, th, W, C, beta_off):
    # x_ref:        (1, C, th*W) f32      activations (channel-major / NCHW)
    # mean/inv_ref: (1, C, 1) f32         hoisted InstanceNorm statistics
    # src_body_ref: (1, th, W+2, Cin)     zero-padded resized source, bf16
    # src_halo_ref: (1, 4,  W+2, Cin)     4-row bottom halo of the same array
    # w1_ref:       (9, Cin, 128) bf16    mlp_shared taps (dy*3+dx)
    # b1_ref:       (1, 128) f32
    # wgb_ref:      (9, 128, GBP) bf16    gamma|beta taps, lane-packed
    # bgb_ref:      (1, GBP) f32
    # out_ref:      (1, C, th*W) f32
    # src_sc:       VMEM (th+4, W+2, Cin) bf16
    # actv_sc:      VMEM (th+2, W+2, 128) bf16   zero-padded hidden (VMEM only)
    bf16 = jnp.bfloat16
    Cin = src_sc.shape[-1]
    M2 = (th + 2) * W            # hidden rows computed per tile (incl. halo)
    M = th * W                   # output pixels per tile
    j = pl.program_id(1)

    # ---- stage the padded source tile contiguously (body rows + 4-row halo).
    src_sc[0:th] = src_body_ref[0]
    src_sc[th:th + 4] = src_halo_ref[0]

    # ---- mlp_shared: 3x3 conv (Cin -> 128) + bias + ReLU on th+2 rows.
    #      9 accumulating (dy, dx) tap matmuls straight from ref slices.
    acc = None
    for t in range(9):
        dy, dx = divmod(t, 3)
        lhs = src_sc[dy:dy + th + 2, dx:dx + W, :].reshape(M2, Cin)
        part = jnp.dot(lhs, w1_ref[t], preferred_element_type=jnp.float32)
        acc = part if acc is None else acc + part
    actv = jnp.maximum(acc + b1_ref[...], 0.0)

    # ---- zero-padded hidden activations live only in VMEM (no HBM round trip).
    actv_sc[:, 1:W + 1, :] = actv.reshape(th + 2, W, NHIDDEN).astype(bf16)
    zcol = jnp.zeros((th + 2, 1, NHIDDEN), bf16)
    actv_sc[:, 0:1, :] = zcol                      # left conv zero-padding
    actv_sc[:, W + 1:W + 2, :] = zcol              # right conv zero-padding
    zrow = jnp.zeros((1, W + 2, NHIDDEN), bf16)

    @pl.when(j == 0)                               # top image border
    def _():
        actv_sc[0:1] = zrow

    @pl.when(j == pl.num_programs(1) - 1)          # bottom image border
    def _():
        actv_sc[th + 1:th + 2] = zrow

    # ---- mlp_gamma / mlp_beta: 3x3 convs (128 -> [gamma|beta] packed lanes).
    gb = None
    for t in range(9):
        dy, dx = divmod(t, 3)
        lhs = actv_sc[dy:dy + th, dx:dx + W, :].reshape(M, NHIDDEN)
        part = jnp.dot(lhs, wgb_ref[t], preferred_element_type=jnp.float32)
        gb = part if gb is None else gb + part
    gb = gb + bgb_ref[...]                                       # (M, GBP) f32

    # ---- InstanceNorm + spatially-adaptive affine in channel-major layout
    #      (spatial dim on lanes -> lane-dense output stores).
    gb_t = jnp.transpose(gb, (1, 0))                             # (GBP, M)
    gamma = gb_t[0:C]
    beta = gb_t[beta_off:beta_off + C]
    xn = (x_ref[0] - mean_ref[0]) * inv_ref[0]                   # (C, M)
    out_ref[0] = xn * (1.0 + gamma) + beta


# ----------------------------------------------------------------------------
# Wrapper
# ----------------------------------------------------------------------------
@functools.partial(jax.jit, static_argnames=("tile_rows",))
def spade_forward(x_nchw, source_nchw, params, tile_rows=None):
    B, C, H, W = x_nchw.shape
    Cin = source_nchw.shape[1]
    f32, bf16 = jnp.float32, jnp.bfloat16

    if H % 4 != 0:
        # TODO(synk): support H % 4 != 0 via four 1-row halo BlockSpec views.
        raise ValueError(f"H={H} must be a multiple of 4")
    th = tile_rows if tile_rows is not None else _pick_tile_rows(H, W, C, Cin, B)
    if H % th != 0 or th % 4 != 0 or ((th * W) % 128 != 0 and th != H):
        raise ValueError(
            f"tile_rows={th} must divide H={H}, be a multiple of 4, and give a "
            f"lane-dense tile (th*W % 128 == 0) unless it covers the whole image")
    n_tiles = H // th
    halo_bidx = th // 4          # block-index stride of the 4-row halo view

    # ---- hoisted InstanceNorm2d statistics: one XLA pass over x, NCHW layout.
    x3 = x_nchw.astype(f32).reshape(B, C, H * W)
    mean = jnp.mean(x3, axis=2, keepdims=True)                    # (B, C, 1)
    msq = jnp.mean(x3 * x3, axis=2, keepdims=True)
    inv = jax.lax.rsqrt(jnp.maximum(msq - mean * mean, 0.0) + EPS)

    # ---- resized segmentation map, zero-padded (2 halo rows, 1 halo column).
    src = nearest_resize_nchw(source_nchw.astype(f32), H, W)      # (B, Cin, H, W)
    src_pad = jnp.pad(jnp.transpose(src, (0, 2, 3, 1)),
                      ((0, 0), (2, 2), (1, 1), (0, 0))).astype(bf16)  # (B,H+4,W+2,Cin)

    # ---- weights: taps flattened (dy*3+dx); gamma|beta packed on lanes so one
    #      matmul per tap feeds both.  beta starts at a sublane/lane-aligned
    #      offset so the post-transpose slices need no cross-lane shifts.
    w1 = params["w1"].reshape(9, Cin, NHIDDEN).astype(bf16)
    b1 = params["b1"].reshape(1, NHIDDEN).astype(f32)
    cpad8 = -(-C // 8) * 8
    if cpad8 + C <= 128:
        beta_off, GBP = cpad8, 128
    elif 2 * C <= 128:
        beta_off, GBP = C, 128
    else:
        cpad128 = -(-C // 128) * 128
        beta_off, GBP = cpad128, 2 * cpad128
    wg = params["wg"].reshape(9, NHIDDEN, C)
    wb = params["wb"].reshape(9, NHIDDEN, C)
    wgb = jnp.zeros((9, NHIDDEN, GBP), f32)
    wgb = wgb.at[..., :C].set(wg).at[..., beta_off:beta_off + C].set(wb)
    wgb = wgb.astype(bf16)
    bgb = jnp.zeros((1, GBP), f32)
    bgb = bgb.at[:, :C].set(params["bg"].reshape(1, C))
    bgb = bgb.at[:, beta_off:beta_off + C].set(params["bb"].reshape(1, C))

    out3 = pl.pallas_call(
        functools.partial(_spade_fused_kernel,
                          th=th, W=W, C=C, beta_off=beta_off),
        out_shape=jax.ShapeDtypeStruct((B, C, H * W), f32),
        grid=(B, n_tiles),
        in_specs=[
            pl.BlockSpec((1, C, th * W), lambda b, j: (b, 0, j)),
            pl.BlockSpec((1, C, 1), lambda b, j: (b, 0, 0)),
            pl.BlockSpec((1, C, 1), lambda b, j: (b, 0, 0)),
            pl.BlockSpec((1, th, W + 2, Cin), lambda b, j: (b, j, 0, 0)),
            pl.BlockSpec((1, 4, W + 2, Cin),
                         lambda b, j: (b, (j + 1) * halo_bidx, 0, 0)),
            pl.BlockSpec((9, Cin, NHIDDEN), lambda b, j: (0, 0, 0)),
            pl.BlockSpec((1, NHIDDEN), lambda b, j: (0, 0)),
            pl.BlockSpec((9, NHIDDEN, GBP), lambda b, j: (0, 0, 0)),
            pl.BlockSpec((1, GBP), lambda b, j: (0, 0)),
        ],
        out_specs=pl.BlockSpec((1, C, th * W), lambda b, j: (b, 0, j)),
        scratch_shapes=[
            pltpu.VMEM((th + 4, W + 2, Cin), bf16),       # staged source tile
            pltpu.VMEM((th + 2, W + 2, NHIDDEN), bf16),   # zero-padded hidden
        ],
        compiler_params=pltpu.CompilerParams(
            dimension_semantics=("parallel", "parallel"),
            vmem_limit_bytes=48 * 1024 * 1024),           # < v7x's 64 MiB physical
    )(x3, mean, inv, src_pad, src_pad, w1, b1, wgb, bgb)

    return out3.reshape(B, C, H, W)


# ----------------------------------------------------------------------------
# Pure-JAX reference (module semantics, f32 end-to-end)
# ----------------------------------------------------------------------------
def spade_reference(x, source, params):
    B, C, H, W = x.shape
    mean = jnp.mean(x, axis=(2, 3), keepdims=True)
    var = jnp.mean((x - mean) ** 2, axis=(2, 3), keepdims=True)
    normalized = (x - mean) / jnp.sqrt(var + EPS)

    src = nearest_resize_nchw(source, H, W)
    src_nhwc = jnp.transpose(src, (0, 2, 3, 1))

    def conv(z, w, b):
        y = jax.lax.conv_general_dilated(
            z, w, window_strides=(1, 1), padding="SAME",
            dimension_numbers=("NHWC", "HWIO", "NHWC"),
            precision=jax.lax.Precision.HIGHEST)
        return y + b

    actv = jnp.maximum(conv(src_nhwc, params["w1"], params["b1"]), 0.0)
    gamma = jnp.transpose(conv(actv, params["wg"], params["bg"]), (0, 3, 1, 2))
    beta = jnp.transpose(conv(actv, params["wb"], params["bb"]), (0, 3, 1, 2))
    return normalized * (1 + gamma) + beta


# ----------------------------------------------------------------------------
if __name__ == "__main__":
    B, norm_nc, label_nc = 2, 4, 3
    H = W = 16
    Hs = Ws = 8

    key = jax.random.PRNGKey(0)
    kx, ks, k1, k2, k3, k4, k5, k6 = jax.random.split(key, 8)

    x = jax.random.normal(kx, (B, norm_nc, H, W), jnp.float32)
    source = jax.random.normal(ks, (B, label_nc, Hs, Ws), jnp.float32)

    # Deterministic synthetic parameters (HWIO conv weights).
    params = {
        "w1": 0.05 * jax.random.normal(k1, (3, 3, label_nc, NHIDDEN), jnp.float32),
        "b1": 0.05 * jax.random.normal(k2, (NHIDDEN,), jnp.float32),
        "wg": 0.05 * jax.random.normal(k3, (3, 3, NHIDDEN, norm_nc), jnp.float32),
        "bg": 0.05 * jax.random.normal(k4, (norm_nc,), jnp.float32),
        "wb": 0.05 * jax.random.normal(k5, (3, 3, NHIDDEN, norm_nc), jnp.float32),
        "bb": 0.05 * jax.random.normal(k6, (norm_nc,), jnp.float32),
    }

    ref = spade_reference(x, source, params)

    # tile_rows=8 -> 2 row tiles per image: exercises the halo / border logic.
    out = jax.block_until_ready(spade_forward(x, source, params, tile_rows=8))
    assert out.shape == (B, norm_nc, H, W), out.shape
    max_err = float(jnp.max(jnp.abs(out - ref)))
    assert max_err < 5e-2, max_err

    # Default tiling (single full-image tile per batch element).
    out2 = jax.block_until_ready(spade_forward(x, source, params))
    max_err2 = float(jnp.max(jnp.abs(out2 - ref)))
    assert max_err2 < 5e-2, max_err2

    print("KERNEL_OK")
</pallas_src>

<mosaic_0001>
module attributes {stable_mosaic.version = 11 : i64} {
  func.func @_spade_fused_kernel(%arg0: i32, %arg1: i32, %arg2: memref<1x4x128xf32, #tpu.memory_space<vmem>>, %arg3: memref<1x4x1xf32, #tpu.memory_space<vmem>>, %arg4: memref<1x4x1xf32, #tpu.memory_space<vmem>>, %arg5: memref<1x8x18x3xbf16, #tpu.memory_space<vmem>>, %arg6: memref<1x4x18x3xbf16, #tpu.memory_space<vmem>>, %arg7: memref<9x3x128xbf16, #tpu.memory_space<vmem>>, %arg8: memref<1x128xf32, #tpu.memory_space<vmem>>, %arg9: memref<9x128x128xbf16, #tpu.memory_space<vmem>>, %arg10: memref<1x128xf32, #tpu.memory_space<vmem>>, %arg11: memref<1x4x128xf32, #tpu.memory_space<vmem>>, %arg12: memref<12x18x3xbf16, #tpu.memory_space<vmem>>, %arg13: memref<10x18x128xbf16, #tpu.memory_space<vmem>>) attributes {dimension_semantics = [#tpu.dimension_semantics<parallel>, #tpu.dimension_semantics<parallel>], iteration_bounds = array<i64: 2, 2>, scalar_prefetch = 0 : i64, scratch_operands = 2 : i64, tpu.core_type = #tpu.core_type<tc>, window_params = [{transform_indices = @transform_0, window_bounds = array<i64: 1, 4, 128>}, {transform_indices = @transform_1, window_bounds = array<i64: 1, 4, 1>}, {transform_indices = @transform_2, window_bounds = array<i64: 1, 4, 1>}, {transform_indices = @transform_3, window_bounds = array<i64: 1, 8, 18, 3>}, {transform_indices = @transform_4, window_bounds = array<i64: 1, 4, 18, 3>}, {pipeline_mode = #tpu.pipeline_mode<synchronous>, transform_indices = @transform_5, window_bounds = array<i64: 9, 3, 128>}, {pipeline_mode = #tpu.pipeline_mode<synchronous>, transform_indices = @transform_6, window_bounds = array<i64: 1, 128>}, {pipeline_mode = #tpu.pipeline_mode<synchronous>, transform_indices = @transform_7, window_bounds = array<i64: 9, 128, 128>}, {pipeline_mode = #tpu.pipeline_mode<synchronous>, transform_indices = @transform_8, window_bounds = array<i64: 1, 128>}, {transform_indices = @transform_9, window_bounds = array<i64: 1, 4, 128>}]} {
    %c0 = arith.constant 0 : index
    %c0_0 = arith.constant 0 : index
    %c0_1 = arith.constant 0 : index
    %c0_2 = arith.constant 0 : index
    %0 = vector.load %arg5[%c0, %c0_0, %c0_1, %c0_2] : memref<1x8x18x3xbf16, #tpu.memory_space<vmem>>, vector<1x8x18x3xbf16>
    %1 = vector.shape_cast %0 : vector<1x8x18x3xbf16> to vector<8x18x3xbf16>
    %c0_3 = arith.constant 0 : index
    %c0_4 = arith.constant 0 : index
    %c0_5 = arith.constant 0 : index
    %2 = vector.load %arg12[%c0_3, %c0_4, %c0_5] : memref<12x18x3xbf16, #tpu.memory_space<vmem>>, vector<8x18x3xbf16>
    tpu.vector_store %arg12[%c0_3, %c0_4, %c0_5], %1 {strides = array<i32>} : memref<12x18x3xbf16, #tpu.memory_space<vmem>>, vector<8x18x3xbf16>,
    %c0_6 = arith.constant 0 : index
    %c0_7 = arith.constant 0 : index
    %c0_8 = arith.constant 0 : index
    %c0_9 = arith.constant 0 : index
    %3 = vector.load %arg6[%c0_6, %c0_7, %c0_8, %c0_9] : memref<1x4x18x3xbf16, #tpu.memory_space<vmem>>, vector<1x4x18x3xbf16>
    %4 = vector.shape_cast %3 : vector<1x4x18x3xbf16> to vector<4x18x3xbf16>
    %c8 = arith.constant 8 : index
    %c0_10 = arith.constant 0 : index
    %c0_11 = arith.constant 0 : index
    %5 = vector.load %arg12[%c8, %c0_10, %c0_11] : memref<12x18x3xbf16, #tpu.memory_space<vmem>>, vector<4x18x3xbf16>
    tpu.vector_store %arg12[%c8, %c0_10, %c0_11], %4 {strides = array<i32>} : memref<12x18x3xbf16, #tpu.memory_space<vmem>>, vector<4x18x3xbf16>,
    %c0_12 = arith.constant 0 : index
    %c0_13 = arith.constant 0 : index
    %c0_14 = arith.constant 0 : index
    %6 = vector.load %arg12[%c0_12, %c0_13, %c0_14] : memref<12x18x3xbf16, #tpu.memory_space<vmem>>, vector<10x16x3xbf16>
    %7 = vector.shape_cast %6 : vector<10x16x3xbf16> to vector<160x3xbf16>
    %c0_15 = arith.constant 0 : index
    %c0_16 = arith.constant 0 : index
    %c0_17 = arith.constant 0 : index
    %8 = vector.load %arg7[%c0_15, %c0_16, %c0_17] : memref<9x3x128xbf16, #tpu.memory_space<vmem>>, vector<1x3x128xbf16>
    %9 = vector.shape_cast %8 : vector<1x3x128xbf16> to vector<3x128xbf16>
    %cst = arith.constant dense<0.000000e+00> : vector<160x128xf32>
    %10 = tpu.matmul %7, %9, %cst {dimension_numbers = #tpu.dot_dimension_numbers<[1], [0], [0], [1], [0, 0, 1, 1], [], []>} : vector<160x3xbf16>, vector<3x128xbf16>, vector<160x128xf32> -> vector<160x128xf32>
    %c0_18 = arith.constant 0 : index
    %c1 = arith.constant 1 : index
    %c0_19 = arith.constant 0 : index
    %11 = vector.load %arg12[%c0_18, %c1, %c0_19] : memref<12x18x3xbf16, #tpu.memory_space<vmem>>, vector<10x16x3xbf16>
    %12 = vector.shape_cast %11 : vector<10x16x3xbf16> to vector<160x3xbf16>
    %c1_20 = arith.constant 1 : index
    %c0_21 = arith.constant 0 : index
    %c0_22 = arith.constant 0 : index
    %13 = vector.load %arg7[%c1_20, %c0_21, %c0_22] : memref<9x3x128xbf16, #tpu.memory_space<vmem>>, vector<1x3x128xbf16>
    %14 = vector.shape_cast %13 : vector<1x3x128xbf16> to vector<3x128xbf16>
    %cst_23 = arith.constant dense<0.000000e+00> : vector<160x128xf32>
    %15 = tpu.matmul %12, %14, %cst_23 {dimension_numbers = #tpu.dot_dimension_numbers<[1], [0], [0], [1], [0, 0, 1, 1], [], []>} : vector<160x3xbf16>, vector<3x128xbf16>, vector<160x128xf32> -> vector<160x128xf32>
    %16 = arith.addf %10, %15 : vector<160x128xf32>
    %c0_24 = arith.constant 0 : index
    %c2 = arith.constant 2 : index
    %c0_25 = arith.constant 0 : index
    %17 = vector.load %arg12[%c0_24, %c2, %c0_25] : memref<12x18x3xbf16, #tpu.memory_space<vmem>>, vector<10x16x3xbf16>
    %18 = vector.shape_cast %17 : vector<10x16x3xbf16> to vector<160x3xbf16>
    %c2_26 = arith.constant 2 : index
    %c0_27 = arith.constant 0 : index
    %c0_28 = arith.constant 0 : index
    %19 = vector.load %arg7[%c2_26, %c0_27, %c0_28] : memref<9x3x128xbf16, #tpu.memory_space<vmem>>, vector<1x3x128xbf16>
    %20 = vector.shape_cast %19 : vector<1x3x128xbf16> to vector<3x128xbf16>
    %cst_29 = arith.constant dense<0.000000e+00> : vector<160x128xf32>
    %21 = tpu.matmul %18, %20, %cst_29 {dimension_numbers = #tpu.dot_dimension_numbers<[1], [0], [0], [1], [0, 0, 1, 1], [], []>} : vector<160x3xbf16>, vector<3x128xbf16>, vector<160x128xf32> -> vector<160x128xf32>
    %22 = arith.addf %16, %21 : vector<160x128xf32>
    %c1_30 = arith.constant 1 : index
    %c0_31 = arith.constant 0 : index
    %c0_32 = arith.constant 0 : index
    %23 = vector.load %arg12[%c1_30, %c0_31, %c0_32] : memref<12x18x3xbf16, #tpu.memory_space<vmem>>, vector<10x16x3xbf16>
    %24 = vector.shape_cast %23 : vector<10x16x3xbf16> to vector<160x3xbf16>
    %c3 = arith.constant 3 : index
    %c0_33 = arith.constant 0 : index
    %c0_34 = arith.constant 0 : index
    %25 = vector.load %arg7[%c3, %c0_33, %c0_34] : memref<9x3x128xbf16, #tpu.memory_space<vmem>>, vector<1x3x128xbf16>
    %26 = vector.shape_cast %25 : vector<1x3x128xbf16> to vector<3x128xbf16>
    %cst_35 = arith.constant dense<0.000000e+00> : vector<160x128xf32>
    %27 = tpu.matmul %24, %26, %cst_35 {dimension_numbers = #tpu.dot_dimension_numbers<[1], [0], [0], [1], [0, 0, 1, 1], [], []>} : vector<160x3xbf16>, vector<3x128xbf16>, vector<160x128xf32> -> vector<160x128xf32>
    %28 = arith.addf %22, %27 : vector<160x128xf32>
    %c1_36 = arith.constant 1 : index
    %c1_37 = arith.constant 1 : index
    %c0_38 = arith.constant 0 : index
    %29 = vector.load %arg12[%c1_36, %c1_37, %c0_38] : memref<12x18x3xbf16, #tpu.memory_space<vmem>>, vector<10x16x3xbf16>
    %30 = vector.shape_cast %29 : vector<10x16x3xbf16> to vector<160x3xbf16>
    %c4 = arith.constant 4 : index
    %c0_39 = arith.constant 0 : index
    %c0_40 = arith.constant 0 : index
    %31 = vector.load %arg7[%c4, %c0_39, %c0_40] : memref<9x3x128xbf16, #tpu.memory_space<vmem>>, vector<1x3x128xbf16>
    %32 = vector.shape_cast %31 : vector<1x3x128xbf16> to vector<3x128xbf16>
    %cst_41 = arith.constant dense<0.000000e+00> : vector<160x128xf32>
    %33 = tpu.matmul %30, %32, %cst_41 {dimension_numbers = #tpu.dot_dimension_numbers<[1], [0], [0], [1], [0, 0, 1, 1], [], []>} : vector<160x3xbf16>, vector<3x128xbf16>, vector<160x128xf32> -> vector<160x128xf32>
    %34 = arith.addf %28, %33 : vector<160x128xf32>
    %c1_42 = arith.constant 1 : index
    %c2_43 = arith.constant 2 : index
    %c0_44 = arith.constant 0 : index
    %35 = vector.load %arg12[%c1_42, %c2_43, %c0_44] : memref<12x18x3xbf16, #tpu.memory_space<vmem>>, vector<10x16x3xbf16>
    %36 = vector.shape_cast %35 : vector<10x16x3xbf16> to vector<160x3xbf16>
    %c5 = arith.constant 5 : index
    %c0_45 = arith.constant 0 : index
    %c0_46 = arith.constant 0 : index
    %37 = vector.load %arg7[%c5, %c0_45, %c0_46] : memref<9x3x128xbf16, #tpu.memory_space<vmem>>, vector<1x3x128xbf16>
    %38 = vector.shape_cast %37 : vector<1x3x128xbf16> to vector<3x128xbf16>
    %cst_47 = arith.constant dense<0.000000e+00> : vector<160x128xf32>
    %39 = tpu.matmul %36, %38, %cst_47 {dimension_numbers = #tpu.dot_dimension_numbers<[1], [0], [0], [1], [0, 0, 1, 1], [], []>} : vector<160x3xbf16>, vector<3x128xbf16>, vector<160x128xf32> -> vector<160x128xf32>
    %40 = arith.addf %34, %39 : vector<160x128xf32>
    %c2_48 = arith.constant 2 : index
    %c0_49 = arith.constant 0 : index
    %c0_50 = arith.constant 0 : index
    %41 = vector.load %arg12[%c2_48, %c0_49, %c0_50] : memref<12x18x3xbf16, #tpu.memory_space<vmem>>, vector<10x16x3xbf16>
    %42 = vector.shape_cast %41 : vector<10x16x3xbf16> to vector<160x3xbf16>
    %c6 = arith.constant 6 : index
    %c0_51 = arith.constant 0 : index
    %c0_52 = arith.constant 0 : index
    %43 = vector.load %arg7[%c6, %c0_51, %c0_52] : memref<9x3x128xbf16, #tpu.memory_space<vmem>>, vector<1x3x128xbf16>
    %44 = vector.shape_cast %43 : vector<1x3x128xbf16> to vector<3x128xbf16>
    %cst_53 = arith.constant dense<0.000000e+00> : vector<160x128xf32>
    %45 = tpu.matmul %42, %44, %cst_53 {dimension_numbers = #tpu.dot_dimension_numbers<[1], [0], [0], [1], [0, 0, 1, 1], [], []>} : vector<160x3xbf16>, vector<3x128xbf16>, vector<160x128xf32> -> vector<160x128xf32>
    %46 = arith.addf %40, %45 : vector<160x128xf32>
    %c2_54 = arith.constant 2 : index
    %c1_55 = arith.constant 1 : index
    %c0_56 = arith.constant 0 : index
    %47 = vector.load %arg12[%c2_54, %c1_55, %c0_56] : memref<12x18x3xbf16, #tpu.memory_space<vmem>>, vector<10x16x3xbf16>
    %48 = vector.shape_cast %47 : vector<10x16x3xbf16> to vector<160x3xbf16>
    %c7 = arith.constant 7 : index
    %c0_57 = arith.constant 0 : index
    %c0_58 = arith.constant 0 : index
    %49 = vector.load %arg7[%c7, %c0_57, %c0_58] : memref<9x3x128xbf16, #tpu.memory_space<vmem>>, vector<1x3x128xbf16>
    %50 = vector.shape_cast %49 : vector<1x3x128xbf16> to vector<3x128xbf16>
    %cst_59 = arith.constant dense<0.000000e+00> : vector<160x128xf32>
    %51 = tpu.matmul %48, %50, %cst_59 {dimension_numbers = #tpu.dot_dimension_numbers<[1], [0], [0], [1], [0, 0, 1, 1], [], []>} : vector<160x3xbf16>, vector<3x128xbf16>, vector<160x128xf32> -> vector<160x128xf32>
    %52 = arith.addf %46, %51 : vector<160x128xf32>
    %c2_60 = arith.constant 2 : index
    %c2_61 = arith.constant 2 : index
    %c0_62 = arith.constant 0 : index
    %53 = vector.load %arg12[%c2_60, %c2_61, %c0_62] : memref<12x18x3xbf16, #tpu.memory_space<vmem>>, vector<10x16x3xbf16>
    %54 = vector.shape_cast %53 : vector<10x16x3xbf16> to vector<160x3xbf16>
    %c8_63 = arith.constant 8 : index
    %c0_64 = arith.constant 0 : index
    %c0_65 = arith.constant 0 : index
    %55 = vector.load %arg7[%c8_63, %c0_64, %c0_65] : memref<9x3x128xbf16, #tpu.memory_space<vmem>>, vector<1x3x128xbf16>
    %56 = vector.shape_cast %55 : vector<1x3x128xbf16> to vector<3x128xbf16>
    %cst_66 = arith.constant dense<0.000000e+00> : vector<160x128xf32>
    %57 = tpu.matmul %54, %56, %cst_66 {dimension_numbers = #tpu.dot_dimension_numbers<[1], [0], [0], [1], [0, 0, 1, 1], [], []>} : vector<160x3xbf16>, vector<3x128xbf16>, vector<160x128xf32> -> vector<160x128xf32>
    %58 = arith.addf %52, %57 : vector<160x128xf32>
    %c0_67 = arith.constant 0 : index
    %c0_68 = arith.constant 0 : index
    %59 = vector.load %arg8[%c0_67, %c0_68] : memref<1x128xf32, #tpu.memory_space<vmem>>, vector<1x128xf32>
    %60 = vector.broadcast %59 : vector<1x128xf32> to vector<160x128xf32>
    %61 = arith.addf %58, %60 : vector<160x128xf32>
    %cst_69 = arith.constant 0.000000e+00 : f32
    %62 = vector.broadcast %cst_69 : f32 to vector<160x128xf32>
    %63 = arith.maximumf %61, %62 : vector<160x128xf32>
    %64 = vector.shape_cast %63 : vector<160x128xf32> to vector<10x16x128xf32>
    %65 = arith.truncf %64 : vector<10x16x128xf32> to vector<10x16x128xbf16>
    %c0_70 = arith.constant 0 : index
    %c1_71 = arith.constant 1 : index
    %c0_72 = arith.constant 0 : index
    %66 = vector.load %arg13[%c0_70, %c1_71, %c0_72] : memref<10x18x128xbf16, #tpu.memory_space<vmem>>, vector<10x16x128xbf16>
    tpu.vector_store %arg13[%c0_70, %c1_71, %c0_72], %65 {strides = array<i32>} : memref<10x18x128xbf16, #tpu.memory_space<vmem>>, vector<10x16x128xbf16>,
    %cst_73 = arith.constant 0.000000e+00 : bf16
    %67 = vector.broadcast %cst_73 : bf16 to vector<10x1x128xbf16>
    %c0_74 = arith.constant 0 : index
    %c0_75 = arith.constant 0 : index
    %c0_76 = arith.constant 0 : index
    %68 = vector.load %arg13[%c0_74, %c0_75, %c0_76] : memref<10x18x128xbf16, #tpu.memory_space<vmem>>, vector<10x1x128xbf16>
    tpu.vector_store %arg13[%c0_74, %c0_75, %c0_76], %67 {strides = array<i32>} : memref<10x18x128xbf16, #tpu.memory_space<vmem>>, vector<10x1x128xbf16>,
    %c0_77 = arith.constant 0 : index
    %c17 = arith.constant 17 : index
    %c0_78 = arith.constant 0 : index
    %69 = vector.load %arg13[%c0_77, %c17, %c0_78] : memref<10x18x128xbf16, #tpu.memory_space<vmem>>, vector<10x1x128xbf16>
    tpu.vector_store %arg13[%c0_77, %c17, %c0_78], %67 {strides = array<i32>} : memref<10x18x128xbf16, #tpu.memory_space<vmem>>, vector<10x1x128xbf16>,
    %cst_79 = arith.constant 0.000000e+00 : bf16
    %70 = vector.broadcast %cst_79 : bf16 to vector<1x18x128xbf16>
    %c0_i32 = arith.constant 0 : i32
    %71 = arith.cmpi eq, %arg1, %c0_i32 : i32
    %72 = arith.extui %71 : i1 to i32
    %c0_i32_80 = arith.constant 0 : i32
    %73 = arith.cmpi ne, %72, %c0_i32_80 : i32
    scf.if %73 {
      %c0_160 = arith.constant 0 : index
      %c0_161 = arith.constant 0 : index
      %c0_162 = arith.constant 0 : index
      %153 = vector.load %arg13[%c0_160, %c0_161, %c0_162] : memref<10x18x128xbf16, #tpu.memory_space<vmem>>, vector<1x18x128xbf16>
      tpu.vector_store %arg13[%c0_160, %c0_161, %c0_162], %70 {strides = array<i32>} : memref<10x18x128xbf16, #tpu.memory_space<vmem>>, vector<1x18x128xbf16>,
    } else {
    }
    %c1_i32 = arith.constant 1 : i32
    %74 = arith.cmpi eq, %arg1, %c1_i32 : i32
    %75 = arith.extui %74 : i1 to i32
    %c0_i32_81 = arith.constant 0 : i32
    %76 = arith.cmpi ne, %75, %c0_i32_81 : i32
    scf.if %76 {
      %c9 = arith.constant 9 : index
      %c0_160 = arith.constant 0 : index
      %c0_161 = arith.constant 0 : index
      %153 = vector.load %arg13[%c9, %c0_160, %c0_161] : memref<10x18x128xbf16, #tpu.memory_space<vmem>>, vector<1x18x128xbf16>
      tpu.vector_store %arg13[%c9, %c0_160, %c0_161], %70 {strides = array<i32>} : memref<10x18x128xbf16, #tpu.memory_space<vmem>>, vector<1x18x128xbf16>,
    } else {
    }
    %c0_82 = arith.constant 0 : index
    %c0_83 = arith.constant 0 : index
    %c0_84 = arith.constant 0 : index
    %77 = vector.load %arg13[%c0_82, %c0_83, %c0_84] : memref<10x18x128xbf16, #tpu.memory_space<vmem>>, vector<8x16x128xbf16>
    %78 = vector.shape_cast %77 : vector<8x16x128xbf16> to vector<128x128xbf16>
    %c0_85 = arith.constant 0 : index
    %c0_86 = arith.constant 0 : index
    %c0_87 = arith.constant 0 : index
    %79 = vector.load %arg9[%c0_85, %c0_86, %c0_87] : memref<9x128x128xbf16, #tpu.memory_space<vmem>>, vector<1x128x128xbf16>
    %80 = vector.shape_cast %79 : vector<1x128x128xbf16> to vector<128x128xbf16>
    %cst_88 = arith.constant dense<0.000000e+00> : vector<128x128xf32>
    %81 = tpu.matmul %78, %80, %cst_88 {dimension_numbers = #tpu.dot_dimension_numbers<[1], [0], [0], [1], [0, 0, 1, 1], [], []>} : vector<128x128xbf16>, vector<128x128xbf16>, vector<128x128xf32> -> vector<128x128xf32>
    %c0_89 = arith.constant 0 : index
    %c1_90 = arith.constant 1 : index
    %c0_91 = arith.constant 0 : index
    %82 = vector.load %arg13[%c0_89, %c1_90, %c0_91] : memref<10x18x128xbf16, #tpu.memory_space<vmem>>, vector<8x16x128xbf16>
    %83 = vector.shape_cast %82 : vector<8x16x128xbf16> to vector<128x128xbf16>
    %c1_92 = arith.constant 1 : index
    %c0_93 = arith.constant 0 : index
    %c0_94 = arith.constant 0 : index
    %84 = vector.load %arg9[%c1_92, %c0_93, %c0_94] : memref<9x128x128xbf16, #tpu.memory_space<vmem>>, vector<1x128x128xbf16>
    %85 = vector.shape_cast %84 : vector<1x128x128xbf16> to vector<128x128xbf16>
    %cst_95 = arith.constant dense<0.000000e+00> : vector<128x128xf32>
    %86 = tpu.matmul %83, %85, %cst_95 {dimension_numbers = #tpu.dot_dimension_numbers<[1], [0], [0], [1], [0, 0, 1, 1], [], []>} : vector<128x128xbf16>, vector<128x128xbf16>, vector<128x128xf32> -> vector<128x128xf32>
    %87 = arith.addf %81, %86 : vector<128x128xf32>
    %c0_96 = arith.constant 0 : index
    %c2_97 = arith.constant 2 : index
    %c0_98 = arith.constant 0 : index
    %88 = vector.load %arg13[%c0_96, %c2_97, %c0_98] : memref<10x18x128xbf16, #tpu.memory_space<vmem>>, vector<8x16x128xbf16>
    %89 = vector.shape_cast %88 : vector<8x16x128xbf16> to vector<128x128xbf16>
    %c2_99 = arith.constant 2 : index
    %c0_100 = arith.constant 0 : index
    %c0_101 = arith.constant 0 : index
    %90 = vector.load %arg9[%c2_99, %c0_100, %c0_101] : memref<9x128x128xbf16, #tpu.memory_space<vmem>>, vector<1x128x128xbf16>
    %91 = vector.shape_cast %90 : vector<1x128x128xbf16> to vector<128x128xbf16>
    %cst_102 = arith.constant dense<0.000000e+00> : vector<128x128xf32>
    %92 = tpu.matmul %89, %91, %cst_102 {dimension_numbers = #tpu.dot_dimension_numbers<[1], [0], [0], [1], [0, 0, 1, 1], [], []>} : vector<128x128xbf16>, vector<128x128xbf16>, vector<128x128xf32> -> vector<128x128xf32>
    %93 = arith.addf %87, %92 : vector<128x128xf32>
    %c1_103 = arith.constant 1 : index
    %c0_104 = arith.constant 0 : index
    %c0_105 = arith.constant 0 : index
    %94 = vector.load %arg13[%c1_103, %c0_104, %c0_105] : memref<10x18x128xbf16, #tpu.memory_space<vmem>>, vector<8x16x128xbf16>
    %95 = vector.shape_cast %94 : vector<8x16x128xbf16> to vector<128x128xbf16>
    %c3_106 = arith.constant 3 : index
    %c0_107 = arith.constant 0 : index
    %c0_108 = arith.constant 0 : index
    %96 = vector.load %arg9[%c3_106, %c0_107, %c0_108] : memref<9x128x128xbf16, #tpu.memory_space<vmem>>, vector<1x128x128xbf16>
    %97 = vector.shape_cast %96 : vector<1x128x128xbf16> to vector<128x128xbf16>
    %cst_109 = arith.constant dense<0.000000e+00> : vector<128x128xf32>
    %98 = tpu.matmul %95, %97, %cst_109 {dimension_numbers = #tpu.dot_dimension_numbers<[1], [0], [0], [1], [0, 0, 1, 1], [], []>} : vector<128x128xbf16>, vector<128x128xbf16>, vector<128x128xf32> -> vector<128x128xf32>
    %99 = arith.addf %93, %98 : vector<128x128xf32>
    %c1_110 = arith.constant 1 : index
    %c1_111 = arith.constant 1 : index
    %c0_112 = arith.constant 0 : index
    %100 = vector.load %arg13[%c1_110, %c1_111, %c0_112] : memref<10x18x128xbf16, #tpu.memory_space<vmem>>, vector<8x16x128xbf16>
    %101 = vector.shape_cast %100 : vector<8x16x128xbf16> to vector<128x128xbf16>
    %c4_113 = arith.constant 4 : index
    %c0_114 = arith.constant 0 : index
    %c0_115 = arith.constant 0 : index
    %102 = vector.load %arg9[%c4_113, %c0_114, %c0_115] : memref<9x128x128xbf16, #tpu.memory_space<vmem>>, vector<1x128x128xbf16>
    %103 = vector.shape_cast %102 : vector<1x128x128xbf16> to vector<128x128xbf16>
    %cst_116 = arith.constant dense<0.000000e+00> : vector<128x128xf32>
    %104 = tpu.matmul %101, %103, %cst_116 {dimension_numbers = #tpu.dot_dimension_numbers<[1], [0], [0], [1], [0, 0, 1, 1], [], []>} : vector<128x128xbf16>, vector<128x128xbf16>, vector<128x128xf32> -> vector<128x128xf32>
    %105 = arith.addf %99, %104 : vector<128x128xf32>
    %c1_117 = arith.constant 1 : index
    %c2_118 = arith.constant 2 : index
    %c0_119 = arith.constant 0 : index
    %106 = vector.load %arg13[%c1_117, %c2_118, %c0_119] : memref<10x18x128xbf16, #tpu.memory_space<vmem>>, vector<8x16x128xbf16>
    %107 = vector.shape_cast %106 : vector<8x16x128xbf16> to vector<128x128xbf16>
    %c5_120 = arith.constant 5 : index
    %c0_121 = arith.constant 0 : index
    %c0_122 = arith.constant 0 : index
    %108 = vector.load %arg9[%c5_120, %c0_121, %c0_122] : memref<9x128x128xbf16, #tpu.memory_space<vmem>>, vector<1x128x128xbf16>
    %109 = vector.shape_cast %108 : vector<1x128x128xbf16> to vector<128x128xbf16>
    %cst_123 = arith.constant dense<0.000000e+00> : vector<128x128xf32>
    %110 = tpu.matmul %107, %109, %cst_123 {dimension_numbers = #tpu.dot_dimension_numbers<[1], [0], [0], [1], [0, 0, 1, 1], [], []>} : vector<128x128xbf16>, vector<128x128xbf16>, vector<128x128xf32> -> vector<128x128xf32>
    %111 = arith.addf %105, %110 : vector<128x128xf32>
    %c2_124 = arith.constant 2 : index
    %c0_125 = arith.constant 0 : index
    %c0_126 = arith.constant 0 : index
    %112 = vector.load %arg13[%c2_124, %c0_125, %c0_126] : memref<10x18x128xbf16, #tpu.memory_space<vmem>>, vector<8x16x128xbf16>
    %113 = vector.shape_cast %112 : vector<8x16x128xbf16> to vector<128x128xbf16>
    %c6_127 = arith.constant 6 : index
    %c0_128 = arith.constant 0 : index
    %c0_129 = arith.constant 0 : index
    %114 = vector.load %arg9[%c6_127, %c0_128, %c0_129] : memref<9x128x128xbf16, #tpu.memory_space<vmem>>, vector<1x128x128xbf16>
    %115 = vector.shape_cast %114 : vector<1x128x128xbf16> to vector<128x128xbf16>
    %cst_130 = arith.constant dense<0.000000e+00> : vector<128x128xf32>
    %116 = tpu.matmul %113, %115, %cst_130 {dimension_numbers = #tpu.dot_dimension_numbers<[1], [0], [0], [1], [0, 0, 1, 1], [], []>} : vector<128x128xbf16>, vector<128x128xbf16>, vector<128x128xf32> -> vector<128x128xf32>
    %117 = arith.addf %111, %116 : vector<128x128xf32>
    %c2_131 = arith.constant 2 : index
    %c1_132 = arith.constant 1 : index
    %c0_133 = arith.constant 0 : index
    %118 = vector.load %arg13[%c2_131, %c1_132, %c0_133] : memref<10x18x128xbf16, #tpu.memory_space<vmem>>, vector<8x16x128xbf16>
    %119 = vector.shape_cast %118 : vector<8x16x128xbf16> to vector<128x128xbf16>
    %c7_134 = arith.constant 7 : index
    %c0_135 = arith.constant 0 : index
    %c0_136 = arith.constant 0 : index
    %120 = vector.load %arg9[%c7_134, %c0_135, %c0_136] : memref<9x128x128xbf16, #tpu.memory_space<vmem>>, vector<1x128x128xbf16>
    %121 = vector.shape_cast %120 : vector<1x128x128xbf16> to vector<128x128xbf16>
    %cst_137 = arith.constant dense<0.000000e+00> : vector<128x128xf32>
    %122 = tpu.matmul %119, %121, %cst_137 {dimension_numbers = #tpu.dot_dimension_numbers<[1], [0], [0], [1], [0, 0, 1, 1], [], []>} : vector<128x128xbf16>, vector<128x128xbf16>, vector<128x128xf32> -> vector<128x128xf32>
    %123 = arith.addf %117, %122 : vector<128x128xf32>
    %c2_138 = arith.constant 2 : index
    %c2_139 = arith.constant 2 : index
    %c0_140 = arith.constant 0 : index
    %124 = vector.load %arg13[%c2_138, %c2_139, %c0_140] : memref<10x18x128xbf16, #tpu.memory_space<vmem>>, vector<8x16x128xbf16>
    %125 = vector.shape_cast %124 : vector<8x16x128xbf16> to vector<128x128xbf16>
    %c8_141 = arith.constant 8 : index
    %c0_142 = arith.constant 0 : index
    %c0_143 = arith.constant 0 : index
    %126 = vector.load %arg9[%c8_141, %c0_142, %c0_143] : memref<9x128x128xbf16, #tpu.memory_space<vmem>>, vector<1x128x128xbf16>
    %127 = vector.shape_cast %126 : vector<1x128x128xbf16> to vector<128x128xbf16>
    %cst_144 = arith.constant dense<0.000000e+00> : vector<128x128xf32>
    %128 = tpu.matmul %125, %127, %cst_144 {dimension_numbers = #tpu.dot_dimension_numbers<[1], [0], [0], [1], [0, 0, 1, 1], [], []>} : vector<128x128xbf16>, vector<128x128xbf16>, vector<128x128xf32> -> vector<128x128xf32>
    %129 = arith.addf %123, %128 : vector<128x128xf32>
    %c0_145 = arith.constant 0 : index
    %c0_146 = arith.constant 0 : index
    %130 = vector.load %arg10[%c0_145, %c0_146] : memref<1x128xf32, #tpu.memory_space<vmem>>, vector<1x128xf32>
    %131 = vector.broadcast %130 : vector<1x128xf32> to vector<128x128xf32>
    %132 = arith.addf %129, %131 : vector<128x128xf32>
    %133 = tpu.transpose %132, [1, 0] : vector<128x128xf32> -> vector<128x128xf32>
    %134 = vector.extract_strided_slice %133 {offsets = [0, 0], sizes = [4, 128], strides = [1, 1]} : vector<128x128xf32> to vector<4x128xf32>
    %135 = vector.extract_strided_slice %133 {offsets = [8, 0], sizes = [4, 128], strides = [1, 1]} : vector<128x128xf32> to vector<4x128xf32>
    %c0_147 = arith.constant 0 : index
    %c0_148 = arith.constant 0 : index
    %c0_149 = arith.constant 0 : index
    %136 = vector.load %arg2[%c0_147, %c0_148, %c0_149] : memref<1x4x128xf32, #tpu.memory_space<vmem>>, vector<1x4x128xf32>
    %137 = vector.shape_cast %136 : vector<1x4x128xf32> to vector<4x128xf32>
    %c0_150 = arith.constant 0 : index
    %c0_151 = arith.constant 0 : index
    %c0_152 = arith.constant 0 : index
    %138 = vector.load %arg3[%c0_150, %c0_151, %c0_152] : memref<1x4x1xf32, #tpu.memory_space<vmem>>, vector<1x4x1xf32>
    %139 = vector.shape_cast %138 : vector<1x4x1xf32> to vector<4x1xf32>
    %140 = vector.broadcast %139 : vector<4x1xf32> to vector<4x128xf32>
    %141 = arith.subf %137, %140 : vector<4x128xf32>
    %c0_153 = arith.constant 0 : index
    %c0_154 = arith.constant 0 : index
    %c0_155 = arith.constant 0 : index
    %142 = vector.load %arg4[%c0_153, %c0_154, %c0_155] : memref<1x4x1xf32, #tpu.memory_space<vmem>>, vector<1x4x1xf32>
    %143 = vector.shape_cast %142 : vector<1x4x1xf32> to vector<4x1xf32>
    %144 = vector.broadcast %143 : vector<4x1xf32> to vector<4x128xf32>
    %145 = arith.mulf %141, %144 : vector<4x128xf32>
    %cst_156 = arith.constant 1.000000e+00 : f32
    %146 = vector.broadcast %cst_156 : f32 to vector<4x128xf32>
    %147 = arith.addf %146, %134 : vector<4x128xf32>
    %148 = arith.mulf %145, %147 : vector<4x128xf32>
    %149 = arith.addf %148, %135 : vector<4x128xf32>
    %c0_157 = arith.constant 0 : index
    %c0_158 = arith.constant 0 : index
    %c0_159 = arith.constant 0 : index
    %150 = vector.load %arg11[%c0_157, %c0_158, %c0_159] : memref<1x4x128xf32, #tpu.memory_space<vmem>>, vector<1x4x128xf32>
    %151 = vector.shape_cast %150 : vector<1x4x128xf32> to vector<4x128xf32>
    %152 = vector.shape_cast %149 : vector<4x128xf32> to vector<1x4x128xf32>
    tpu.vector_store %arg11[%c0_157, %c0_158, %c0_159], %152 {strides = array<i32>} : memref<1x4x128xf32, #tpu.memory_space<vmem>>, vector<1x4x128xf32>,
    return
  }
  func.func @transform_0(%arg0: i32, %arg1: i32) -> (i32, i32, i32) {
    %c0_i32 = arith.constant 0 : i32
    %c0_i32_0 = arith.constant 0 : i32
    return %arg0, %c0_i32, %arg1 : i32, i32, i32
  }
  func.func @transform_1(%arg0: i32, %arg1: i32) -> (i32, i32, i32) {
    %c0_i32 = arith.constant 0 : i32
    %c0_i32_0 = arith.constant 0 : i32
    %c0_i32_1 = arith.constant 0 : i32
    return %arg0, %c0_i32, %c0_i32_0 : i32, i32, i32
  }
  func.func @transform_2(%arg0: i32, %arg1: i32) -> (i32, i32, i32) {
    %c0_i32 = arith.constant 0 : i32
    %c0_i32_0 = arith.constant 0 : i32
    %c0_i32_1 = arith.constant 0 : i32
    return %arg0, %c0_i32, %c0_i32_0 : i32, i32, i32
  }
  func.func @transform_3(%arg0: i32, %arg1: i32) -> (i32, i32, i32, i32) {
    %c0_i32 = arith.constant 0 : i32
    %c0_i32_0 = arith.constant 0 : i32
    %c0_i32_1 = arith.constant 0 : i32
    return %arg0, %arg1, %c0_i32, %c0_i32_0 : i32, i32, i32, i32
  }
  func.func @transform_4(%arg0: i32, %arg1: i32) -> (i32, i32, i32, i32) {
    %c1_i32 = arith.constant 1 : i32
    %0 = arith.addi %arg1, %c1_i32 : i32
    %c2_i32 = arith.constant 2 : i32
    %1 = arith.muli %0, %c2_i32 : i32
    %c0_i32 = arith.constant 0 : i32
    %c0_i32_0 = arith.constant 0 : i32
    %c0_i32_1 = arith.constant 0 : i32
    return %arg0, %1, %c0_i32, %c0_i32_0 : i32, i32, i32, i32
  }
  func.func @transform_5(%arg0: i32, %arg1: i32) -> (i32, i32, i32) {
    %c0_i32 = arith.constant 0 : i32
    %c0_i32_0 = arith.constant 0 : i32
    %c0_i32_1 = arith.constant 0 : i32
    %c0_i32_2 = arith.constant 0 : i32
    return %c0_i32, %c0_i32_0, %c0_i32_1 : i32, i32, i32
  }
  func.func @transform_6(%arg0: i32, %arg1: i32) -> (i32, i32) {
    %c0_i32 = arith.constant 0 : i32
    %c0_i32_0 = arith.constant 0 : i32
    %c0_i32_1 = arith.constant 0 : i32
    return %c0_i32, %c0_i32_0 : i32, i32
  }
  func.func @transform_7(%arg0: i32, %arg1: i32) -> (i32, i32, i32) {
    %c0_i32 = arith.constant 0 : i32
    %c0_i32_0 = arith.constant 0 : i32
    %c0_i32_1 = arith.constant 0 : i32
    %c0_i32_2 = arith.constant 0 : i32
    return %c0_i32, %c0_i32_0, %c0_i32_1 : i32, i32, i32
  }
  func.func @transform_8(%arg0: i32, %arg1: i32) -> (i32, i32) {
    %c0_i32 = arith.constant 0 : i32
    %c0_i32_0 = arith.constant 0 : i32
    %c0_i32_1 = arith.constant 0 : i32
    return %c0_i32, %c0_i32_0 : i32, i32
  }
  func.func @transform_9(%arg0: i32, %arg1: i32) -> (i32, i32, i32) {
    %c0_i32 = arith.constant 0 : i32
    %c0_i32_0 = arith.constant 0 : i32
    return %arg0, %c0_i32, %arg1 : i32, i32, i32
  }
}

</mosaic_0001>

<llo_original>
// kernel: spade_forward.1
$region0: #{spade_forward.1}
  #allocation0 [shape = 'u32[]', space=smem, size = 0x4, offset = 0x4, fixed_abs, tag = 'smem constant byte address 0x4 - core index']
  #allocation1 [shape = 'u32[144,128]{1,0:T(1,128)}', space=vmem, size = 0x12000, scoped, tag = 'internal scratch']
  #allocation2 [shape = 'bf16[12,18,3]{2,1,0:T(8,128)(2,1)}', space=vmem, size = 0x12000, scoped, tag = 'scratch operand']
  #allocation3 [shape = 'bf16[10,18,128]{2,1,0:T(8,128)(2,1)}', space=vmem, size = 0xf000, scoped, tag = 'scratch operand']
  %s0 = inlined_call_operand.vmem [shape: f32[2,4,256], index: 0, kind: input, shape index: {}]
  %s1 = inlined_call_operand.vmem [shape: f32[2,4,1], index: 1, kind: input, shape index: {}]
  %s2 = inlined_call_operand.vmem [shape: f32[2,4,1], index: 2, kind: input, shape index: {}]
  %s3 = inlined_call_operand.vmem [shape: bf16[2,20,18,3], index: 3, kind: input, shape index: {}, may-alias: {3,4}]
  %s4 = inlined_call_operand.vmem [shape: bf16[2,20,18,3], index: 4, kind: input, shape index: {}, may-alias: {3,4}]
  %s5 = inlined_call_operand.vmem [shape: bf16[9,3,128], index: 5, kind: input, shape index: {}]
  %s6 = inlined_call_operand.vmem [shape: f32[1,128], index: 6, kind: input, shape index: {}]
  %s7 = inlined_call_operand.vmem [shape: bf16[9,128,128], index: 7, kind: input, shape index: {}]
  %s8 = inlined_call_operand.vmem [shape: f32[1,128], index: 8, kind: input, shape index: {}]
  %s9 = inlined_call_operand.vmem [shape: f32[2,4,256], index: 9, kind: output, shape index: {}]
  %s10 = sld [smem:[#allocation0]]
  $region77: #{spade_forward.1} parent=0
    _
  %s12 = ssub.s32 1, %s10
  %s13 = scalar_select 0, %s12, %s10
  loop: start=0, step=1, limit=6
  $region2: #{spade_forward.1} parent=0 // loop_pre_header
    _
  $region3: #{spade_forward.1} parent=0 // loop_header
    %s15 = sphi 0, %s19
    %p16 = scmp.ge.s32.totalorder %s15, 6
    %s22 = sphi 0, %s34
    %s23 = sphi 0, %s30
    %s24 = sphi 0, %s22
    %s25 = sphi 0, %s23
    %s26 = sphi 0, %s24
    %s27 = sphi 0, %s25
    %s39 = sphi 0, %s41
    %s42 = sphi 0, %s39
    %s43 = sphi 0, %s42
    %s59 = sphi 0, %s43
    %s65 = sphi 0, %s67
    %s68 = sphi 0, %s65
    %s69 = sphi 0, %s68
    %s85 = sphi 0, %s69
    %s91 = sphi 0, %s93
    %s94 = sphi 0, %s91
    %s95 = sphi 0, %s94
    %s111 = sphi 0, %s95
    %s119 = sphi 0, %s121
    %s122 = sphi 0, %s119
    %s123 = sphi 0, %s122
    %s139 = sphi 0, %s123
    %s151 = sphi 0, %s153
    %s154 = sphi 0, %s151
    %s155 = sphi 0, %s154
    %s171 = sphi 0, %s155
    %s175 = sphi 0, %s175
    %s177 = sphi 0, %s175
    %s178 = sphi 0, %s177
    %s192 = sphi 0, %s178
    %s196 = sphi 0, %s196
    %s198 = sphi 0, %s196
    %s199 = sphi 0, %s198
    %s213 = sphi 0, %s199
    %s217 = sphi 0, %s217
    %s219 = sphi 0, %s217
    %s220 = sphi 0, %s219
    %s234 = sphi 0, %s220
    %s238 = sphi 0, %s238
    %s240 = sphi 0, %s238
    %s241 = sphi 0, %s240
    %s255 = sphi 0, %s241
    %s263 = sphi 0, %s265
    %s266 = sphi 0, %s263
    %s267 = sphi 0, %s266
    %s283 = sphi 0, %s267
  $region4: #{spade_forward.1} parent=0 // loop_header_branch
    %18 = sbr.rel (%p16) target = $region8
  $region5: #{spade_forward.1} parent=0 // loop_body
    %s20 = ssub.s32 %s15, 1
    %s21 = ssub.s32 %s15, 2
    %s28 = sadd.s32 1, %s23
    %p29 = scmp.ge.s32.totalorder %s28, 2
    %s30 = scalar_select %p29, 0, %s28
    %s31 = sadd.s32 1, %s22
    %s32 = scalar_select %p29, %s31, %s22
    %p33 = scmp.ge.s32.totalorder %s32, 2
    %s34 = scalar_select %p33, 0, %s32
    %s35 = ssub.s32 %s22, %s34
    %s36 = ssub.s32 %s23, %s30
    %s37 = sor.u32 %s35, %s36
    %p38 = scmp.eq.s32.totalorder %s37, 0
    %s40 = sadd.s32 %s39, 1
    %s41 = scalar_select %p38, %s39, %s40
    %p44 = pneg %p38
    %p45 = scmp.eq.s32.totalorder %s15, 3
    %p46 = por %p44, %p45
    %p47 = scmp.ne.s32.totalorder %s39, %s42
    %p48 = scmp.eq.s32.totalorder %s15, 0
    %p49 = por %p47, %p48
    %p50 = scmp.ne.s32.totalorder %s39, %s42
    %p51 = scmp.eq.s32.totalorder %s20, 3
    %p52 = por %p50, %p51
    %p53 = scmp.ne.s32.totalorder %s42, %s43
    %p54 = scmp.eq.s32.totalorder %s20, 0
    %p55 = por %p53, %p54
    %p56 = scmp.ne.s32.totalorder %s42, %s43
    %p57 = scmp.eq.s32.totalorder %s21, 3
    %p58 = por %p56, %p57
    %p60 = scmp.ne.s32.totalorder %s43, %s59
    %p61 = scmp.eq.s32.totalorder %s21, 0
    %p62 = por %p60, %p61
    %s63 = ssub.s32 %s22, %s34
    %p64 = scmp.eq.s32.totalorder %s63, 0
    %s66 = sadd.s32 %s65, 1
    %s67 = scalar_select %p64, %s65, %s66
    %p70 = pneg %p64
    %p71 = scmp.eq.s32.totalorder %s15, 3
    %p72 = por %p70, %p71
    %p73 = scmp.ne.s32.totalorder %s65, %s68
    %p74 = scmp.eq.s32.totalorder %s15, 0
    %p75 = por %p73, %p74
    %p76 = scmp.ne.s32.totalorder %s65, %s68
    %p77 = scmp.eq.s32.totalorder %s20, 3
    %p78 = por %p76, %p77
    %p79 = scmp.ne.s32.totalorder %s68, %s69
    %p80 = scmp.eq.s32.totalorder %s20, 0
    %p81 = por %p79, %p80
    %p82 = scmp.ne.s32.totalorder %s68, %s69
    %p83 = scmp.eq.s32.totalorder %s21, 3
    %p84 = por %p82, %p83
    %p86 = scmp.ne.s32.totalorder %s69, %s85
    %p87 = scmp.eq.s32.totalorder %s21, 0
    %p88 = por %p86, %p87
    %s89 = ssub.s32 %s22, %s34
    %p90 = scmp.eq.s32.totalorder %s89, 0
    %s92 = sadd.s32 %s91, 1
    %s93 = scalar_select %p90, %s91, %s92
    %p96 = pneg %p90
    %p97 = scmp.eq.s32.totalorder %s15, 3
    %p98 = por %p96, %p97
    %p99 = scmp.ne.s32.totalorder %s91, %s94
    %p100 = scmp.eq.s32.totalorder %s15, 0
    %p101 = por %p99, %p100
    %p102 = scmp.ne.s32.totalorder %s91, %s94
    %p103 = scmp.eq.s32.totalorder %s20, 3
    %p104 = por %p102, %p103
    %p105 = scmp.ne.s32.totalorder %s94, %s95
    %p106 = scmp.eq.s32.totalorder %s20, 0
    %p107 = por %p105, %p106
    %p108 = scmp.ne.s32.totalorder %s94, %s95
    %p109 = scmp.eq.s32.totalorder %s21, 3
    %p110 = por %p108, %p109
    %p112 = scmp.ne.s32.totalorder %s95, %s111
    %p113 = scmp.eq.s32.totalorder %s21, 0
    %p114 = por %p112, %p113
    %s115 = ssub.s32 %s22, %s34
    %s116 = ssub.s32 %s23, %s30
    %s117 = sor.u32 %s115, %s116
    %p118 = scmp.eq.s32.totalorder %s117, 0
    %s120 = sadd.s32 %s119, 1
    %s121 = scalar_select %p118, %s119, %s120
    %p124 = pneg %p118
    %p125 = scmp.eq.s32.totalorder %s15, 3
    %p126 = por %p124, %p125
    %p127 = scmp.ne.s32.totalorder %s119, %s122
    %p128 = scmp.eq.s32.totalorder %s15, 0
    %p129 = por %p127, %p128
    %p130 = scmp.ne.s32.totalorder %s119, %s122
    %p131 = scmp.eq.s32.totalorder %s20, 3
    %p132 = por %p130, %p131
    %p133 = scmp.ne.s32.totalorder %s122, %s123
    %p134 = scmp.eq.s32.totalorder %s20, 0
    %p135 = por %p133, %p134
    %p136 = scmp.ne.s32.totalorder %s122, %s123
    %p137 = scmp.eq.s32.totalorder %s21, 3
    %p138 = por %p136, %p137
    %p140 = scmp.ne.s32.totalorder %s123, %s139
    %p141 = scmp.eq.s32.totalorder %s21, 0
    %p142 = por %p140, %p141
    %s143 = sadd.s32 %s23, 1
    %s144 = smul.u32 %s143, 2
    %s145 = sadd.s32 %s30, 1
    %s146 = smul.u32 %s145, 2
    %s147 = ssub.s32 %s22, %s34
    %s148 = ssub.s32 %s144, %s146
    %s149 = sor.u32 %s147, %s148
    %p150 = scmp.eq.s32.totalorder %s149, 0
    %s152 = sadd.s32 %s151, 1
    %s153 = scalar_select %p150, %s151, %s152
    %p156 = pneg %p150
    %p157 = scmp.eq.s32.totalorder %s15, 3
    %p158 = por %p156, %p157
    %p159 = scmp.ne.s32.totalorder %s151, %s154
    %p160 = scmp.eq.s32.totalorder %s15, 0
    %p161 = por %p159, %p160
    %p162 = scmp.ne.s32.totalorder %s151, %s154
    %p163 = scmp.eq.s32.totalorder %s20, 3
    %p164 = por %p162, %p163
    %p165 = scmp.ne.s32.totalorder %s154, %s155
    %p166 = scmp.eq.s32.totalorder %s20, 0
    %p167 = por %p165, %p166
    %p168 = scmp.ne.s32.totalorder %s154, %s155
    %p169 = scmp.eq.s32.totalorder %s21, 3
    %p170 = por %p168, %p169
    %p172 = scmp.ne.s32.totalorder %s155, %s171
    %p173 = scmp.eq.s32.totalorder %s21, 0
    %p174 = por %p172, %p173
    %s176 = sadd.s32 %s175, 1
    %p179 = scmp.eq.s32.totalorder %s15, 3
    %p180 = scmp.ne.s32.totalorder %s175, %s177
    %p181 = scmp.eq.s32.totalorder %s15, 0
    %p182 = por %p180, %p181
    %p183 = scmp.ne.s32.totalorder %s175, %s177
    %p184 = scmp.eq.s32.totalorder %s20, 3
    %p185 = por %p183, %p184
    %p186 = scmp.ne.s32.totalorder %s177, %s178
    %p187 = scmp.eq.s32.totalorder %s20, 0
    %p188 = por %p186, %p187
    %p189 = scmp.ne.s32.totalorder %s177, %s178
    %p190 = scmp.eq.s32.totalorder %s21, 3
    %p191 = por %p189, %p190
    %p193 = scmp.ne.s32.totalorder %s178, %s192
    %p194 = scmp.eq.s32.totalorder %s21, 0
    %p195 = por %p193, %p194
    %s197 = sadd.s32 %s196, 1
    %p200 = scmp.eq.s32.totalorder %s15, 3
    %p201 = scmp.ne.s32.totalorder %s196, %s198
    %p202 = scmp.eq.s32.totalorder %s15, 0
    %p203 = por %p201, %p202
    %p204 = scmp.ne.s32.totalorder %s196, %s198
    %p205 = scmp.eq.s32.totalorder %s20, 3
    %p206 = por %p204, %p205
    %p207 = scmp.ne.s32.totalorder %s198, %s199
    %p208 = scmp.eq.s32.totalorder %s20, 0
    %p209 = por %p207, %p208
    %p210 = scmp.ne.s32.totalorder %s198, %s199
    %p211 = scmp.eq.s32.totalorder %s21, 3
    %p212 = por %p210, %p211
    %p214 = scmp.ne.s32.totalorder %s199, %s213
    %p215 = scmp.eq.s32.totalorder %s21, 0
    %p216 = por %p214, %p215
    %s218 = sadd.s32 %s217, 1
    %p221 = scmp.eq.s32.totalorder %s15, 3
    %p222 = scmp.ne.s32.totalorder %s217, %s219
    %p223 = scmp.eq.s32.totalorder %s15, 0
    %p224 = por %p222, %p223
    %p225 = scmp.ne.s32.totalorder %s217, %s219
    %p226 = scmp.eq.s32.totalorder %s20, 3
    %p227 = por %p225, %p226
    %p228 = scmp.ne.s32.totalorder %s219, %s220
    %p229 = scmp.eq.s32.totalorder %s20, 0
    %p230 = por %p228, %p229
    %p231 = scmp.ne.s32.totalorder %s219, %s220
    %p232 = scmp.eq.s32.totalorder %s21, 3
    %p233 = por %p231, %p232
    %p235 = scmp.ne.s32.totalorder %s220, %s234
    %p236 = scmp.eq.s32.totalorder %s21, 0
    %p237 = por %p235, %p236
    %s239 = sadd.s32 %s238, 1
    %p242 = scmp.eq.s32.totalorder %s15, 3
    %p243 = scmp.ne.s32.totalorder %s238, %s240
    %p244 = scmp.eq.s32.totalorder %s15, 0
    %p245 = por %p243, %p244
    %p246 = scmp.ne.s32.totalorder %s238, %s240
    %p247 = scmp.eq.s32.totalorder %s20, 3
    %p248 = por %p246, %p247
    %p249 = scmp.ne.s32.totalorder %s240, %s241
    %p250 = scmp.eq.s32.totalorder %s20, 0
    %p251 = por %p249, %p250
    %p252 = scmp.ne.s32.totalorder %s240, %s241
    %p253 = scmp.eq.s32.totalorder %s21, 3
    %p254 = por %p252, %p253
    %p256 = scmp.ne.s32.totalorder %s241, %s255
    %p257 = scmp.eq.s32.totalorder %s21, 0
    %p258 = por %p256, %p257
    %s259 = ssub.s32 %s22, %s34
    %s260 = ssub.s32 %s23, %s30
    %s261 = sor.u32 %s259, %s260
    %p262 = scmp.eq.s32.totalorder %s261, 0
    %s264 = sadd.s32 %s263, 1
    %s265 = scalar_select %p262, %s263, %s264
    %p268 = pneg %p262
    %p269 = scmp.eq.s32.totalorder %s15, 3
    %p270 = por %p268, %p269
    %p271 = scmp.ne.s32.totalorder %s263, %s266
    %p272 = scmp.eq.s32.totalorder %s15, 0
    %p273 = por %p271, %p272
    %p274 = scmp.ne.s32.totalorder %s263, %s266
    %p275 = scmp.eq.s32.totalorder %s20, 3
    %p276 = por %p274, %p275
    %p277 = scmp.ne.s32.totalorder %s266, %s267
    %p278 = scmp.eq.s32.totalorder %s20, 0
    %p279 = por %p277, %p278
    %p280 = scmp.ne.s32.totalorder %s266, %s267
    %p281 = scmp.eq.s32.totalorder %s21, 3
    %p282 = por %p280, %p281
    %p284 = scmp.ne.s32.totalorder %s267, %s283
    %p285 = scmp.eq.s32.totalorder %s21, 0
    %p286 = por %p284, %p285
    %p287 = scmp.le.s32.totalorder 1, %s15
    %p288 = scmp.lt.s32.totalorder %s15, 5
    %p289 = pnand %p287, %p288
    %p290 = pneg %p289
    // Predicated region
    $region9: #{spade_forward.1} parent=5 // pred_check
      _
    $region10: #{spade_forward.1} parent=5 // pred_check_branch
      %292 = sbr.rel (%p289) target = $region12
    $region11: #{spade_forward.1} parent=5 // pred_region
      %s293 = ssub.s32 %s15, 1
      // Predicated region
      $region13: #{spade_forward.1} parent=11 // pred_check
        %p294 = pneg %p188
      $region14: #{spade_forward.1} parent=11 // pred_check_branch
        %296 = sbr.rel (%p294) target = $region16
      $region15: #{spade_forward.1} parent=11 // pred_region
        _
      $region16: #{spade_forward.1} parent=11 // pred_fallthru
        _
      // Predicated region
      $region17: #{spade_forward.1} parent=11 // pred_check
        %p297 = pneg %p209
      $region18: #{spade_forward.1} parent=11 // pred_check_branch
        %299 = sbr.rel (%p297) target = $region20
      $region19: #{spade_forward.1} parent=11 // pred_region
        _
      $region20: #{spade_forward.1} parent=11 // pred_fallthru
        _
      // Predicated region
      $region21: #{spade_forward.1} parent=11 // pred_check
        %p300 = pneg %p230
      $region22: #{spade_forward.1} parent=11 // pred_check_branch
        %302 = sbr.rel (%p300) target = $region24
      $region23: #{spade_forward.1} parent=11 // pred_region
        _
      $region24: #{spade_forward.1} parent=11 // pred_fallthru
        _
      // Predicated region
      $region25: #{spade_forward.1} parent=11 // pred_check
        %p303 = pneg %p251
      $region26: #{spade_forward.1} parent=11 // pred_check_branch
        %305 = sbr.rel (%p303) target = $region28
      $region27: #{spade_forward.1} parent=11 // pred_region
        _
      $region28: #{spade_forward.1} parent=11 // pred_fallthru
        _
    $region12: #{spade_forward.1} parent=5 // pred_fallthru
      _
    %p306 = scmp.lt.s32.totalorder %s15, 4
    // Predicated region
    $region29: #{spade_forward.1} parent=5 // pred_check
      %p307 = pneg %p306
    $region30: #{spade_forward.1} parent=5 // pred_check_branch
      %309 = sbr.rel (%p307) target = $region32
    $region31: #{spade_forward.1} parent=5 // pred_region
      // Predicated region
      $region33: #{spade_forward.1} parent=31 // pred_check
        %p310 = pneg %p49
      $region34: #{spade_forward.1} parent=31 // pred_check_branch
        %312 = sbr.rel (%p310) target = $region36
      $region35: #{spade_forward.1} parent=31 // pred_region
        %p313 = scmp.lt.s32.totalorder %s22, 1
        %s314 = scalar_select %p313, %s22, 1
        %p315 = scmp.lt.s32.totalorder %s23, 1
        %s316 = scalar_select %p315, %s23, 1
        %s317 = smul.addr %s314, 2
        %s318 = sadd.s32 %s316, %s317
        %s319 = smul.addr %s318, 4
        %s320 = scalar_lea.vmem %s0, %s319
      $region36: #{spade_forward.1} parent=31 // pred_fallthru
        _
      // Predicated region
      $region37: #{spade_forward.1} parent=31 // pred_check
        %p321 = pneg %p75
      $region38: #{spade_forward.1} parent=31 // pred_check_branch
        %323 = sbr.rel (%p321) target = $region40
      $region39: #{spade_forward.1} parent=31 // pred_region
        %p324 = scmp.lt.s32.totalorder %s22, 1
        %s325 = scalar_select %p324, %s22, 1
        %s326 = smul.addr %s325, 4
        %s327 = scalar_lea.vmem %s1, %s326
      $region40: #{spade_forward.1} parent=31 // pred_fallthru
        _
      // Predicated region
      $region41: #{spade_forward.1} parent=31 // pred_check
        %p328 = pneg %p101
      $region42: #{spade_forward.1} parent=31 // pred_check_branch
        %330 = sbr.rel (%p328) target = $region44
      $region43: #{spade_forward.1} parent=31 // pred_region
        %p331 = scmp.lt.s32.totalorder %s22, 1
        %s332 = scalar_select %p331, %s22, 1
        %s333 = smul.addr %s332, 4
        %s334 = scalar_lea.vmem %s2, %s333
      $region44: #{spade_forward.1} parent=31 // pred_fallthru
        _
      // Predicated region
      $region45: #{spade_forward.1} parent=31 // pred_check
        %p335 = pneg %p129
      $region46: #{spade_forward.1} parent=31 // pred_check_branch
        %337 = sbr.rel (%p335) target = $region48
      $region47: #{spade_forward.1} parent=31 // pred_region
        %s338 = smul.u32 8, %s23
        %s339 = ssub.s32 20, %s338
        %p340 = scmp.lt.s32.totalorder %s339, 8
        %s341 = scalar_select %p340, %s339, 8
        %s342 = smul.u32 64, %s341
        %s343 = smul.u32 %s342, 3
        %p344 = scmp.lt.s32.totalorder %s22, 1
        %s345 = scalar_select %p344, %s22, 1
        %p346 = scmp.lt.s32.totalorder %s338, 19
        %s347 = scalar_select %p346, %s338, 19
        %s348 = smul.addr %s347, 3
        %s349 = smul.addr %s345, 60
        %s350 = sadd.s32 %s348, %s349
        %s351 = smul.addr %s350, 4
        %s352 = scalar_lea.vmem %s3, %s351
        %s353 = smul.u32 8, %s23
        %s354 = ssub.s32 20, %s353
        %p355 = scmp.lt.s32.totalorder %s354, 8
        %s356 = scalar_select %p355, %s354, 8
        %s357 = smul.u32 64, %s356
        %s358 = smul.u32 %s357, 3
      $region48: #{spade_forward.1} parent=31 // pred_fallthru
        _
      // Predicated region
      $region49: #{spade_forward.1} parent=31 // pred_check
        %p359 = pneg %p161
      $region50: #{spade_forward.1} parent=31 // pred_check_branch
        %361 = sbr.rel (%p359) target = $region52
      $region51: #{spade_forward.1} parent=31 // pred_region
        %s362 = sadd.s32 %s23, 1
        %s363 = smul.u32 %s362, 2
        %s364 = smul.u32 4, %s363
        %p365 = scmp.lt.s32.totalorder %s22, 1
        %s366 = scalar_select %p365, %s22, 1
        %p367 = scmp.lt.s32.totalorder %s364, 19
        %s368 = scalar_select %p367, %s364, 19
        %s369 = smul.addr %s368, 3
        %s370 = smul.addr %s366, 60
        %s371 = sadd.s32 %s369, %s370
        %s372 = smul.addr %s371, 4
        %s373 = scalar_lea.vmem %s4, %s372
        %s374 = sadd.s32 %s23, 1
        %s375 = smul.u32 %s374, 2
        %s376 = smul.u32 4, %s375
      $region52: #{spade_forward.1} parent=31 // pred_fallthru
        _
    $region32: #{spade_forward.1} parent=5 // pred_fallthru
      _
    %p377 = scmp.le.s32.totalorder 1, %s15
    %p378 = scmp.lt.s32.totalorder %s15, 5
    %p379 = pnand %p377, %p378
    %p380 = pneg %p379
    // Predicated region
    $region53: #{spade_forward.1} parent=5 // pred_check
      _
    $region54: #{spade_forward.1} parent=5 // pred_check_branch
      %382 = sbr.rel (%p379) target = $region56
    $region55: #{spade_forward.1} parent=5 // pred_region
      %s383 = ssub.s32 %s15, 1
      %p384 = scmp.lt.s32.totalorder %s24, 1
      %s385 = scalar_select %p384, %s24, 1
      %p386 = scmp.lt.s32.totalorder %s25, 1
      %s387 = scalar_select %p386, %s25, 1
      %s388 = smul.addr %s385, 2
      %s389 = sadd.s32 %s387, %s388
      %s390 = smul.addr %s389, 4
      %s391 = scalar_lea.vmem %s0, %s390
      %p392 = pneg %p55
      %p393 = pneg %p52
      %p394 = scmp.lt.s32.totalorder %s24, 1
      %s395 = scalar_select %p394, %s24, 1
      %s396 = smul.addr %s395, 4
      %s397 = scalar_lea.vmem %s1, %s396
      %p398 = pneg %p81
      %p399 = pneg %p78
      %p400 = scmp.lt.s32.totalorder %s24, 1
      %s401 = scalar_select %p400, %s24, 1
      %s402 = smul.addr %s401, 4
      %s403 = scalar_lea.vmem %s2, %s402
      %p404 = pneg %p107
      %p405 = pneg %p104
      %s406 = smul.u32 8, %s25
      %s407 = ssub.s32 20, %s406
      %p408 = scmp.lt.s32.totalorder %s407, 8
      %s409 = scalar_select %p408, %s407, 8
      %s410 = smul.u32 64, %s409
      %s411 = smul.u32 %s410, 3
      %p412 = scmp.lt.s32.totalorder %s24, 1
      %s413 = scalar_select %p412, %s24, 1
      %p414 = scmp.lt.s32.totalorder %s406, 19
      %s415 = scalar_select %p414, %s406, 19
      %s416 = smul.addr %s415, 3
      %s417 = smul.addr %s413, 60
      %s418 = sadd.s32 %s416, %s417
      %s419 = smul.addr %s418, 4
      %s420 = scalar_lea.vmem %s3, %s419
      %p421 = pneg %p135
      %p422 = pneg %p132
      %s423 = sadd.s32 %s25, 1
      %s424 = smul.u32 %s423, 2
      %s425 = smul.u32 4, %s424
      %p426 = scmp.lt.s32.totalorder %s24, 1
      %s427 = scalar_select %p426, %s24, 1
      %p428 = scmp.lt.s32.totalorder %s425, 19
      %s429 = scalar_select %p428, %s425, 19
      %s430 = smul.addr %s429, 3
      %s431 = smul.addr %s427, 60
      %s432 = sadd.s32 %s430, %s431
      %s433 = smul.addr %s432, 4
      %s434 = scalar_lea.vmem %s4, %s433
      %p435 = pneg %p167
      %p436 = pneg %p164
      %p437 = pneg %p188
      %p438 = pneg %p185
      %p439 = pneg %p209
      %p440 = pneg %p206
      %p441 = pneg %p230
      %p442 = pneg %p227
      %p443 = pneg %p251
      %p444 = pneg %p248
      %p445 = pneg %p279
      %p446 = pneg %p276
      %p447 = scmp.lt.s32.totalorder %s24, 1
      %s448 = scalar_select %p447, %s24, 1
      %p449 = scmp.lt.s32.totalorder %s25, 1
      %s450 = scalar_select %p449, %s25, 1
      %s451 = smul.addr %s448, 2
      %s452 = sadd.s32 %s450, %s451
      %s453 = smul.addr %s452, 4
      %s454 = scalar_lea.vmem %s9, %s453
      %p455 = scmp.lt.s32.totalorder %s24, 1
      %s456 = scalar_select %p455, %s24, 1
      %p457 = scmp.lt.s32.totalorder %s25, 1
      %s458 = scalar_select %p457, %s25, 1
      %s459 = smul.addr %s456, 2
      %s460 = sadd.s32 %s458, %s459
      %s461 = smul.addr %s460, 4
      %s462 = scalar_lea.vmem %s0, %s461
      %p463 = scmp.lt.s32.totalorder %s24, 1
      %s464 = scalar_select %p463, %s24, 1
      %s465 = smul.addr %s464, 4
      %s466 = scalar_lea.vmem %s1, %s465
      %p467 = scmp.lt.s32.totalorder %s24, 1
      %s468 = scalar_select %p467, %s24, 1
      %s469 = smul.addr %s468, 4
      %s470 = scalar_lea.vmem %s2, %s469
      %s471 = smul.u32 8, %s25
      %s472 = ssub.s32 20, %s471
      %p473 = scmp.lt.s32.totalorder %s472, 8
      %s474 = scalar_select %p473, %s472, 8
      %s475 = smul.u32 64, %s474
      %s476 = smul.u32 %s475, 3
      %p477 = scmp.lt.s32.totalorder %s24, 1
      %s478 = scalar_select %p477, %s24, 1
      %p479 = scmp.lt.s32.totalorder %s471, 19
      %s480 = scalar_select %p479, %s471, 19
      %s481 = smul.addr %s480, 3
      %s482 = smul.addr %s478, 60
      %s483 = sadd.s32 %s481, %s482
      %s484 = smul.addr %s483, 4
      %s485 = scalar_lea.vmem %s3, %s484
      %s486 = smul.u32 8, %s25
      %s487 = ssub.s32 20, %s486
      %p488 = scmp.lt.s32.totalorder %s487, 8
      %s489 = scalar_select %p488, %s487, 8
      %s490 = smul.u32 64, %s489
      %s491 = smul.u32 %s490, 3
      %s492 = sadd.s32 %s25, 1
      %s493 = smul.u32 %s492, 2
      %s494 = smul.u32 4, %s493
      %p495 = scmp.lt.s32.totalorder %s24, 1
      %s496 = scalar_select %p495, %s24, 1
      %p497 = scmp.lt.s32.totalorder %s494, 19
      %s498 = scalar_select %p497, %s494, 19
      %s499 = smul.addr %s498, 3
      %s500 = smul.addr %s496, 60
      %s501 = sadd.s32 %s499, %s500
      %s502 = smul.addr %s501, 4
      %s503 = scalar_lea.vmem %s4, %s502
      %s504 = sadd.s32 %s25, 1
      %s505 = smul.u32 %s504, 2
      %s506 = smul.u32 4, %s505
      %p507 = scmp.lt.s32.totalorder %s24, 1
      %s508 = scalar_select %p507, %s24, 1
      %p509 = scmp.lt.s32.totalorder %s25, 1
      %s510 = scalar_select %p509, %s25, 1
      %s511 = smul.addr %s508, 2
      %s512 = sadd.s32 %s510, %s511
      %s513 = smul.addr %s512, 4
      %s514 = scalar_lea.vmem %s9, %s513
      %v516 = vld [vmem:[%s485] sm:$0xf]
      %v517 = vld [vmem:[%s485 + $0x4] sm:$0xf]
      %v518 = vld [vmem:[%s485 + $0x8] sm:$0x1]
      %v519 = vld [vmem:[%s485 + $0xc] sm:$0xf]
      %v520 = vld [vmem:[%s485 + $0x10] sm:$0xf]
      %v521 = vld [vmem:[%s485 + $0x14] sm:$0x1]
      %v522 = vld [vmem:[%s485 + $0x18] sm:$0xf]
      %v523 = vld [vmem:[%s485 + $0x1c] sm:$0xf]
      %v524 = vld [vmem:[%s485 + $0x20] sm:$0x1]
      %v525 = vld [vmem:[%s485 + $0x24] sm:$0xf]
      %v526 = vld [vmem:[%s485 + $0x28] sm:$0xf]
      %v527 = vld [vmem:[%s485 + $0x2c] sm:$0x1]
      %v528 = vld [vmem:[%s485 + $0x30] sm:$0xf]
      %v529 = vld [vmem:[%s485 + $0x34] sm:$0xf]
      %v530 = vld [vmem:[%s485 + $0x38] sm:$0x1]
      %v531 = vld [vmem:[%s485 + $0x3c] sm:$0xf]
      %v532 = vld [vmem:[%s485 + $0x40] sm:$0xf]
      %v533 = vld [vmem:[%s485 + $0x44] sm:$0x1]
      %v534 = vld [vmem:[%s485 + $0x48] sm:$0xf]
      %v535 = vld [vmem:[%s485 + $0x4c] sm:$0xf]
      %v536 = vld [vmem:[%s485 + $0x50] sm:$0x1]
      %v537 = vld [vmem:[%s485 + $0x54] sm:$0xf]
      %v538 = vld [vmem:[%s485 + $0x58] sm:$0xf]
      %v539 = vld [vmem:[%s485 + $0x5c] sm:$0x1]
      %vm540 = vcmask 19456
      %541 = vst.msk [vmem:[#allocation2] sm:$0xf] %vm540, %v516
      %542 = vst.msk [vmem:[#allocation2 + $0x4] sm:$0xf] %vm540, %v517
      %vm543 = vcmask 16384
      %544 = vst.msk [vmem:[#allocation2 + $0x8] sm:$0x1] %vm543, %v518
      %545 = vst.msk [vmem:[#allocation2 + $0xc] sm:$0xf] %vm540, %v519
      %546 = vst.msk [vmem:[#allocation2 + $0x10] sm:$0xf] %vm540, %v520
      %547 = vst.msk [vmem:[#allocation2 + $0x14] sm:$0x1] %vm543, %v521
      %548 = vst.msk [vmem:[#allocation2 + $0x18] sm:$0xf] %vm540, %v522
      %549 = vst.msk [vmem:[#allocation2 + $0x1c] sm:$0xf] %vm540, %v523
      %550 = vst.msk [vmem:[#allocation2 + $0x20] sm:$0x1] %vm543, %v524
      %551 = vst.msk [vmem:[#allocation2 + $0x24] sm:$0xf] %vm540, %v525
      %552 = vst.msk [vmem:[#allocation2 + $0x28] sm:$0xf] %vm540, %v526
      %553 = vst.msk [vmem:[#allocation2 + $0x2c] sm:$0x1] %vm543, %v527
      %554 = vst.msk [vmem:[#allocation2 + $0x30] sm:$0xf] %vm540, %v528
      %555 = vst.msk [vmem:[#allocation2 + $0x34] sm:$0xf] %vm540, %v529
      %556 = vst.msk [vmem:[#allocation2 + $0x38] sm:$0x1] %vm543, %v530
      %557 = vst.msk [vmem:[#allocation2 + $0x3c] sm:$0xf] %vm540, %v531
      %558 = vst.msk [vmem:[#allocation2 + $0x40] sm:$0xf] %vm540, %v532
      %559 = vst.msk [vmem:[#allocation2 + $0x44] sm:$0x1] %vm543, %v533
      %560 = vst.msk [vmem:[#allocation2 + $0x48] sm:$0xf] %vm540, %v534
      %561 = vst.msk [vmem:[#allocation2 + $0x4c] sm:$0xf] %vm540, %v535
      %562 = vst.msk [vmem:[#allocation2 + $0x50] sm:$0x1] %vm543, %v536
      %563 = vst.msk [vmem:[#allocation2 + $0x54] sm:$0xf] %vm540, %v537
      %564 = vst.msk [vmem:[#allocation2 + $0x58] sm:$0xf] %vm540, %v538
      %565 = vst.msk [vmem:[#allocation2 + $0x5c] sm:$0x1] %vm543, %v539
      %v566 = vld [vmem:[%s503] sm:$0xf]
      %v567 = vld [vmem:[%s503 + $0x4] sm:$0xf]
      %v568 = vld [vmem:[%s503 + $0x8] sm:$0x1]
      %v569 = vld [vmem:[%s503 + $0xc] sm:$0xf]
      %v570 = vld [vmem:[%s503 + $0x10] sm:$0xf]
      %v571 = vld [vmem:[%s503 + $0x14] sm:$0x1]
      %v572 = vld [vmem:[%s503 + $0x18] sm:$0xf]
      %v573 = vld [vmem:[%s503 + $0x1c] sm:$0xf]
      %v574 = vld [vmem:[%s503 + $0x20] sm:$0x1]
      %v575 = vld [vmem:[%s503 + $0x24] sm:$0xf]
      %v576 = vld [vmem:[%s503 + $0x28] sm:$0xf]
      %v577 = vld [vmem:[%s503 + $0x2c] sm:$0x1]
      %s578 = scalar_lea.vmem [#allocation2], 96
      %579 = vst.msk [vmem:[%s578] sm:$0xf] %vm540, %v566
      %580 = vst.msk [vmem:[%s578 + $0x4] sm:$0xf] %vm540, %v567
      %581 = vst.msk [vmem:[%s578 + $0x8] sm:$0x1] %vm543, %v568
      %582 = vst.msk [vmem:[%s578 + $0xc] sm:$0xf] %vm540, %v569
      %583 = vst.msk [vmem:[%s578 + $0x10] sm:$0xf] %vm540, %v570
      %584 = vst.msk [vmem:[%s578 + $0x14] sm:$0x1] %vm543, %v571
      %585 = vst.msk [vmem:[%s578 + $0x18] sm:$0xf] %vm540, %v572
      %586 = vst.msk [vmem:[%s578 + $0x1c] sm:$0xf] %vm540, %v573
      %587 = vst.msk [vmem:[%s578 + $0x20] sm:$0x1] %vm543, %v574
      %588 = vst.msk [vmem:[%s578 + $0x24] sm:$0xf] %vm540, %v575
      %589 = vst.msk [vmem:[%s578 + $0x28] sm:$0xf] %vm540, %v576
      %590 = vst.msk [vmem:[%s578 + $0x2c] sm:$0x1] %vm543, %v577
      %v591 = vld [vmem:[#allocation2] sm:$0xf]
      %v592 = vld [vmem:[#allocation2 + $0x4] sm:$0xf]
      %v593 = vld [vmem:[#allocation2 + $0xc] sm:$0xf]
      %v594 = vld [vmem:[#allocation2 + $0x10] sm:$0xf]
      %v595 = vld [vmem:[#allocation2 + $0x18] sm:$0xf]
      %v596 = vld [vmem:[#allocation2 + $0x1c] sm:$0xf]
      %v597 = vld [vmem:[#allocation2 + $0x24] sm:$0xf]
      %v598 = vld [vmem:[#allocation2 + $0x28] sm:$0xf]
      %v599 = vld [vmem:[#allocation2 + $0x30] sm:$0xf]
      %v600 = vld [vmem:[#allocation2 + $0x34] sm:$0xf]
      %v601 = vld [vmem:[#allocation2 + $0x3c] sm:$0xf]
      %v602 = vld [vmem:[#allocation2 + $0x40] sm:$0xf]
      %v603 = vld [vmem:[#allocation2 + $0x48] sm:$0xf]
      %v604 = vld [vmem:[#allocation2 + $0x4c] sm:$0xf]
      %v605 = vld [vmem:[#allocation2 + $0x54] sm:$0xf]
      %v606 = vld [vmem:[#allocation2 + $0x58] sm:$0xf]
      %v607 = vld [vmem:[#allocation2 + $0x60] sm:$0xf]
      %v608 = vld [vmem:[#allocation2 + $0x64] sm:$0xf]
      %v609 = vld [vmem:[#allocation2 + $0x6c] sm:$0xf]
      %v610 = vld [vmem:[#allocation2 + $0x70] sm:$0xf]
      %v611 = vld [vmem:[%s5] sm:$0x3]
      %v612 = vld [vmem:[#allocation2 + $0x8] sm:$0x1]
      %v613 = vld [vmem:[#allocation2 + $0x14] sm:$0x1]
      %v614 = vld [vmem:[#allocation2 + $0x20] sm:$0x1]
      %v615 = vld [vmem:[#allocation2 + $0x2c] sm:$0x1]
      %v616 = vld [vmem:[#allocation2 + $0x38] sm:$0x1]
      %v617 = vld [vmem:[#allocation2 + $0x44] sm:$0x1]
      %v618 = vld [vmem:[#allocation2 + $0x50] sm:$0x1]
      %v619 = vld [vmem:[#allocation2 + $0x5c] sm:$0x1]
      %v620 = vld [vmem:[#allocation2 + $0x68] sm:$0x1]
      %v621 = vld [vmem:[#allocation2 + $0x74] sm:$0x1]
      %vm622 = vsmask.f32 3328
      %vm623 = vsmask.f32 7440
      %vm624 = vmor %vm622, %vm623
      %v626 = vshrl.u32 %v591, 16
      %v628 = vrot.slane %v626, 4
      %v629 = vshll.u32 %v591, 16
      %v631 = vrot.slane %v629, 5
      %v632 = vor.u32 %v628, %v631
      %v633 = vrot.slane %v632, 4
      %v635 = vshll.u32 %v592, 16
      %v637 = vrot.slane %v635, 5
      %v638 = vsel %vm624, %v633, %v637
      %v639 = vshrl.u32 %v592, 16
      %v641 = vrot.slane %v639, 4
      %v642 = vor.u32 %v641, %v637
      %v643 = vrot.slane %v642, 4
      %v645 = vshll.u32 %v612, 16
      %v647 = vrot.slane %v645, 5
      %v648 = vsel %vm624, %v643, %v647
      %v650 = vshrl.u32 %v593, 16
      %v652 = vrot.slane %v650, 4
      %v653 = vshll.u32 %v593, 16
      %v655 = vrot.slane %v653, 5
      %v656 = vor.u32 %v652, %v655
      %v657 = vrot.slane %v656, 4
      %v659 = vshll.u32 %v594, 16
      %v661 = vrot.slane %v659, 5
      %v662 = vsel %vm624, %v657, %v661
      %v663 = vshrl.u32 %v594, 16
      %v665 = vrot.slane %v663, 4
      %v666 = vor.u32 %v665, %v661
      %v667 = vrot.slane %v666, 4
      %v669 = vshll.u32 %v613, 16
      %v671 = vrot.slane %v669, 5
      %v672 = vsel %vm624, %v667, %v671
      %v674 = vshrl.u32 %v595, 16
      %v676 = vrot.slane %v674, 4
      %v677 = vshll.u32 %v595, 16
      %v679 = vrot.slane %v677, 5
      %v680 = vor.u32 %v676, %v679
      %v681 = vrot.slane %v680, 4
      %v683 = vshll.u32 %v596, 16
      %v685 = vrot.slane %v683, 5
      %v686 = vsel %vm624, %v681, %v685
      %v687 = vshrl.u32 %v596, 16
      %v689 = vrot.slane %v687, 4
      %v690 = vor.u32 %v689, %v685
      %v691 = vrot.slane %v690, 4
      %v693 = vshll.u32 %v614, 16
      %v695 = vrot.slane %v693, 5
      %v696 = vsel %vm624, %v691, %v695
      %v698 = vshrl.u32 %v597, 16
      %v700 = vrot.slane %v698, 4
      %v701 = vshll.u32 %v597, 16
      %v703 = vrot.slane %v701, 5
      %v704 = vor.u32 %v700, %v703
      %v705 = vrot.slane %v704, 4
      %v707 = vshll.u32 %v598, 16
      %v709 = vrot.slane %v707, 5
      %v710 = vsel %vm624, %v705, %v709
      %v711 = vshrl.u32 %v598, 16
      %v713 = vrot.slane %v711, 4
      %v714 = vor.u32 %v713, %v709
      %v715 = vrot.slane %v714, 4
      %v717 = vshll.u32 %v615, 16
      %v719 = vrot.slane %v717, 5
      %v720 = vsel %vm624, %v715, %v719
      %v722 = vshrl.u32 %v599, 16
      %v724 = vrot.slane %v722, 4
      %v725 = vshll.u32 %v599, 16
      %v727 = vrot.slane %v725, 5
      %v728 = vor.u32 %v724, %v727
      %v729 = vrot.slane %v728, 4
      %v731 = vshll.u32 %v600, 16
      %v733 = vrot.slane %v731, 5
      %v734 = vsel %vm624, %v729, %v733
      %v735 = vshrl.u32 %v600, 16
      %v737 = vrot.slane %v735, 4
      %v738 = vor.u32 %v737, %v733
      %v739 = vrot.slane %v738, 4
      %v741 = vshll.u32 %v616, 16
      %v743 = vrot.slane %v741, 5
      %v744 = vsel %vm624, %v739, %v743
      %v746 = vshrl.u32 %v601, 16
      %v748 = vrot.slane %v746, 4
      %v749 = vshll.u32 %v601, 16
      %v751 = vrot.slane %v749, 5
      %v752 = vor.u32 %v748, %v751
      %v753 = vrot.slane %v752, 4
      %v755 = vshll.u32 %v602, 16
      %v757 = vrot.slane %v755, 5
      %v758 = vsel %vm624, %v753, %v757
      %v759 = vshrl.u32 %v602, 16
      %v761 = vrot.slane %v759, 4
      %v762 = vor.u32 %v761, %v757
      %v763 = vrot.slane %v762, 4
      %v765 = vshll.u32 %v617, 16
      %v767 = vrot.slane %v765, 5
      %v768 = vsel %vm624, %v763, %v767
      %v770 = vshrl.u32 %v603, 16
      %v772 = vrot.slane %v770, 4
      %v773 = vshll.u32 %v603, 16
      %v775 = vrot.slane %v773, 5
      %v776 = vor.u32 %v772, %v775
      %v777 = vrot.slane %v776, 4
      %v779 = vshll.u32 %v604, 16
      %v781 = vrot.slane %v779, 5
      %v782 = vsel %vm624, %v777, %v781
      %v783 = vshrl.u32 %v604, 16
      %v785 = vrot.slane %v783, 4
      %v786 = vor.u32 %v785, %v781
      %v787 = vrot.slane %v786, 4
      %v789 = vshll.u32 %v618, 16
      %v791 = vrot.slane %v789, 5
      %v792 = vsel %vm624, %v787, %v791
      %v794 = vshrl.u32 %v605, 16
      %v796 = vrot.slane %v794, 4
      %v797 = vshll.u32 %v605, 16
      %v799 = vrot.slane %v797, 5
      %v800 = vor.u32 %v796, %v799
      %v801 = vrot.slane %v800, 4
      %v803 = vshll.u32 %v606, 16
      %v805 = vrot.slane %v803, 5
      %v806 = vsel %vm624, %v801, %v805
      %v807 = vshrl.u32 %v606, 16
      %v809 = vrot.slane %v807, 4
      %v810 = vor.u32 %v809, %v805
      %v811 = vrot.slane %v810, 4
      %v813 = vshll.u32 %v619, 16
      %v815 = vrot.slane %v813, 5
      %v816 = vsel %vm624, %v811, %v815
      %v818 = vshrl.u32 %v607, 16
      %v820 = vrot.slane %v818, 4
      %v821 = vshll.u32 %v607, 16
      %v823 = vrot.slane %v821, 5
      %v824 = vor.u32 %v820, %v823
      %v825 = vrot.slane %v824, 4
      %v827 = vshll.u32 %v608, 16
      %v829 = vrot.slane %v827, 5
      %v830 = vsel %vm624, %v825, %v829
      %v831 = vshrl.u32 %v608, 16
      %v833 = vrot.slane %v831, 4
      %v834 = vor.u32 %v833, %v829
      %v835 = vrot.slane %v834, 4
      %v837 = vshll.u32 %v620, 16
      %v839 = vrot.slane %v837, 5
      %v840 = vsel %vm624, %v835, %v839
      %v842 = vshrl.u32 %v609, 16
      %v844 = vrot.slane %v842, 4
      %v845 = vshll.u32 %v609, 16
      %v847 = vrot.slane %v845, 5
      %v848 = vor.u32 %v844, %v847
      %v849 = vrot.slane %v848, 4
      %v851 = vshll.u32 %v610, 16
      %v853 = vrot.slane %v851, 5
      %v854 = vsel %vm624, %v849, %v853
      %v855 = vshrl.u32 %v610, 16
      %v857 = vrot.slane %v855, 4
      %v858 = vor.u32 %v857, %v853
      %v859 = vrot.slane %v858, 4
      %v861 = vshll.u32 %v621, 16
      %v863 = vrot.slane %v861, 5
      %v864 = vsel %vm624, %v859, %v863
      %s865 = scalar_lea.vmem %s5, 2
      %v866 = vld [vmem:[%s865] sm:$0x3]
      %v867 = vunpack.c.l.b16 %v638
      %v868 = vunpack.c.l.b16 %v648
      %v869 = vunpack.c.l.b16 %v662
      %v870 = vunpack.c.l.b16 %v672
      %v871 = vunpack.c.l.b16 %v686
      %v872 = vunpack.c.l.b16 %v696
      %v873 = vunpack.c.l.b16 %v710
      %v874 = vunpack.c.l.b16 %v720
      %v875 = vunpack.c.l.b16 %v734
      %v876 = vunpack.c.l.b16 %v744
      %v877 = vunpack.c.l.b16 %v758
      %v878 = vunpack.c.l.b16 %v768
      %v879 = vunpack.c.l.b16 %v782
      %v880 = vunpack.c.l.b16 %v792
      %v881 = vunpack.c.l.b16 %v806
      %v882 = vunpack.c.l.b16 %v816
      %v883 = vunpack.c.l.b16 %v830
      %v884 = vunpack.c.l.b16 %v840
      %v885 = vunpack.c.l.b16 %v854
      %v886 = vunpack.c.l.b16 %v864
      %v887 = vpack.c.b16 %v868, %v867
      %v888 = vpack.c.b16 %v870, %v869
      %v889 = vpack.c.b16 %v872, %v871
      %v890 = vpack.c.b16 %v874, %v873
      %v891 = vpack.c.b16 %v876, %v875
      %v892 = vpack.c.b16 %v878, %v877
      %v893 = vpack.c.b16 %v880, %v879
      %v894 = vpack.c.b16 %v882, %v881
      %v895 = vpack.c.b16 %v884, %v883
      %v896 = vpack.c.b16 %v886, %v885
      %vm897 = vcmask 23552
      %v899 = vsel %vm897, %v887, 0
      %v902 = vsel %vm897, %v888, 0
      %v905 = vsel %vm897, %v889, 0
      %v908 = vsel %vm897, %v890, 0
      %v911 = vsel %vm897, %v891, 0
      %v914 = vsel %vm897, %v892, 0
      %v917 = vsel %vm897, %v893, 0
      %v920 = vsel %vm897, %v894, 0
      %v923 = vsel %vm897, %v895, 0
      %v926 = vsel %vm897, %v896, 0
      %vm928 = vcmask 1040384
      %vm929 = vcmask 1041408
      %v930 = vsel %vm928, 4294967295, 65535
      %v931 = vsel %vm929, %v930, 0
      %v933 = vand.u32 %v866, %v931
      %935 = vmatprep.subr.bf16.mxu0 0
      %936 = vmatpush1.bf16.msra.mxu0 %v933
      %937 = vmatprep.subr.bf16.mxu0 0
      %938 = vmatpush1.bf16.msra.mxu0 0
      %939 = vmatprep.subr.bf16.mxu0 0
      %940 = vmatpush1.bf16.msra.mxu0 0
      %941 = vmatprep.subr.bf16.mxu0 0
      %942 = vmatpush1.bf16.msra.mxu0 0
      %943 = vmatprep.subr.bf16.mxu0 0
      %944 = vmatpush1.bf16.msra.mxu0 0
      %945 = vmatprep.subr.bf16.mxu0 0
      %946 = vmatpush1.bf16.msra.mxu0 0
      %947 = vmatprep.subr.bf16.mxu0 0
      %948 = vmatpush1.bf16.msra.mxu0 0
      %949 = vmatprep.subr.bf16.mxu0 0
      %950 = vmatpush1.bf16.msra.mxu0 0
      %951 = vmatprep.subr.bf16.mxu0 0
      %952 = vmatpush1.bf16.msra.mxu0 0
      %953 = vmatprep.subr.bf16.mxu0 0
      %954 = vmatpush1.bf16.msra.mxu0 0
      %955 = vmatprep.subr.bf16.mxu0 0
      %956 = vmatpush1.bf16.msra.mxu0 0
      %957 = vmatprep.subr.bf16.mxu0 0
      %958 = vmatpush1.bf16.msra.mxu0 0
      %959 = vmatprep.subr.bf16.mxu0 0
      %960 = vmatpush1.bf16.msra.mxu0 0
      %961 = vmatprep.subr.bf16.mxu0 0
      %962 = vmatpush1.bf16.msra.mxu0 0
      %963 = vmatprep.subr.bf16.mxu0 0
      %964 = vmatpush1.bf16.msra.mxu0 0
      %965 = vmatprep.subr.bf16.mxu0 0
      %966 = vmatpush1.bf16.msra.mxu0 0
      %967 = vmatprep.mubr.bf16.mxu0 0
      %968 = vmatmul.mubr.bf16.gmra.mrb[0].mxu0 %v899
      %v969 = vpop.f32.mrb[0].mxu0
      %v970 = vadd.f32 0.0, %v969
      %v971 = vpop.f32.mrb[0].mxu0
      %v972 = vpop.f32.mrb[0].mxu0
      %v973 = vadd.f32 0.0, %v972
      %v974 = vpop.f32.mrb[0].mxu0
      %975 = vmatprep.mubr.bf16.mxu0 0
      %976 = vmatmul.mubr.bf16.gmra.mrb[0].mxu0 %v902
      %v977 = vpop.f32.mrb[0].mxu0
      %v978 = vadd.f32 0.0, %v977
      %v979 = vpop.f32.mrb[0].mxu0
      %v980 = vpop.f32.mrb[0].mxu0
      %v981 = vadd.f32 0.0, %v980
      %v982 = vpop.f32.mrb[0].mxu0
      %983 = vmatprep.mubr.bf16.mxu0 0
      %984 = vmatmul.mubr.bf16.gmra.mrb[0].mxu0 %v905
      %v985 = vpop.f32.mrb[0].mxu0
      %v986 = vadd.f32 0.0, %v985
      %v987 = vpop.f32.mrb[0].mxu0
      %v988 = vpop.f32.mrb[0].mxu0
      %v989 = vadd.f32 0.0, %v988
      %v990 = vpop.f32.mrb[0].mxu0
      %991 = vmatprep.mubr.bf16.mxu0 0
      %992 = vmatmul.mubr.bf16.gmra.mrb[0].mxu0 %v908
      %v993 = vpop.f32.mrb[0].mxu0
      %v994 = vadd.f32 0.0, %v993
      %v995 = vpop.f32.mrb[0].mxu0
      %v996 = vpop.f32.mrb[0].mxu0
      %v997 = vadd.f32 0.0, %v996
      %v998 = vpop.f32.mrb[0].mxu0
      %999 = vmatprep.mubr.bf16.mxu0 0
      %1000 = vmatmul.mubr.bf16.gmra.mrb[0].mxu0 %v911
      %v1001 = vpop.f32.mrb[0].mxu0
      %v1002 = vadd.f32 0.0, %v1001
      %v1003 = vpop.f32.mrb[0].mxu0
      %v1004 = vpop.f32.mrb[0].mxu0
      %v1005 = vadd.f32 0.0, %v1004
      %v1006 = vpop.f32.mrb[0].mxu0
      %1007 = vmatprep.mubr.bf16.mxu0 0
      %1008 = vmatmul.mubr.bf16.gmra.mrb[0].mxu0 %v914
      %v1009 = vpop.f32.mrb[0].mxu0
      %v1010 = vadd.f32 0.0, %v1009
      %v1011 = vpop.f32.mrb[0].mxu0
      %v1012 = vpop.f32.mrb[0].mxu0
      %v1013 = vadd.f32 0.0, %v1012
      %v1014 = vpop.f32.mrb[0].mxu0
      %1015 = vmatprep.mubr.bf16.mxu0 0
      %1016 = vmatmul.mubr.bf16.gmra.mrb[0].mxu0 %v917
      %v1017 = vpop.f32.mrb[0].mxu0
      %v1018 = vadd.f32 0.0, %v1017
      %v1019 = vpop.f32.mrb[0].mxu0
      %v1020 = vpop.f32.mrb[0].mxu0
      %v1021 = vadd.f32 0.0, %v1020
      %v1022 = vpop.f32.mrb[0].mxu0
      %1023 = vmatprep.mubr.bf16.mxu0 0
      %1024 = vmatmul.mubr.bf16.gmra.mrb[0].mxu0 %v920
      %v1025 = vpop.f32.mrb[0].mxu0
      %v1026 = vadd.f32 0.0, %v1025
      %v1027 = vpop.f32.mrb[0].mxu0
      %v1028 = vpop.f32.mrb[0].mxu0
      %v1029 = vadd.f32 0.0, %v1028
      %v1030 = vpop.f32.mrb[0].mxu0
      %1031 = vmatprep.mubr.bf16.mxu0 0
      %1032 = vmatmul.mubr.bf16.gmra.mrb[0].mxu0 %v923
      %v1033 = vpop.f32.mrb[0].mxu0
      %v1034 = vadd.f32 0.0, %v1033
      %v1035 = vpop.f32.mrb[0].mxu0
      %v1036 = vpop.f32.mrb[0].mxu0
      %v1037 = vadd.f32 0.0, %v1036
      %v1038 = vpop.f32.mrb[0].mxu0
      %1039 = vmatprep.mubr.bf16.mxu0 0
      %1040 = vmatmul.mubr.bf16.gmra.mrb[0].mxu0 %v926
      %v1041 = vpop.f32.mrb[0].mxu0
      %v1042 = vadd.f32 0.0, %v1041
      %v1043 = vpop.f32.mrb[0].mxu0
      %v1044 = vpop.f32.mrb[0].mxu0
      %v1045 = vadd.f32 0.0, %v1044
      %v1046 = vpop.f32.mrb[0].mxu0
      %1047 = vdwg.mxu0
      %v1068 = vunpack.c.l.b16 %v591
      %v1069 = vunpack.c.l.b16 %v592
      %v1070 = vunpack.c.l.b16 %v593
      %v1071 = vunpack.c.l.b16 %v594
      %v1072 = vunpack.c.l.b16 %v595
      %v1073 = vunpack.c.l.b16 %v596
      %v1074 = vunpack.c.l.b16 %v597
      %v1075 = vunpack.c.l.b16 %v598
      %v1076 = vunpack.c.l.b16 %v599
      %v1077 = vunpack.c.l.b16 %v600
      %v1078 = vunpack.c.l.b16 %v601
      %v1079 = vunpack.c.l.b16 %v602
      %v1080 = vunpack.c.l.b16 %v603
      %v1081 = vunpack.c.l.b16 %v604
      %v1082 = vunpack.c.l.b16 %v605
      %v1083 = vunpack.c.l.b16 %v606
      %v1084 = vunpack.c.l.b16 %v607
      %v1085 = vunpack.c.l.b16 %v608
      %v1086 = vunpack.c.l.b16 %v609
      %v1087 = vunpack.c.l.b16 %v610
      %v1088 = vpack.c.b16 %v1069, %v1068
      %v1089 = vpack.c.b16 %v1071, %v1070
      %v1090 = vpack.c.b16 %v1073, %v1072
      %v1091 = vpack.c.b16 %v1075, %v1074
      %v1092 = vpack.c.b16 %v1077, %v1076
      %v1093 = vpack.c.b16 %v1079, %v1078
      %v1094 = vpack.c.b16 %v1081, %v1080
      %v1095 = vpack.c.b16 %v1083, %v1082
      %v1096 = vpack.c.b16 %v1085, %v1084
      %v1097 = vpack.c.b16 %v1087, %v1086
      %v1099 = vsel %vm897, %v1088, 0
      %v1102 = vsel %vm897, %v1089, 0
      %v1105 = vsel %vm897, %v1090, 0
      %v1108 = vsel %vm897, %v1091, 0
      %v1111 = vsel %vm897, %v1092, 0
      %v1114 = vsel %vm897, %v1093, 0
      %v1117 = vsel %vm897, %v1094, 0
      %v1120 = vsel %vm897, %v1095, 0
      %v1123 = vsel %vm897, %v1096, 0
      %v1126 = vsel %vm897, %v1097, 0
      %v1129 = vand.u32 %v611, %v931
      %1131 = vmatprep.subr.bf16.mxu0 0
      %1132 = vmatpush1.bf16.msra.mxu0 %v1129
      %1133 = vmatprep.subr.bf16.mxu0 0
      %1134 = vmatpush1.bf16.msra.mxu0 0
      %1135 = vmatprep.subr.bf16.mxu0 0
      %1136 = vmatpush1.bf16.msra.mxu0 0
      %1137 = vmatprep.subr.bf16.mxu0 0
      %1138 = vmatpush1.bf16.msra.mxu0 0
      %1139 = vmatprep.subr.bf16.mxu0 0
      %1140 = vmatpush1.bf16.msra.mxu0 0
      %1141 = vmatprep.subr.bf16.mxu0 0
      %1142 = vmatpush1.bf16.msra.mxu0 0
      %1143 = vmatprep.subr.bf16.mxu0 0
      %1144 = vmatpush1.bf16.msra.mxu0 0
      %1145 = vmatprep.subr.bf16.mxu0 0
      %1146 = vmatpush1.bf16.msra.mxu0 0
      %1147 = vmatprep.subr.bf16.mxu0 0
      %1148 = vmatpush1.bf16.msra.mxu0 0
      %1149 = vmatprep.subr.bf16.mxu0 0
      %1150 = vmatpush1.bf16.msra.mxu0 0
      %1151 = vmatprep.subr.bf16.mxu0 0
      %1152 = vmatpush1.bf16.msra.mxu0 0
      %1153 = vmatprep.subr.bf16.mxu0 0
      %1154 = vmatpush1.bf16.msra.mxu0 0
      %1155 = vmatprep.subr.bf16.mxu0 0
      %1156 = vmatpush1.bf16.msra.mxu0 0
      %1157 = vmatprep.subr.bf16.mxu0 0
      %1158 = vmatpush1.bf16.msra.mxu0 0
      %1159 = vmatprep.subr.bf16.mxu0 0
      %1160 = vmatpush1.bf16.msra.mxu0 0
      %1161 = vmatprep.subr.bf16.mxu0 0
      %1162 = vmatpush1.bf16.msra.mxu0 0
      %1163 = vmatprep.mubr.bf16.mxu0 0
      %1164 = vmatmul.mubr.bf16.gmra.mrb[0].mxu0 %v1099
      %v1165 = vpop.f32.mrb[0].mxu0
      %v1166 = vadd.f32 %v970, %v1165
      %v1167 = vpop.f32.mrb[0].mxu0
      %v1168 = vpop.f32.mrb[0].mxu0
      %v1169 = vadd.f32 %v973, %v1168
      %v1170 = vpop.f32.mrb[0].mxu0
      %1171 = vmatprep.mubr.bf16.mxu0 0
      %1172 = vmatmul.mubr.bf16.gmra.mrb[0].mxu0 %v1102
      %v1173 = vpop.f32.mrb[0].mxu0
      %v1174 = vadd.f32 %v978, %v1173
      %v1175 = vpop.f32.mrb[0].mxu0
      %v1176 = vpop.f32.mrb[0].mxu0
      %v1177 = vadd.f32 %v981, %v1176
      %v1178 = vpop.f32.mrb[0].mxu0
      %1179 = vmatprep.mubr.bf16.mxu0 0
      %1180 = vmatmul.mubr.bf16.gmra.mrb[0].mxu0 %v1105
      %v1181 = vpop.f32.mrb[0].mxu0
      %v1182 = vadd.f32 %v986, %v1181
      %v1183 = vpop.f32.mrb[0].mxu0
      %v1184 = vpop.f32.mrb[0].mxu0
      %v1185 = vadd.f32 %v989, %v1184
      %v1186 = vpop.f32.mrb[0].mxu0
      %1187 = vmatprep.mubr.bf16.mxu0 0
      %1188 = vmatmul.mubr.bf16.gmra.mrb[0].mxu0 %v1108
      %v1189 = vpop.f32.mrb[0].mxu0
      %v1190 = vadd.f32 %v994, %v1189
      %v1191 = vpop.f32.mrb[0].mxu0
      %v1192 = vpop.f32.mrb[0].mxu0
      %v1193 = vadd.f32 %v997, %v1192
      %v1194 = vpop.f32.mrb[0].mxu0
      %1195 = vmatprep.mubr.bf16.mxu0 0
      %1196 = vmatmul.mubr.bf16.gmra.mrb[0].mxu0 %v1111
      %v1197 = vpop.f32.mrb[0].mxu0
      %v1198 = vadd.f32 %v1002, %v1197
      %v1199 = vpop.f32.mrb[0].mxu0
      %v1200 = vpop.f32.mrb[0].mxu0
      %v1201 = vadd.f32 %v1005, %v1200
      %v1202 = vpop.f32.mrb[0].mxu0
      %1203 = vmatprep.mubr.bf16.mxu0 0
      %1204 = vmatmul.mubr.bf16.gmra.mrb[0].mxu0 %v1114
      %v1205 = vpop.f32.mrb[0].mxu0
      %v1206 = vadd.f32 %v1010, %v1205
      %v1207 = vpop.f32.mrb[0].mxu0
      %v1208 = vpop.f32.mrb[0].mxu0
      %v1209 = vadd.f32 %v1013, %v1208
      %v1210 = vpop.f32.mrb[0].mxu0
      %1211 = vmatprep.mubr.bf16.mxu0 0
      %1212 = vmatmul.mubr.bf16.gmra.mrb[0].mxu0 %v1117
      %v1213 = vpop.f32.mrb[0].mxu0
      %v1214 = vadd.f32 %v1018, %v1213
      %v1215 = vpop.f32.mrb[0].mxu0
      %v1216 = vpop.f32.mrb[0].mxu0
      %v1217 = vadd.f32 %v1021, %v1216
      %v1218 = vpop.f32.mrb[0].mxu0
      %1219 = vmatprep.mubr.bf16.mxu0 0
      %1220 = vmatmul.mubr.bf16.gmra.mrb[0].mxu0 %v1120
      %v1221 = vpop.f32.mrb[0].mxu0
      %v1222 = vadd.f32 %v1026, %v1221
      %v1223 = vpop.f32.mrb[0].mxu0
      %v1224 = vpop.f32.mrb[0].mxu0
      %v1225 = vadd.f32 %v1029, %v1224
      %v1226 = vpop.f32.mrb[0].mxu0
      %1227 = vmatprep.mubr.bf16.mxu0 0
      %1228 = vmatmul.mubr.bf16.gmra.mrb[0].mxu0 %v1123
      %v1229 = vpop.f32.mrb[0].mxu0
      %v1230 = vadd.f32 %v1034, %v1229
      %v1231 = vpop.f32.mrb[0].mxu0
      %v1232 = vpop.f32.mrb[0].mxu0
      %v1233 = vadd.f32 %v1037, %v1232
      %v1234 = vpop.f32.mrb[0].mxu0
      %1235 = vmatprep.mubr.bf16.mxu0 0
      %1236 = vmatmul.mubr.bf16.gmra.mrb[0].mxu0 %v1126
      %v1237 = vpop.f32.mrb[0].mxu0
      %v1238 = vadd.f32 %v1042, %v1237
      %v1239 = vpop.f32.mrb[0].mxu0
      %v1240 = vpop.f32.mrb[0].mxu0
      %v1241 = vadd.f32 %v1045, %v1240
      %v1242 = vpop.f32.mrb[0].mxu0
      %1243 = vdwg.mxu0
      %v1244 = vld [vmem:[#allocation2] sm:$0xe]
      %v1245 = vld [vmem:[#allocation2 + $0xc] sm:$0xe]
      %v1246 = vld [vmem:[#allocation2 + $0x18] sm:$0xe]
      %v1247 = vld [vmem:[#allocation2 + $0x24] sm:$0xe]
      %v1248 = vld [vmem:[#allocation2 + $0x30] sm:$0xe]
      %v1249 = vld [vmem:[#allocation2 + $0x3c] sm:$0xe]
      %v1250 = vld [vmem:[#allocation2 + $0x48] sm:$0xe]
      %v1251 = vld [vmem:[#allocation2 + $0x54] sm:$0xe]
      %v1252 = vld [vmem:[#allocation2 + $0x60] sm:$0xe]
      %v1253 = vld [vmem:[#allocation2 + $0x6c] sm:$0xe]
      %vm1274 = vcmask 1042432
      %vm1275 = vcmask 1046532
      %vm1276 = vmor %vm1274, %vm1275
      %v1277 = vrot.slane %v1244, 5
      %v1278 = vrot.slane %v1277, 4
      %v1279 = vrot.slane %v592, 5
      %v1280 = vsel %vm1276, %v1278, %v1279
      %v1281 = vrot.slane %v1279, 4
      %v1282 = vrot.slane %v612, 5
      %v1283 = vsel %vm1276, %v1281, %v1282
      %v1284 = vrot.slane %v1245, 5
      %v1285 = vrot.slane %v1284, 4
      %v1286 = vrot.slane %v594, 5
      %v1287 = vsel %vm1276, %v1285, %v1286
      %v1288 = vrot.slane %v1286, 4
      %v1289 = vrot.slane %v613, 5
      %v1290 = vsel %vm1276, %v1288, %v1289
      %v1291 = vrot.slane %v1246, 5
      %v1292 = vrot.slane %v1291, 4
      %v1293 = vrot.slane %v596, 5
      %v1294 = vsel %vm1276, %v1292, %v1293
      %v1295 = vrot.slane %v1293, 4
      %v1296 = vrot.slane %v614, 5
      %v1297 = vsel %vm1276, %v1295, %v1296
      %v1298 = vrot.slane %v1247, 5
      %v1299 = vrot.slane %v1298, 4
      %v1300 = vrot.slane %v598, 5
      %v1301 = vsel %vm1276, %v1299, %v1300
      %v1302 = vrot.slane %v1300, 4
      %v1303 = vrot.slane %v615, 5
      %v1304 = vsel %vm1276, %v1302, %v1303
      %v1305 = vrot.slane %v1248, 5
      %v1306 = vrot.slane %v1305, 4
      %v1307 = vrot.slane %v600, 5
      %v1308 = vsel %vm1276, %v1306, %v1307
      %v1309 = vrot.slane %v1307, 4
      %v1310 = vrot.slane %v616, 5
      %v1311 = vsel %vm1276, %v1309, %v1310
      %v1312 = vrot.slane %v1249, 5
      %v1313 = vrot.slane %v1312, 4
      %v1314 = vrot.slane %v602, 5
      %v1315 = vsel %vm1276, %v1313, %v1314
      %v1316 = vrot.slane %v1314, 4
      %v1317 = vrot.slane %v617, 5
      %v1318 = vsel %vm1276, %v1316, %v1317
      %v1319 = vrot.slane %v1250, 5
      %v1320 = vrot.slane %v1319, 4
      %v1321 = vrot.slane %v604, 5
      %v1322 = vsel %vm1276, %v1320, %v1321
      %v1323 = vrot.slane %v1321, 4
      %v1324 = vrot.slane %v618, 5
      %v1325 = vsel %vm1276, %v1323, %v1324
      %v1326 = vrot.slane %v1251, 5
      %v1327 = vrot.slane %v1326, 4
      %v1328 = vrot.slane %v606, 5
      %v1329 = vsel %vm1276, %v1327, %v1328
      %v1330 = vrot.slane %v1328, 4
      %v1331 = vrot.slane %v619, 5
      %v1332 = vsel %vm1276, %v1330, %v1331
      %v1333 = vrot.slane %v1252, 5
      %v1334 = vrot.slane %v1333, 4
      %v1335 = vrot.slane %v608, 5
      %v1336 = vsel %vm1276, %v1334, %v1335
      %v1337 = vrot.slane %v1335, 4
      %v1338 = vrot.slane %v620, 5
      %v1339 = vsel %vm1276, %v1337, %v1338
      %v1340 = vrot.slane %v1253, 5
      %v1341 = vrot.slane %v1340, 4
      %v1342 = vrot.slane %v610, 5
      %v1343 = vsel %vm1276, %v1341, %v1342
      %v1344 = vrot.slane %v1342, 4
      %v1345 = vrot.slane %v621, 5
      %v1346 = vsel %vm1276, %v1344, %v1345
      %s1347 = scalar_lea.vmem %s5, 4
      %v1348 = vld [vmem:[%s1347] sm:$0x3]
      %v1349 = vunpack.c.l.b16 %v1280
      %v1350 = vunpack.c.l.b16 %v1283
      %v1351 = vunpack.c.l.b16 %v1287
      %v1352 = vunpack.c.l.b16 %v1290
      %v1353 = vunpack.c.l.b16 %v1294
      %v1354 = vunpack.c.l.b16 %v1297
      %v1355 = vunpack.c.l.b16 %v1301
      %v1356 = vunpack.c.l.b16 %v1304
      %v1357 = vunpack.c.l.b16 %v1308
      %v1358 = vunpack.c.l.b16 %v1311
      %v1359 = vunpack.c.l.b16 %v1315
      %v1360 = vunpack.c.l.b16 %v1318
      %v1361 = vunpack.c.l.b16 %v1322
      %v1362 = vunpack.c.l.b16 %v1325
      %v1363 = vunpack.c.l.b16 %v1329
      %v1364 = vunpack.c.l.b16 %v1332
      %v1365 = vunpack.c.l.b16 %v1336
      %v1366 = vunpack.c.l.b16 %v1339
      %v1367 = vunpack.c.l.b16 %v1343
      %v1368 = vunpack.c.l.b16 %v1346
      %v1369 = vpack.c.b16 %v1350, %v1349
      %v1370 = vpack.c.b16 %v1352, %v1351
      %v1371 = vpack.c.b16 %v1354, %v1353
      %v1372 = vpack.c.b16 %v1356, %v1355
      %v1373 = vpack.c.b16 %v1358, %v1357
      %v1374 = vpack.c.b16 %v1360, %v1359
      %v1375 = vpack.c.b16 %v1362, %v1361
      %v1376 = vpack.c.b16 %v1364, %v1363
      %v1377 = vpack.c.b16 %v1366, %v1365
      %v1378 = vpack.c.b16 %v1368, %v1367
      %v1380 = vsel %vm897, %v1369, 0
      %v1383 = vsel %vm897, %v1370, 0
      %v1386 = vsel %vm897, %v1371, 0
      %v1389 = vsel %vm897, %v1372, 0
      %v1392 = vsel %vm897, %v1373, 0
      %v1395 = vsel %vm897, %v1374, 0
      %v1398 = vsel %vm897, %v1375, 0
      %v1401 = vsel %vm897, %v1376, 0
      %v1404 = vsel %vm897, %v1377, 0
      %v1407 = vsel %vm897, %v1378, 0
      %v1410 = vand.u32 %v1348, %v931
      %1412 = vmatprep.subr.bf16.mxu0 0
      %1413 = vmatpush1.bf16.msra.mxu0 %v1410
      %1414 = vmatprep.subr.bf16.mxu0 0
      %1415 = vmatpush1.bf16.msra.mxu0 0
      %1416 = vmatprep.subr.bf16.mxu0 0
      %1417 = vmatpush1.bf16.msra.mxu0 0
      %1418 = vmatprep.subr.bf16.mxu0 0
      %1419 = vmatpush1.bf16.msra.mxu0 0
      %1420 = vmatprep.subr.bf16.mxu0 0
      %1421 = vmatpush1.bf16.msra.mxu0 0
      %1422 = vmatprep.subr.bf16.mxu0 0
      %1423 = vmatpush1.bf16.msra.mxu0 0
      %1424 = vmatprep.subr.bf16.mxu0 0
      %1425 = vmatpush1.bf16.msra.mxu0 0
      %1426 = vmatprep.subr.bf16.mxu0 0
      %1427 = vmatpush1.bf16.msra.mxu0 0
      %1428 = vmatprep.subr.bf16.mxu0 0
      %1429 = vmatpush1.bf16.msra.mxu0 0
      %1430 = vmatprep.subr.bf16.mxu0 0
      %1431 = vmatpush1.bf16.msra.mxu0 0
      %1432 = vmatprep.subr.bf16.mxu0 0
      %1433 = vmatpush1.bf16.msra.mxu0 0
      %1434 = vmatprep.subr.bf16.mxu0 0
      %1435 = vmatpush1.bf16.msra.mxu0 0
      %1436 = vmatprep.subr.bf16.mxu0 0
      %1437 = vmatpush1.bf16.msra.mxu0 0
      %1438 = vmatprep.subr.bf16.mxu0 0
      %1439 = vmatpush1.bf16.msra.mxu0 0
      %1440 = vmatprep.subr.bf16.mxu0 0
      %1441 = vmatpush1.bf16.msra.mxu0 0
      %1442 = vmatprep.subr.bf16.mxu0 0
      %1443 = vmatpush1.bf16.msra.mxu0 0
      %1444 = vmatprep.mubr.bf16.mxu0 0
      %1445 = vmatmul.mubr.bf16.gmra.mrb[0].mxu0 %v1380
      %v1446 = vpop.f32.mrb[0].mxu0
      %v1447 = vadd.f32 0.0, %v1446
      %v1448 = vpop.f32.mrb[0].mxu0
      %v1449 = vpop.f32.mrb[0].mxu0
      %v1450 = vadd.f32 0.0, %v1449
      %v1451 = vpop.f32.mrb[0].mxu0
      %1452 = vmatprep.mubr.bf16.mxu0 0
      %1453 = vmatmul.mubr.bf16.gmra.mrb[0].mxu0 %v1383
      %v1454 = vpop.f32.mrb[0].mxu0
      %v1455 = vadd.f32 0.0, %v1454
      %v1456 = vpop.f32.mrb[0].mxu0
      %v1457 = vpop.f32.mrb[0].mxu0
      %v1458 = vadd.f32 0.0, %v1457
      %v1459 = vpop.f32.mrb[0].mxu0
      %1460 = vmatprep.mubr.bf16.mxu0 0
      %1461 = vmatmul.mubr.bf16.gmra.mrb[0].mxu0 %v1386
      %v1462 = vpop.f32.mrb[0].mxu0
      %v1463 = vadd.f32 0.0, %v1462
      %v1464 = vpop.f32.mrb[0].mxu0
      %v1465 = vpop.f32.mrb[0].mxu0
      %v1466 = vadd.f32 0.0, %v1465
      %v1467 = vpop.f32.mrb[0].mxu0
      %1468 = vmatprep.mubr.bf16.mxu0 0
      %1469 = vmatmul.mubr.bf16.gmra.mrb[0].mxu0 %v1389
      %v1470 = vpop.f32.mrb[0].mxu0
      %v1471 = vadd.f32 0.0, %v1470
      %v1472 = vpop.f32.mrb[0].mxu0
      %v1473 = vpop.f32.mrb[0].mxu0
      %v1474 = vadd.f32 0.0, %v1473
      %v1475 = vpop.f32.mrb[0].mxu0
      %1476 = vmatprep.mubr.bf16.mxu0 0
      %1477 = vmatmul.mubr.bf16.gmra.mrb[0].mxu0 %v1392
      %v1478 = vpop.f32.mrb[0].mxu0
      %v1479 = vadd.f32 0.0, %v1478
      %v1480 = vpop.f32.mrb[0].mxu0
      %v1481 = vpop.f32.mrb[0].mxu0
      %v1482 = vadd.f32 0.0, %v1481
      %v1483 = vpop.f32.mrb[0].mxu0
      %1484 = vmatprep.mubr.bf16.mxu0 0
      %1485 = vmatmul.mubr.bf16.gmra.mrb[0].mxu0 %v1395
      %v1486 = vpop.f32.mrb[0].mxu0
      %v1487 = vadd.f32 0.0, %v1486
      %v1488 = vpop.f32.mrb[0].mxu0
      %v1489 = vpop.f32.mrb[0].mxu0
      %v1490 = vadd.f32 0.0, %v1489
      %v1491 = vpop.f32.mrb[0].mxu0
      %1492 = vmatprep.mubr.bf16.mxu0 0
      %1493 = vmatmul.mubr.bf16.gmra.mrb[0].mxu0 %v1398
      %v1494 = vpop.f32.mrb[0].mxu0
      %v1495 = vadd.f32 0.0, %v1494
      %v1496 = vpop.f32.mrb[0].mxu0
      %v1497 = vpop.f32.mrb[0].mxu0
      %v1498 = vadd.f32 0.0, %v1497
      %v1499 = vpop.f32.mrb[0].mxu0
      %1500 = vmatprep.mubr.bf16.mxu0 0
      %1501 = vmatmul.mubr.bf16.gmra.mrb[0].mxu0 %v1401
      %v1502 = vpop.f32.mrb[0].mxu0
      %v1503 = vadd.f32 0.0, %v1502
      %v1504 = vpop.f32.mrb[0].mxu0
      %v1505 = vpop.f32.mrb[0].mxu0
      %v1506 = vadd.f32 0.0, %v1505
      %v1507 = vpop.f32.mrb[0].mxu0
      %1508 = vmatprep.mubr.bf16.mxu0 0
      %1509 = vmatmul.mubr.bf16.gmra.mrb[0].mxu0 %v1404
      %v1510 = vpop.f32.mrb[0].mxu0
      %v1511 = vadd.f32 0.0, %v1510
      %v1512 = vpop.f32.mrb[0].mxu0
      %v1513 = vpop.f32.mrb[0].mxu0
      %v1514 = vadd.f32 0.0, %v1513
      %v1515 = vpop.f32.mrb[0].mxu0
      %1516 = vmatprep.mubr.bf16.mxu0 0
      %1517 = vmatmul.mubr.bf16.gmra.mrb[0].mxu0 %v1407
      %v1518 = vpop.f32.mrb[0].mxu0
      %v1519 = vadd.f32 0.0, %v1518
      %v1520 = vpop.f32.mrb[0].mxu0
      %v1521 = vpop.f32.mrb[0].mxu0
      %v1522 = vadd.f32 0.0, %v1521
      %v1523 = vpop.f32.mrb[0].mxu0
      %1524 = vdwg.mxu0
      %v1525 = vadd.f32 %v1166, %v1447
      %v1526 = vadd.f32 %v1169, %v1450
      %v1527 = vadd.f32 %v1174, %v1455
      %v1528 = vadd.f32 %v1177, %v1458
      %v1529 = vadd.f32 %v1182, %v1463
      %v1530 = vadd.f32 %v1185, %v1466
      %v1531 = vadd.f32 %v1190, %v1471
      %v1532 = vadd.f32 %v1193, %v1474
      %v1533 = vadd.f32 %v1198, %v1479
      %v1534 = vadd.f32 %v1201, %v1482
      %v1535 = vadd.f32 %v1206, %v1487
      %v1536 = vadd.f32 %v1209, %v1490
      %v1537 = vadd.f32 %v1214, %v1495
      %v1538 = vadd.f32 %v1217, %v1498
      %v1539 = vadd.f32 %v1222, %v1503
      %v1540 = vadd.f32 %v1225, %v1506
      %v1541 = vadd.f32 %v1230, %v1511
      %v1542 = vadd.f32 %v1233, %v1514
      %v1543 = vadd.f32 %v1238, %v1519
      %v1544 = vadd.f32 %v1241, %v1522
      %s1545 = scalar_lea.vmem [#allocation2], 12
      %v1546 = vld [vmem:[%s1545] sm:$0xf]
      %v1547 = vld [vmem:[%s1545 + $0x4] sm:$0xf]
      %v1548 = vld [vmem:[%s1545 + $0xc] sm:$0xf]
      %v1549 = vld [vmem:[%s1545 + $0x10] sm:$0xf]
      %v1550 = vld [vmem:[%s1545 + $0x18] sm:$0xf]
      %v1551 = vld [vmem:[%s1545 + $0x1c] sm:$0xf]
      %v1552 = vld [vmem:[%s1545 + $0x24] sm:$0xf]
      %v1553 = vld [vmem:[%s1545 + $0x28] sm:$0xf]
      %v1554 = vld [vmem:[%s1545 + $0x30] sm:$0xf]
      %v1555 = vld [vmem:[%s1545 + $0x34] sm:$0xf]
      %v1556 = vld [vmem:[%s1545 + $0x3c] sm:$0xf]
      %v1557 = vld [vmem:[%s1545 + $0x40] sm:$0xf]
      %v1558 = vld [vmem:[%s1545 + $0x48] sm:$0xf]
      %v1559 = vld [vmem:[%s1545 + $0x4c] sm:$0xf]
      %v1560 = vld [vmem:[%s1545 + $0x54] sm:$0xf]
      %v1561 = vld [vmem:[%s1545 + $0x58] sm:$0xf]
      %v1562 = vld [vmem:[%s1545 + $0x60] sm:$0xf]
      %v1563 = vld [vmem:[%s1545 + $0x64] sm:$0xf]
      %v1564 = vld [vmem:[%s1545 + $0x6c] sm:$0xf]
      %v1565 = vld [vmem:[%s1545 + $0x70] sm:$0xf]
      %s1566 = scalar_lea.vmem %s5, 6
      %v1567 = vld [vmem:[%s1566] sm:$0x3]
      %v1588 = vunpack.c.l.b16 %v1546
      %v1589 = vunpack.c.l.b16 %v1547
      %v1590 = vunpack.c.l.b16 %v1548
      %v1591 = vunpack.c.l.b16 %v1549
      %v1592 = vunpack.c.l.b16 %v1550
      %v1593 = vunpack.c.l.b16 %v1551
      %v1594 = vunpack.c.l.b16 %v1552
      %v1595 = vunpack.c.l.b16 %v1553
      %v1596 = vunpack.c.l.b16 %v1554
      %v1597 = vunpack.c.l.b16 %v1555
      %v1598 = vunpack.c.l.b16 %v1556
      %v1599 = vunpack.c.l.b16 %v1557
      %v1600 = vunpack.c.l.b16 %v1558
      %v1601 = vunpack.c.l.b16 %v1559
      %v1602 = vunpack.c.l.b16 %v1560
      %v1603 = vunpack.c.l.b16 %v1561
      %v1604 = vunpack.c.l.b16 %v1562
      %v1605 = vunpack.c.l.b16 %v1563
      %v1606 = vunpack.c.l.b16 %v1564
      %v1607 = vunpack.c.l.b16 %v1565
      %v1608 = vpack.c.b16 %v1589, %v1588
      %v1609 = vpack.c.b16 %v1591, %v1590
      %v1610 = vpack.c.b16 %v1593, %v1592
      %v1611 = vpack.c.b16 %v1595, %v1594
      %v1612 = vpack.c.b16 %v1597, %v1596
      %v1613 = vpack.c.b16 %v1599, %v1598
      %v1614 = vpack.c.b16 %v1601, %v1600
      %v1615 = vpack.c.b16 %v1603, %v1602
      %v1616 = vpack.c.b16 %v1605, %v1604
      %v1617 = vpack.c.b16 %v1607, %v1606
      %v1619 = vsel %vm897, %v1608, 0
      %v1622 = vsel %vm897, %v1609, 0
      %v1625 = vsel %vm897, %v1610, 0
      %v1628 = vsel %vm897, %v1611, 0
      %v1631 = vsel %vm897, %v1612, 0
      %v1634 = vsel %vm897, %v1613, 0
      %v1637 = vsel %vm897, %v1614, 0
      %v1640 = vsel %vm897, %v1615, 0
      %v1643 = vsel %vm897, %v1616, 0
      %v1646 = vsel %vm897, %v1617, 0
      %v1649 = vand.u32 %v1567, %v931
      %1651 = vmatprep.subr.bf16.mxu0 0
      %1652 = vmatpush1.bf16.msra.mxu0 %v1649
      %1653 = vmatprep.subr.bf16.mxu0 0
      %1654 = vmatpush1.bf16.msra.mxu0 0
      %1655 = vmatprep.subr.bf16.mxu0 0
      %1656 = vmatpush1.bf16.msra.mxu0 0
      %1657 = vmatprep.subr.bf16.mxu0 0
      %1658 = vmatpush1.bf16.msra.mxu0 0
      %1659 = vmatprep.subr.bf16.mxu0 0
      %1660 = vmatpush1.bf16.msra.mxu0 0
      %1661 = vmatprep.subr.bf16.mxu0 0
      %1662 = vmatpush1.bf16.msra.mxu0 0
      %1663 = vmatprep.subr.bf16.mxu0 0
      %1664 = vmatpush1.bf16.msra.mxu0 0
      %1665 = vmatprep.subr.bf16.mxu0 0
      %1666 = vmatpush1.bf16.msra.mxu0 0
      %1667 = vmatprep.subr.bf16.mxu0 0
      %1668 = vmatpush1.bf16.msra.mxu0 0
      %1669 = vmatprep.subr.bf16.mxu0 0
      %1670 = vmatpush1.bf16.msra.mxu0 0
      %1671 = vmatprep.subr.bf16.mxu0 0
      %1672 = vmatpush1.bf16.msra.mxu0 0
      %1673 = vmatprep.subr.bf16.mxu0 0
      %1674 = vmatpush1.bf16.msra.mxu0 0
      %1675 = vmatprep.subr.bf16.mxu0 0
      %1676 = vmatpush1.bf16.msra.mxu0 0
      %1677 = vmatprep.subr.bf16.mxu0 0
      %1678 = vmatpush1.bf16.msra.mxu0 0
      %1679 = vmatprep.subr.bf16.mxu0 0
      %1680 = vmatpush1.bf16.msra.mxu0 0
      %1681 = vmatprep.subr.bf16.mxu0 0
      %1682 = vmatpush1.bf16.msra.mxu0 0
      %1683 = vmatprep.mubr.bf16.mxu0 0
      %1684 = vmatmul.mubr.bf16.gmra.mrb[0].mxu0 %v1619
      %v1685 = vpop.f32.mrb[0].mxu0
      %v1686 = vadd.f32 0.0, %v1685
      %v1687 = vpop.f32.mrb[0].mxu0
      %v1688 = vpop.f32.mrb[0].mxu0
      %v1689 = vadd.f32 0.0, %v1688
      %v1690 = vpop.f32.mrb[0].mxu0
      %1691 = vmatprep.mubr.bf16.mxu0 0
      %1692 = vmatmul.mubr.bf16.gmra.mrb[0].mxu0 %v1622
      %v1693 = vpop.f32.mrb[0].mxu0
      %v1694 = vadd.f32 0.0, %v1693
      %v1695 = vpop.f32.mrb[0].mxu0
      %v1696 = vpop.f32.mrb[0].mxu0
      %v1697 = vadd.f32 0.0, %v1696
      %v1698 = vpop.f32.mrb[0].mxu0
      %1699 = vmatprep.mubr.bf16.mxu0 0
      %1700 = vmatmul.mubr.bf16.gmra.mrb[0].mxu0 %v1625
      %v1701 = vpop.f32.mrb[0].mxu0
      %v1702 = vadd.f32 0.0, %v1701
      %v1703 = vpop.f32.mrb[0].mxu0
      %v1704 = vpop.f32.mrb[0].mxu0
      %v1705 = vadd.f32 0.0, %v1704
      %v1706 = vpop.f32.mrb[0].mxu0
      %1707 = vmatprep.mubr.bf16.mxu0 0
      %1708 = vmatmul.mubr.bf16.gmra.mrb[0].mxu0 %v1628
      %v1709 = vpop.f32.mrb[0].mxu0
      %v1710 = vadd.f32 0.0, %v1709
      %v1711 = vpop.f32.mrb[0].mxu0
      %v1712 = vpop.f32.mrb[0].mxu0
      %v1713 = vadd.f32 0.0, %v1712
      %v1714 = vpop.f32.mrb[0].mxu0
      %1715 = vmatprep.mubr.bf16.mxu0 0
      %1716 = vmatmul.mubr.bf16.gmra.mrb[0].mxu0 %v1631
      %v1717 = vpop.f32.mrb[0].mxu0
      %v1718 = vadd.f32 0.0, %v1717
      %v1719 = vpop.f32.mrb[0].mxu0
      %v1720 = vpop.f32.mrb[0].mxu0
      %v1721 = vadd.f32 0.0, %v1720
      %v1722 = vpop.f32.mrb[0].mxu0
      %1723 = vmatprep.mubr.bf16.mxu0 0
      %1724 = vmatmul.mubr.bf16.gmra.mrb[0].mxu0 %v1634
      %v1725 = vpop.f32.mrb[0].mxu0
      %v1726 = vadd.f32 0.0, %v1725
      %v1727 = vpop.f32.mrb[0].mxu0
      %v1728 = vpop.f32.mrb[0].mxu0
      %v1729 = vadd.f32 0.0, %v1728
      %v1730 = vpop.f32.mrb[0].mxu0
      %1731 = vmatprep.mubr.bf16.mxu0 0
      %1732 = vmatmul.mubr.bf16.gmra.mrb[0].mxu0 %v1637
      %v1733 = vpop.f32.mrb[0].mxu0
      %v1734 = vadd.f32 0.0, %v1733
      %v1735 = vpop.f32.mrb[0].mxu0
      %v1736 = vpop.f32.mrb[0].mxu0
      %v1737 = vadd.f32 0.0, %v1736
      %v1738 = vpop.f32.mrb[0].mxu0
      %1739 = vmatprep.mubr.bf16.mxu0 0
      %1740 = vmatmul.mubr.bf16.gmra.mrb[0].mxu0 %v1640
      %v1741 = vpop.f32.mrb[0].mxu0
      %v1742 = vadd.f32 0.0, %v1741
      %v1743 = vpop.f32.mrb[0].mxu0
      %v1744 = vpop.f32.mrb[0].mxu0
      %v1745 = vadd.f32 0.0, %v1744
      %v1746 = vpop.f32.mrb[0].mxu0
      %1747 = vmatprep.mubr.bf16.mxu0 0
      %1748 = vmatmul.mubr.bf16.gmra.mrb[0].mxu0 %v1643
      %v1749 = vpop.f32.mrb[0].mxu0
      %v1750 = vadd.f32 0.0, %v1749
      %v1751 = vpop.f32.mrb[0].mxu0
      %v1752 = vpop.f32.mrb[0].mxu0
      %v1753 = vadd.f32 0.0, %v1752
      %v1754 = vpop.f32.mrb[0].mxu0
      %1755 = vmatprep.mubr.bf16.mxu0 0
      %1756 = vmatmul.mubr.bf16.gmra.mrb[0].mxu0 %v1646
      %v1757 = vpop.f32.mrb[0].mxu0
      %v1758 = vadd.f32 0.0, %v1757
      %v1759 = vpop.f32.mrb[0].mxu0
      %v1760 = vpop.f32.mrb[0].mxu0
      %v1761 = vadd.f32 0.0, %v1760
      %v1762 = vpop.f32.mrb[0].mxu0
      %1763 = vdwg.mxu0
      %v1764 = vadd.f32 %v1525, %v1686
      %v1765 = vadd.f32 %v1526, %v1689
      %v1766 = vadd.f32 %v1527, %v1694
      %v1767 = vadd.f32 %v1528, %v1697
      %v1768 = vadd.f32 %v1529, %v1702
      %v1769 = vadd.f32 %v1530, %v1705
      %v1770 = vadd.f32 %v1531, %v1710
      %v1771 = vadd.f32 %v1532, %v1713
      %v1772 = vadd.f32 %v1533, %v1718
      %v1773 = vadd.f32 %v1534, %v1721
      %v1774 = vadd.f32 %v1535, %v1726
      %v1775 = vadd.f32 %v1536, %v1729
      %v1776 = vadd.f32 %v1537, %v1734
      %v1777 = vadd.f32 %v1538, %v1737
      %v1778 = vadd.f32 %v1539, %v1742
      %v1779 = vadd.f32 %v1540, %v1745
      %v1780 = vadd.f32 %v1541, %v1750
      %v1781 = vadd.f32 %v1542, %v1753
      %v1782 = vadd.f32 %v1543, %v1758
      %v1783 = vadd.f32 %v1544, %v1761
      %v1784 = vld [vmem:[%s1545] sm:$0xf]
      %v1785 = vld [vmem:[%s1545 + $0x4] sm:$0xf]
      %v1786 = vld [vmem:[%s1545 + $0x8] sm:$0x1]
      %v1787 = vld [vmem:[%s1545 + $0xc] sm:$0xf]
      %v1788 = vld [vmem:[%s1545 + $0x10] sm:$0xf]
      %v1789 = vld [vmem:[%s1545 + $0x14] sm:$0x1]
      %v1790 = vld [vmem:[%s1545 + $0x18] sm:$0xf]
      %v1791 = vld [vmem:[%s1545 + $0x1c] sm:$0xf]
      %v1792 = vld [vmem:[%s1545 + $0x20] sm:$0x1]
      %v1793 = vld [vmem:[%s1545 + $0x24] sm:$0xf]
      %v1794 = vld [vmem:[%s1545 + $0x28] sm:$0xf]
      %v1795 = vld [vmem:[%s1545 + $0x2c] sm:$0x1]
      %v1796 = vld [vmem:[%s1545 + $0x30] sm:$0xf]
      %v1797 = vld [vmem:[%s1545 + $0x34] sm:$0xf]
      %v1798 = vld [vmem:[%s1545 + $0x38] sm:$0x1]
      %v1799 = vld [vmem:[%s1545 + $0x3c] sm:$0xf]
      %v1800 = vld [vmem:[%s1545 + $0x40] sm:$0xf]
      %v1801 = vld [vmem:[%s1545 + $0x44] sm:$0x1]
      %v1802 = vld [vmem:[%s1545 + $0x48] sm:$0xf]
      %v1803 = vld [vmem:[%s1545 + $0x4c] sm:$0xf]
      %v1804 = vld [vmem:[%s1545 + $0x50] sm:$0x1]
      %v1805 = vld [vmem:[%s1545 + $0x54] sm:$0xf]
      %v1806 = vld [vmem:[%s1545 + $0x58] sm:$0xf]
      %v1807 = vld [vmem:[%s1545 + $0x5c] sm:$0x1]
      %v1808 = vld [vmem:[%s1545 + $0x60] sm:$0xf]
      %v1809 = vld [vmem:[%s1545 + $0x64] sm:$0xf]
      %v1810 = vld [vmem:[%s1545 + $0x68] sm:$0x1]
      %v1811 = vld [vmem:[%s1545 + $0x6c] sm:$0xf]
      %v1812 = vld [vmem:[%s1545 + $0x70] sm:$0xf]
      %v1813 = vld [vmem:[%s1545 + $0x74] sm:$0x1]
      %v1815 = vshrl.u32 %v1784, 16
      %v1817 = vrot.slane %v1815, 4
      %v1818 = vshll.u32 %v1784, 16
      %v1820 = vrot.slane %v1818, 5
      %v1821 = vor.u32 %v1817, %v1820
      %v1822 = vrot.slane %v1821, 4
      %v1824 = vshll.u32 %v1785, 16
      %v1826 = vrot.slane %v1824, 5
      %v1827 = vsel %vm624, %v1822, %v1826
      %v1828 = vshrl.u32 %v1785, 16
      %v1830 = vrot.slane %v1828, 4
      %v1831 = vor.u32 %v1830, %v1826
      %v1832 = vrot.slane %v1831, 4
      %v1834 = vshll.u32 %v1786, 16
      %v1836 = vrot.slane %v1834, 5
      %v1837 = vsel %vm624, %v1832, %v1836
      %v1839 = vshrl.u32 %v1787, 16
      %v1841 = vrot.slane %v1839, 4
      %v1842 = vshll.u32 %v1787, 16
      %v1844 = vrot.slane %v1842, 5
      %v1845 = vor.u32 %v1841, %v1844
      %v1846 = vrot.slane %v1845, 4
      %v1848 = vshll.u32 %v1788, 16
      %v1850 = vrot.slane %v1848, 5
      %v1851 = vsel %vm624, %v1846, %v1850
      %v1852 = vshrl.u32 %v1788, 16
      %v1854 = vrot.slane %v1852, 4
      %v1855 = vor.u32 %v1854, %v1850
      %v1856 = vrot.slane %v1855, 4
      %v1858 = vshll.u32 %v1789, 16
      %v1860 = vrot.slane %v1858, 5
      %v1861 = vsel %vm624, %v1856, %v1860
      %v1863 = vshrl.u32 %v1790, 16
      %v1865 = vrot.slane %v1863, 4
      %v1866 = vshll.u32 %v1790, 16
      %v1868 = vrot.slane %v1866, 5
      %v1869 = vor.u32 %v1865, %v1868
      %v1870 = vrot.slane %v1869, 4
      %v1872 = vshll.u32 %v1791, 16
      %v1874 = vrot.slane %v1872, 5
      %v1875 = vsel %vm624, %v1870, %v1874
      %v1876 = vshrl.u32 %v1791, 16
      %v1878 = vrot.slane %v1876, 4
      %v1879 = vor.u32 %v1878, %v1874
      %v1880 = vrot.slane %v1879, 4
      %v1882 = vshll.u32 %v1792, 16
      %v1884 = vrot.slane %v1882, 5
      %v1885 = vsel %vm624, %v1880, %v1884
      %v1887 = vshrl.u32 %v1793, 16
      %v1889 = vrot.slane %v1887, 4
      %v1890 = vshll.u32 %v1793, 16
      %v1892 = vrot.slane %v1890, 5
      %v1893 = vor.u32 %v1889, %v1892
      %v1894 = vrot.slane %v1893, 4
      %v1896 = vshll.u32 %v1794, 16
      %v1898 = vrot.slane %v1896, 5
      %v1899 = vsel %vm624, %v1894, %v1898
      %v1900 = vshrl.u32 %v1794, 16
      %v1902 = vrot.slane %v1900, 4
      %v1903 = vor.u32 %v1902, %v1898
      %v1904 = vrot.slane %v1903, 4
      %v1906 = vshll.u32 %v1795, 16
      %v1908 = vrot.slane %v1906, 5
      %v1909 = vsel %vm624, %v1904, %v1908
      %v1911 = vshrl.u32 %v1796, 16
      %v1913 = vrot.slane %v1911, 4
      %v1914 = vshll.u32 %v1796, 16
      %v1916 = vrot.slane %v1914, 5
      %v1917 = vor.u32 %v1913, %v1916
      %v1918 = vrot.slane %v1917, 4
      %v1920 = vshll.u32 %v1797, 16
      %v1922 = vrot.slane %v1920, 5
      %v1923 = vsel %vm624, %v1918, %v1922
      %v1924 = vshrl.u32 %v1797, 16
      %v1926 = vrot.slane %v1924, 4
      %v1927 = vor.u32 %v1926, %v1922
      %v1928 = vrot.slane %v1927, 4
      %v1930 = vshll.u32 %v1798, 16
      %v1932 = vrot.slane %v1930, 5
      %v1933 = vsel %vm624, %v1928, %v1932
      %v1935 = vshrl.u32 %v1799, 16
      %v1937 = vrot.slane %v1935, 4
      %v1938 = vshll.u32 %v1799, 16
      %v1940 = vrot.slane %v1938, 5
      %v1941 = vor.u32 %v1937, %v1940
      %v1942 = vrot.slane %v1941, 4
      %v1944 = vshll.u32 %v1800, 16
      %v1946 = vrot.slane %v1944, 5
      %v1947 = vsel %vm624, %v1942, %v1946
      %v1948 = vshrl.u32 %v1800, 16
      %v1950 = vrot.slane %v1948, 4
      %v1951 = vor.u32 %v1950, %v1946
      %v1952 = vrot.slane %v1951, 4
      %v1954 = vshll.u32 %v1801, 16
      %v1956 = vrot.slane %v1954, 5
      %v1957 = vsel %vm624, %v1952, %v1956
      %v1959 = vshrl.u32 %v1802, 16
      %v1961 = vrot.slane %v1959, 4
      %v1962 = vshll.u32 %v1802, 16
      %v1964 = vrot.slane %v1962, 5
      %v1965 = vor.u32 %v1961, %v1964
      %v1966 = vrot.slane %v1965, 4
      %v1968 = vshll.u32 %v1803, 16
      %v1970 = vrot.slane %v1968, 5
      %v1971 = vsel %vm624, %v1966, %v1970
      %v1972 = vshrl.u32 %v1803, 16
      %v1974 = vrot.slane %v1972, 4
      %v1975 = vor.u32 %v1974, %v1970
      %v1976 = vrot.slane %v1975, 4
      %v1978 = vshll.u32 %v1804, 16
      %v1980 = vrot.slane %v1978, 5
      %v1981 = vsel %vm624, %v1976, %v1980
      %v1983 = vshrl.u32 %v1805, 16
      %v1985 = vrot.slane %v1983, 4
      %v1986 = vshll.u32 %v1805, 16
      %v1988 = vrot.slane %v1986, 5
      %v1989 = vor.u32 %v1985, %v1988
      %v1990 = vrot.slane %v1989, 4
      %v1992 = vshll.u32 %v1806, 16
      %v1994 = vrot.slane %v1992, 5
      %v1995 = vsel %vm624, %v1990, %v1994
      %v1996 = vshrl.u32 %v1806, 16
      %v1998 = vrot.slane %v1996, 4
      %v1999 = vor.u32 %v1998, %v1994
      %v2000 = vrot.slane %v1999, 4
      %v2002 = vshll.u32 %v1807, 16
      %v2004 = vrot.slane %v2002, 5
      %v2005 = vsel %vm624, %v2000, %v2004
      %v2007 = vshrl.u32 %v1808, 16
      %v2009 = vrot.slane %v2007, 4
      %v2010 = vshll.u32 %v1808, 16
      %v2012 = vrot.slane %v2010, 5
      %v2013 = vor.u32 %v2009, %v2012
      %v2014 = vrot.slane %v2013, 4
      %v2016 = vshll.u32 %v1809, 16
      %v2018 = vrot.slane %v2016, 5
      %v2019 = vsel %vm624, %v2014, %v2018
      %v2020 = vshrl.u32 %v1809, 16
      %v2022 = vrot.slane %v2020, 4
      %v2023 = vor.u32 %v2022, %v2018
      %v2024 = vrot.slane %v2023, 4
      %v2026 = vshll.u32 %v1810, 16
      %v2028 = vrot.slane %v2026, 5
      %v2029 = vsel %vm624, %v2024, %v2028
      %v2031 = vshrl.u32 %v1811, 16
      %v2033 = vrot.slane %v2031, 4
      %v2034 = vshll.u32 %v1811, 16
      %v2036 = vrot.slane %v2034, 5
      %v2037 = vor.u32 %v2033, %v2036
      %v2038 = vrot.slane %v2037, 4
      %v2040 = vshll.u32 %v1812, 16
      %v2042 = vrot.slane %v2040, 5
      %v2043 = vsel %vm624, %v2038, %v2042
      %v2044 = vshrl.u32 %v1812, 16
      %v2046 = vrot.slane %v2044, 4
      %v2047 = vor.u32 %v2046, %v2042
      %v2048 = vrot.slane %v2047, 4
      %v2050 = vshll.u32 %v1813, 16
      %v2052 = vrot.slane %v2050, 5
      %v2053 = vsel %vm624, %v2048, %v2052
      %s2054 = scalar_lea.vmem %s5, 8
      %v2055 = vld [vmem:[%s2054] sm:$0x3]
      %v2056 = vunpack.c.l.b16 %v1827
      %v2057 = vunpack.c.l.b16 %v1837
      %v2058 = vunpack.c.l.b16 %v1851
      %v2059 = vunpack.c.l.b16 %v1861
      %v2060 = vunpack.c.l.b16 %v1875
      %v2061 = vunpack.c.l.b16 %v1885
      %v2062 = vunpack.c.l.b16 %v1899
      %v2063 = vunpack.c.l.b16 %v1909
      %v2064 = vunpack.c.l.b16 %v1923
      %v2065 = vunpack.c.l.b16 %v1933
      %v2066 = vunpack.c.l.b16 %v1947
      %v2067 = vunpack.c.l.b16 %v1957
      %v2068 = vunpack.c.l.b16 %v1971
      %v2069 = vunpack.c.l.b16 %v1981
      %v2070 = vunpack.c.l.b16 %v1995
      %v2071 = vunpack.c.l.b16 %v2005
      %v2072 = vunpack.c.l.b16 %v2019
      %v2073 = vunpack.c.l.b16 %v2029
      %v2074 = vunpack.c.l.b16 %v2043
      %v2075 = vunpack.c.l.b16 %v2053
      %v2076 = vpack.c.b16 %v2057, %v2056
      %v2077 = vpack.c.b16 %v2059, %v2058
      %v2078 = vpack.c.b16 %v2061, %v2060
      %v2079 = vpack.c.b16 %v2063, %v2062
      %v2080 = vpack.c.b16 %v2065, %v2064
      %v2081 = vpack.c.b16 %v2067, %v2066
      %v2082 = vpack.c.b16 %v2069, %v2068
      %v2083 = vpack.c.b16 %v2071, %v2070
      %v2084 = vpack.c.b16 %v2073, %v2072
      %v2085 = vpack.c.b16 %v2075, %v2074
      %v2087 = vsel %vm897, %v2076, 0
      %v2090 = vsel %vm897, %v2077, 0
      %v2093 = vsel %vm897, %v2078, 0
      %v2096 = vsel %vm897, %v2079, 0
      %v2099 = vsel %vm897, %v2080, 0
      %v2102 = vsel %vm897, %v2081, 0
      %v2105 = vsel %vm897, %v2082, 0
      %v2108 = vsel %vm897, %v2083, 0
      %v2111 = vsel %vm897, %v2084, 0
      %v2114 = vsel %vm897, %v2085, 0
      %v2117 = vand.u32 %v2055, %v931
      %2119 = vmatprep.subr.bf16.mxu0 0
      %2120 = vmatpush1.bf16.msra.mxu0 %v2117
      %2121 = vmatprep.subr.bf16.mxu0 0
      %2122 = vmatpush1.bf16.msra.mxu0 0
      %2123 = vmatprep.subr.bf16.mxu0 0
      %2124 = vmatpush1.bf16.msra.mxu0 0
      %2125 = vmatprep.subr.bf16.mxu0 0
      %2126 = vmatpush1.bf16.msra.mxu0 0
      %2127 = vmatprep.subr.bf16.mxu0 0
      %2128 = vmatpush1.bf16.msra.mxu0 0
      %2129 = vmatprep.subr.bf16.mxu0 0
      %2130 = vmatpush1.bf16.msra.mxu0 0
      %2131 = vmatprep.subr.bf16.mxu0 0
      %2132 = vmatpush1.bf16.msra.mxu0 0
      %2133 = vmatprep.subr.bf16.mxu0 0
      %2134 = vmatpush1.bf16.msra.mxu0 0
      %2135 = vmatprep.subr.bf16.mxu0 0
      %2136 = vmatpush1.bf16.msra.mxu0 0
      %2137 = vmatprep.subr.bf16.mxu0 0
      %2138 = vmatpush1.bf16.msra.mxu0 0
      %2139 = vmatprep.subr.bf16.mxu0 0
      %2140 = vmatpush1.bf16.msra.mxu0 0
      %2141 = vmatprep.subr.bf16.mxu0 0
      %2142 = vmatpush1.bf16.msra.mxu0 0
      %2143 = vmatprep.subr.bf16.mxu0 0
      %2144 = vmatpush1.bf16.msra.mxu0 0
      %2145 = vmatprep.subr.bf16.mxu0 0
      %2146 = vmatpush1.bf16.msra.mxu0 0
      %2147 = vmatprep.subr.bf16.mxu0 0
      %2148 = vmatpush1.bf16.msra.mxu0 0
      %2149 = vmatprep.subr.bf16.mxu0 0
      %2150 = vmatpush1.bf16.msra.mxu0 0
      %2151 = vmatprep.mubr.bf16.mxu0 0
      %2152 = vmatmul.mubr.bf16.gmra.mrb[0].mxu0 %v2087
      %v2153 = vpop.f32.mrb[0].mxu0
      %v2154 = vadd.f32 0.0, %v2153
      %v2155 = vpop.f32.mrb[0].mxu0
      %v2156 = vpop.f32.mrb[0].mxu0
      %v2157 = vadd.f32 0.0, %v2156
      %v2158 = vpop.f32.mrb[0].mxu0
      %2159 = vmatprep.mubr.bf16.mxu0 0
      %2160 = vmatmul.mubr.bf16.gmra.mrb[0].mxu0 %v2090
      %v2161 = vpop.f32.mrb[0].mxu0
      %v2162 = vadd.f32 0.0, %v2161
      %v2163 = vpop.f32.mrb[0].mxu0
      %v2164 = vpop.f32.mrb[0].mxu0
      %v2165 = vadd.f32 0.0, %v2164
      %v2166 = vpop.f32.mrb[0].mxu0
      %2167 = vmatprep.mubr.bf16.mxu0 0
      %2168 = vmatmul.mubr.bf16.gmra.mrb[0].mxu0 %v2093
      %v2169 = vpop.f32.mrb[0].mxu0
      %v2170 = vadd.f32 0.0, %v2169
      %v2171 = vpop.f32.mrb[0].mxu0
      %v2172 = vpop.f32.mrb[0].mxu0
      %v2173 = vadd.f32 0.0, %v2172
      %v2174 = vpop.f32.mrb[0].mxu0
      %2175 = vmatprep.mubr.bf16.mxu0 0
      %2176 = vmatmul.mubr.bf16.gmra.mrb[0].mxu0 %v2096
      %v2177 = vpop.f32.mrb[0].mxu0
      %v2178 = vadd.f32 0.0, %v2177
      %v2179 = vpop.f32.mrb[0].mxu0
      %v2180 = vpop.f32.mrb[0].mxu0
      %v2181 = vadd.f32 0.0, %v2180
      %v2182 = vpop.f32.mrb[0].mxu0
      %2183 = vmatprep.mubr.bf16.mxu0 0
      %2184 = vmatmul.mubr.bf16.gmra.mrb[0].mxu0 %v2099
      %v2185 = vpop.f32.mrb[0].mxu0
      %v2186 = vadd.f32 0.0, %v2185
      %v2187 = vpop.f32.mrb[0].mxu0
      %v2188 = vpop.f32.mrb[0].mxu0
      %v2189 = vadd.f32 0.0, %v2188
      %v2190 = vpop.f32.mrb[0].mxu0
      %2191 = vmatprep.mubr.bf16.mxu0 0
      %2192 = vmatmul.mubr.bf16.gmra.mrb[0].mxu0 %v2102
      %v2193 = vpop.f32.mrb[0].mxu0
      %v2194 = vadd.f32 0.0, %v2193
      %v2195 = vpop.f32.mrb[0].mxu0
      %v2196 = vpop.f32.mrb[0].mxu0
      %v2197 = vadd.f32 0.0, %v2196
      %v2198 = vpop.f32.mrb[0].mxu0
      %2199 = vmatprep.mubr.bf16.mxu0 0
      %2200 = vmatmul.mubr.bf16.gmra.mrb[0].mxu0 %v2105
      %v2201 = vpop.f32.mrb[0].mxu0
      %v2202 = vadd.f32 0.0, %v2201
      %v2203 = vpop.f32.mrb[0].mxu0
      %v2204 = vpop.f32.mrb[0].mxu0
      %v2205 = vadd.f32 0.0, %v2204
      %v2206 = vpop.f32.mrb[0].mxu0
      %2207 = vmatprep.mubr.bf16.mxu0 0
      %2208 = vmatmul.mubr.bf16.gmra.mrb[0].mxu0 %v2108
      %v2209 = vpop.f32.mrb[0].mxu0
      %v2210 = vadd.f32 0.0, %v2209
      %v2211 = vpop.f32.mrb[0].mxu0
      %v2212 = vpop.f32.mrb[0].mxu0
      %v2213 = vadd.f32 0.0, %v2212
      %v2214 = vpop.f32.mrb[0].mxu0
      %2215 = vmatprep.mubr.bf16.mxu0 0
      %2216 = vmatmul.mubr.bf16.gmra.mrb[0].mxu0 %v2111
      %v2217 = vpop.f32.mrb[0].mxu0
      %v2218 = vadd.f32 0.0, %v2217
      %v2219 = vpop.f32.mrb[0].mxu0
      %v2220 = vpop.f32.mrb[0].mxu0
      %v2221 = vadd.f32 0.0, %v2220
      %v2222 = vpop.f32.mrb[0].mxu0
      %2223 = vmatprep.mubr.bf16.mxu0 0
      %2224 = vmatmul.mubr.bf16.gmra.mrb[0].mxu0 %v2114
      %v2225 = vpop.f32.mrb[0].mxu0
      %v2226 = vadd.f32 0.0, %v2225
      %v2227 = vpop.f32.mrb[0].mxu0
      %v2228 = vpop.f32.mrb[0].mxu0
      %v2229 = vadd.f32 0.0, %v2228
      %v2230 = vpop.f32.mrb[0].mxu0
      %2231 = vdwg.mxu0
      %v2232 = vadd.f32 %v1764, %v2154
      %v2233 = vadd.f32 %v1765, %v2157
      %v2234 = vadd.f32 %v1766, %v2162
      %v2235 = vadd.f32 %v1767, %v2165
      %v2236 = vadd.f32 %v1768, %v2170
      %v2237 = vadd.f32 %v1769, %v2173
      %v2238 = vadd.f32 %v1770, %v2178
      %v2239 = vadd.f32 %v1771, %v2181
      %v2240 = vadd.f32 %v1772, %v2186
      %v2241 = vadd.f32 %v1773, %v2189
      %v2242 = vadd.f32 %v1774, %v2194
      %v2243 = vadd.f32 %v1775, %v2197
      %v2244 = vadd.f32 %v1776, %v2202
      %v2245 = vadd.f32 %v1777, %v2205
      %v2246 = vadd.f32 %v1778, %v2210
      %v2247 = vadd.f32 %v1779, %v2213
      %v2248 = vadd.f32 %v1780, %v2218
      %v2249 = vadd.f32 %v1781, %v2221
      %v2250 = vadd.f32 %v1782, %v2226
      %v2251 = vadd.f32 %v1783, %v2229
      %v2252 = vld [vmem:[%s1545] sm:$0xe]
      %v2253 = vld [vmem:[%s1545 + $0xc] sm:$0xe]
      %v2254 = vld [vmem:[%s1545 + $0x18] sm:$0xe]
      %v2255 = vld [vmem:[%s1545 + $0x24] sm:$0xe]
      %v2256 = vld [vmem:[%s1545 + $0x30] sm:$0xe]
      %v2257 = vld [vmem:[%s1545 + $0x3c] sm:$0xe]
      %v2258 = vld [vmem:[%s1545 + $0x48] sm:$0xe]
      %v2259 = vld [vmem:[%s1545 + $0x54] sm:$0xe]
      %v2260 = vld [vmem:[%s1545 + $0x60] sm:$0xe]
      %v2261 = vld [vmem:[%s1545 + $0x6c] sm:$0xe]
      %v2292 = vrot.slane %v2252, 5
      %v2293 = vrot.slane %v2292, 4
      %v2294 = vrot.slane %v1785, 5
      %v2295 = vsel %vm1276, %v2293, %v2294
      %v2296 = vrot.slane %v2294, 4
      %v2297 = vrot.slane %v1786, 5
      %v2298 = vsel %vm1276, %v2296, %v2297
      %v2299 = vrot.slane %v2253, 5
      %v2300 = vrot.slane %v2299, 4
      %v2301 = vrot.slane %v1788, 5
      %v2302 = vsel %vm1276, %v2300, %v2301
      %v2303 = vrot.slane %v2301, 4
      %v2304 = vrot.slane %v1789, 5
      %v2305 = vsel %vm1276, %v2303, %v2304
      %v2306 = vrot.slane %v2254, 5
      %v2307 = vrot.slane %v2306, 4
      %v2308 = vrot.slane %v1791, 5
      %v2309 = vsel %vm1276, %v2307, %v2308
      %v2310 = vrot.slane %v2308, 4
      %v2311 = vrot.slane %v1792, 5
      %v2312 = vsel %vm1276, %v2310, %v2311
      %v2313 = vrot.slane %v2255, 5
      %v2314 = vrot.slane %v2313, 4
      %v2315 = vrot.slane %v1794, 5
      %v2316 = vsel %vm1276, %v2314, %v2315
      %v2317 = vrot.slane %v2315, 4
      %v2318 = vrot.slane %v1795, 5
      %v2319 = vsel %vm1276, %v2317, %v2318
      %v2320 = vrot.slane %v2256, 5
      %v2321 = vrot.slane %v2320, 4
      %v2322 = vrot.slane %v1797, 5
      %v2323 = vsel %vm1276, %v2321, %v2322
      %v2324 = vrot.slane %v2322, 4
      %v2325 = vrot.slane %v1798, 5
      %v2326 = vsel %vm1276, %v2324, %v2325
      %v2327 = vrot.slane %v2257, 5
      %v2328 = vrot.slane %v2327, 4
      %v2329 = vrot.slane %v1800, 5
      %v2330 = vsel %vm1276, %v2328, %v2329
      %v2331 = vrot.slane %v2329, 4
      %v2332 = vrot.slane %v1801, 5
      %v2333 = vsel %vm1276, %v2331, %v2332
      %v2334 = vrot.slane %v2258, 5
      %v2335 = vrot.slane %v2334, 4
      %v2336 = vrot.slane %v1803, 5
      %v2337 = vsel %vm1276, %v2335, %v2336
      %v2338 = vrot.slane %v2336, 4
      %v2339 = vrot.slane %v1804, 5
      %v2340 = vsel %vm1276, %v2338, %v2339
      %v2341 = vrot.slane %v2259, 5
      %v2342 = vrot.slane %v2341, 4
      %v2343 = vrot.slane %v1806, 5
      %v2344 = vsel %vm1276, %v2342, %v2343
      %v2345 = vrot.slane %v2343, 4
      %v2346 = vrot.slane %v1807, 5
      %v2347 = vsel %vm1276, %v2345, %v2346
      %v2348 = vrot.slane %v2260, 5
      %v2349 = vrot.slane %v2348, 4
      %v2350 = vrot.slane %v1809, 5
      %v2351 = vsel %vm1276, %v2349, %v2350
      %v2352 = vrot.slane %v2350, 4
      %v2353 = vrot.slane %v1810, 5
      %v2354 = vsel %vm1276, %v2352, %v2353
      %v2355 = vrot.slane %v2261, 5
      %v2356 = vrot.slane %v2355, 4
      %v2357 = vrot.slane %v1812, 5
      %v2358 = vsel %vm1276, %v2356, %v2357
      %v2359 = vrot.slane %v2357, 4
      %v2360 = vrot.slane %v1813, 5
      %v2361 = vsel %vm1276, %v2359, %v2360
      %s2362 = scalar_lea.vmem %s5, 10
      %v2363 = vld [vmem:[%s2362] sm:$0x3]
      %v2364 = vunpack.c.l.b16 %v2295
      %v2365 = vunpack.c.l.b16 %v2298
      %v2366 = vunpack.c.l.b16 %v2302
      %v2367 = vunpack.c.l.b16 %v2305
      %v2368 = vunpack.c.l.b16 %v2309
      %v2369 = vunpack.c.l.b16 %v2312
      %v2370 = vunpack.c.l.b16 %v2316
      %v2371 = vunpack.c.l.b16 %v2319
      %v2372 = vunpack.c.l.b16 %v2323
      %v2373 = vunpack.c.l.b16 %v2326
      %v2374 = vunpack.c.l.b16 %v2330
      %v2375 = vunpack.c.l.b16 %v2333
      %v2376 = vunpack.c.l.b16 %v2337
      %v2377 = vunpack.c.l.b16 %v2340
      %v2378 = vunpack.c.l.b16 %v2344
      %v2379 = vunpack.c.l.b16 %v2347
      %v2380 = vunpack.c.l.b16 %v2351
      %v2381 = vunpack.c.l.b16 %v2354
      %v2382 = vunpack.c.l.b16 %v2358
      %v2383 = vunpack.c.l.b16 %v2361
      %v2384 = vpack.c.b16 %v2365, %v2364
      %v2385 = vpack.c.b16 %v2367, %v2366
      %v2386 = vpack.c.b16 %v2369, %v2368
      %v2387 = vpack.c.b16 %v2371, %v2370
      %v2388 = vpack.c.b16 %v2373, %v2372
      %v2389 = vpack.c.b16 %v2375, %v2374
      %v2390 = vpack.c.b16 %v2377, %v2376
      %v2391 = vpack.c.b16 %v2379, %v2378
      %v2392 = vpack.c.b16 %v2381, %v2380
      %v2393 = vpack.c.b16 %v2383, %v2382
      %v2395 = vsel %vm897, %v2384, 0
      %v2398 = vsel %vm897, %v2385, 0
      %v2401 = vsel %vm897, %v2386, 0
      %v2404 = vsel %vm897, %v2387, 0
      %v2407 = vsel %vm897, %v2388, 0
      %v2410 = vsel %vm897, %v2389, 0
      %v2413 = vsel %vm897, %v2390, 0
      %v2416 = vsel %vm897, %v2391, 0
      %v2419 = vsel %vm897, %v2392, 0
      %v2422 = vsel %vm897, %v2393, 0
      %v2425 = vand.u32 %v2363, %v931
      %2427 = vmatprep.subr.bf16.mxu0 0
      %2428 = vmatpush1.bf16.msra.mxu0 %v2425
      %2429 = vmatprep.subr.bf16.mxu0 0
      %2430 = vmatpush1.bf16.msra.mxu0 0
      %2431 = vmatprep.subr.bf16.mxu0 0
      %2432 = vmatpush1.bf16.msra.mxu0 0
      %2433 = vmatprep.subr.bf16.mxu0 0
      %2434 = vmatpush1.bf16.msra.mxu0 0
      %2435 = vmatprep.subr.bf16.mxu0 0
      %2436 = vmatpush1.bf16.msra.mxu0 0
      %2437 = vmatprep.subr.bf16.mxu0 0
      %2438 = vmatpush1.bf16.msra.mxu0 0
      %2439 = vmatprep.subr.bf16.mxu0 0
      %2440 = vmatpush1.bf16.msra.mxu0 0
      %2441 = vmatprep.subr.bf16.mxu0 0
      %2442 = vmatpush1.bf16.msra.mxu0 0
      %2443 = vmatprep.subr.bf16.mxu0 0
      %2444 = vmatpush1.bf16.msra.mxu0 0
      %2445 = vmatprep.subr.bf16.mxu0 0
      %2446 = vmatpush1.bf16.msra.mxu0 0
      %2447 = vmatprep.subr.bf16.mxu0 0
      %2448 = vmatpush1.bf16.msra.mxu0 0
      %2449 = vmatprep.subr.bf16.mxu0 0
      %2450 = vmatpush1.bf16.msra.mxu0 0
      %2451 = vmatprep.subr.bf16.mxu0 0
      %2452 = vmatpush1.bf16.msra.mxu0 0
      %2453 = vmatprep.subr.bf16.mxu0 0
      %2454 = vmatpush1.bf16.msra.mxu0 0
      %2455 = vmatprep.subr.bf16.mxu0 0
      %2456 = vmatpush1.bf16.msra.mxu0 0
      %2457 = vmatprep.subr.bf16.mxu0 0
      %2458 = vmatpush1.bf16.msra.mxu0 0
      %2459 = vmatprep.mubr.bf16.mxu0 0
      %2460 = vmatmul.mubr.bf16.gmra.mrb[0].mxu0 %v2395
      %v2461 = vpop.f32.mrb[0].mxu0
      %v2462 = vadd.f32 0.0, %v2461
      %v2463 = vpop.f32.mrb[0].mxu0
      %v2464 = vpop.f32.mrb[0].mxu0
      %v2465 = vadd.f32 0.0, %v2464
      %v2466 = vpop.f32.mrb[0].mxu0
      %2467 = vmatprep.mubr.bf16.mxu0 0
      %2468 = vmatmul.mubr.bf16.gmra.mrb[0].mxu0 %v2398
      %v2469 = vpop.f32.mrb[0].mxu0
      %v2470 = vadd.f32 0.0, %v2469
      %v2471 = vpop.f32.mrb[0].mxu0
      %v2472 = vpop.f32.mrb[0].mxu0
      %v2473 = vadd.f32 0.0, %v2472
      %v2474 = vpop.f32.mrb[0].mxu0
      %2475 = vmatprep.mubr.bf16.mxu0 0
      %2476 = vmatmul.mubr.bf16.gmra.mrb[0].mxu0 %v2401
      %v2477 = vpop.f32.mrb[0].mxu0
      %v2478 = vadd.f32 0.0, %v2477
      %v2479 = vpop.f32.mrb[0].mxu0
      %v2480 = vpop.f32.mrb[0].mxu0
      %v2481 = vadd.f32 0.0, %v2480
      %v2482 = vpop.f32.mrb[0].mxu0
      %2483 = vmatprep.mubr.bf16.mxu0 0
      %2484 = vmatmul.mubr.bf16.gmra.mrb[0].mxu0 %v2404
      %v2485 = vpop.f32.mrb[0].mxu0
      %v2486 = vadd.f32 0.0, %v2485
      %v2487 = vpop.f32.mrb[0].mxu0
      %v2488 = vpop.f32.mrb[0].mxu0
      %v2489 = vadd.f32 0.0, %v2488
      %v2490 = vpop.f32.mrb[0].mxu0
      %2491 = vmatprep.mubr.bf16.mxu0 0
      %2492 = vmatmul.mubr.bf16.gmra.mrb[0].mxu0 %v2407
      %v2493 = vpop.f32.mrb[0].mxu0
      %v2494 = vadd.f32 0.0, %v2493
      %v2495 = vpop.f32.mrb[0].mxu0
      %v2496 = vpop.f32.mrb[0].mxu0
      %v2497 = vadd.f32 0.0, %v2496
      %v2498 = vpop.f32.mrb[0].mxu0
      %2499 = vmatprep.mubr.bf16.mxu0 0
      %2500 = vmatmul.mubr.bf16.gmra.mrb[0].mxu0 %v2410
      %v2501 = vpop.f32.mrb[0].mxu0
      %v2502 = vadd.f32 0.0, %v2501
      %v2503 = vpop.f32.mrb[0].mxu0
      %v2504 = vpop.f32.mrb[0].mxu0
      %v2505 = vadd.f32 0.0, %v2504
      %v2506 = vpop.f32.mrb[0].mxu0
      %2507 = vmatprep.mubr.bf16.mxu0 0
      %2508 = vmatmul.mubr.bf16.gmra.mrb[0].mxu0 %v2413
      %v2509 = vpop.f32.mrb[0].mxu0
      %v2510 = vadd.f32 0.0, %v2509
      %v2511 = vpop.f32.mrb[0].mxu0
      %v2512 = vpop.f32.mrb[0].mxu0
      %v2513 = vadd.f32 0.0, %v2512
      %v2514 = vpop.f32.mrb[0].mxu0
      %2515 = vmatprep.mubr.bf16.mxu0 0
      %2516 = vmatmul.mubr.bf16.gmra.mrb[0].mxu0 %v2416
      %v2517 = vpop.f32.mrb[0].mxu0
      %v2518 = vadd.f32 0.0, %v2517
      %v2519 = vpop.f32.mrb[0].mxu0
      %v2520 = vpop.f32.mrb[0].mxu0
      %v2521 = vadd.f32 0.0, %v2520
      %v2522 = vpop.f32.mrb[0].mxu0
      %2523 = vmatprep.mubr.bf16.mxu0 0
      %2524 = vmatmul.mubr.bf16.gmra.mrb[0].mxu0 %v2419
      %v2525 = vpop.f32.mrb[0].mxu0
      %v2526 = vadd.f32 0.0, %v2525
      %v2527 = vpop.f32.mrb[0].mxu0
      %v2528 = vpop.f32.mrb[0].mxu0
      %v2529 = vadd.f32 0.0, %v2528
      %v2530 = vpop.f32.mrb[0].mxu0
      %2531 = vmatprep.mubr.bf16.mxu0 0
      %2532 = vmatmul.mubr.bf16.gmra.mrb[0].mxu0 %v2422
      %v2533 = vpop.f32.mrb[0].mxu0
      %v2534 = vadd.f32 0.0, %v2533
      %v2535 = vpop.f32.mrb[0].mxu0
      %v2536 = vpop.f32.mrb[0].mxu0
      %v2537 = vadd.f32 0.0, %v2536
      %v2538 = vpop.f32.mrb[0].mxu0
      %2539 = vdwg.mxu0
      %v2540 = vadd.f32 %v2232, %v2462
      %v2541 = vadd.f32 %v2233, %v2465
      %v2542 = vadd.f32 %v2234, %v2470
      %v2543 = vadd.f32 %v2235, %v2473
      %v2544 = vadd.f32 %v2236, %v2478
      %v2545 = vadd.f32 %v2237, %v2481
      %v2546 = vadd.f32 %v2238, %v2486
      %v2547 = vadd.f32 %v2239, %v2489
      %v2548 = vadd.f32 %v2240, %v2494
      %v2549 = vadd.f32 %v2241, %v2497
      %v2550 = vadd.f32 %v2242, %v2502
      %v2551 = vadd.f32 %v2243, %v2505
      %v2552 = vadd.f32 %v2244, %v2510
      %v2553 = vadd.f32 %v2245, %v2513
      %v2554 = vadd.f32 %v2246, %v2518
      %v2555 = vadd.f32 %v2247, %v2521
      %v2556 = vadd.f32 %v2248, %v2526
      %v2557 = vadd.f32 %v2249, %v2529
      %v2558 = vadd.f32 %v2250, %v2534
      %v2559 = vadd.f32 %v2251, %v2537
      %s2560 = scalar_lea.vmem [#allocation2], 24
      %v2561 = vld [vmem:[%s2560] sm:$0xf]
      %v2562 = vld [vmem:[%s2560 + $0x4] sm:$0xf]
      %v2563 = vld [vmem:[%s2560 + $0xc] sm:$0xf]
      %v2564 = vld [vmem:[%s2560 + $0x10] sm:$0xf]
      %v2565 = vld [vmem:[%s2560 + $0x18] sm:$0xf]
      %v2566 = vld [vmem:[%s2560 + $0x1c] sm:$0xf]
      %v2567 = vld [vmem:[%s2560 + $0x24] sm:$0xf]
      %v2568 = vld [vmem:[%s2560 + $0x28] sm:$0xf]
      %v2569 = vld [vmem:[%s2560 + $0x30] sm:$0xf]
      %v2570 = vld [vmem:[%s2560 + $0x34] sm:$0xf]
      %v2571 = vld [vmem:[%s2560 + $0x3c] sm:$0xf]
      %v2572 = vld [vmem:[%s2560 + $0x40] sm:$0xf]
      %v2573 = vld [vmem:[%s2560 + $0x48] sm:$0xf]
      %v2574 = vld [vmem:[%s2560 + $0x4c] sm:$0xf]
      %v2575 = vld [vmem:[%s2560 + $0x54] sm:$0xf]
      %v2576 = vld [vmem:[%s2560 + $0x58] sm:$0xf]
      %v2577 = vld [vmem:[%s2560 + $0x60] sm:$0xf]
      %v2578 = vld [vmem:[%s2560 + $0x64] sm:$0xf]
      %v2579 = vld [vmem:[%s2560 + $0x6c] sm:$0xf]
      %v2580 = vld [vmem:[%s2560 + $0x70] sm:$0xf]
      %s2581 = scalar_lea.vmem %s5, 12
      %v2582 = vld [vmem:[%s2581] sm:$0x3]
      %v2603 = vunpack.c.l.b16 %v2561
      %v2604 = vunpack.c.l.b16 %v2562
      %v2605 = vunpack.c.l.b16 %v2563
      %v2606 = vunpack.c.l.b16 %v2564
      %v2607 = vunpack.c.l.b16 %v2565
      %v2608 = vunpack.c.l.b16 %v2566
      %v2609 = vunpack.c.l.b16 %v2567
      %v2610 = vunpack.c.l.b16 %v2568
      %v2611 = vunpack.c.l.b16 %v2569
      %v2612 = vunpack.c.l.b16 %v2570
      %v2613 = vunpack.c.l.b16 %v2571
      %v2614 = vunpack.c.l.b16 %v2572
      %v2615 = vunpack.c.l.b16 %v2573
      %v2616 = vunpack.c.l.b16 %v2574
      %v2617 = vunpack.c.l.b16 %v2575
      %v2618 = vunpack.c.l.b16 %v2576
      %v2619 = vunpack.c.l.b16 %v2577
      %v2620 = vunpack.c.l.b16 %v2578
      %v2621 = vunpack.c.l.b16 %v2579
      %v2622 = vunpack.c.l.b16 %v2580
      %v2623 = vpack.c.b16 %v2604, %v2603
      %v2624 = vpack.c.b16 %v2606, %v2605
      %v2625 = vpack.c.b16 %v2608, %v2607
      %v2626 = vpack.c.b16 %v2610, %v2609
      %v2627 = vpack.c.b16 %v2612, %v2611
      %v2628 = vpack.c.b16 %v2614, %v2613
      %v2629 = vpack.c.b16 %v2616, %v2615
      %v2630 = vpack.c.b16 %v2618, %v2617
      %v2631 = vpack.c.b16 %v2620, %v2619
      %v2632 = vpack.c.b16 %v2622, %v2621
      %v2634 = vsel %vm897, %v2623, 0
      %v2637 = vsel %vm897, %v2624, 0
      %v2640 = vsel %vm897, %v2625, 0
      %v2643 = vsel %vm897, %v2626, 0
      %v2646 = vsel %vm897, %v2627, 0
      %v2649 = vsel %vm897, %v2628, 0
      %v2652 = vsel %vm897, %v2629, 0
      %v2655 = vsel %vm897, %v2630, 0
      %v2658 = vsel %vm897, %v2631, 0
      %v2661 = vsel %vm897, %v2632, 0
      %v2664 = vand.u32 %v2582, %v931
      %2666 = vmatprep.subr.bf16.mxu0 0
      %2667 = vmatpush1.bf16.msra.mxu0 %v2664
      %2668 = vmatprep.subr.bf16.mxu0 0
      %2669 = vmatpush1.bf16.msra.mxu0 0
      %2670 = vmatprep.subr.bf16.mxu0 0
      %2671 = vmatpush1.bf16.msra.mxu0 0
      %2672 = vmatprep.subr.bf16.mxu0 0
      %2673 = vmatpush1.bf16.msra.mxu0 0
      %2674 = vmatprep.subr.bf16.mxu0 0
      %2675 = vmatpush1.bf16.msra.mxu0 0
      %2676 = vmatprep.subr.bf16.mxu0 0
      %2677 = vmatpush1.bf16.msra.mxu0 0
      %2678 = vmatprep.subr.bf16.mxu0 0
      %2679 = vmatpush1.bf16.msra.mxu0 0
      %2680 = vmatprep.subr.bf16.mxu0 0
      %2681 = vmatpush1.bf16.msra.mxu0 0
      %2682 = vmatprep.subr.bf16.mxu0 0
      %2683 = vmatpush1.bf16.msra.mxu0 0
      %2684 = vmatprep.subr.bf16.mxu0 0
      %2685 = vmatpush1.bf16.msra.mxu0 0
      %2686 = vmatprep.subr.bf16.mxu0 0
      %2687 = vmatpush1.bf16.msra.mxu0 0
      %2688 = vmatprep.subr.bf16.mxu0 0
      %2689 = vmatpush1.bf16.msra.mxu0 0
      %2690 = vmatprep.subr.bf16.mxu0 0
      %2691 = vmatpush1.bf16.msra.mxu0 0
      %2692 = vmatprep.subr.bf16.mxu0 0
      %2693 = vmatpush1.bf16.msra.mxu0 0
      %2694 = vmatprep.subr.bf16.mxu0 0
      %2695 = vmatpush1.bf16.msra.mxu0 0
      %2696 = vmatprep.subr.bf16.mxu0 0
      %2697 = vmatpush1.bf16.msra.mxu0 0
      %2698 = vmatprep.mubr.bf16.mxu0 0
      %2699 = vmatmul.mubr.bf16.gmra.mrb[0].mxu0 %v2634
      %v2700 = vpop.f32.mrb[0].mxu0
      %v2701 = vadd.f32 0.0, %v2700
      %v2702 = vpop.f32.mrb[0].mxu0
      %v2703 = vpop.f32.mrb[0].mxu0
      %v2704 = vadd.f32 0.0, %v2703
      %v2705 = vpop.f32.mrb[0].mxu0
      %2706 = vmatprep.mubr.bf16.mxu0 0
      %2707 = vmatmul.mubr.bf16.gmra.mrb[0].mxu0 %v2637
      %v2708 = vpop.f32.mrb[0].mxu0
      %v2709 = vadd.f32 0.0, %v2708
      %v2710 = vpop.f32.mrb[0].mxu0
      %v2711 = vpop.f32.mrb[0].mxu0
      %v2712 = vadd.f32 0.0, %v2711
      %v2713 = vpop.f32.mrb[0].mxu0
      %2714 = vmatprep.mubr.bf16.mxu0 0
      %2715 = vmatmul.mubr.bf16.gmra.mrb[0].mxu0 %v2640
      %v2716 = vpop.f32.mrb[0].mxu0
      %v2717 = vadd.f32 0.0, %v2716
      %v2718 = vpop.f32.mrb[0].mxu0
      %v2719 = vpop.f32.mrb[0].mxu0
      %v2720 = vadd.f32 0.0, %v2719
      %v2721 = vpop.f32.mrb[0].mxu0
      %2722 = vmatprep.mubr.bf16.mxu0 0
      %2723 = vmatmul.mubr.bf16.gmra.mrb[0].mxu0 %v2643
      %v2724 = vpop.f32.mrb[0].mxu0
      %v2725 = vadd.f32 0.0, %v2724
      %v2726 = vpop.f32.mrb[0].mxu0
      %v2727 = vpop.f32.mrb[0].mxu0
      %v2728 = vadd.f32 0.0, %v2727
      %v2729 = vpop.f32.mrb[0].mxu0
      %2730 = vmatprep.mubr.bf16.mxu0 0
      %2731 = vmatmul.mubr.bf16.gmra.mrb[0].mxu0 %v2646
      %v2732 = vpop.f32.mrb[0].mxu0
      %v2733 = vadd.f32 0.0, %v2732
      %v2734 = vpop.f32.mrb[0].mxu0
      %v2735 = vpop.f32.mrb[0].mxu0
      %v2736 = vadd.f32 0.0, %v2735
      %v2737 = vpop.f32.mrb[0].mxu0
      %2738 = vmatprep.mubr.bf16.mxu0 0
      %2739 = vmatmul.mubr.bf16.gmra.mrb[0].mxu0 %v2649
      %v2740 = vpop.f32.mrb[0].mxu0
      %v2741 = vadd.f32 0.0, %v2740
      %v2742 = vpop.f32.mrb[0].mxu0
      %v2743 = vpop.f32.mrb[0].mxu0
      %v2744 = vadd.f32 0.0, %v2743
      %v2745 = vpop.f32.mrb[0].mxu0
      %2746 = vmatprep.mubr.bf16.mxu0 0
      %2747 = vmatmul.mubr.bf16.gmra.mrb[0].mxu0 %v2652
      %v2748 = vpop.f32.mrb[0].mxu0
      %v2749 = vadd.f32 0.0, %v2748
      %v2750 = vpop.f32.mrb[0].mxu0
      %v2751 = vpop.f32.mrb[0].mxu0
      %v2752 = vadd.f32 0.0, %v2751
      %v2753 = vpop.f32.mrb[0].mxu0
      %2754 = vmatprep.mubr.bf16.mxu0 0
      %2755 = vmatmul.mubr.bf16.gmra.mrb[0].mxu0 %v2655
      %v2756 = vpop.f32.mrb[0].mxu0
      %v2757 = vadd.f32 0.0, %v2756
      %v2758 = vpop.f32.mrb[0].mxu0
      %v2759 = vpop.f32.mrb[0].mxu0
      %v2760 = vadd.f32 0.0, %v2759
      %v2761 = vpop.f32.mrb[0].mxu0
      %2762 = vmatprep.mubr.bf16.mxu0 0
      %2763 = vmatmul.mubr.bf16.gmra.mrb[0].mxu0 %v2658
      %v2764 = vpop.f32.mrb[0].mxu0
      %v2765 = vadd.f32 0.0, %v2764
      %v2766 = vpop.f32.mrb[0].mxu0
      %v2767 = vpop.f32.mrb[0].mxu0
      %v2768 = vadd.f32 0.0, %v2767
      %v2769 = vpop.f32.mrb[0].mxu0
      %2770 = vmatprep.mubr.bf16.mxu0 0
      %2771 = vmatmul.mubr.bf16.gmra.mrb[0].mxu0 %v2661
      %v2772 = vpop.f32.mrb[0].mxu0
      %v2773 = vadd.f32 0.0, %v2772
      %v2774 = vpop.f32.mrb[0].mxu0
      %v2775 = vpop.f32.mrb[0].mxu0
      %v2776 = vadd.f32 0.0, %v2775
      %v2777 = vpop.f32.mrb[0].mxu0
      %2778 = vdwg.mxu0
      %v2779 = vadd.f32 %v2540, %v2701
      %v2780 = vadd.f32 %v2541, %v2704
      %v2781 = vadd.f32 %v2542, %v2709
      %v2782 = vadd.f32 %v2543, %v2712
      %v2783 = vadd.f32 %v2544, %v2717
      %v2784 = vadd.f32 %v2545, %v2720
      %v2785 = vadd.f32 %v2546, %v2725
      %v2786 = vadd.f32 %v2547, %v2728
      %v2787 = vadd.f32 %v2548, %v2733
      %v2788 = vadd.f32 %v2549, %v2736
      %v2789 = vadd.f32 %v2550, %v2741
      %v2790 = vadd.f32 %v2551, %v2744
      %v2791 = vadd.f32 %v2552, %v2749
      %v2792 = vadd.f32 %v2553, %v2752
      %v2793 = vadd.f32 %v2554, %v2757
      %v2794 = vadd.f32 %v2555, %v2760
      %v2795 = vadd.f32 %v2556, %v2765
      %v2796 = vadd.f32 %v2557, %v2768
      %v2797 = vadd.f32 %v2558, %v2773
      %v2798 = vadd.f32 %v2559, %v2776
      %v2799 = vld [vmem:[%s2560] sm:$0xf]
      %v2800 = vld [vmem:[%s2560 + $0x4] sm:$0xf]
      %v2801 = vld [vmem:[%s2560 + $0x8] sm:$0x1]
      %v2802 = vld [vmem:[%s2560 + $0xc] sm:$0xf]
      %v2803 = vld [vmem:[%s2560 + $0x10] sm:$0xf]
      %v2804 = vld [vmem:[%s2560 + $0x14] sm:$0x1]
      %v2805 = vld [vmem:[%s2560 + $0x18] sm:$0xf]
      %v2806 = vld [vmem:[%s2560 + $0x1c] sm:$0xf]
      %v2807 = vld [vmem:[%s2560 + $0x20] sm:$0x1]
      %v2808 = vld [vmem:[%s2560 + $0x24] sm:$0xf]
      %v2809 = vld [vmem:[%s2560 + $0x28] sm:$0xf]
      %v2810 = vld [vmem:[%s2560 + $0x2c] sm:$0x1]
      %v2811 = vld [vmem:[%s2560 + $0x30] sm:$0xf]
      %v2812 = vld [vmem:[%s2560 + $0x34] sm:$0xf]
      %v2813 = vld [vmem:[%s2560 + $0x38] sm:$0x1]
      %v2814 = vld [vmem:[%s2560 + $0x3c] sm:$0xf]
      %v2815 = vld [vmem:[%s2560 + $0x40] sm:$0xf]
      %v2816 = vld [vmem:[%s2560 + $0x44] sm:$0x1]
      %v2817 = vld [vmem:[%s2560 + $0x48] sm:$0xf]
      %v2818 = vld [vmem:[%s2560 + $0x4c] sm:$0xf]
      %v2819 = vld [vmem:[%s2560 + $0x50] sm:$0x1]
      %v2820 = vld [vmem:[%s2560 + $0x54] sm:$0xf]
      %v2821 = vld [vmem:[%s2560 + $0x58] sm:$0xf]
      %v2822 = vld [vmem:[%s2560 + $0x5c] sm:$0x1]
      %v2823 = vld [vmem:[%s2560 + $0x60] sm:$0xf]
      %v2824 = vld [vmem:[%s2560 + $0x64] sm:$0xf]
      %v2825 = vld [vmem:[%s2560 + $0x68] sm:$0x1]
      %v2826 = vld [vmem:[%s2560 + $0x6c] sm:$0xf]
      %v2827 = vld [vmem:[%s2560 + $0x70] sm:$0xf]
      %v2828 = vld [vmem:[%s2560 + $0x74] sm:$0x1]
      %v2830 = vshrl.u32 %v2799, 16
      %v2832 = vrot.slane %v2830, 4
      %v2833 = vshll.u32 %v2799, 16
      %v2835 = vrot.slane %v2833, 5
      %v2836 = vor.u32 %v2832, %v2835
      %v2837 = vrot.slane %v2836, 4
      %v2839 = vshll.u32 %v2800, 16
      %v2841 = vrot.slane %v2839, 5
      %v2842 = vsel %vm624, %v2837, %v2841
      %v2843 = vshrl.u32 %v2800, 16
      %v2845 = vrot.slane %v2843, 4
      %v2846 = vor.u32 %v2845, %v2841
      %v2847 = vrot.slane %v2846, 4
      %v2849 = vshll.u32 %v2801, 16
      %v2851 = vrot.slane %v2849, 5
      %v2852 = vsel %vm624, %v2847, %v2851
      %v2854 = vshrl.u32 %v2802, 16
      %v2856 = vrot.slane %v2854, 4
      %v2857 = vshll.u32 %v2802, 16
      %v2859 = vrot.slane %v2857, 5
      %v2860 = vor.u32 %v2856, %v2859
      %v2861 = vrot.slane %v2860, 4
      %v2863 = vshll.u32 %v2803, 16
      %v2865 = vrot.slane %v2863, 5
      %v2866 = vsel %vm624, %v2861, %v2865
      %v2867 = vshrl.u32 %v2803, 16
      %v2869 = vrot.slane %v2867, 4
      %v2870 = vor.u32 %v2869, %v2865
      %v2871 = vrot.slane %v2870, 4
      %v2873 = vshll.u32 %v2804, 16
      %v2875 = vrot.slane %v2873, 5
      %v2876 = vsel %vm624, %v2871, %v2875
      %v2878 = vshrl.u32 %v2805, 16
      %v2880 = vrot.slane %v2878, 4
      %v2881 = vshll.u32 %v2805, 16
      %v2883 = vrot.slane %v2881, 5
      %v2884 = vor.u32 %v2880, %v2883
      %v2885 = vrot.slane %v2884, 4
      %v2887 = vshll.u32 %v2806, 16
      %v2889 = vrot.slane %v2887, 5
      %v2890 = vsel %vm624, %v2885, %v2889
      %v2891 = vshrl.u32 %v2806, 16
      %v2893 = vrot.slane %v2891, 4
      %v2894 = vor.u32 %v2893, %v2889
      %v2895 = vrot.slane %v2894, 4
      %v2897 = vshll.u32 %v2807, 16
      %v2899 = vrot.slane %v2897, 5
      %v2900 = vsel %vm624, %v2895, %v2899
      %v2902 = vshrl.u32 %v2808, 16
      %v2904 = vrot.slane %v2902, 4
      %v2905 = vshll.u32 %v2808, 16
      %v2907 = vrot.slane %v2905, 5
      %v2908 = vor.u32 %v2904, %v2907
      %v2909 = vrot.slane %v2908, 4
      %v2911 = vshll.u32 %v2809, 16
      %v2913 = vrot.slane %v2911, 5
      %v2914 = vsel %vm624, %v2909, %v2913
      %v2915 = vshrl.u32 %v2809, 16
      %v2917 = vrot.slane %v2915, 4
      %v2918 = vor.u32 %v2917, %v2913
      %v2919 = vrot.slane %v2918, 4
      %v2921 = vshll.u32 %v2810, 16
      %v2923 = vrot.slane %v2921, 5
      %v2924 = vsel %vm624, %v2919, %v2923
      %v2926 = vshrl.u32 %v2811, 16
      %v2928 = vrot.slane %v2926, 4
      %v2929 = vshll.u32 %v2811, 16
      %v2931 = vrot.slane %v2929, 5
      %v2932 = vor.u32 %v2928, %v2931
      %v2933 = vrot.slane %v2932, 4
      %v2935 = vshll.u32 %v2812, 16
      %v2937 = vrot.slane %v2935, 5
      %v2938 = vsel %vm624, %v2933, %v2937
      %v2939 = vshrl.u32 %v2812, 16
      %v2941 = vrot.slane %v2939, 4
      %v2942 = vor.u32 %v2941, %v2937
      %v2943 = vrot.slane %v2942, 4
      %v2945 = vshll.u32 %v2813, 16
      %v2947 = vrot.slane %v2945, 5
      %v2948 = vsel %vm624, %v2943, %v2947
      %v2950 = vshrl.u32 %v2814, 16
      %v2952 = vrot.slane %v2950, 4
      %v2953 = vshll.u32 %v2814, 16
      %v2955 = vrot.slane %v2953, 5
      %v2956 = vor.u32 %v2952, %v2955
      %v2957 = vrot.slane %v2956, 4
      %v2959 = vshll.u32 %v2815, 16
      %v2961 = vrot.slane %v2959, 5
      %v2962 = vsel %vm624, %v2957, %v2961
      %v2963 = vshrl.u32 %v2815, 16
      %v2965 = vrot.slane %v2963, 4
      %v2966 = vor.u32 %v2965, %v2961
      %v2967 = vrot.slane %v2966, 4
      %v2969 = vshll.u32 %v2816, 16
      %v2971 = vrot.slane %v2969, 5
      %v2972 = vsel %vm624, %v2967, %v2971
      %v2974 = vshrl.u32 %v2817, 16
      %v2976 = vrot.slane %v2974, 4
      %v2977 = vshll.u32 %v2817, 16
      %v2979 = vrot.slane %v2977, 5
      %v2980 = vor.u32 %v2976, %v2979
      %v2981 = vrot.slane %v2980, 4
      %v2983 = vshll.u32 %v2818, 16
      %v2985 = vrot.slane %v2983, 5
      %v2986 = vsel %vm624, %v2981, %v2985
      %v2987 = vshrl.u32 %v2818, 16
      %v2989 = vrot.slane %v2987, 4
      %v2990 = vor.u32 %v2989, %v2985
      %v2991 = vrot.slane %v2990, 4
      %v2993 = vshll.u32 %v2819, 16
      %v2995 = vrot.slane %v2993, 5
      %v2996 = vsel %vm624, %v2991, %v2995
      %v2998 = vshrl.u32 %v2820, 16
      %v3000 = vrot.slane %v2998, 4
      %v3001 = vshll.u32 %v2820, 16
      %v3003 = vrot.slane %v3001, 5
      %v3004 = vor.u32 %v3000, %v3003
      %v3005 = vrot.slane %v3004, 4
      %v3007 = vshll.u32 %v2821, 16
      %v3009 = vrot.slane %v3007, 5
      %v3010 = vsel %vm624, %v3005, %v3009
      %v3011 = vshrl.u32 %v2821, 16
      %v3013 = vrot.slane %v3011, 4
      %v3014 = vor.u32 %v3013, %v3009
      %v3015 = vrot.slane %v3014, 4
      %v3017 = vshll.u32 %v2822, 16
      %v3019 = vrot.slane %v3017, 5
      %v3020 = vsel %vm624, %v3015, %v3019
      %v3022 = vshrl.u32 %v2823, 16
      %v3024 = vrot.slane %v3022, 4
      %v3025 = vshll.u32 %v2823, 16
      %v3027 = vrot.slane %v3025, 5
      %v3028 = vor.u32 %v3024, %v3027
      %v3029 = vrot.slane %v3028, 4
      %v3031 = vshll.u32 %v2824, 16
      %v3033 = vrot.slane %v3031, 5
      %v3034 = vsel %vm624, %v3029, %v3033
      %v3035 = vshrl.u32 %v2824, 16
      %v3037 = vrot.slane %v3035, 4
      %v3038 = vor.u32 %v3037, %v3033
      %v3039 = vrot.slane %v3038, 4
      %v3041 = vshll.u32 %v2825, 16
      %v3043 = vrot.slane %v3041, 5
      %v3044 = vsel %vm624, %v3039, %v3043
      %v3046 = vshrl.u32 %v2826, 16
      %v3048 = vrot.slane %v3046, 4
      %v3049 = vshll.u32 %v2826, 16
      %v3051 = vrot.slane %v3049, 5
      %v3052 = vor.u32 %v3048, %v3051
      %v3053 = vrot.slane %v3052, 4
      %v3055 = vshll.u32 %v2827, 16
      %v3057 = vrot.slane %v3055, 5
      %v3058 = vsel %vm624, %v3053, %v3057
      %v3059 = vshrl.u32 %v2827, 16
      %v3061 = vrot.slane %v3059, 4
      %v3062 = vor.u32 %v3061, %v3057
      %v3063 = vrot.slane %v3062, 4
      %v3065 = vshll.u32 %v2828, 16
      %v3067 = vrot.slane %v3065, 5
      %v3068 = vsel %vm624, %v3063, %v3067
      %s3069 = scalar_lea.vmem %s5, 14
      %v3070 = vld [vmem:[%s3069] sm:$0x3]
      %v3071 = vunpack.c.l.b16 %v2842
      %v3072 = vunpack.c.l.b16 %v2852
      %v3073 = vunpack.c.l.b16 %v2866
      %v3074 = vunpack.c.l.b16 %v2876
      %v3075 = vunpack.c.l.b16 %v2890
      %v3076 = vunpack.c.l.b16 %v2900
      %v3077 = vunpack.c.l.b16 %v2914
      %v3078 = vunpack.c.l.b16 %v2924
      %v3079 = vunpack.c.l.b16 %v2938
      %v3080 = vunpack.c.l.b16 %v2948
      %v3081 = vunpack.c.l.b16 %v2962
      %v3082 = vunpack.c.l.b16 %v2972
      %v3083 = vunpack.c.l.b16 %v2986
      %v3084 = vunpack.c.l.b16 %v2996
      %v3085 = vunpack.c.l.b16 %v3010
      %v3086 = vunpack.c.l.b16 %v3020
      %v3087 = vunpack.c.l.b16 %v3034
      %v3088 = vunpack.c.l.b16 %v3044
      %v3089 = vunpack.c.l.b16 %v3058
      %v3090 = vunpack.c.l.b16 %v3068
      %v3091 = vpack.c.b16 %v3072, %v3071
      %v3092 = vpack.c.b16 %v3074, %v3073
      %v3093 = vpack.c.b16 %v3076, %v3075
      %v3094 = vpack.c.b16 %v3078, %v3077
      %v3095 = vpack.c.b16 %v3080, %v3079
      %v3096 = vpack.c.b16 %v3082, %v3081
      %v3097 = vpack.c.b16 %v3084, %v3083
      %v3098 = vpack.c.b16 %v3086, %v3085
      %v3099 = vpack.c.b16 %v3088, %v3087
      %v3100 = vpack.c.b16 %v3090, %v3089
      %v3102 = vsel %vm897, %v3091, 0
      %v3105 = vsel %vm897, %v3092, 0
      %v3108 = vsel %vm897, %v3093, 0
      %v3111 = vsel %vm897, %v3094, 0
      %v3114 = vsel %vm897, %v3095, 0
      %v3117 = vsel %vm897, %v3096, 0
      %v3120 = vsel %vm897, %v3097, 0
      %v3123 = vsel %vm897, %v3098, 0
      %v3126 = vsel %vm897, %v3099, 0
      %v3129 = vsel %vm897, %v3100, 0
      %v3132 = vand.u32 %v3070, %v931
      %3134 = vmatprep.subr.bf16.mxu0 0
      %3135 = vmatpush1.bf16.msra.mxu0 %v3132
      %3136 = vmatprep.subr.bf16.mxu0 0
      %3137 = vmatpush1.bf16.msra.mxu0 0
      %3138 = vmatprep.subr.bf16.mxu0 0
      %3139 = vmatpush1.bf16.msra.mxu0 0
      %3140 = vmatprep.subr.bf16.mxu0 0
      %3141 = vmatpush1.bf16.msra.mxu0 0
      %3142 = vmatprep.subr.bf16.mxu0 0
      %3143 = vmatpush1.bf16.msra.mxu0 0
      %3144 = vmatprep.subr.bf16.mxu0 0
      %3145 = vmatpush1.bf16.msra.mxu0 0
      %3146 = vmatprep.subr.bf16.mxu0 0
      %3147 = vmatpush1.bf16.msra.mxu0 0
      %3148 = vmatprep.subr.bf16.mxu0 0
      %3149 = vmatpush1.bf16.msra.mxu0 0
      %3150 = vmatprep.subr.bf16.mxu0 0
      %3151 = vmatpush1.bf16.msra.mxu0 0
      %3152 = vmatprep.subr.bf16.mxu0 0
      %3153 = vmatpush1.bf16.msra.mxu0 0
      %3154 = vmatprep.subr.bf16.mxu0 0
      %3155 = vmatpush1.bf16.msra.mxu0 0
      %3156 = vmatprep.subr.bf16.mxu0 0
      %3157 = vmatpush1.bf16.msra.mxu0 0
      %3158 = vmatprep.subr.bf16.mxu0 0
      %3159 = vmatpush1.bf16.msra.mxu0 0
      %3160 = vmatprep.subr.bf16.mxu0 0
      %3161 = vmatpush1.bf16.msra.mxu0 0
      %3162 = vmatprep.subr.bf16.mxu0 0
      %3163 = vmatpush1.bf16.msra.mxu0 0
      %3164 = vmatprep.subr.bf16.mxu0 0
      %3165 = vmatpush1.bf16.msra.mxu0 0
      %3166 = vmatprep.mubr.bf16.mxu0 0
      %3167 = vmatmul.mubr.bf16.gmra.mrb[0].mxu0 %v3102
      %v3168 = vpop.f32.mrb[0].mxu0
      %v3169 = vadd.f32 0.0, %v3168
      %v3170 = vpop.f32.mrb[0].mxu0
      %v3171 = vpop.f32.mrb[0].mxu0
      %v3172 = vadd.f32 0.0, %v3171
      %v3173 = vpop.f32.mrb[0].mxu0
      %3174 = vmatprep.mubr.bf16.mxu0 0
      %3175 = vmatmul.mubr.bf16.gmra.mrb[0].mxu0 %v3105
      %v3176 = vpop.f32.mrb[0].mxu0
      %v3177 = vadd.f32 0.0, %v3176
      %v3178 = vpop.f32.mrb[0].mxu0
      %v3179 = vpop.f32.mrb[0].mxu0
      %v3180 = vadd.f32 0.0, %v3179
      %v3181 = vpop.f32.mrb[0].mxu0
      %3182 = vmatprep.mubr.bf16.mxu0 0
      %3183 = vmatmul.mubr.bf16.gmra.mrb[0].mxu0 %v3108
      %v3184 = vpop.f32.mrb[0].mxu0
      %v3185 = vadd.f32 0.0, %v3184
      %v3186 = vpop.f32.mrb[0].mxu0
      %v3187 = vpop.f32.mrb[0].mxu0
      %v3188 = vadd.f32 0.0, %v3187
      %v3189 = vpop.f32.mrb[0].mxu0
      %3190 = vmatprep.mubr.bf16.mxu0 0
      %3191 = vmatmul.mubr.bf16.gmra.mrb[0].mxu0 %v3111
      %v3192 = vpop.f32.mrb[0].mxu0
      %v3193 = vadd.f32 0.0, %v3192
      %v3194 = vpop.f32.mrb[0].mxu0
      %v3195 = vpop.f32.mrb[0].mxu0
      %v3196 = vadd.f32 0.0, %v3195
      %v3197 = vpop.f32.mrb[0].mxu0
      %3198 = vmatprep.mubr.bf16.mxu0 0
      %3199 = vmatmul.mubr.bf16.gmra.mrb[0].mxu0 %v3114
      %v3200 = vpop.f32.mrb[0].mxu0
      %v3201 = vadd.f32 0.0, %v3200
      %v3202 = vpop.f32.mrb[0].mxu0
      %v3203 = vpop.f32.mrb[0].mxu0
      %v3204 = vadd.f32 0.0, %v3203
      %v3205 = vpop.f32.mrb[0].mxu0
      %3206 = vmatprep.mubr.bf16.mxu0 0
      %3207 = vmatmul.mubr.bf16.gmra.mrb[0].mxu0 %v3117
      %v3208 = vpop.f32.mrb[0].mxu0
      %v3209 = vadd.f32 0.0, %v3208
      %v3210 = vpop.f32.mrb[0].mxu0
      %v3211 = vpop.f32.mrb[0].mxu0
      %v3212 = vadd.f32 0.0, %v3211
      %v3213 = vpop.f32.mrb[0].mxu0
      %3214 = vmatprep.mubr.bf16.mxu0 0
      %3215 = vmatmul.mubr.bf16.gmra.mrb[0].mxu0 %v3120
      %v3216 = vpop.f32.mrb[0].mxu0
      %v3217 = vadd.f32 0.0, %v3216
      %v3218 = vpop.f32.mrb[0].mxu0
      %v3219 = vpop.f32.mrb[0].mxu0
      %v3220 = vadd.f32 0.0, %v3219
      %v3221 = vpop.f32.mrb[0].mxu0
      %3222 = vmatprep.mubr.bf16.mxu0 0
      %3223 = vmatmul.mubr.bf16.gmra.mrb[0].mxu0 %v3123
      %v3224 = vpop.f32.mrb[0].mxu0
      %v3225 = vadd.f32 0.0, %v3224
      %v3226 = vpop.f32.mrb[0].mxu0
      %v3227 = vpop.f32.mrb[0].mxu0
      %v3228 = vadd.f32 0.0, %v3227
      %v3229 = vpop.f32.mrb[0].mxu0
      %3230 = vmatprep.mubr.bf16.mxu0 0
      %3231 = vmatmul.mubr.bf16.gmra.mrb[0].mxu0 %v3126
      %v3232 = vpop.f32.mrb[0].mxu0
      %v3233 = vadd.f32 0.0, %v3232
      %v3234 = vpop.f32.mrb[0].mxu0
      %v3235 = vpop.f32.mrb[0].mxu0
      %v3236 = vadd.f32 0.0, %v3235
      %v3237 = vpop.f32.mrb[0].mxu0
      %3238 = vmatprep.mubr.bf16.mxu0 0
      %3239 = vmatmul.mubr.bf16.gmra.mrb[0].mxu0 %v3129
      %v3240 = vpop.f32.mrb[0].mxu0
      %v3241 = vadd.f32 0.0, %v3240
      %v3242 = vpop.f32.mrb[0].mxu0
      %v3243 = vpop.f32.mrb[0].mxu0
      %v3244 = vadd.f32 0.0, %v3243
      %v3245 = vpop.f32.mrb[0].mxu0
      %3246 = vdwg.mxu0
      %v3247 = vadd.f32 %v2779, %v3169
      %v3248 = vadd.f32 %v2780, %v3172
      %v3249 = vadd.f32 %v2781, %v3177
      %v3250 = vadd.f32 %v2782, %v3180
      %v3251 = vadd.f32 %v2783, %v3185
      %v3252 = vadd.f32 %v2784, %v3188
      %v3253 = vadd.f32 %v2785, %v3193
      %v3254 = vadd.f32 %v2786, %v3196
      %v3255 = vadd.f32 %v2787, %v3201
      %v3256 = vadd.f32 %v2788, %v3204
      %v3257 = vadd.f32 %v2789, %v3209
      %v3258 = vadd.f32 %v2790, %v3212
      %v3259 = vadd.f32 %v2791, %v3217
      %v3260 = vadd.f32 %v2792, %v3220
      %v3261 = vadd.f32 %v2793, %v3225
      %v3262 = vadd.f32 %v2794, %v3228
      %v3263 = vadd.f32 %v2795, %v3233
      %v3264 = vadd.f32 %v2796, %v3236
      %v3265 = vadd.f32 %v2797, %v3241
      %v3266 = vadd.f32 %v2798, %v3244
      %v3267 = vld [vmem:[%s2560] sm:$0xe]
      %v3268 = vld [vmem:[%s2560 + $0xc] sm:$0xe]
      %v3269 = vld [vmem:[%s2560 + $0x18] sm:$0xe]
      %v3270 = vld [vmem:[%s2560 + $0x24] sm:$0xe]
      %v3271 = vld [vmem:[%s2560 + $0x30] sm:$0xe]
      %v3272 = vld [vmem:[%s2560 + $0x3c] sm:$0xe]
      %v3273 = vld [vmem:[%s2560 + $0x48] sm:$0xe]
      %v3274 = vld [vmem:[%s2560 + $0x54] sm:$0xe]
      %v3275 = vld [vmem:[%s2560 + $0x60] sm:$0xe]
      %v3276 = vld [vmem:[%s2560 + $0x6c] sm:$0xe]
      %v3307 = vrot.slane %v3267, 5
      %v3308 = vrot.slane %v3307, 4
      %v3309 = vrot.slane %v2800, 5
      %v3310 = vsel %vm1276, %v3308, %v3309
      %v3311 = vrot.slane %v3309, 4
      %v3312 = vrot.slane %v2801, 5
      %v3313 = vsel %vm1276, %v3311, %v3312
      %v3314 = vrot.slane %v3268, 5
      %v3315 = vrot.slane %v3314, 4
      %v3316 = vrot.slane %v2803, 5
      %v3317 = vsel %vm1276, %v3315, %v3316
      %v3318 = vrot.slane %v3316, 4
      %v3319 = vrot.slane %v2804, 5
      %v3320 = vsel %vm1276, %v3318, %v3319
      %v3321 = vrot.slane %v3269, 5
      %v3322 = vrot.slane %v3321, 4
      %v3323 = vrot.slane %v2806, 5
      %v3324 = vsel %vm1276, %v3322, %v3323
      %v3325 = vrot.slane %v3323, 4
      %v3326 = vrot.slane %v2807, 5
      %v3327 = vsel %vm1276, %v3325, %v3326
      %v3328 = vrot.slane %v3270, 5
      %v3329 = vrot.slane %v3328, 4
      %v3330 = vrot.slane %v2809, 5
      %v3331 = vsel %vm1276, %v3329, %v3330
      %v3332 = vrot.slane %v3330, 4
      %v3333 = vrot.slane %v2810, 5
      %v3334 = vsel %vm1276, %v3332, %v3333
      %v3335 = vrot.slane %v3271, 5
      %v3336 = vrot.slane %v3335, 4
      %v3337 = vrot.slane %v2812, 5
      %v3338 = vsel %vm1276, %v3336, %v3337
      %v3339 = vrot.slane %v3337, 4
      %v3340 = vrot.slane %v2813, 5
      %v3341 = vsel %vm1276, %v3339, %v3340
      %v3342 = vrot.slane %v3272, 5
      %v3343 = vrot.slane %v3342, 4
      %v3344 = vrot.slane %v2815, 5
      %v3345 = vsel %vm1276, %v3343, %v3344
      %v3346 = vrot.slane %v3344, 4
      %v3347 = vrot.slane %v2816, 5
      %v3348 = vsel %vm1276, %v3346, %v3347
      %v3349 = vrot.slane %v3273, 5
      %v3350 = vrot.slane %v3349, 4
      %v3351 = vrot.slane %v2818, 5
      %v3352 = vsel %vm1276, %v3350, %v3351
      %v3353 = vrot.slane %v3351, 4
      %v3354 = vrot.slane %v2819, 5
      %v3355 = vsel %vm1276, %v3353, %v3354
      %v3356 = vrot.slane %v3274, 5
      %v3357 = vrot.slane %v3356, 4
      %v3358 = vrot.slane %v2821, 5
      %v3359 = vsel %vm1276, %v3357, %v3358
      %v3360 = vrot.slane %v3358, 4
      %v3361 = vrot.slane %v2822, 5
      %v3362 = vsel %vm1276, %v3360, %v3361
      %v3363 = vrot.slane %v3275, 5
      %v3364 = vrot.slane %v3363, 4
      %v3365 = vrot.slane %v2824, 5
      %v3366 = vsel %vm1276, %v3364, %v3365
      %v3367 = vrot.slane %v3365, 4
      %v3368 = vrot.slane %v2825, 5
      %v3369 = vsel %vm1276, %v3367, %v3368
      %v3370 = vrot.slane %v3276, 5
      %v3371 = vrot.slane %v3370, 4
      %v3372 = vrot.slane %v2827, 5
      %v3373 = vsel %vm1276, %v3371, %v3372
      %v3374 = vrot.slane %v3372, 4
      %v3375 = vrot.slane %v2828, 5
      %v3376 = vsel %vm1276, %v3374, %v3375
      %s3377 = scalar_lea.vmem %s5, 16
      %v3378 = vld [vmem:[%s3377] sm:$0x3]
      %v3379 = vunpack.c.l.b16 %v3310
      %v3380 = vunpack.c.l.b16 %v3313
      %v3381 = vunpack.c.l.b16 %v3317
      %v3382 = vunpack.c.l.b16 %v3320
      %v3383 = vunpack.c.l.b16 %v3324
      %v3384 = vunpack.c.l.b16 %v3327
      %v3385 = vunpack.c.l.b16 %v3331
      %v3386 = vunpack.c.l.b16 %v3334
      %v3387 = vunpack.c.l.b16 %v3338
      %v3388 = vunpack.c.l.b16 %v3341
      %v3389 = vunpack.c.l.b16 %v3345
      %v3390 = vunpack.c.l.b16 %v3348
      %v3391 = vunpack.c.l.b16 %v3352
      %v3392 = vunpack.c.l.b16 %v3355
      %v3393 = vunpack.c.l.b16 %v3359
      %v3394 = vunpack.c.l.b16 %v3362
      %v3395 = vunpack.c.l.b16 %v3366
      %v3396 = vunpack.c.l.b16 %v3369
      %v3397 = vunpack.c.l.b16 %v3373
      %v3398 = vunpack.c.l.b16 %v3376
      %v3399 = vpack.c.b16 %v3380, %v3379
      %v3400 = vpack.c.b16 %v3382, %v3381
      %v3401 = vpack.c.b16 %v3384, %v3383
      %v3402 = vpack.c.b16 %v3386, %v3385
      %v3403 = vpack.c.b16 %v3388, %v3387
      %v3404 = vpack.c.b16 %v3390, %v3389
      %v3405 = vpack.c.b16 %v3392, %v3391
      %v3406 = vpack.c.b16 %v3394, %v3393
      %v3407 = vpack.c.b16 %v3396, %v3395
      %v3408 = vpack.c.b16 %v3398, %v3397
      %v3410 = vsel %vm897, %v3399, 0
      %v3413 = vsel %vm897, %v3400, 0
      %v3416 = vsel %vm897, %v3401, 0
      %v3419 = vsel %vm897, %v3402, 0
      %v3422 = vsel %vm897, %v3403, 0
      %v3425 = vsel %vm897, %v3404, 0
      %v3428 = vsel %vm897, %v3405, 0
      %v3431 = vsel %vm897, %v3406, 0
      %v3434 = vsel %vm897, %v3407, 0
      %v3437 = vsel %vm897, %v3408, 0
      %v3440 = vand.u32 %v3378, %v931
      %3442 = vmatprep.subr.bf16.mxu0 0
      %3443 = vmatpush1.bf16.msra.mxu0 %v3440
      %3444 = vmatprep.subr.bf16.mxu0 0
      %3445 = vmatpush1.bf16.msra.mxu0 0
      %3446 = vmatprep.subr.bf16.mxu0 0
      %3447 = vmatpush1.bf16.msra.mxu0 0
      %3448 = vmatprep.subr.bf16.mxu0 0
      %3449 = vmatpush1.bf16.msra.mxu0 0
      %3450 = vmatprep.subr.bf16.mxu0 0
      %3451 = vmatpush1.bf16.msra.mxu0 0
      %3452 = vmatprep.subr.bf16.mxu0 0
      %3453 = vmatpush1.bf16.msra.mxu0 0
      %3454 = vmatprep.subr.bf16.mxu0 0
      %3455 = vmatpush1.bf16.msra.mxu0 0
      %3456 = vmatprep.subr.bf16.mxu0 0
      %3457 = vmatpush1.bf16.msra.mxu0 0
      %3458 = vmatprep.subr.bf16.mxu0 0
      %3459 = vmatpush1.bf16.msra.mxu0 0
      %3460 = vmatprep.subr.bf16.mxu0 0
      %3461 = vmatpush1.bf16.msra.mxu0 0
      %3462 = vmatprep.subr.bf16.mxu0 0
      %3463 = vmatpush1.bf16.msra.mxu0 0
      %3464 = vmatprep.subr.bf16.mxu0 0
      %3465 = vmatpush1.bf16.msra.mxu0 0
      %3466 = vmatprep.subr.bf16.mxu0 0
      %3467 = vmatpush1.bf16.msra.mxu0 0
      %3468 = vmatprep.subr.bf16.mxu0 0
      %3469 = vmatpush1.bf16.msra.mxu0 0
      %3470 = vmatprep.subr.bf16.mxu0 0
      %3471 = vmatpush1.bf16.msra.mxu0 0
      %3472 = vmatprep.subr.bf16.mxu0 0
      %3473 = vmatpush1.bf16.msra.mxu0 0
      %3474 = vmatprep.mubr.bf16.mxu0 0
      %3475 = vmatmul.mubr.bf16.gmra.mrb[0].mxu0 %v3410
      %v3476 = vpop.f32.mrb[0].mxu0
      %v3477 = vadd.f32 0.0, %v3476
      %v3478 = vpop.f32.mrb[0].mxu0
      %v3479 = vpop.f32.mrb[0].mxu0
      %v3480 = vadd.f32 0.0, %v3479
      %v3481 = vpop.f32.mrb[0].mxu0
      %3482 = vmatprep.mubr.bf16.mxu0 0
      %3483 = vmatmul.mubr.bf16.gmra.mrb[0].mxu0 %v3413
      %v3484 = vpop.f32.mrb[0].mxu0
      %v3485 = vadd.f32 0.0, %v3484
      %v3486 = vpop.f32.mrb[0].mxu0
      %v3487 = vpop.f32.mrb[0].mxu0
      %v3488 = vadd.f32 0.0, %v3487
      %v3489 = vpop.f32.mrb[0].mxu0
      %3490 = vmatprep.mubr.bf16.mxu0 0
      %3491 = vmatmul.mubr.bf16.gmra.mrb[0].mxu0 %v3416
      %v3492 = vpop.f32.mrb[0].mxu0
      %v3493 = vadd.f32 0.0, %v3492
      %v3494 = vpop.f32.mrb[0].mxu0
      %v3495 = vpop.f32.mrb[0].mxu0
      %v3496 = vadd.f32 0.0, %v3495
      %v3497 = vpop.f32.mrb[0].mxu0
      %3498 = vmatprep.mubr.bf16.mxu0 0
      %3499 = vmatmul.mubr.bf16.gmra.mrb[0].mxu0 %v3419
      %v3500 = vpop.f32.mrb[0].mxu0
      %v3501 = vadd.f32 0.0, %v3500
      %v3502 = vpop.f32.mrb[0].mxu0
      %v3503 = vpop.f32.mrb[0].mxu0
      %v3504 = vadd.f32 0.0, %v3503
      %v3505 = vpop.f32.mrb[0].mxu0
      %3506 = vmatprep.mubr.bf16.mxu0 0
      %3507 = vmatmul.mubr.bf16.gmra.mrb[0].mxu0 %v3422
      %v3508 = vpop.f32.mrb[0].mxu0
      %v3509 = vadd.f32 0.0, %v3508
      %v3510 = vpop.f32.mrb[0].mxu0
      %v3511 = vpop.f32.mrb[0].mxu0
      %v3512 = vadd.f32 0.0, %v3511
      %v3513 = vpop.f32.mrb[0].mxu0
      %3514 = vmatprep.mubr.bf16.mxu0 0
      %3515 = vmatmul.mubr.bf16.gmra.mrb[0].mxu0 %v3425
      %v3516 = vpop.f32.mrb[0].mxu0
      %v3517 = vadd.f32 0.0, %v3516
      %v3518 = vpop.f32.mrb[0].mxu0
      %v3519 = vpop.f32.mrb[0].mxu0
      %v3520 = vadd.f32 0.0, %v3519
      %v3521 = vpop.f32.mrb[0].mxu0
      %3522 = vmatprep.mubr.bf16.mxu0 0
      %3523 = vmatmul.mubr.bf16.gmra.mrb[0].mxu0 %v3428
      %v3524 = vpop.f32.mrb[0].mxu0
      %v3525 = vadd.f32 0.0, %v3524
      %v3526 = vpop.f32.mrb[0].mxu0
      %v3527 = vpop.f32.mrb[0].mxu0
      %v3528 = vadd.f32 0.0, %v3527
      %v3529 = vpop.f32.mrb[0].mxu0
      %3530 = vmatprep.mubr.bf16.mxu0 0
      %3531 = vmatmul.mubr.bf16.gmra.mrb[0].mxu0 %v3431
      %v3532 = vpop.f32.mrb[0].mxu0
      %v3533 = vadd.f32 0.0, %v3532
      %v3534 = vpop.f32.mrb[0].mxu0
      %v3535 = vpop.f32.mrb[0].mxu0
      %v3536 = vadd.f32 0.0, %v3535
      %v3537 = vpop.f32.mrb[0].mxu0
      %3538 = vmatprep.mubr.bf16.mxu0 0
      %3539 = vmatmul.mubr.bf16.gmra.mrb[0].mxu0 %v3434
      %v3540 = vpop.f32.mrb[0].mxu0
      %v3541 = vadd.f32 0.0, %v3540
      %v3542 = vpop.f32.mrb[0].mxu0
      %v3543 = vpop.f32.mrb[0].mxu0
      %v3544 = vadd.f32 0.0, %v3543
      %v3545 = vpop.f32.mrb[0].mxu0
      %3546 = vmatprep.mubr.bf16.mxu0 0
      %3547 = vmatmul.mubr.bf16.gmra.mrb[0].mxu0 %v3437
      %v3548 = vpop.f32.mrb[0].mxu0
      %v3549 = vadd.f32 0.0, %v3548
      %v3550 = vpop.f32.mrb[0].mxu0
      %v3551 = vpop.f32.mrb[0].mxu0
      %v3552 = vadd.f32 0.0, %v3551
      %v3553 = vpop.f32.mrb[0].mxu0
      %3554 = vdwg.mxu0
      %v3555 = vadd.f32 %v3247, %v3477
      %v3556 = vadd.f32 %v3248, %v3480
      %v3557 = vadd.f32 %v3249, %v3485
      %v3558 = vadd.f32 %v3250, %v3488
      %v3559 = vadd.f32 %v3251, %v3493
      %v3560 = vadd.f32 %v3252, %v3496
      %v3561 = vadd.f32 %v3253, %v3501
      %v3562 = vadd.f32 %v3254, %v3504
      %v3563 = vadd.f32 %v3255, %v3509
      %v3564 = vadd.f32 %v3256, %v3512
      %v3565 = vadd.f32 %v3257, %v3517
      %v3566 = vadd.f32 %v3258, %v3520
      %v3567 = vadd.f32 %v3259, %v3525
      %v3568 = vadd.f32 %v3260, %v3528
      %v3569 = vadd.f32 %v3261, %v3533
      %v3570 = vadd.f32 %v3262, %v3536
      %v3571 = vadd.f32 %v3263, %v3541
      %v3572 = vadd.f32 %v3264, %v3544
      %v3573 = vadd.f32 %v3265, %v3549
      %v3574 = vadd.f32 %v3266, %v3552
      %v3575 = vld [vmem:[%s6] sm:$0x1]
      %v3577 = vlaneseq
      %v3578 = vshrl.u32 %v3577, 7
      %v3579 = vsub.s32 0, %v3578
      %v3580 = vrot.slane %v3575, %v3579
      %v3582 = vadd.f32 %v3555, %v3580
      %v3583 = vadd.f32 %v3556, %v3580
      %v3584 = vadd.f32 %v3557, %v3580
      %v3585 = vadd.f32 %v3558, %v3580
      %v3586 = vadd.f32 %v3559, %v3580
      %v3587 = vadd.f32 %v3560, %v3580
      %v3588 = vadd.f32 %v3561, %v3580
      %v3589 = vadd.f32 %v3562, %v3580
      %v3590 = vadd.f32 %v3563, %v3580
      %v3591 = vadd.f32 %v3564, %v3580
      %v3592 = vadd.f32 %v3565, %v3580
      %v3593 = vadd.f32 %v3566, %v3580
      %v3594 = vadd.f32 %v3567, %v3580
      %v3595 = vadd.f32 %v3568, %v3580
      %v3596 = vadd.f32 %v3569, %v3580
      %v3597 = vadd.f32 %v3570, %v3580
      %v3598 = vadd.f32 %v3571, %v3580
      %v3599 = vadd.f32 %v3572, %v3580
      %v3600 = vadd.f32 %v3573, %v3580
      %v3601 = vadd.f32 %v3574, %v3580
      %v3602 = vmax.f32 %v3582, 0.0
      %v3603 = vmax.f32 %v3583, 0.0
      %v3604 = vmax.f32 %v3584, 0.0
      %v3605 = vmax.f32 %v3585, 0.0
      %v3606 = vmax.f32 %v3586, 0.0
      %v3607 = vmax.f32 %v3587, 0.0
      %v3608 = vmax.f32 %v3588, 0.0
      %v3609 = vmax.f32 %v3589, 0.0
      %v3610 = vmax.f32 %v3590, 0.0
      %v3611 = vmax.f32 %v3591, 0.0
      %v3612 = vmax.f32 %v3592, 0.0
      %v3613 = vmax.f32 %v3593, 0.0
      %v3614 = vmax.f32 %v3594, 0.0
      %v3615 = vmax.f32 %v3595, 0.0
      %v3616 = vmax.f32 %v3596, 0.0
      %v3617 = vmax.f32 %v3597, 0.0
      %v3618 = vmax.f32 %v3598, 0.0
      %v3619 = vmax.f32 %v3599, 0.0
      %v3620 = vmax.f32 %v3600, 0.0
      %v3621 = vmax.f32 %v3601, 0.0
      %v3622 = vpack.c.bf16 %v3603, %v3602
      %v3623 = vpack.c.bf16 %v3605, %v3604
      %v3624 = vpack.c.bf16 %v3607, %v3606
      %v3625 = vpack.c.bf16 %v3609, %v3608
      %v3626 = vpack.c.bf16 %v3611, %v3610
      %v3627 = vpack.c.bf16 %v3613, %v3612
      %v3628 = vpack.c.bf16 %v3615, %v3614
      %v3629 = vpack.c.bf16 %v3617, %v3616
      %v3630 = vpack.c.bf16 %v3619, %v3618
      %v3631 = vpack.c.bf16 %v3621, %v3620
      %v3642 = vunpack.c.l.b16 %v3622
      %v3643 = vunpack.c.h.b16 %v3622
      %v3644 = vunpack.c.l.b16 %v3623
      %v3645 = vunpack.c.h.b16 %v3623
      %v3646 = vunpack.c.l.b16 %v3624
      %v3647 = vunpack.c.h.b16 %v3624
      %v3648 = vunpack.c.l.b16 %v3625
      %v3649 = vunpack.c.h.b16 %v3625
      %v3650 = vunpack.c.l.b16 %v3626
      %v3651 = vunpack.c.h.b16 %v3626
      %v3652 = vunpack.c.l.b16 %v3627
      %v3653 = vunpack.c.h.b16 %v3627
      %v3654 = vunpack.c.l.b16 %v3628
      %v3655 = vunpack.c.h.b16 %v3628
      %v3656 = vunpack.c.l.b16 %v3629
      %v3657 = vunpack.c.h.b16 %v3629
      %v3658 = vunpack.c.l.b16 %v3630
      %v3659 = vunpack.c.h.b16 %v3630
      %v3660 = vunpack.c.l.b16 %v3631
      %v3661 = vunpack.c.h.b16 %v3631
      %v3662 = vpack.c.b16 %v3642, %v3642
      %v3663 = vpack.c.b16 %v3643, %v3643
      %v3664 = vpack.c.b16 %v3644, %v3644
      %v3665 = vpack.c.b16 %v3645, %v3645
      %v3666 = vpack.c.b16 %v3646, %v3646
      %v3667 = vpack.c.b16 %v3647, %v3647
      %v3668 = vpack.c.b16 %v3648, %v3648
      %v3669 = vpack.c.b16 %v3649, %v3649
      %v3670 = vpack.c.b16 %v3650, %v3650
      %v3671 = vpack.c.b16 %v3651, %v3651
      %v3672 = vpack.c.b16 %v3652, %v3652
      %v3673 = vpack.c.b16 %v3653, %v3653
      %v3674 = vpack.c.b16 %v3654, %v3654
      %v3675 = vpack.c.b16 %v3655, %v3655
      %v3676 = vpack.c.b16 %v3656, %v3656
      %v3677 = vpack.c.b16 %v3657, %v3657
      %v3678 = vpack.c.b16 %v3658, %v3658
      %v3679 = vpack.c.b16 %v3659, %v3659
      %v3680 = vpack.c.b16 %v3660, %v3660
      %v3681 = vpack.c.b16 %v3661, %v3661
      %vm3682 = vsmask.f32 256
      %vm3683 = vsmask.f32 4368
      %vm3684 = vmor %vm3682, %vm3683
      %v3686 = vshrl.u32 %v3662, 16
      %v3688 = vrot.slane %v3686, 7
      %v3689 = vshll.u32 %v3662, 16
      %v3691 = vor.u32 %v3688, %v3689
      %v3692 = vrot.slane %v3688, 4
      %v3694 = vshrl.u32 %v3663, 16
      %v3696 = vrot.slane %v3694, 7
      %v3697 = vshll.u32 %v3663, 16
      %v3699 = vor.u32 %v3696, %v3697
      %v3700 = vsel %vm3684, %v3692, %v3699
      %v3701 = vrot.slane %v3696, 4
      %v3703 = vshrl.u32 %v3664, 16
      %v3705 = vrot.slane %v3703, 7
      %v3706 = vshll.u32 %v3664, 16
      %v3708 = vor.u32 %v3705, %v3706
      %v3709 = vrot.slane %v3705, 4
      %v3711 = vshrl.u32 %v3665, 16
      %v3713 = vrot.slane %v3711, 7
      %v3714 = vshll.u32 %v3665, 16
      %v3716 = vor.u32 %v3713, %v3714
      %v3717 = vsel %vm3684, %v3709, %v3716
      %v3718 = vrot.slane %v3713, 4
      %v3720 = vshrl.u32 %v3666, 16
      %v3722 = vrot.slane %v3720, 7
      %v3723 = vshll.u32 %v3666, 16
      %v3725 = vor.u32 %v3722, %v3723
      %v3726 = vrot.slane %v3722, 4
      %v3728 = vshrl.u32 %v3667, 16
      %v3730 = vrot.slane %v3728, 7
      %v3731 = vshll.u32 %v3667, 16
      %v3733 = vor.u32 %v3730, %v3731
      %v3734 = vsel %vm3684, %v3726, %v3733
      %v3735 = vrot.slane %v3730, 4
      %v3737 = vshrl.u32 %v3668, 16
      %v3739 = vrot.slane %v3737, 7
      %v3740 = vshll.u32 %v3668, 16
      %v3742 = vor.u32 %v3739, %v3740
      %v3743 = vrot.slane %v3739, 4
      %v3745 = vshrl.u32 %v3669, 16
      %v3747 = vrot.slane %v3745, 7
      %v3748 = vshll.u32 %v3669, 16
      %v3750 = vor.u32 %v3747, %v3748
      %v3751 = vsel %vm3684, %v3743, %v3750
      %v3752 = vrot.slane %v3747, 4
      %v3754 = vshrl.u32 %v3670, 16
      %v3756 = vrot.slane %v3754, 7
      %v3757 = vshll.u32 %v3670, 16
      %v3759 = vor.u32 %v3756, %v3757
      %v3760 = vrot.slane %v3756, 4
      %v3762 = vshrl.u32 %v3671, 16
      %v3764 = vrot.slane %v3762, 7
      %v3765 = vshll.u32 %v3671, 16
      %v3767 = vor.u32 %v3764, %v3765
      %v3768 = vsel %vm3684, %v3760, %v3767
      %v3769 = vrot.slane %v3764, 4
      %v3771 = vshrl.u32 %v3672, 16
      %v3773 = vrot.slane %v3771, 7
      %v3774 = vshll.u32 %v3672, 16
      %v3776 = vor.u32 %v3773, %v3774
      %v3777 = vrot.slane %v3773, 4
      %v3779 = vshrl.u32 %v3673, 16
      %v3781 = vrot.slane %v3779, 7
      %v3782 = vshll.u32 %v3673, 16
      %v3784 = vor.u32 %v3781, %v3782
      %v3785 = vsel %vm3684, %v3777, %v3784
      %v3786 = vrot.slane %v3781, 4
      %v3788 = vshrl.u32 %v3674, 16
      %v3790 = vrot.slane %v3788, 7
      %v3791 = vshll.u32 %v3674, 16
      %v3793 = vor.u32 %v3790, %v3791
      %v3794 = vrot.slane %v3790, 4
      %v3796 = vshrl.u32 %v3675, 16
      %v3798 = vrot.slane %v3796, 7
      %v3799 = vshll.u32 %v3675, 16
      %v3801 = vor.u32 %v3798, %v3799
      %v3802 = vsel %vm3684, %v3794, %v3801
      %v3803 = vrot.slane %v3798, 4
      %v3805 = vshrl.u32 %v3676, 16
      %v3807 = vrot.slane %v3805, 7
      %v3808 = vshll.u32 %v3676, 16
      %v3810 = vor.u32 %v3807, %v3808
      %v3811 = vrot.slane %v3807, 4
      %v3813 = vshrl.u32 %v3677, 16
      %v3815 = vrot.slane %v3813, 7
      %v3816 = vshll.u32 %v3677, 16
      %v3818 = vor.u32 %v3815, %v3816
      %v3819 = vsel %vm3684, %v3811, %v3818
      %v3820 = vrot.slane %v3815, 4
      %v3822 = vshrl.u32 %v3678, 16
      %v3824 = vrot.slane %v3822, 7
      %v3825 = vshll.u32 %v3678, 16
      %v3827 = vor.u32 %v3824, %v3825
      %v3828 = vrot.slane %v3824, 4
      %v3830 = vshrl.u32 %v3679, 16
      %v3832 = vrot.slane %v3830, 7
      %v3833 = vshll.u32 %v3679, 16
      %v3835 = vor.u32 %v3832, %v3833
      %v3836 = vsel %vm3684, %v3828, %v3835
      %v3837 = vrot.slane %v3832, 4
      %v3839 = vshrl.u32 %v3680, 16
      %v3841 = vrot.slane %v3839, 7
      %v3842 = vshll.u32 %v3680, 16
      %v3844 = vor.u32 %v3841, %v3842
      %v3845 = vrot.slane %v3841, 4
      %v3847 = vshrl.u32 %v3681, 16
      %v3849 = vrot.slane %v3847, 7
      %v3850 = vshll.u32 %v3681, 16
      %v3852 = vor.u32 %v3849, %v3850
      %v3853 = vsel %vm3684, %v3845, %v3852
      %v3854 = vrot.slane %v3849, 4
      %vm3885 = vcmask 1043456
      %vm3886 = vsmask.f32 7938
      %vm3887 = vmand %vm3885, %vm3886
      %v3888 = vld [vmem:[#allocation3] sm:$0xf]
      %v3889 = vsel %vm3887, %v3691, %v3888
      %3890 = vst [vmem:[#allocation3] sm:$0xf] %v3889
      %3891 = vst [vmem:[#allocation3 + $0x4] sm:$0xf] %v3700
      %vm3892 = vcmask 1040384
      %vm3893 = vmand %vm3892, %vm3682
      %v3894 = vld [vmem:[#allocation3 + $0x8] sm:$0x1]
      %v3895 = vsel %vm3893, %v3701, %v3894
      %3896 = vst [vmem:[#allocation3 + $0x8] sm:$0x1] %v3895
      %v3897 = vld [vmem:[#allocation3 + $0xc] sm:$0xf]
      %v3898 = vsel %vm3887, %v3708, %v3897
      %3899 = vst [vmem:[#allocation3 + $0xc] sm:$0xf] %v3898
      %3900 = vst [vmem:[#allocation3 + $0x10] sm:$0xf] %v3717
      %v3901 = vld [vmem:[#allocation3 + $0x14] sm:$0x1]
      %v3902 = vsel %vm3893, %v3718, %v3901
      %3903 = vst [vmem:[#allocation3 + $0x14] sm:$0x1] %v3902
      %v3904 = vld [vmem:[#allocation3 + $0x18] sm:$0xf]
      %v3905 = vsel %vm3887, %v3725, %v3904
      %3906 = vst [vmem:[#allocation3 + $0x18] sm:$0xf] %v3905
      %3907 = vst [vmem:[#allocation3 + $0x1c] sm:$0xf] %v3734
      %v3908 = vld [vmem:[#allocation3 + $0x20] sm:$0x1]
      %v3909 = vsel %vm3893, %v3735, %v3908
      %3910 = vst [vmem:[#allocation3 + $0x20] sm:$0x1] %v3909
      %v3911 = vld [vmem:[#allocation3 + $0x24] sm:$0xf]
      %v3912 = vsel %vm3887, %v3742, %v3911
      %3913 = vst [vmem:[#allocation3 + $0x24] sm:$0xf] %v3912
      %3914 = vst [vmem:[#allocation3 + $0x28] sm:$0xf] %v3751
      %v3915 = vld [vmem:[#allocation3 + $0x2c] sm:$0x1]
      %v3916 = vsel %vm3893, %v3752, %v3915
      %3917 = vst [vmem:[#allocation3 + $0x2c] sm:$0x1] %v3916
      %v3918 = vld [vmem:[#allocation3 + $0x30] sm:$0xf]
      %v3919 = vsel %vm3887, %v3759, %v3918
      %3920 = vst [vmem:[#allocation3 + $0x30] sm:$0xf] %v3919
      %3921 = vst [vmem:[#allocation3 + $0x34] sm:$0xf] %v3768
      %v3922 = vld [vmem:[#allocation3 + $0x38] sm:$0x1]
      %v3923 = vsel %vm3893, %v3769, %v3922
      %3924 = vst [vmem:[#allocation3 + $0x38] sm:$0x1] %v3923
      %v3925 = vld [vmem:[#allocation3 + $0x3c] sm:$0xf]
      %v3926 = vsel %vm3887, %v3776, %v3925
      %3927 = vst [vmem:[#allocation3 + $0x3c] sm:$0xf] %v3926
      %3928 = vst [vmem:[#allocation3 + $0x40] sm:$0xf] %v3785
      %v3929 = vld [vmem:[#allocation3 + $0x44] sm:$0x1]
      %v3930 = vsel %vm3893, %v3786, %v3929
      %3931 = vst [vmem:[#allocation3 + $0x44] sm:$0x1] %v3930
      %v3932 = vld [vmem:[#allocation3 + $0x48] sm:$0xf]
      %v3933 = vsel %vm3887, %v3793, %v3932
      %3934 = vst [vmem:[#allocation3 + $0x48] sm:$0xf] %v3933
      %3935 = vst [vmem:[#allocation3 + $0x4c] sm:$0xf] %v3802
      %v3936 = vld [vmem:[#allocation3 + $0x50] sm:$0x1]
      %v3937 = vsel %vm3893, %v3803, %v3936
      %3938 = vst [vmem:[#allocation3 + $0x50] sm:$0x1] %v3937
      %v3939 = vld [vmem:[#allocation3 + $0x54] sm:$0xf]
      %v3940 = vsel %vm3887, %v3810, %v3939
      %3941 = vst [vmem:[#allocation3 + $0x54] sm:$0xf] %v3940
      %3942 = vst [vmem:[#allocation3 + $0x58] sm:$0xf] %v3819
      %v3943 = vld [vmem:[#allocation3 + $0x5c] sm:$0x1]
      %v3944 = vsel %vm3893, %v3820, %v3943
      %3945 = vst [vmem:[#allocation3 + $0x5c] sm:$0x1] %v3944
      %v3946 = vld [vmem:[#allocation3 + $0x60] sm:$0xf]
      %v3947 = vsel %vm3887, %v3827, %v3946
      %3948 = vst [vmem:[#allocation3 + $0x60] sm:$0xf] %v3947
      %3949 = vst [vmem:[#allocation3 + $0x64] sm:$0xf] %v3836
      %v3950 = vld [vmem:[#allocation3 + $0x68] sm:$0x1]
      %v3951 = vsel %vm3893, %v3837, %v3950
      %3952 = vst [vmem:[#allocation3 + $0x68] sm:$0x1] %v3951
      %v3953 = vld [vmem:[#allocation3 + $0x6c] sm:$0xf]
      %v3954 = vsel %vm3887, %v3844, %v3953
      %3955 = vst [vmem:[#allocation3 + $0x6c] sm:$0xf] %v3954
      %3956 = vst [vmem:[#allocation3 + $0x70] sm:$0xf] %v3853
      %v3957 = vld [vmem:[#allocation3 + $0x74] sm:$0x1]
      %v3958 = vsel %vm3893, %v3854, %v3957
      %3959 = vst [vmem:[#allocation3 + $0x74] sm:$0x1] %v3958
      %v3960 = vld [vmem:[#allocation3] sm:$0x1]
      %v3961 = vsel %vm3893, 0, %v3960
      %3962 = vst [vmem:[#allocation3] sm:$0x1] %v3961
      %v3963 = vld [vmem:[#allocation3 + $0xc] sm:$0x1]
      %v3964 = vsel %vm3893, 0, %v3963
      %3965 = vst [vmem:[#allocation3 + $0xc] sm:$0x1] %v3964
      %v3966 = vld [vmem:[#allocation3 + $0x18] sm:$0x1]
      %v3967 = vsel %vm3893, 0, %v3966
      %3968 = vst [vmem:[#allocation3 + $0x18] sm:$0x1] %v3967
      %v3969 = vld [vmem:[#allocation3 + $0x24] sm:$0x1]
      %v3970 = vsel %vm3893, 0, %v3969
      %3971 = vst [vmem:[#allocation3 + $0x24] sm:$0x1] %v3970
      %v3972 = vld [vmem:[#allocation3 + $0x30] sm:$0x1]
      %v3973 = vsel %vm3893, 0, %v3972
      %3974 = vst [vmem:[#allocation3 + $0x30] sm:$0x1] %v3973
      %v3975 = vld [vmem:[#allocation3 + $0x3c] sm:$0x1]
      %v3976 = vsel %vm3893, 0, %v3975
      %3977 = vst [vmem:[#allocation3 + $0x3c] sm:$0x1] %v3976
      %v3978 = vld [vmem:[#allocation3 + $0x48] sm:$0x1]
      %v3979 = vsel %vm3893, 0, %v3978
      %3980 = vst [vmem:[#allocation3 + $0x48] sm:$0x1] %v3979
      %v3981 = vld [vmem:[#allocation3 + $0x54] sm:$0x1]
      %v3982 = vsel %vm3893, 0, %v3981
      %3983 = vst [vmem:[#allocation3 + $0x54] sm:$0x1] %v3982
      %v3984 = vld [vmem:[#allocation3 + $0x60] sm:$0x1]
      %v3985 = vsel %vm3893, 0, %v3984
      %3986 = vst [vmem:[#allocation3 + $0x60] sm:$0x1] %v3985
      %v3987 = vld [vmem:[#allocation3 + $0x6c] sm:$0x1]
      %v3988 = vsel %vm3893, 0, %v3987
      %3989 = vst [vmem:[#allocation3 + $0x6c] sm:$0x1] %v3988
      %vm3990 = vmand %vm3892, %vm3886
      %v3991 = vld [vmem:[#allocation3 + $0x8] sm:$0x1]
      %v3992 = vsel %vm3990, 0, %v3991
      %3993 = vst [vmem:[#allocation3 + $0x8] sm:$0x1] %v3992
      %v3994 = vld [vmem:[#allocation3 + $0x14] sm:$0x1]
      %v3995 = vsel %vm3990, 0, %v3994
      %3996 = vst [vmem:[#allocation3 + $0x14] sm:$0x1] %v3995
      %v3997 = vld [vmem:[#allocation3 + $0x20] sm:$0x1]
      %v3998 = vsel %vm3990, 0, %v3997
      %3999 = vst [vmem:[#allocation3 + $0x20] sm:$0x1] %v3998
      %v4000 = vld [vmem:[#allocation3 + $0x2c] sm:$0x1]
      %v4001 = vsel %vm3990, 0, %v4000
      %4002 = vst [vmem:[#allocation3 + $0x2c] sm:$0x1] %v4001
      %v4003 = vld [vmem:[#allocation3 + $0x38] sm:$0x1]
      %v4004 = vsel %vm3990, 0, %v4003
      %4005 = vst [vmem:[#allocation3 + $0x38] sm:$0x1] %v4004
      %v4006 = vld [vmem:[#allocation3 + $0x44] sm:$0x1]
      %v4007 = vsel %vm3990, 0, %v4006
      %4008 = vst [vmem:[#allocation3 + $0x44] sm:$0x1] %v4007
      %v4009 = vld [vmem:[#allocation3 + $0x50] sm:$0x1]
      %v4010 = vsel %vm3990, 0, %v4009
      %4011 = vst [vmem:[#allocation3 + $0x50] sm:$0x1] %v4010
      %v4012 = vld [vmem:[#allocation3 + $0x5c] sm:$0x1]
      %v4013 = vsel %vm3990, 0, %v4012
      %4014 = vst [vmem:[#allocation3 + $0x5c] sm:$0x1] %v4013
      %v4015 = vld [vmem:[#allocation3 + $0x68] sm:$0x1]
      %v4016 = vsel %vm3990, 0, %v4015
      %4017 = vst [vmem:[#allocation3 + $0x68] sm:$0x1] %v4016
      %v4018 = vld [vmem:[#allocation3 + $0x74] sm:$0x1]
      %v4019 = vsel %vm3990, 0, %v4018
      %4020 = vst [vmem:[#allocation3 + $0x74] sm:$0x1] %v4019
      %p4021 = scmp.eq.s32.totalorder %s25, 0
      // Predicated region
      $region57: #{spade_forward.1} parent=55 // pred_check
        %p4022 = pneg %p4021
      $region58: #{spade_forward.1} parent=55 // pred_check_branch
        %4024 = sbr.rel (%p4022) target = $region60
      $region59: #{spade_forward.1} parent=55 // pred_region
        %4025 = vst [vmem:[#allocation3] sm:$0xf] 0
        %4026 = vst [vmem:[#allocation3 + $0x4] sm:$0xf] 0
        %4027 = vst [vmem:[#allocation3 + $0x8] sm:$0x1] 0
      $region60: #{spade_forward.1} parent=55 // pred_fallthru
        _
      %p4028 = scmp.eq.s32.totalorder %s25, 1
      // Predicated region
      $region61: #{spade_forward.1} parent=55 // pred_check
        %p4029 = pneg %p4028
      $region62: #{spade_forward.1} parent=55 // pred_check_branch
        %4031 = sbr.rel (%p4029) target = $region64
      $region63: #{spade_forward.1} parent=55 // pred_region
        %s4032 = scalar_lea.vmem [#allocation3], 108
        %4033 = vst [vmem:[%s4032] sm:$0xf] 0
        %4034 = vst [vmem:[%s4032 + $0x4] sm:$0xf] 0
        %4035 = vst [vmem:[%s4032 + $0x8] sm:$0x1] 0
      $region64: #{spade_forward.1} parent=55 // pred_fallthru
        _
      %v4036 = vld [vmem:[#allocation3] sm:$0xf]
      %v4037 = vld [vmem:[#allocation3 + $0x4] sm:$0xf]
      %v4038 = vld [vmem:[#allocation3 + $0xc] sm:$0xf]
      %v4039 = vld [vmem:[#allocation3 + $0x10] sm:$0xf]
      %v4040 = vld [vmem:[#allocation3 + $0x18] sm:$0xf]
      %v4041 = vld [vmem:[#allocation3 + $0x1c] sm:$0xf]
      %v4042 = vld [vmem:[#allocation3 + $0x24] sm:$0xf]
      %v4043 = vld [vmem:[#allocation3 + $0x28] sm:$0xf]
      %v4044 = vld [vmem:[#allocation3 + $0x30] sm:$0xf]
      %v4045 = vld [vmem:[#allocation3 + $0x34] sm:$0xf]
      %v4046 = vld [vmem:[#allocation3 + $0x3c] sm:$0xf]
      %v4047 = vld [vmem:[#allocation3 + $0x40] sm:$0xf]
      %v4048 = vld [vmem:[#allocation3 + $0x48] sm:$0xf]
      %v4049 = vld [vmem:[#allocation3 + $0x4c] sm:$0xf]
      %v4050 = vld [vmem:[#allocation3 + $0x54] sm:$0xf]
      %v4051 = vld [vmem:[#allocation3 + $0x58] sm:$0xf]
      %v4052 = vld [vmem:[%s7] sm:$0xf]
      %v4053 = vld [vmem:[%s7 + $0x4] sm:$0xf]
      %v4054 = vld [vmem:[%s7 + $0x8] sm:$0xf]
      %v4055 = vld [vmem:[%s7 + $0xc] sm:$0xf]
      %v4056 = vld [vmem:[%s7 + $0x10] sm:$0xf]
      %v4057 = vld [vmem:[%s7 + $0x14] sm:$0xf]
      %v4058 = vld [vmem:[%s7 + $0x18] sm:$0xf]
      %v4059 = vld [vmem:[%s7 + $0x1c] sm:$0xf]
      %v4060 = vld [vmem:[%s7 + $0x20] sm:$0xf]
      %v4061 = vld [vmem:[%s7 + $0x24] sm:$0xf]
      %v4062 = vld [vmem:[%s7 + $0x28] sm:$0xf]
      %v4063 = vld [vmem:[%s7 + $0x2c] sm:$0xf]
      %v4064 = vld [vmem:[%s7 + $0x30] sm:$0xf]
      %v4065 = vld [vmem:[%s7 + $0x34] sm:$0xf]
      %v4066 = vld [vmem:[%s7 + $0x38] sm:$0xf]
      %v4067 = vld [vmem:[%s7 + $0x3c] sm:$0xf]
      %v4068 = vld [vmem:[#allocation3 + $0x8] sm:$0x1]
      %v4069 = vld [vmem:[#allocation3 + $0x14] sm:$0x1]
      %v4070 = vld [vmem:[#allocation3 + $0x20] sm:$0x1]
      %v4071 = vld [vmem:[#allocation3 + $0x2c] sm:$0x1]
      %v4072 = vld [vmem:[#allocation3 + $0x38] sm:$0x1]
      %v4073 = vld [vmem:[#allocation3 + $0x44] sm:$0x1]
      %v4074 = vld [vmem:[#allocation3 + $0x50] sm:$0x1]
      %v4075 = vld [vmem:[#allocation3 + $0x5c] sm:$0x1]
      %v4077 = vshrl.u32 %v4036, 16
      %v4079 = vrot.slane %v4077, 4
      %v4080 = vshll.u32 %v4036, 16
      %v4082 = vrot.slane %v4080, 5
      %v4083 = vor.u32 %v4079, %v4082
      %v4084 = vrot.slane %v4083, 4
      %v4086 = vshll.u32 %v4037, 16
      %v4088 = vrot.slane %v4086, 5
      %v4089 = vsel %vm624, %v4084, %v4088
      %v4090 = vshrl.u32 %v4037, 16
      %v4092 = vrot.slane %v4090, 4
      %v4093 = vor.u32 %v4092, %v4088
      %v4094 = vrot.slane %v4093, 4
      %v4096 = vshll.u32 %v4068, 16
      %v4098 = vrot.slane %v4096, 5
      %v4099 = vsel %vm624, %v4094, %v4098
      %v4101 = vshrl.u32 %v4038, 16
      %v4103 = vrot.slane %v4101, 4
      %v4104 = vshll.u32 %v4038, 16
      %v4106 = vrot.slane %v4104, 5
      %v4107 = vor.u32 %v4103, %v4106
      %v4108 = vrot.slane %v4107, 4
      %v4110 = vshll.u32 %v4039, 16
      %v4112 = vrot.slane %v4110, 5
      %v4113 = vsel %vm624, %v4108, %v4112
      %v4114 = vshrl.u32 %v4039, 16
      %v4116 = vrot.slane %v4114, 4
      %v4117 = vor.u32 %v4116, %v4112
      %v4118 = vrot.slane %v4117, 4
      %v4120 = vshll.u32 %v4069, 16
      %v4122 = vrot.slane %v4120, 5
      %v4123 = vsel %vm624, %v4118, %v4122
      %v4125 = vshrl.u32 %v4040, 16
      %v4127 = vrot.slane %v4125, 4
      %v4128 = vshll.u32 %v4040, 16
      %v4130 = vrot.slane %v4128, 5
      %v4131 = vor.u32 %v4127, %v4130
      %v4132 = vrot.slane %v4131, 4
      %v4134 = vshll.u32 %v4041, 16
      %v4136 = vrot.slane %v4134, 5
      %v4137 = vsel %vm624, %v4132, %v4136
      %v4138 = vshrl.u32 %v4041, 16
      %v4140 = vrot.slane %v4138, 4
      %v4141 = vor.u32 %v4140, %v4136
      %v4142 = vrot.slane %v4141, 4
      %v4144 = vshll.u32 %v4070, 16
      %v4146 = vrot.slane %v4144, 5
      %v4147 = vsel %vm624, %v4142, %v4146
      %v4149 = vshrl.u32 %v4042, 16
      %v4151 = vrot.slane %v4149, 4
      %v4152 = vshll.u32 %v4042, 16
      %v4154 = vrot.slane %v4152, 5
      %v4155 = vor.u32 %v4151, %v4154
      %v4156 = vrot.slane %v4155, 4
      %v4158 = vshll.u32 %v4043, 16
      %v4160 = vrot.slane %v4158, 5
      %v4161 = vsel %vm624, %v4156, %v4160
      %v4162 = vshrl.u32 %v4043, 16
      %v4164 = vrot.slane %v4162, 4
      %v4165 = vor.u32 %v4164, %v4160
      %v4166 = vrot.slane %v4165, 4
      %v4168 = vshll.u32 %v4071, 16
      %v4170 = vrot.slane %v4168, 5
      %v4171 = vsel %vm624, %v4166, %v4170
      %v4173 = vshrl.u32 %v4044, 16
      %v4175 = vrot.slane %v4173, 4
      %v4176 = vshll.u32 %v4044, 16
      %v4178 = vrot.slane %v4176, 5
      %v4179 = vor.u32 %v4175, %v4178
      %v4180 = vrot.slane %v4179, 4
      %v4182 = vshll.u32 %v4045, 16
      %v4184 = vrot.slane %v4182, 5
      %v4185 = vsel %vm624, %v4180, %v4184
      %v4186 = vshrl.u32 %v4045, 16
      %v4188 = vrot.slane %v4186, 4
      %v4189 = vor.u32 %v4188, %v4184
      %v4190 = vrot.slane %v4189, 4
      %v4192 = vshll.u32 %v4072, 16
      %v4194 = vrot.slane %v4192, 5
      %v4195 = vsel %vm624, %v4190, %v4194
      %v4197 = vshrl.u32 %v4046, 16
      %v4199 = vrot.slane %v4197, 4
      %v4200 = vshll.u32 %v4046, 16
      %v4202 = vrot.slane %v4200, 5
      %v4203 = vor.u32 %v4199, %v4202
      %v4204 = vrot.slane %v4203, 4
      %v4206 = vshll.u32 %v4047, 16
      %v4208 = vrot.slane %v4206, 5
      %v4209 = vsel %vm624, %v4204, %v4208
      %v4210 = vshrl.u32 %v4047, 16
      %v4212 = vrot.slane %v4210, 4
      %v4213 = vor.u32 %v4212, %v4208
      %v4214 = vrot.slane %v4213, 4
      %v4216 = vshll.u32 %v4073, 16
      %v4218 = vrot.slane %v4216, 5
      %v4219 = vsel %vm624, %v4214, %v4218
      %v4221 = vshrl.u32 %v4048, 16
      %v4223 = vrot.slane %v4221, 4
      %v4224 = vshll.u32 %v4048, 16
      %v4226 = vrot.slane %v4224, 5
      %v4227 = vor.u32 %v4223, %v4226
      %v4228 = vrot.slane %v4227, 4
      %v4230 = vshll.u32 %v4049, 16
      %v4232 = vrot.slane %v4230, 5
      %v4233 = vsel %vm624, %v4228, %v4232
      %v4234 = vshrl.u32 %v4049, 16
      %v4236 = vrot.slane %v4234, 4
      %v4237 = vor.u32 %v4236, %v4232
      %v4238 = vrot.slane %v4237, 4
      %v4240 = vshll.u32 %v4074, 16
      %v4242 = vrot.slane %v4240, 5
      %v4243 = vsel %vm624, %v4238, %v4242
      %v4245 = vshrl.u32 %v4050, 16
      %v4247 = vrot.slane %v4245, 4
      %v4248 = vshll.u32 %v4050, 16
      %v4250 = vrot.slane %v4248, 5
      %v4251 = vor.u32 %v4247, %v4250
      %v4252 = vrot.slane %v4251, 4
      %v4254 = vshll.u32 %v4051, 16
      %v4256 = vrot.slane %v4254, 5
      %v4257 = vsel %vm624, %v4252, %v4256
      %v4258 = vshrl.u32 %v4051, 16
      %v4260 = vrot.slane %v4258, 4
      %v4261 = vor.u32 %v4260, %v4256
      %v4262 = vrot.slane %v4261, 4
      %v4264 = vshll.u32 %v4075, 16
      %v4266 = vrot.slane %v4264, 5
      %v4267 = vsel %vm624, %v4262, %v4266
      %s4268 = scalar_lea.vmem %s7, 64
      %v4269 = vld [vmem:[%s4268] sm:$0xf]
      %v4270 = vld [vmem:[%s4268 + $0x4] sm:$0xf]
      %v4271 = vld [vmem:[%s4268 + $0x8] sm:$0xf]
      %v4272 = vld [vmem:[%s4268 + $0xc] sm:$0xf]
      %v4273 = vld [vmem:[%s4268 + $0x10] sm:$0xf]
      %v4274 = vld [vmem:[%s4268 + $0x14] sm:$0xf]
      %v4275 = vld [vmem:[%s4268 + $0x18] sm:$0xf]
      %v4276 = vld [vmem:[%s4268 + $0x1c] sm:$0xf]
      %v4277 = vld [vmem:[%s4268 + $0x20] sm:$0xf]
      %v4278 = vld [vmem:[%s4268 + $0x24] sm:$0xf]
      %v4279 = vld [vmem:[%s4268 + $0x28] sm:$0xf]
      %v4280 = vld [vmem:[%s4268 + $0x2c] sm:$0xf]
      %v4281 = vld [vmem:[%s4268 + $0x30] sm:$0xf]
      %v4282 = vld [vmem:[%s4268 + $0x34] sm:$0xf]
      %v4283 = vld [vmem:[%s4268 + $0x38] sm:$0xf]
      %v4284 = vld [vmem:[%s4268 + $0x3c] sm:$0xf]
      %v4285 = vunpack.c.l.b16 %v4089
      %v4286 = vunpack.c.l.b16 %v4099
      %v4287 = vunpack.c.l.b16 %v4113
      %v4288 = vunpack.c.l.b16 %v4123
      %v4289 = vunpack.c.l.b16 %v4137
      %v4290 = vunpack.c.l.b16 %v4147
      %v4291 = vunpack.c.l.b16 %v4161
      %v4292 = vunpack.c.l.b16 %v4171
      %v4293 = vunpack.c.l.b16 %v4185
      %v4294 = vunpack.c.l.b16 %v4195
      %v4295 = vunpack.c.l.b16 %v4209
      %v4296 = vunpack.c.l.b16 %v4219
      %v4297 = vunpack.c.l.b16 %v4233
      %v4298 = vunpack.c.l.b16 %v4243
      %v4299 = vunpack.c.l.b16 %v4257
      %v4300 = vunpack.c.l.b16 %v4267
      %v4301 = vpack.c.b16 %v4286, %v4285
      %v4302 = vpack.c.b16 %v4288, %v4287
      %v4303 = vpack.c.b16 %v4290, %v4289
      %v4304 = vpack.c.b16 %v4292, %v4291
      %v4305 = vpack.c.b16 %v4294, %v4293
      %v4306 = vpack.c.b16 %v4296, %v4295
      %v4307 = vpack.c.b16 %v4298, %v4297
      %v4308 = vpack.c.b16 %v4300, %v4299
      %v4333 = vunpack.c.l.b16 %v4269
      %v4334 = vunpack.c.l.b16 %v4270
      %v4335 = vunpack.c.l.b16 %v4271
      %v4336 = vunpack.c.l.b16 %v4272
      %v4337 = vunpack.c.l.b16 %v4273
      %v4338 = vunpack.c.l.b16 %v4274
      %v4339 = vunpack.c.l.b16 %v4275
      %v4340 = vunpack.c.l.b16 %v4276
      %v4341 = vunpack.c.l.b16 %v4277
      %v4342 = vunpack.c.l.b16 %v4278
      %v4343 = vunpack.c.l.b16 %v4279
      %v4344 = vunpack.c.l.b16 %v4280
      %v4345 = vunpack.c.l.b16 %v4281
      %v4346 = vunpack.c.l.b16 %v4282
      %v4347 = vunpack.c.l.b16 %v4283
      %v4348 = vunpack.c.l.b16 %v4284
      %v4349 = vpack.c.b16 %v4334, %v4333
      %v4350 = vpack.c.b16 %v4336, %v4335
      %v4351 = vpack.c.b16 %v4338, %v4337
      %v4352 = vpack.c.b16 %v4340, %v4339
      %v4353 = vpack.c.b16 %v4342, %v4341
      %v4354 = vpack.c.b16 %v4344, %v4343
      %v4355 = vpack.c.b16 %v4346, %v4345
      %v4356 = vpack.c.b16 %v4348, %v4347
      %4365 = vmatprep.subr.bf16.mxu0 0
      %4366 = vmatpush1.bf16.msra.mxu0 %v4349
      %4367 = vmatprep.subr.bf16.mxu0 0
      %4368 = vmatpush1.bf16.msra.mxu0 %v4350
      %4369 = vmatprep.subr.bf16.mxu0 0
      %4370 = vmatpush1.bf16.msra.mxu0 %v4351
      %4371 = vmatprep.subr.bf16.mxu0 0
      %4372 = vmatpush1.bf16.msra.mxu0 %v4352
      %4373 = vmatprep.subr.bf16.mxu0 0
      %4374 = vmatpush1.bf16.msra.mxu0 %v4353
      %4375 = vmatprep.subr.bf16.mxu0 0
      %4376 = vmatpush1.bf16.msra.mxu0 %v4354
      %4377 = vmatprep.subr.bf16.mxu0 0
      %4378 = vmatpush1.bf16.msra.mxu0 %v4355
      %4379 = vmatprep.subr.bf16.mxu0 0
      %4380 = vmatpush1.bf16.msra.mxu0 %v4356
      %4381 = vmatprep.subr.bf16.mxu0 0
      %4382 = vmatpush1.bf16.msra.mxu0 0
      %4383 = vmatprep.subr.bf16.mxu0 0
      %4384 = vmatpush1.bf16.msra.mxu0 0
      %4385 = vmatprep.subr.bf16.mxu0 0
      %4386 = vmatpush1.bf16.msra.mxu0 0
      %4387 = vmatprep.subr.bf16.mxu0 0
      %4388 = vmatpush1.bf16.msra.mxu0 0
      %4389 = vmatprep.subr.bf16.mxu0 0
      %4390 = vmatpush1.bf16.msra.mxu0 0
      %4391 = vmatprep.subr.bf16.mxu0 0
      %4392 = vmatpush1.bf16.msra.mxu0 0
      %4393 = vmatprep.subr.bf16.mxu0 0
      %4394 = vmatpush1.bf16.msra.mxu0 0
      %4395 = vmatprep.subr.bf16.mxu0 0
      %4396 = vmatpush1.bf16.msra.mxu0 0
      %4397 = vmatprep.mubr.bf16.mxu0 0
      %4398 = vmatmul.mubr.bf16.gmra.mrb[0].mxu0 %v4301
      %v4399 = vpop.f32.mrb[0].mxu0
      %v4400 = vadd.f32 0.0, %v4399
      %v4401 = vpop.f32.mrb[0].mxu0
      %v4402 = vpop.f32.mrb[0].mxu0
      %v4403 = vadd.f32 0.0, %v4402
      %v4404 = vpop.f32.mrb[0].mxu0
      %4405 = vmatprep.mubr.bf16.mxu0 0
      %4406 = vmatmul.mubr.bf16.gmra.mrb[0].mxu0 %v4302
      %v4407 = vpop.f32.mrb[0].mxu0
      %v4408 = vadd.f32 0.0, %v4407
      %v4409 = vpop.f32.mrb[0].mxu0
      %v4410 = vpop.f32.mrb[0].mxu0
      %v4411 = vadd.f32 0.0, %v4410
      %v4412 = vpop.f32.mrb[0].mxu0
      %4413 = vmatprep.mubr.bf16.mxu0 0
      %4414 = vmatmul.mubr.bf16.gmra.mrb[0].mxu0 %v4303
      %v4415 = vpop.f32.mrb[0].mxu0
      %v4416 = vadd.f32 0.0, %v4415
      %v4417 = vpop.f32.mrb[0].mxu0
      %v4418 = vpop.f32.mrb[0].mxu0
      %v4419 = vadd.f32 0.0, %v4418
      %v4420 = vpop.f32.mrb[0].mxu0
      %4421 = vmatprep.mubr.bf16.mxu0 0
      %4422 = vmatmul.mubr.bf16.gmra.mrb[0].mxu0 %v4304
      %v4423 = vpop.f32.mrb[0].mxu0
      %v4424 = vadd.f32 0.0, %v4423
      %v4425 = vpop.f32.mrb[0].mxu0
      %v4426 = vpop.f32.mrb[0].mxu0
      %v4427 = vadd.f32 0.0, %v4426
      %v4428 = vpop.f32.mrb[0].mxu0
      %4429 = vmatprep.mubr.bf16.mxu0 0
      %4430 = vmatmul.mubr.bf16.gmra.mrb[0].mxu0 %v4305
      %v4431 = vpop.f32.mrb[0].mxu0
      %v4432 = vadd.f32 0.0, %v4431
      %v4433 = vpop.f32.mrb[0].mxu0
      %v4434 = vpop.f32.mrb[0].mxu0
      %v4435 = vadd.f32 0.0, %v4434
      %v4436 = vpop.f32.mrb[0].mxu0
      %4437 = vmatprep.mubr.bf16.mxu0 0
      %4438 = vmatmul.mubr.bf16.gmra.mrb[0].mxu0 %v4306
      %v4439 = vpop.f32.mrb[0].mxu0
      %v4440 = vadd.f32 0.0, %v4439
      %v4441 = vpop.f32.mrb[0].mxu0
      %v4442 = vpop.f32.mrb[0].mxu0
      %v4443 = vadd.f32 0.0, %v4442
      %v4444 = vpop.f32.mrb[0].mxu0
      %4445 = vmatprep.mubr.bf16.mxu0 0
      %4446 = vmatmul.mubr.bf16.gmra.mrb[0].mxu0 %v4307
      %v4447 = vpop.f32.mrb[0].mxu0
      %v4448 = vadd.f32 0.0, %v4447
      %v4449 = vpop.f32.mrb[0].mxu0
      %v4450 = vpop.f32.mrb[0].mxu0
      %v4451 = vadd.f32 0.0, %v4450
      %v4452 = vpop.f32.mrb[0].mxu0
      %4453 = vmatprep.mubr.bf16.mxu0 0
      %4454 = vmatmul.mubr.bf16.gmra.mrb[0].mxu0 %v4308
      %v4455 = vpop.f32.mrb[0].mxu0
      %v4456 = vadd.f32 0.0, %v4455
      %v4457 = vpop.f32.mrb[0].mxu0
      %v4458 = vpop.f32.mrb[0].mxu0
      %v4459 = vadd.f32 0.0, %v4458
      %v4460 = vpop.f32.mrb[0].mxu0
      %4461 = vdwg.mxu0
      %v4478 = vunpack.c.l.b16 %v4036
      %v4479 = vunpack.c.l.b16 %v4037
      %v4480 = vunpack.c.l.b16 %v4038
      %v4481 = vunpack.c.l.b16 %v4039
      %v4482 = vunpack.c.l.b16 %v4040
      %v4483 = vunpack.c.l.b16 %v4041
      %v4484 = vunpack.c.l.b16 %v4042
      %v4485 = vunpack.c.l.b16 %v4043
      %v4486 = vunpack.c.l.b16 %v4044
      %v4487 = vunpack.c.l.b16 %v4045
      %v4488 = vunpack.c.l.b16 %v4046
      %v4489 = vunpack.c.l.b16 %v4047
      %v4490 = vunpack.c.l.b16 %v4048
      %v4491 = vunpack.c.l.b16 %v4049
      %v4492 = vunpack.c.l.b16 %v4050
      %v4493 = vunpack.c.l.b16 %v4051
      %v4494 = vpack.c.b16 %v4479, %v4478
      %v4495 = vpack.c.b16 %v4481, %v4480
      %v4496 = vpack.c.b16 %v4483, %v4482
      %v4497 = vpack.c.b16 %v4485, %v4484
      %v4498 = vpack.c.b16 %v4487, %v4486
      %v4499 = vpack.c.b16 %v4489, %v4488
      %v4500 = vpack.c.b16 %v4491, %v4490
      %v4501 = vpack.c.b16 %v4493, %v4492
      %v4526 = vunpack.c.l.b16 %v4052
      %v4527 = vunpack.c.l.b16 %v4053
      %v4528 = vunpack.c.l.b16 %v4054
      %v4529 = vunpack.c.l.b16 %v4055
      %v4530 = vunpack.c.l.b16 %v4056
      %v4531 = vunpack.c.l.b16 %v4057
      %v4532 = vunpack.c.l.b16 %v4058
      %v4533 = vunpack.c.l.b16 %v4059
      %v4534 = vunpack.c.l.b16 %v4060
      %v4535 = vunpack.c.l.b16 %v4061
      %v4536 = vunpack.c.l.b16 %v4062
      %v4537 = vunpack.c.l.b16 %v4063
      %v4538 = vunpack.c.l.b16 %v4064
      %v4539 = vunpack.c.l.b16 %v4065
      %v4540 = vunpack.c.l.b16 %v4066
      %v4541 = vunpack.c.l.b16 %v4067
      %v4542 = vpack.c.b16 %v4527, %v4526
      %v4543 = vpack.c.b16 %v4529, %v4528
      %v4544 = vpack.c.b16 %v4531, %v4530
      %v4545 = vpack.c.b16 %v4533, %v4532
      %v4546 = vpack.c.b16 %v4535, %v4534
      %v4547 = vpack.c.b16 %v4537, %v4536
      %v4548 = vpack.c.b16 %v4539, %v4538
      %v4549 = vpack.c.b16 %v4541, %v4540
      %4558 = vmatprep.subr.bf16.mxu0 0
      %4559 = vmatpush1.bf16.msra.mxu0 %v4542
      %4560 = vmatprep.subr.bf16.mxu0 0
      %4561 = vmatpush1.bf16.msra.mxu0 %v4543
      %4562 = vmatprep.subr.bf16.mxu0 0
      %4563 = vmatpush1.bf16.msra.mxu0 %v4544
      %4564 = vmatprep.subr.bf16.mxu0 0
      %4565 = vmatpush1.bf16.msra.mxu0 %v4545
      %4566 = vmatprep.subr.bf16.mxu0 0
      %4567 = vmatpush1.bf16.msra.mxu0 %v4546
      %4568 = vmatprep.subr.bf16.mxu0 0
      %4569 = vmatpush1.bf16.msra.mxu0 %v4547
      %4570 = vmatprep.subr.bf16.mxu0 0
      %4571 = vmatpush1.bf16.msra.mxu0 %v4548
      %4572 = vmatprep.subr.bf16.mxu0 0
      %4573 = vmatpush1.bf16.msra.mxu0 %v4549
      %4574 = vmatprep.subr.bf16.mxu0 0
      %4575 = vmatpush1.bf16.msra.mxu0 0
      %4576 = vmatprep.subr.bf16.mxu0 0
      %4577 = vmatpush1.bf16.msra.mxu0 0
      %4578 = vmatprep.subr.bf16.mxu0 0
      %4579 = vmatpush1.bf16.msra.mxu0 0
      %4580 = vmatprep.subr.bf16.mxu0 0
      %4581 = vmatpush1.bf16.msra.mxu0 0
      %4582 = vmatprep.subr.bf16.mxu0 0
      %4583 = vmatpush1.bf16.msra.mxu0 0
      %4584 = vmatprep.subr.bf16.mxu0 0
      %4585 = vmatpush1.bf16.msra.mxu0 0
      %4586 = vmatprep.subr.bf16.mxu0 0
      %4587 = vmatpush1.bf16.msra.mxu0 0
      %4588 = vmatprep.subr.bf16.mxu0 0
      %4589 = vmatpush1.bf16.msra.mxu0 0
      %4590 = vmatprep.mubr.bf16.mxu0 0
      %4591 = vmatmul.mubr.bf16.gmra.mrb[0].mxu0 %v4494
      %v4592 = vpop.f32.mrb[0].mxu0
      %v4593 = vadd.f32 %v4400, %v4592
      %v4594 = vpop.f32.mrb[0].mxu0
      %v4595 = vpop.f32.mrb[0].mxu0
      %v4596 = vadd.f32 %v4403, %v4595
      %v4597 = vpop.f32.mrb[0].mxu0
      %4598 = vmatprep.mubr.bf16.mxu0 0
      %4599 = vmatmul.mubr.bf16.gmra.mrb[0].mxu0 %v4495
      %v4600 = vpop.f32.mrb[0].mxu0
      %v4601 = vadd.f32 %v4408, %v4600
      %v4602 = vpop.f32.mrb[0].mxu0
      %v4603 = vpop.f32.mrb[0].mxu0
      %v4604 = vadd.f32 %v4411, %v4603
      %v4605 = vpop.f32.mrb[0].mxu0
      %4606 = vmatprep.mubr.bf16.mxu0 0
      %4607 = vmatmul.mubr.bf16.gmra.mrb[0].mxu0 %v4496
      %v4608 = vpop.f32.mrb[0].mxu0
      %v4609 = vadd.f32 %v4416, %v4608
      %v4610 = vpop.f32.mrb[0].mxu0
      %v4611 = vpop.f32.mrb[0].mxu0
      %v4612 = vadd.f32 %v4419, %v4611
      %v4613 = vpop.f32.mrb[0].mxu0
      %4614 = vmatprep.mubr.bf16.mxu0 0
      %4615 = vmatmul.mubr.bf16.gmra.mrb[0].mxu0 %v4497
      %v4616 = vpop.f32.mrb[0].mxu0
      %v4617 = vadd.f32 %v4424, %v4616
      %v4618 = vpop.f32.mrb[0].mxu0
      %v4619 = vpop.f32.mrb[0].mxu0
      %v4620 = vadd.f32 %v4427, %v4619
      %v4621 = vpop.f32.mrb[0].mxu0
      %4622 = vmatprep.mubr.bf16.mxu0 0
      %4623 = vmatmul.mubr.bf16.gmra.mrb[0].mxu0 %v4498
      %v4624 = vpop.f32.mrb[0].mxu0
      %v4625 = vadd.f32 %v4432, %v4624
      %v4626 = vpop.f32.mrb[0].mxu0
      %v4627 = vpop.f32.mrb[0].mxu0
      %v4628 = vadd.f32 %v4435, %v4627
      %v4629 = vpop.f32.mrb[0].mxu0
      %4630 = vmatprep.mubr.bf16.mxu0 0
      %4631 = vmatmul.mubr.bf16.gmra.mrb[0].mxu0 %v4499
      %v4632 = vpop.f32.mrb[0].mxu0
      %v4633 = vadd.f32 %v4440, %v4632
      %v4634 = vpop.f32.mrb[0].mxu0
      %v4635 = vpop.f32.mrb[0].mxu0
      %v4636 = vadd.f32 %v4443, %v4635
      %v4637 = vpop.f32.mrb[0].mxu0
      %4638 = vmatprep.mubr.bf16.mxu0 0
      %4639 = vmatmul.mubr.bf16.gmra.mrb[0].mxu0 %v4500
      %v4640 = vpop.f32.mrb[0].mxu0
      %v4641 = vadd.f32 %v4448, %v4640
      %v4642 = vpop.f32.mrb[0].mxu0
      %v4643 = vpop.f32.mrb[0].mxu0
      %v4644 = vadd.f32 %v4451, %v4643
      %v4645 = vpop.f32.mrb[0].mxu0
      %4646 = vmatprep.mubr.bf16.mxu0 0
      %4647 = vmatmul.mubr.bf16.gmra.mrb[0].mxu0 %v4501
      %v4648 = vpop.f32.mrb[0].mxu0
      %v4649 = vadd.f32 %v4456, %v4648
      %v4650 = vpop.f32.mrb[0].mxu0
      %v4651 = vpop.f32.mrb[0].mxu0
      %v4652 = vadd.f32 %v4459, %v4651
      %v4653 = vpop.f32.mrb[0].mxu0
      %4654 = vdwg.mxu0
      %v4655 = vld [vmem:[#allocation3] sm:$0xe]
      %v4656 = vld [vmem:[#allocation3 + $0xc] sm:$0xe]
      %v4657 = vld [vmem:[#allocation3 + $0x18] sm:$0xe]
      %v4658 = vld [vmem:[#allocation3 + $0x24] sm:$0xe]
      %v4659 = vld [vmem:[#allocation3 + $0x30] sm:$0xe]
      %v4660 = vld [vmem:[#allocation3 + $0x3c] sm:$0xe]
      %v4661 = vld [vmem:[#allocation3 + $0x48] sm:$0xe]
      %v4662 = vld [vmem:[#allocation3 + $0x54] sm:$0xe]
      %v4679 = vrot.slane %v4655, 5
      %v4680 = vrot.slane %v4679, 4
      %v4681 = vrot.slane %v4037, 5
      %v4682 = vsel %vm1276, %v4680, %v4681
      %v4683 = vrot.slane %v4681, 4
      %v4684 = vrot.slane %v4068, 5
      %v4685 = vsel %vm1276, %v4683, %v4684
      %v4686 = vrot.slane %v4656, 5
      %v4687 = vrot.slane %v4686, 4
      %v4688 = vrot.slane %v4039, 5
      %v4689 = vsel %vm1276, %v4687, %v4688
      %v4690 = vrot.slane %v4688, 4
      %v4691 = vrot.slane %v4069, 5
      %v4692 = vsel %vm1276, %v4690, %v4691
      %v4693 = vrot.slane %v4657, 5
      %v4694 = vrot.slane %v4693, 4
      %v4695 = vrot.slane %v4041, 5
      %v4696 = vsel %vm1276, %v4694, %v4695
      %v4697 = vrot.slane %v4695, 4
      %v4698 = vrot.slane %v4070, 5
      %v4699 = vsel %vm1276, %v4697, %v4698
      %v4700 = vrot.slane %v4658, 5
      %v4701 = vrot.slane %v4700, 4
      %v4702 = vrot.slane %v4043, 5
      %v4703 = vsel %vm1276, %v4701, %v4702
      %v4704 = vrot.slane %v4702, 4
      %v4705 = vrot.slane %v4071, 5
      %v4706 = vsel %vm1276, %v4704, %v4705
      %v4707 = vrot.slane %v4659, 5
      %v4708 = vrot.slane %v4707, 4
      %v4709 = vrot.slane %v4045, 5
      %v4710 = vsel %vm1276, %v4708, %v4709
      %v4711 = vrot.slane %v4709, 4
      %v4712 = vrot.slane %v4072, 5
      %v4713 = vsel %vm1276, %v4711, %v4712
      %v4714 = vrot.slane %v4660, 5
      %v4715 = vrot.slane %v4714, 4
      %v4716 = vrot.slane %v4047, 5
      %v4717 = vsel %vm1276, %v4715, %v4716
      %v4718 = vrot.slane %v4716, 4
      %v4719 = vrot.slane %v4073, 5
      %v4720 = vsel %vm1276, %v4718, %v4719
      %v4721 = vrot.slane %v4661, 5
      %v4722 = vrot.slane %v4721, 4
      %v4723 = vrot.slane %v4049, 5
      %v4724 = vsel %vm1276, %v4722, %v4723
      %v4725 = vrot.slane %v4723, 4
      %v4726 = vrot.slane %v4074, 5
      %v4727 = vsel %vm1276, %v4725, %v4726
      %v4728 = vrot.slane %v4662, 5
      %v4729 = vrot.slane %v4728, 4
      %v4730 = vrot.slane %v4051, 5
      %v4731 = vsel %vm1276, %v4729, %v4730
      %v4732 = vrot.slane %v4730, 4
      %v4733 = vrot.slane %v4075, 5
      %v4734 = vsel %vm1276, %v4732, %v4733
      %s4735 = scalar_lea.vmem %s7, 128
      %v4736 = vld [vmem:[%s4735] sm:$0xf]
      %v4737 = vld [vmem:[%s4735 + $0x4] sm:$0xf]
      %v4738 = vld [vmem:[%s4735 + $0x8] sm:$0xf]
      %v4739 = vld [vmem:[%s4735 + $0xc] sm:$0xf]
      %v4740 = vld [vmem:[%s4735 + $0x10] sm:$0xf]
      %v4741 = vld [vmem:[%s4735 + $0x14] sm:$0xf]
      %v4742 = vld [vmem:[%s4735 + $0x18] sm:$0xf]
      %v4743 = vld [vmem:[%s4735 + $0x1c] sm:$0xf]
      %v4744 = vld [vmem:[%s4735 + $0x20] sm:$0xf]
      %v4745 = vld [vmem:[%s4735 + $0x24] sm:$0xf]
      %v4746 = vld [vmem:[%s4735 + $0x28] sm:$0xf]
      %v4747 = vld [vmem:[%s4735 + $0x2c] sm:$0xf]
      %v4748 = vld [vmem:[%s4735 + $0x30] sm:$0xf]
      %v4749 = vld [vmem:[%s4735 + $0x34] sm:$0xf]
      %v4750 = vld [vmem:[%s4735 + $0x38] sm:$0xf]
      %v4751 = vld [vmem:[%s4735 + $0x3c] sm:$0xf]
      %v4752 = vunpack.c.l.b16 %v4682
      %v4753 = vunpack.c.l.b16 %v4685
      %v4754 = vunpack.c.l.b16 %v4689
      %v4755 = vunpack.c.l.b16 %v4692
      %v4756 = vunpack.c.l.b16 %v4696
      %v4757 = vunpack.c.l.b16 %v4699
      %v4758 = vunpack.c.l.b16 %v4703
      %v4759 = vunpack.c.l.b16 %v4706
      %v4760 = vunpack.c.l.b16 %v4710
      %v4761 = vunpack.c.l.b16 %v4713
      %v4762 = vunpack.c.l.b16 %v4717
      %v4763 = vunpack.c.l.b16 %v4720
      %v4764 = vunpack.c.l.b16 %v4724
      %v4765 = vunpack.c.l.b16 %v4727
      %v4766 = vunpack.c.l.b16 %v4731
      %v4767 = vunpack.c.l.b16 %v4734
      %v4768 = vpack.c.b16 %v4753, %v4752
      %v4769 = vpack.c.b16 %v4755, %v4754
      %v4770 = vpack.c.b16 %v4757, %v4756
      %v4771 = vpack.c.b16 %v4759, %v4758
      %v4772 = vpack.c.b16 %v4761, %v4760
      %v4773 = vpack.c.b16 %v4763, %v4762
      %v4774 = vpack.c.b16 %v4765, %v4764
      %v4775 = vpack.c.b16 %v4767, %v4766
      %v4800 = vunpack.c.l.b16 %v4736
      %v4801 = vunpack.c.l.b16 %v4737
      %v4802 = vunpack.c.l.b16 %v4738
      %v4803 = vunpack.c.l.b16 %v4739
      %v4804 = vunpack.c.l.b16 %v4740
      %v4805 = vunpack.c.l.b16 %v4741
      %v4806 = vunpack.c.l.b16 %v4742
      %v4807 = vunpack.c.l.b16 %v4743
      %v4808 = vunpack.c.l.b16 %v4744
      %v4809 = vunpack.c.l.b16 %v4745
      %v4810 = vunpack.c.l.b16 %v4746
      %v4811 = vunpack.c.l.b16 %v4747
      %v4812 = vunpack.c.l.b16 %v4748
      %v4813 = vunpack.c.l.b16 %v4749
      %v4814 = vunpack.c.l.b16 %v4750
      %v4815 = vunpack.c.l.b16 %v4751
      %v4816 = vpack.c.b16 %v4801, %v4800
      %v4817 = vpack.c.b16 %v4803, %v4802
      %v4818 = vpack.c.b16 %v4805, %v4804
      %v4819 = vpack.c.b16 %v4807, %v4806
      %v4820 = vpack.c.b16 %v4809, %v4808
      %v4821 = vpack.c.b16 %v4811, %v4810
      %v4822 = vpack.c.b16 %v4813, %v4812
      %v4823 = vpack.c.b16 %v4815, %v4814
      %4832 = vmatprep.subr.bf16.mxu0 0
      %4833 = vmatpush1.bf16.msra.mxu0 %v4816
      %4834 = vmatprep.subr.bf16.mxu0 0
      %4835 = vmatpush1.bf16.msra.mxu0 %v4817
      %4836 = vmatprep.subr.bf16.mxu0 0
      %4837 = vmatpush1.bf16.msra.mxu0 %v4818
      %4838 = vmatprep.subr.bf16.mxu0 0
      %4839 = vmatpush1.bf16.msra.mxu0 %v4819
      %4840 = vmatprep.subr.bf16.mxu0 0
      %4841 = vmatpush1.bf16.msra.mxu0 %v4820
      %4842 = vmatprep.subr.bf16.mxu0 0
      %4843 = vmatpush1.bf16.msra.mxu0 %v4821
      %4844 = vmatprep.subr.bf16.mxu0 0
      %4845 = vmatpush1.bf16.msra.mxu0 %v4822
      %4846 = vmatprep.subr.bf16.mxu0 0
      %4847 = vmatpush1.bf16.msra.mxu0 %v4823
      %4848 = vmatprep.subr.bf16.mxu0 0
      %4849 = vmatpush1.bf16.msra.mxu0 0
      %4850 = vmatprep.subr.bf16.mxu0 0
      %4851 = vmatpush1.bf16.msra.mxu0 0
      %4852 = vmatprep.subr.bf16.mxu0 0
      %4853 = vmatpush1.bf16.msra.mxu0 0
      %4854 = vmatprep.subr.bf16.mxu0 0
      %4855 = vmatpush1.bf16.msra.mxu0 0
      %4856 = vmatprep.subr.bf16.mxu0 0
      %4857 = vmatpush1.bf16.msra.mxu0 0
      %4858 = vmatprep.subr.bf16.mxu0 0
      %4859 = vmatpush1.bf16.msra.mxu0 0
      %4860 = vmatprep.subr.bf16.mxu0 0
      %4861 = vmatpush1.bf16.msra.mxu0 0
      %4862 = vmatprep.subr.bf16.mxu0 0
      %4863 = vmatpush1.bf16.msra.mxu0 0
      %4864 = vmatprep.mubr.bf16.mxu0 0
      %4865 = vmatmul.mubr.bf16.gmra.mrb[0].mxu0 %v4768
      %v4866 = vpop.f32.mrb[0].mxu0
      %v4867 = vadd.f32 0.0, %v4866
      %v4868 = vpop.f32.mrb[0].mxu0
      %v4869 = vpop.f32.mrb[0].mxu0
      %v4870 = vadd.f32 0.0, %v4869
      %v4871 = vpop.f32.mrb[0].mxu0
      %4872 = vmatprep.mubr.bf16.mxu0 0
      %4873 = vmatmul.mubr.bf16.gmra.mrb[0].mxu0 %v4769
      %v4874 = vpop.f32.mrb[0].mxu0
      %v4875 = vadd.f32 0.0, %v4874
      %v4876 = vpop.f32.mrb[0].mxu0
      %v4877 = vpop.f32.mrb[0].mxu0
      %v4878 = vadd.f32 0.0, %v4877
      %v4879 = vpop.f32.mrb[0].mxu0
      %4880 = vmatprep.mubr.bf16.mxu0 0
      %4881 = vmatmul.mubr.bf16.gmra.mrb[0].mxu0 %v4770
      %v4882 = vpop.f32.mrb[0].mxu0
      %v4883 = vadd.f32 0.0, %v4882
      %v4884 = vpop.f32.mrb[0].mxu0
      %v4885 = vpop.f32.mrb[0].mxu0
      %v4886 = vadd.f32 0.0, %v4885
      %v4887 = vpop.f32.mrb[0].mxu0
      %4888 = vmatprep.mubr.bf16.mxu0 0
      %4889 = vmatmul.mubr.bf16.gmra.mrb[0].mxu0 %v4771
      %v4890 = vpop.f32.mrb[0].mxu0
      %v4891 = vadd.f32 0.0, %v4890
      %v4892 = vpop.f32.mrb[0].mxu0
      %v4893 = vpop.f32.mrb[0].mxu0
      %v4894 = vadd.f32 0.0, %v4893
      %v4895 = vpop.f32.mrb[0].mxu0
      %4896 = vmatprep.mubr.bf16.mxu0 0
      %4897 = vmatmul.mubr.bf16.gmra.mrb[0].mxu0 %v4772
      %v4898 = vpop.f32.mrb[0].mxu0
      %v4899 = vadd.f32 0.0, %v4898
      %v4900 = vpop.f32.mrb[0].mxu0
      %v4901 = vpop.f32.mrb[0].mxu0
      %v4902 = vadd.f32 0.0, %v4901
      %v4903 = vpop.f32.mrb[0].mxu0
      %4904 = vmatprep.mubr.bf16.mxu0 0
      %4905 = vmatmul.mubr.bf16.gmra.mrb[0].mxu0 %v4773
      %v4906 = vpop.f32.mrb[0].mxu0
      %v4907 = vadd.f32 0.0, %v4906
      %v4908 = vpop.f32.mrb[0].mxu0
      %v4909 = vpop.f32.mrb[0].mxu0
      %v4910 = vadd.f32 0.0, %v4909
      %v4911 = vpop.f32.mrb[0].mxu0
      %4912 = vmatprep.mubr.bf16.mxu0 0
      %4913 = vmatmul.mubr.bf16.gmra.mrb[0].mxu0 %v4774
      %v4914 = vpop.f32.mrb[0].mxu0
      %v4915 = vadd.f32 0.0, %v4914
      %v4916 = vpop.f32.mrb[0].mxu0
      %v4917 = vpop.f32.mrb[0].mxu0
      %v4918 = vadd.f32 0.0, %v4917
      %v4919 = vpop.f32.mrb[0].mxu0
      %4920 = vmatprep.mubr.bf16.mxu0 0
      %4921 = vmatmul.mubr.bf16.gmra.mrb[0].mxu0 %v4775
      %v4922 = vpop.f32.mrb[0].mxu0
      %v4923 = vadd.f32 0.0, %v4922
      %v4924 = vpop.f32.mrb[0].mxu0
      %v4925 = vpop.f32.mrb[0].mxu0
      %v4926 = vadd.f32 0.0, %v4925
      %v4927 = vpop.f32.mrb[0].mxu0
      %4928 = vdwg.mxu0
      %v4929 = vadd.f32 %v4593, %v4867
      %v4930 = vadd.f32 %v4596, %v4870
      %v4931 = vadd.f32 %v4601, %v4875
      %v4932 = vadd.f32 %v4604, %v4878
      %v4933 = vadd.f32 %v4609, %v4883
      %v4934 = vadd.f32 %v4612, %v4886
      %v4935 = vadd.f32 %v4617, %v4891
      %v4936 = vadd.f32 %v4620, %v4894
      %v4937 = vadd.f32 %v4625, %v4899
      %v4938 = vadd.f32 %v4628, %v4902
      %v4939 = vadd.f32 %v4633, %v4907
      %v4940 = vadd.f32 %v4636, %v4910
      %v4941 = vadd.f32 %v4641, %v4915
      %v4942 = vadd.f32 %v4644, %v4918
      %v4943 = vadd.f32 %v4649, %v4923
      %v4944 = vadd.f32 %v4652, %v4926
      %s4945 = scalar_lea.vmem [#allocation3], 12
      %v4946 = vld [vmem:[%s4945] sm:$0xf]
      %v4947 = vld [vmem:[%s4945 + $0x4] sm:$0xf]
      %v4948 = vld [vmem:[%s4945 + $0xc] sm:$0xf]
      %v4949 = vld [vmem:[%s4945 + $0x10] sm:$0xf]
      %v4950 = vld [vmem:[%s4945 + $0x18] sm:$0xf]
      %v4951 = vld [vmem:[%s4945 + $0x1c] sm:$0xf]
      %v4952 = vld [vmem:[%s4945 + $0x24] sm:$0xf]
      %v4953 = vld [vmem:[%s4945 + $0x28] sm:$0xf]
      %v4954 = vld [vmem:[%s4945 + $0x30] sm:$0xf]
      %v4955 = vld [vmem:[%s4945 + $0x34] sm:$0xf]
      %v4956 = vld [vmem:[%s4945 + $0x3c] sm:$0xf]
      %v4957 = vld [vmem:[%s4945 + $0x40] sm:$0xf]
      %v4958 = vld [vmem:[%s4945 + $0x48] sm:$0xf]
      %v4959 = vld [vmem:[%s4945 + $0x4c] sm:$0xf]
      %v4960 = vld [vmem:[%s4945 + $0x54] sm:$0xf]
      %v4961 = vld [vmem:[%s4945 + $0x58] sm:$0xf]
      %s4962 = scalar_lea.vmem %s7, 192
      %v4963 = vld [vmem:[%s4962] sm:$0xf]
      %v4964 = vld [vmem:[%s4962 + $0x4] sm:$0xf]
      %v4965 = vld [vmem:[%s4962 + $0x8] sm:$0xf]
      %v4966 = vld [vmem:[%s4962 + $0xc] sm:$0xf]
      %v4967 = vld [vmem:[%s4962 + $0x10] sm:$0xf]
      %v4968 = vld [vmem:[%s4962 + $0x14] sm:$0xf]
      %v4969 = vld [vmem:[%s4962 + $0x18] sm:$0xf]
      %v4970 = vld [vmem:[%s4962 + $0x1c] sm:$0xf]
      %v4971 = vld [vmem:[%s4962 + $0x20] sm:$0xf]
      %v4972 = vld [vmem:[%s4962 + $0x24] sm:$0xf]
      %v4973 = vld [vmem:[%s4962 + $0x28] sm:$0xf]
      %v4974 = vld [vmem:[%s4962 + $0x2c] sm:$0xf]
      %v4975 = vld [vmem:[%s4962 + $0x30] sm:$0xf]
      %v4976 = vld [vmem:[%s4962 + $0x34] sm:$0xf]
      %v4977 = vld [vmem:[%s4962 + $0x38] sm:$0xf]
      %v4978 = vld [vmem:[%s4962 + $0x3c] sm:$0xf]
      %v4995 = vunpack.c.l.b16 %v4946
      %v4996 = vunpack.c.l.b16 %v4947
      %v4997 = vunpack.c.l.b16 %v4948
      %v4998 = vunpack.c.l.b16 %v4949
      %v4999 = vunpack.c.l.b16 %v4950
      %v5000 = vunpack.c.l.b16 %v4951
      %v5001 = vunpack.c.l.b16 %v4952
      %v5002 = vunpack.c.l.b16 %v4953
      %v5003 = vunpack.c.l.b16 %v4954
      %v5004 = vunpack.c.l.b16 %v4955
      %v5005 = vunpack.c.l.b16 %v4956
      %v5006 = vunpack.c.l.b16 %v4957
      %v5007 = vunpack.c.l.b16 %v4958
      %v5008 = vunpack.c.l.b16 %v4959
      %v5009 = vunpack.c.l.b16 %v4960
      %v5010 = vunpack.c.l.b16 %v4961
      %v5011 = vpack.c.b16 %v4996, %v4995
      %v5012 = vpack.c.b16 %v4998, %v4997
      %v5013 = vpack.c.b16 %v5000, %v4999
      %v5014 = vpack.c.b16 %v5002, %v5001
      %v5015 = vpack.c.b16 %v5004, %v5003
      %v5016 = vpack.c.b16 %v5006, %v5005
      %v5017 = vpack.c.b16 %v5008, %v5007
      %v5018 = vpack.c.b16 %v5010, %v5009
      %v5043 = vunpack.c.l.b16 %v4963
      %v5044 = vunpack.c.l.b16 %v4964
      %v5045 = vunpack.c.l.b16 %v4965
      %v5046 = vunpack.c.l.b16 %v4966
      %v5047 = vunpack.c.l.b16 %v4967
      %v5048 = vunpack.c.l.b16 %v4968
      %v5049 = vunpack.c.l.b16 %v4969
      %v5050 = vunpack.c.l.b16 %v4970
      %v5051 = vunpack.c.l.b16 %v4971
      %v5052 = vunpack.c.l.b16 %v4972
      %v5053 = vunpack.c.l.b16 %v4973
      %v5054 = vunpack.c.l.b16 %v4974
      %v5055 = vunpack.c.l.b16 %v4975
      %v5056 = vunpack.c.l.b16 %v4976
      %v5057 = vunpack.c.l.b16 %v4977
      %v5058 = vunpack.c.l.b16 %v4978
      %v5059 = vpack.c.b16 %v5044, %v5043
      %v5060 = vpack.c.b16 %v5046, %v5045
      %v5061 = vpack.c.b16 %v5048, %v5047
      %v5062 = vpack.c.b16 %v5050, %v5049
      %v5063 = vpack.c.b16 %v5052, %v5051
      %v5064 = vpack.c.b16 %v5054, %v5053
      %v5065 = vpack.c.b16 %v5056, %v5055
      %v5066 = vpack.c.b16 %v5058, %v5057
      %5075 = vmatprep.subr.bf16.mxu0 0
      %5076 = vmatpush1.bf16.msra.mxu0 %v5059
      %5077 = vmatprep.subr.bf16.mxu0 0
      %5078 = vmatpush1.bf16.msra.mxu0 %v5060
      %5079 = vmatprep.subr.bf16.mxu0 0
      %5080 = vmatpush1.bf16.msra.mxu0 %v5061
      %5081 = vmatprep.subr.bf16.mxu0 0
      %5082 = vmatpush1.bf16.msra.mxu0 %v5062
      %5083 = vmatprep.subr.bf16.mxu0 0
      %5084 = vmatpush1.bf16.msra.mxu0 %v5063
      %5085 = vmatprep.subr.bf16.mxu0 0
      %5086 = vmatpush1.bf16.msra.mxu0 %v5064
      %5087 = vmatprep.subr.bf16.mxu0 0
      %5088 = vmatpush1.bf16.msra.mxu0 %v5065
      %5089 = vmatprep.subr.bf16.mxu0 0
      %5090 = vmatpush1.bf16.msra.mxu0 %v5066
      %5091 = vmatprep.subr.bf16.mxu0 0
      %5092 = vmatpush1.bf16.msra.mxu0 0
      %5093 = vmatprep.subr.bf16.mxu0 0
      %5094 = vmatpush1.bf16.msra.mxu0 0
      %5095 = vmatprep.subr.bf16.mxu0 0
      %5096 = vmatpush1.bf16.msra.mxu0 0
      %5097 = vmatprep.subr.bf16.mxu0 0
      %5098 = vmatpush1.bf16.msra.mxu0 0
      %5099 = vmatprep.subr.bf16.mxu0 0
      %5100 = vmatpush1.bf16.msra.mxu0 0
      %5101 = vmatprep.subr.bf16.mxu0 0
      %5102 = vmatpush1.bf16.msra.mxu0 0
      %5103 = vmatprep.subr.bf16.mxu0 0
      %5104 = vmatpush1.bf16.msra.mxu0 0
      %5105 = vmatprep.subr.bf16.mxu0 0
      %5106 = vmatpush1.bf16.msra.mxu0 0
      %5107 = vmatprep.mubr.bf16.mxu0 0
      %5108 = vmatmul.mubr.bf16.gmra.mrb[0].mxu0 %v5011
      %v5109 = vpop.f32.mrb[0].mxu0
      %v5110 = vadd.f32 0.0, %v5109
      %v5111 = vpop.f32.mrb[0].mxu0
      %v5112 = vpop.f32.mrb[0].mxu0
      %v5113 = vadd.f32 0.0, %v5112
      %v5114 = vpop.f32.mrb[0].mxu0
      %5115 = vmatprep.mubr.bf16.mxu0 0
      %5116 = vmatmul.mubr.bf16.gmra.mrb[0].mxu0 %v5012
      %v5117 = vpop.f32.mrb[0].mxu0
      %v5118 = vadd.f32 0.0, %v5117
      %v5119 = vpop.f32.mrb[0].mxu0
      %v5120 = vpop.f32.mrb[0].mxu0
      %v5121 = vadd.f32 0.0, %v5120
      %v5122 = vpop.f32.mrb[0].mxu0
      %5123 = vmatprep.mubr.bf16.mxu0 0
      %5124 = vmatmul.mubr.bf16.gmra.mrb[0].mxu0 %v5013
      %v5125 = vpop.f32.mrb[0].mxu0
      %v5126 = vadd.f32 0.0, %v5125
      %v5127 = vpop.f32.mrb[0].mxu0
      %v5128 = vpop.f32.mrb[0].mxu0
      %v5129 = vadd.f32 0.0, %v5128
      %v5130 = vpop.f32.mrb[0].mxu0
      %5131 = vmatprep.mubr.bf16.mxu0 0
      %5132 = vmatmul.mubr.bf16.gmra.mrb[0].mxu0 %v5014
      %v5133 = vpop.f32.mrb[0].mxu0
      %v5134 = vadd.f32 0.0, %v5133
      %v5135 = vpop.f32.mrb[0].mxu0
      %v5136 = vpop.f32.mrb[0].mxu0
      %v5137 = vadd.f32 0.0, %v5136
      %v5138 = vpop.f32.mrb[0].mxu0
      %5139 = vmatprep.mubr.bf16.mxu0 0
      %5140 = vmatmul.mubr.bf16.gmra.mrb[0].mxu0 %v5015
      %v5141 = vpop.f32.mrb[0].mxu0
      %v5142 = vadd.f32 0.0, %v5141
      %v5143 = vpop.f32.mrb[0].mxu0
      %v5144 = vpop.f32.mrb[0].mxu0
      %v5145 = vadd.f32 0.0, %v5144
      %v5146 = vpop.f32.mrb[0].mxu0
      %5147 = vmatprep.mubr.bf16.mxu0 0
      %5148 = vmatmul.mubr.bf16.gmra.mrb[0].mxu0 %v5016
      %v5149 = vpop.f32.mrb[0].mxu0
      %v5150 = vadd.f32 0.0, %v5149
      %v5151 = vpop.f32.mrb[0].mxu0
      %v5152 = vpop.f32.mrb[0].mxu0
      %v5153 = vadd.f32 0.0, %v5152
      %v5154 = vpop.f32.mrb[0].mxu0
      %5155 = vmatprep.mubr.bf16.mxu0 0
      %5156 = vmatmul.mubr.bf16.gmra.mrb[0].mxu0 %v5017
      %v5157 = vpop.f32.mrb[0].mxu0
      %v5158 = vadd.f32 0.0, %v5157
      %v5159 = vpop.f32.mrb[0].mxu0
      %v5160 = vpop.f32.mrb[0].mxu0
      %v5161 = vadd.f32 0.0, %v5160
      %v5162 = vpop.f32.mrb[0].mxu0
      %5163 = vmatprep.mubr.bf16.mxu0 0
      %5164 = vmatmul.mubr.bf16.gmra.mrb[0].mxu0 %v5018
      %v5165 = vpop.f32.mrb[0].mxu0
      %v5166 = vadd.f32 0.0, %v5165
      %v5167 = vpop.f32.mrb[0].mxu0
      %v5168 = vpop.f32.mrb[0].mxu0
      %v5169 = vadd.f32 0.0, %v5168
      %v5170 = vpop.f32.mrb[0].mxu0
      %5171 = vdwg.mxu0
      %v5172 = vadd.f32 %v4929, %v5110
      %v5173 = vadd.f32 %v4930, %v5113
      %v5174 = vadd.f32 %v4931, %v5118
      %v5175 = vadd.f32 %v4932, %v5121
      %v5176 = vadd.f32 %v4933, %v5126
      %v5177 = vadd.f32 %v4934, %v5129
      %v5178 = vadd.f32 %v4935, %v5134
      %v5179 = vadd.f32 %v4936, %v5137
      %v5180 = vadd.f32 %v4937, %v5142
      %v5181 = vadd.f32 %v4938, %v5145
      %v5182 = vadd.f32 %v4939, %v5150
      %v5183 = vadd.f32 %v4940, %v5153
      %v5184 = vadd.f32 %v4941, %v5158
      %v5185 = vadd.f32 %v4942, %v5161
      %v5186 = vadd.f32 %v4943, %v5166
      %v5187 = vadd.f32 %v4944, %v5169
      %v5188 = vld [vmem:[%s4945] sm:$0xf]
      %v5189 = vld [vmem:[%s4945 + $0x4] sm:$0xf]
      %v5190 = vld [vmem:[%s4945 + $0x8] sm:$0x1]
      %v5191 = vld [vmem:[%s4945 + $0xc] sm:$0xf]
      %v5192 = vld [vmem:[%s4945 + $0x10] sm:$0xf]
      %v5193 = vld [vmem:[%s4945 + $0x14] sm:$0x1]
      %v5194 = vld [vmem:[%s4945 + $0x18] sm:$0xf]
      %v5195 = vld [vmem:[%s4945 + $0x1c] sm:$0xf]
      %v5196 = vld [vmem:[%s4945 + $0x20] sm:$0x1]
      %v5197 = vld [vmem:[%s4945 + $0x24] sm:$0xf]
      %v5198 = vld [vmem:[%s4945 + $0x28] sm:$0xf]
      %v5199 = vld [vmem:[%s4945 + $0x2c] sm:$0x1]
      %v5200 = vld [vmem:[%s4945 + $0x30] sm:$0xf]
      %v5201 = vld [vmem:[%s4945 + $0x34] sm:$0xf]
      %v5202 = vld [vmem:[%s4945 + $0x38] sm:$0x1]
      %v5203 = vld [vmem:[%s4945 + $0x3c] sm:$0xf]
      %v5204 = vld [vmem:[%s4945 + $0x40] sm:$0xf]
      %v5205 = vld [vmem:[%s4945 + $0x44] sm:$0x1]
      %v5206 = vld [vmem:[%s4945 + $0x48] sm:$0xf]
      %v5207 = vld [vmem:[%s4945 + $0x4c] sm:$0xf]
      %v5208 = vld [vmem:[%s4945 + $0x50] sm:$0x1]
      %v5209 = vld [vmem:[%s4945 + $0x54] sm:$0xf]
      %v5210 = vld [vmem:[%s4945 + $0x58] sm:$0xf]
      %v5211 = vld [vmem:[%s4945 + $0x5c] sm:$0x1]
      %v5213 = vshrl.u32 %v5188, 16
      %v5215 = vrot.slane %v5213, 4
      %v5216 = vshll.u32 %v5188, 16
      %v5218 = vrot.slane %v5216, 5
      %v5219 = vor.u32 %v5215, %v5218
      %v5220 = vrot.slane %v5219, 4
      %v5222 = vshll.u32 %v5189, 16
      %v5224 = vrot.slane %v5222, 5
      %v5225 = vsel %vm624, %v5220, %v5224
      %v5226 = vshrl.u32 %v5189, 16
      %v5228 = vrot.slane %v5226, 4
      %v5229 = vor.u32 %v5228, %v5224
      %v5230 = vrot.slane %v5229, 4
      %v5232 = vshll.u32 %v5190, 16
      %v5234 = vrot.slane %v5232, 5
      %v5235 = vsel %vm624, %v5230, %v5234
      %v5237 = vshrl.u32 %v5191, 16
      %v5239 = vrot.slane %v5237, 4
      %v5240 = vshll.u32 %v5191, 16
      %v5242 = vrot.slane %v5240, 5
      %v5243 = vor.u32 %v5239, %v5242
      %v5244 = vrot.slane %v5243, 4
      %v5246 = vshll.u32 %v5192, 16
      %v5248 = vrot.slane %v5246, 5
      %v5249 = vsel %vm624, %v5244, %v5248
      %v5250 = vshrl.u32 %v5192, 16
      %v5252 = vrot.slane %v5250, 4
      %v5253 = vor.u32 %v5252, %v5248
      %v5254 = vrot.slane %v5253, 4
      %v5256 = vshll.u32 %v5193, 16
      %v5258 = vrot.slane %v5256, 5
      %v5259 = vsel %vm624, %v5254, %v5258
      %v5261 = vshrl.u32 %v5194, 16
      %v5263 = vrot.slane %v5261, 4
      %v5264 = vshll.u32 %v5194, 16
      %v5266 = vrot.slane %v5264, 5
      %v5267 = vor.u32 %v5263, %v5266
      %v5268 = vrot.slane %v5267, 4
      %v5270 = vshll.u32 %v5195, 16
      %v5272 = vrot.slane %v5270, 5
      %v5273 = vsel %vm624, %v5268, %v5272
      %v5274 = vshrl.u32 %v5195, 16
      %v5276 = vrot.slane %v5274, 4
      %v5277 = vor.u32 %v5276, %v5272
      %v5278 = vrot.slane %v5277, 4
      %v5280 = vshll.u32 %v5196, 16
      %v5282 = vrot.slane %v5280, 5
      %v5283 = vsel %vm624, %v5278, %v5282
      %v5285 = vshrl.u32 %v5197, 16
      %v5287 = vrot.slane %v5285, 4
      %v5288 = vshll.u32 %v5197, 16
      %v5290 = vrot.slane %v5288, 5
      %v5291 = vor.u32 %v5287, %v5290
      %v5292 = vrot.slane %v5291, 4
      %v5294 = vshll.u32 %v5198, 16
      %v5296 = vrot.slane %v5294, 5
      %v5297 = vsel %vm624, %v5292, %v5296
      %v5298 = vshrl.u32 %v5198, 16
      %v5300 = vrot.slane %v5298, 4
      %v5301 = vor.u32 %v5300, %v5296
      %v5302 = vrot.slane %v5301, 4
      %v5304 = vshll.u32 %v5199, 16
      %v5306 = vrot.slane %v5304, 5
      %v5307 = vsel %vm624, %v5302, %v5306
      %v5309 = vshrl.u32 %v5200, 16
      %v5311 = vrot.slane %v5309, 4
      %v5312 = vshll.u32 %v5200, 16
      %v5314 = vrot.slane %v5312, 5
      %v5315 = vor.u32 %v5311, %v5314
      %v5316 = vrot.slane %v5315, 4
      %v5318 = vshll.u32 %v5201, 16
      %v5320 = vrot.slane %v5318, 5
      %v5321 = vsel %vm624, %v5316, %v5320
      %v5322 = vshrl.u32 %v5201, 16
      %v5324 = vrot.slane %v5322, 4
      %v5325 = vor.u32 %v5324, %v5320
      %v5326 = vrot.slane %v5325, 4
      %v5328 = vshll.u32 %v5202, 16
      %v5330 = vrot.slane %v5328, 5
      %v5331 = vsel %vm624, %v5326, %v5330
      %v5333 = vshrl.u32 %v5203, 16
      %v5335 = vrot.slane %v5333, 4
      %v5336 = vshll.u32 %v5203, 16
      %v5338 = vrot.slane %v5336, 5
      %v5339 = vor.u32 %v5335, %v5338
      %v5340 = vrot.slane %v5339, 4
      %v5342 = vshll.u32 %v5204, 16
      %v5344 = vrot.slane %v5342, 5
      %v5345 = vsel %vm624, %v5340, %v5344
      %v5346 = vshrl.u32 %v5204, 16
      %v5348 = vrot.slane %v5346, 4
      %v5349 = vor.u32 %v5348, %v5344
      %v5350 = vrot.slane %v5349, 4
      %v5352 = vshll.u32 %v5205, 16
      %v5354 = vrot.slane %v5352, 5
      %v5355 = vsel %vm624, %v5350, %v5354
      %v5357 = vshrl.u32 %v5206, 16
      %v5359 = vrot.slane %v5357, 4
      %v5360 = vshll.u32 %v5206, 16
      %v5362 = vrot.slane %v5360, 5
      %v5363 = vor.u32 %v5359, %v5362
      %v5364 = vrot.slane %v5363, 4
      %v5366 = vshll.u32 %v5207, 16
      %v5368 = vrot.slane %v5366, 5
      %v5369 = vsel %vm624, %v5364, %v5368
      %v5370 = vshrl.u32 %v5207, 16
      %v5372 = vrot.slane %v5370, 4
      %v5373 = vor.u32 %v5372, %v5368
      %v5374 = vrot.slane %v5373, 4
      %v5376 = vshll.u32 %v5208, 16
      %v5378 = vrot.slane %v5376, 5
      %v5379 = vsel %vm624, %v5374, %v5378
      %v5381 = vshrl.u32 %v5209, 16
      %v5383 = vrot.slane %v5381, 4
      %v5384 = vshll.u32 %v5209, 16
      %v5386 = vrot.slane %v5384, 5
      %v5387 = vor.u32 %v5383, %v5386
      %v5388 = vrot.slane %v5387, 4
      %v5390 = vshll.u32 %v5210, 16
      %v5392 = vrot.slane %v5390, 5
      %v5393 = vsel %vm624, %v5388, %v5392
      %v5394 = vshrl.u32 %v5210, 16
      %v5396 = vrot.slane %v5394, 4
      %v5397 = vor.u32 %v5396, %v5392
      %v5398 = vrot.slane %v5397, 4
      %v5400 = vshll.u32 %v5211, 16
      %v5402 = vrot.slane %v5400, 5
      %v5403 = vsel %vm624, %v5398, %v5402
      %s5404 = scalar_lea.vmem %s7, 256
      %v5405 = vld [vmem:[%s5404] sm:$0xf]
      %v5406 = vld [vmem:[%s5404 + $0x4] sm:$0xf]
      %v5407 = vld [vmem:[%s5404 + $0x8] sm:$0xf]
      %v5408 = vld [vmem:[%s5404 + $0xc] sm:$0xf]
      %v5409 = vld [vmem:[%s5404 + $0x10] sm:$0xf]
      %v5410 = vld [vmem:[%s5404 + $0x14] sm:$0xf]
      %v5411 = vld [vmem:[%s5404 + $0x18] sm:$0xf]
      %v5412 = vld [vmem:[%s5404 + $0x1c] sm:$0xf]
      %v5413 = vld [vmem:[%s5404 + $0x20] sm:$0xf]
      %v5414 = vld [vmem:[%s5404 + $0x24] sm:$0xf]
      %v5415 = vld [vmem:[%s5404 + $0x28] sm:$0xf]
      %v5416 = vld [vmem:[%s5404 + $0x2c] sm:$0xf]
      %v5417 = vld [vmem:[%s5404 + $0x30] sm:$0xf]
      %v5418 = vld [vmem:[%s5404 + $0x34] sm:$0xf]
      %v5419 = vld [vmem:[%s5404 + $0x38] sm:$0xf]
      %v5420 = vld [vmem:[%s5404 + $0x3c] sm:$0xf]
      %v5421 = vunpack.c.l.b16 %v5225
      %v5422 = vunpack.c.l.b16 %v5235
      %v5423 = vunpack.c.l.b16 %v5249
      %v5424 = vunpack.c.l.b16 %v5259
      %v5425 = vunpack.c.l.b16 %v5273
      %v5426 = vunpack.c.l.b16 %v5283
      %v5427 = vunpack.c.l.b16 %v5297
      %v5428 = vunpack.c.l.b16 %v5307
      %v5429 = vunpack.c.l.b16 %v5321
      %v5430 = vunpack.c.l.b16 %v5331
      %v5431 = vunpack.c.l.b16 %v5345
      %v5432 = vunpack.c.l.b16 %v5355
      %v5433 = vunpack.c.l.b16 %v5369
      %v5434 = vunpack.c.l.b16 %v5379
      %v5435 = vunpack.c.l.b16 %v5393
      %v5436 = vunpack.c.l.b16 %v5403
      %v5437 = vpack.c.b16 %v5422, %v5421
      %v5438 = vpack.c.b16 %v5424, %v5423
      %v5439 = vpack.c.b16 %v5426, %v5425
      %v5440 = vpack.c.b16 %v5428, %v5427
      %v5441 = vpack.c.b16 %v5430, %v5429
      %v5442 = vpack.c.b16 %v5432, %v5431
      %v5443 = vpack.c.b16 %v5434, %v5433
      %v5444 = vpack.c.b16 %v5436, %v5435
      %v5469 = vunpack.c.l.b16 %v5405
      %v5470 = vunpack.c.l.b16 %v5406
      %v5471 = vunpack.c.l.b16 %v5407
      %v5472 = vunpack.c.l.b16 %v5408
      %v5473 = vunpack.c.l.b16 %v5409
      %v5474 = vunpack.c.l.b16 %v5410
      %v5475 = vunpack.c.l.b16 %v5411
      %v5476 = vunpack.c.l.b16 %v5412
      %v5477 = vunpack.c.l.b16 %v5413
      %v5478 = vunpack.c.l.b16 %v5414
      %v5479 = vunpack.c.l.b16 %v5415
      %v5480 = vunpack.c.l.b16 %v5416
      %v5481 = vunpack.c.l.b16 %v5417
      %v5482 = vunpack.c.l.b16 %v5418
      %v5483 = vunpack.c.l.b16 %v5419
      %v5484 = vunpack.c.l.b16 %v5420
      %v5485 = vpack.c.b16 %v5470, %v5469
      %v5486 = vpack.c.b16 %v5472, %v5471
      %v5487 = vpack.c.b16 %v5474, %v5473
      %v5488 = vpack.c.b16 %v5476, %v5475
      %v5489 = vpack.c.b16 %v5478, %v5477
      %v5490 = vpack.c.b16 %v5480, %v5479
      %v5491 = vpack.c.b16 %v5482, %v5481
      %v5492 = vpack.c.b16 %v5484, %v5483
      %5501 = vmatprep.subr.bf16.mxu0 0
      %5502 = vmatpush1.bf16.msra.mxu0 %v5485
      %5503 = vmatprep.subr.bf16.mxu0 0
      %5504 = vmatpush1.bf16.msra.mxu0 %v5486
      %5505 = vmatprep.subr.bf16.mxu0 0
      %5506 = vmatpush1.bf16.msra.mxu0 %v5487
      %5507 = vmatprep.subr.bf16.mxu0 0
      %5508 = vmatpush1.bf16.msra.mxu0 %v5488
      %5509 = vmatprep.subr.bf16.mxu0 0
      %5510 = vmatpush1.bf16.msra.mxu0 %v5489
      %5511 = vmatprep.subr.bf16.mxu0 0
      %5512 = vmatpush1.bf16.msra.mxu0 %v5490
      %5513 = vmatprep.subr.bf16.mxu0 0
      %5514 = vmatpush1.bf16.msra.mxu0 %v5491
      %5515 = vmatprep.subr.bf16.mxu0 0
      %5516 = vmatpush1.bf16.msra.mxu0 %v5492
      %5517 = vmatprep.subr.bf16.mxu0 0
      %5518 = vmatpush1.bf16.msra.mxu0 0
      %5519 = vmatprep.subr.bf16.mxu0 0
      %5520 = vmatpush1.bf16.msra.mxu0 0
      %5521 = vmatprep.subr.bf16.mxu0 0
      %5522 = vmatpush1.bf16.msra.mxu0 0
      %5523 = vmatprep.subr.bf16.mxu0 0
      %5524 = vmatpush1.bf16.msra.mxu0 0
      %5525 = vmatprep.subr.bf16.mxu0 0
      %5526 = vmatpush1.bf16.msra.mxu0 0
      %5527 = vmatprep.subr.bf16.mxu0 0
      %5528 = vmatpush1.bf16.msra.mxu0 0
      %5529 = vmatprep.subr.bf16.mxu0 0
      %5530 = vmatpush1.bf16.msra.mxu0 0
      %5531 = vmatprep.subr.bf16.mxu0 0
      %5532 = vmatpush1.bf16.msra.mxu0 0
      %5533 = vmatprep.mubr.bf16.mxu0 0
      %5534 = vmatmul.mubr.bf16.gmra.mrb[0].mxu0 %v5437
      %v5535 = vpop.f32.mrb[0].mxu0
      %v5536 = vadd.f32 0.0, %v5535
      %v5537 = vpop.f32.mrb[0].mxu0
      %v5538 = vpop.f32.mrb[0].mxu0
      %v5539 = vadd.f32 0.0, %v5538
      %v5540 = vpop.f32.mrb[0].mxu0
      %5541 = vmatprep.mubr.bf16.mxu0 0
      %5542 = vmatmul.mubr.bf16.gmra.mrb[0].mxu0 %v5438
      %v5543 = vpop.f32.mrb[0].mxu0
      %v5544 = vadd.f32 0.0, %v5543
      %v5545 = vpop.f32.mrb[0].mxu0
      %v5546 = vpop.f32.mrb[0].mxu0
      %v5547 = vadd.f32 0.0, %v5546
      %v5548 = vpop.f32.mrb[0].mxu0
      %5549 = vmatprep.mubr.bf16.mxu0 0
      %5550 = vmatmul.mubr.bf16.gmra.mrb[0].mxu0 %v5439
      %v5551 = vpop.f32.mrb[0].mxu0
      %v5552 = vadd.f32 0.0, %v5551
      %v5553 = vpop.f32.mrb[0].mxu0
      %v5554 = vpop.f32.mrb[0].mxu0
      %v5555 = vadd.f32 0.0, %v5554
      %v5556 = vpop.f32.mrb[0].mxu0
      %5557 = vmatprep.mubr.bf16.mxu0 0
      %5558 = vmatmul.mubr.bf16.gmra.mrb[0].mxu0 %v5440
      %v5559 = vpop.f32.mrb[0].mxu0
      %v5560 = vadd.f32 0.0, %v5559
      %v5561 = vpop.f32.mrb[0].mxu0
      %v5562 = vpop.f32.mrb[0].mxu0
      %v5563 = vadd.f32 0.0, %v5562
      %v5564 = vpop.f32.mrb[0].mxu0
      %5565 = vmatprep.mubr.bf16.mxu0 0
      %5566 = vmatmul.mubr.bf16.gmra.mrb[0].mxu0 %v5441
      %v5567 = vpop.f32.mrb[0].mxu0
      %v5568 = vadd.f32 0.0, %v5567
      %v5569 = vpop.f32.mrb[0].mxu0
      %v5570 = vpop.f32.mrb[0].mxu0
      %v5571 = vadd.f32 0.0, %v5570
      %v5572 = vpop.f32.mrb[0].mxu0
      %5573 = vmatprep.mubr.bf16.mxu0 0
      %5574 = vmatmul.mubr.bf16.gmra.mrb[0].mxu0 %v5442
      %v5575 = vpop.f32.mrb[0].mxu0
      %v5576 = vadd.f32 0.0, %v5575
      %v5577 = vpop.f32.mrb[0].mxu0
      %v5578 = vpop.f32.mrb[0].mxu0
      %v5579 = vadd.f32 0.0, %v5578
      %v5580 = vpop.f32.mrb[0].mxu0
      %5581 = vmatprep.mubr.bf16.mxu0 0
      %5582 = vmatmul.mubr.bf16.gmra.mrb[0].mxu0 %v5443
      %v5583 = vpop.f32.mrb[0].mxu0
      %v5584 = vadd.f32 0.0, %v5583
      %v5585 = vpop.f32.mrb[0].mxu0
      %v5586 = vpop.f32.mrb[0].mxu0
      %v5587 = vadd.f32 0.0, %v5586
      %v5588 = vpop.f32.mrb[0].mxu0
      %5589 = vmatprep.mubr.bf16.mxu0 0
      %5590 = vmatmul.mubr.bf16.gmra.mrb[0].mxu0 %v5444
      %v5591 = vpop.f32.mrb[0].mxu0
      %v5592 = vadd.f32 0.0, %v5591
      %v5593 = vpop.f32.mrb[0].mxu0
      %v5594 = vpop.f32.mrb[0].mxu0
      %v5595 = vadd.f32 0.0, %v5594
      %v5596 = vpop.f32.mrb[0].mxu0
      %5597 = vdwg.mxu0
      %v5598 = vadd.f32 %v5172, %v5536
      %v5599 = vadd.f32 %v5173, %v5539
      %v5600 = vadd.f32 %v5174, %v5544
      %v5601 = vadd.f32 %v5175, %v5547
      %v5602 = vadd.f32 %v5176, %v5552
      %v5603 = vadd.f32 %v5177, %v5555
      %v5604 = vadd.f32 %v5178, %v5560
      %v5605 = vadd.f32 %v5179, %v5563
      %v5606 = vadd.f32 %v5180, %v5568
      %v5607 = vadd.f32 %v5181, %v5571
      %v5608 = vadd.f32 %v5182, %v5576
      %v5609 = vadd.f32 %v5183, %v5579
      %v5610 = vadd.f32 %v5184, %v5584
      %v5611 = vadd.f32 %v5185, %v5587
      %v5612 = vadd.f32 %v5186, %v5592
      %v5613 = vadd.f32 %v5187, %v5595
      %v5614 = vld [vmem:[%s4945] sm:$0xe]
      %v5615 = vld [vmem:[%s4945 + $0xc] sm:$0xe]
      %v5616 = vld [vmem:[%s4945 + $0x18] sm:$0xe]
      %v5617 = vld [vmem:[%s4945 + $0x24] sm:$0xe]
      %v5618 = vld [vmem:[%s4945 + $0x30] sm:$0xe]
      %v5619 = vld [vmem:[%s4945 + $0x3c] sm:$0xe]
      %v5620 = vld [vmem:[%s4945 + $0x48] sm:$0xe]
      %v5621 = vld [vmem:[%s4945 + $0x54] sm:$0xe]
      %v5646 = vrot.slane %v5614, 5
      %v5647 = vrot.slane %v5646, 4
      %v5648 = vrot.slane %v5189, 5
      %v5649 = vsel %vm1276, %v5647, %v5648
      %v5650 = vrot.slane %v5648, 4
      %v5651 = vrot.slane %v5190, 5
      %v5652 = vsel %vm1276, %v5650, %v5651
      %v5653 = vrot.slane %v5615, 5
      %v5654 = vrot.slane %v5653, 4
      %v5655 = vrot.slane %v5192, 5
      %v5656 = vsel %vm1276, %v5654, %v5655
      %v5657 = vrot.slane %v5655, 4
      %v5658 = vrot.slane %v5193, 5
      %v5659 = vsel %vm1276, %v5657, %v5658
      %v5660 = vrot.slane %v5616, 5
      %v5661 = vrot.slane %v5660, 4
      %v5662 = vrot.slane %v5195, 5
      %v5663 = vsel %vm1276, %v5661, %v5662
      %v5664 = vrot.slane %v5662, 4
      %v5665 = vrot.slane %v5196, 5
      %v5666 = vsel %vm1276, %v5664, %v5665
      %v5667 = vrot.slane %v5617, 5
      %v5668 = vrot.slane %v5667, 4
      %v5669 = vrot.slane %v5198, 5
      %v5670 = vsel %vm1276, %v5668, %v5669
      %v5671 = vrot.slane %v5669, 4
      %v5672 = vrot.slane %v5199, 5
      %v5673 = vsel %vm1276, %v5671, %v5672
      %v5674 = vrot.slane %v5618, 5
      %v5675 = vrot.slane %v5674, 4
      %v5676 = vrot.slane %v5201, 5
      %v5677 = vsel %vm1276, %v5675, %v5676
      %v5678 = vrot.slane %v5676, 4
      %v5679 = vrot.slane %v5202, 5
      %v5680 = vsel %vm1276, %v5678, %v5679
      %v5681 = vrot.slane %v5619, 5
      %v5682 = vrot.slane %v5681, 4
      %v5683 = vrot.slane %v5204, 5
      %v5684 = vsel %vm1276, %v5682, %v5683
      %v5685 = vrot.slane %v5683, 4
      %v5686 = vrot.slane %v5205, 5
      %v5687 = vsel %vm1276, %v5685, %v5686
      %v5688 = vrot.slane %v5620, 5
      %v5689 = vrot.slane %v5688, 4
      %v5690 = vrot.slane %v5207, 5
      %v5691 = vsel %vm1276, %v5689, %v5690
      %v5692 = vrot.slane %v5690, 4
      %v5693 = vrot.slane %v5208, 5
      %v5694 = vsel %vm1276, %v5692, %v5693
      %v5695 = vrot.slane %v5621, 5
      %v5696 = vrot.slane %v5695, 4
      %v5697 = vrot.slane %v5210, 5
      %v5698 = vsel %vm1276, %v5696, %v5697
      %v5699 = vrot.slane %v5697, 4
      %v5700 = vrot.slane %v5211, 5
      %v5701 = vsel %vm1276, %v5699, %v5700
      %s5702 = scalar_lea.vmem %s7, 320
      %v5703 = vld [vmem:[%s5702] sm:$0xf]
      %v5704 = vld [vmem:[%s5702 + $0x4] sm:$0xf]
      %v5705 = vld [vmem:[%s5702 + $0x8] sm:$0xf]
      %v5706 = vld [vmem:[%s5702 + $0xc] sm:$0xf]
      %v5707 = vld [vmem:[%s5702 + $0x10] sm:$0xf]
      %v5708 = vld [vmem:[%s5702 + $0x14] sm:$0xf]
      %v5709 = vld [vmem:[%s5702 + $0x18] sm:$0xf]
      %v5710 = vld [vmem:[%s5702 + $0x1c] sm:$0xf]
      %v5711 = vld [vmem:[%s5702 + $0x20] sm:$0xf]
      %v5712 = vld [vmem:[%s5702 + $0x24] sm:$0xf]
      %v5713 = vld [vmem:[%s5702 + $0x28] sm:$0xf]
      %v5714 = vld [vmem:[%s5702 + $0x2c] sm:$0xf]
      %v5715 = vld [vmem:[%s5702 + $0x30] sm:$0xf]
      %v5716 = vld [vmem:[%s5702 + $0x34] sm:$0xf]
      %v5717 = vld [vmem:[%s5702 + $0x38] sm:$0xf]
      %v5718 = vld [vmem:[%s5702 + $0x3c] sm:$0xf]
      %v5719 = vunpack.c.l.b16 %v5649
      %v5720 = vunpack.c.l.b16 %v5652
      %v5721 = vunpack.c.l.b16 %v5656
      %v5722 = vunpack.c.l.b16 %v5659
      %v5723 = vunpack.c.l.b16 %v5663
      %v5724 = vunpack.c.l.b16 %v5666
      %v5725 = vunpack.c.l.b16 %v5670
      %v5726 = vunpack.c.l.b16 %v5673
      %v5727 = vunpack.c.l.b16 %v5677
      %v5728 = vunpack.c.l.b16 %v5680
      %v5729 = vunpack.c.l.b16 %v5684
      %v5730 = vunpack.c.l.b16 %v5687
      %v5731 = vunpack.c.l.b16 %v5691
      %v5732 = vunpack.c.l.b16 %v5694
      %v5733 = vunpack.c.l.b16 %v5698
      %v5734 = vunpack.c.l.b16 %v5701
      %v5735 = vpack.c.b16 %v5720, %v5719
      %v5736 = vpack.c.b16 %v5722, %v5721
      %v5737 = vpack.c.b16 %v5724, %v5723
      %v5738 = vpack.c.b16 %v5726, %v5725
      %v5739 = vpack.c.b16 %v5728, %v5727
      %v5740 = vpack.c.b16 %v5730, %v5729
      %v5741 = vpack.c.b16 %v5732, %v5731
      %v5742 = vpack.c.b16 %v5734, %v5733
      %v5767 = vunpack.c.l.b16 %v5703
      %v5768 = vunpack.c.l.b16 %v5704
      %v5769 = vunpack.c.l.b16 %v5705
      %v5770 = vunpack.c.l.b16 %v5706
      %v5771 = vunpack.c.l.b16 %v5707
      %v5772 = vunpack.c.l.b16 %v5708
      %v5773 = vunpack.c.l.b16 %v5709
      %v5774 = vunpack.c.l.b16 %v5710
      %v5775 = vunpack.c.l.b16 %v5711
      %v5776 = vunpack.c.l.b16 %v5712
      %v5777 = vunpack.c.l.b16 %v5713
      %v5778 = vunpack.c.l.b16 %v5714
      %v5779 = vunpack.c.l.b16 %v5715
      %v5780 = vunpack.c.l.b16 %v5716
      %v5781 = vunpack.c.l.b16 %v5717
      %v5782 = vunpack.c.l.b16 %v5718
      %v5783 = vpack.c.b16 %v5768, %v5767
      %v5784 = vpack.c.b16 %v5770, %v5769
      %v5785 = vpack.c.b16 %v5772, %v5771
      %v5786 = vpack.c.b16 %v5774, %v5773
      %v5787 = vpack.c.b16 %v5776, %v5775
      %v5788 = vpack.c.b16 %v5778, %v5777
      %v5789 = vpack.c.b16 %v5780, %v5779
      %v5790 = vpack.c.b16 %v5782, %v5781
      %5799 = vmatprep.subr.bf16.mxu0 0
      %5800 = vmatpush1.bf16.msra.mxu0 %v5783
      %5801 = vmatprep.subr.bf16.mxu0 0
      %5802 = vmatpush1.bf16.msra.mxu0 %v5784
      %5803 = vmatprep.subr.bf16.mxu0 0
      %5804 = vmatpush1.bf16.msra.mxu0 %v5785
      %5805 = vmatprep.subr.bf16.mxu0 0
      %5806 = vmatpush1.bf16.msra.mxu0 %v5786
      %5807 = vmatprep.subr.bf16.mxu0 0
      %5808 = vmatpush1.bf16.msra.mxu0 %v5787
      %5809 = vmatprep.subr.bf16.mxu0 0
      %5810 = vmatpush1.bf16.msra.mxu0 %v5788
      %5811 = vmatprep.subr.bf16.mxu0 0
      %5812 = vmatpush1.bf16.msra.mxu0 %v5789
      %5813 = vmatprep.subr.bf16.mxu0 0
      %5814 = vmatpush1.bf16.msra.mxu0 %v5790
      %5815 = vmatprep.subr.bf16.mxu0 0
      %5816 = vmatpush1.bf16.msra.mxu0 0
      %5817 = vmatprep.subr.bf16.mxu0 0
      %5818 = vmatpush1.bf16.msra.mxu0 0
      %5819 = vmatprep.subr.bf16.mxu0 0
      %5820 = vmatpush1.bf16.msra.mxu0 0
      %5821 = vmatprep.subr.bf16.mxu0 0
      %5822 = vmatpush1.bf16.msra.mxu0 0
      %5823 = vmatprep.subr.bf16.mxu0 0
      %5824 = vmatpush1.bf16.msra.mxu0 0
      %5825 = vmatprep.subr.bf16.mxu0 0
      %5826 = vmatpush1.bf16.msra.mxu0 0
      %5827 = vmatprep.subr.bf16.mxu0 0
      %5828 = vmatpush1.bf16.msra.mxu0 0
      %5829 = vmatprep.subr.bf16.mxu0 0
      %5830 = vmatpush1.bf16.msra.mxu0 0
      %5831 = vmatprep.mubr.bf16.mxu0 0
      %5832 = vmatmul.mubr.bf16.gmra.mrb[0].mxu0 %v5735
      %v5833 = vpop.f32.mrb[0].mxu0
      %v5834 = vadd.f32 0.0, %v5833
      %v5835 = vpop.f32.mrb[0].mxu0
      %v5836 = vpop.f32.mrb[0].mxu0
      %v5837 = vadd.f32 0.0, %v5836
      %v5838 = vpop.f32.mrb[0].mxu0
      %5839 = vmatprep.mubr.bf16.mxu0 0
      %5840 = vmatmul.mubr.bf16.gmra.mrb[0].mxu0 %v5736
      %v5841 = vpop.f32.mrb[0].mxu0
      %v5842 = vadd.f32 0.0, %v5841
      %v5843 = vpop.f32.mrb[0].mxu0
      %v5844 = vpop.f32.mrb[0].mxu0
      %v5845 = vadd.f32 0.0, %v5844
      %v5846 = vpop.f32.mrb[0].mxu0
      %5847 = vmatprep.mubr.bf16.mxu0 0
      %5848 = vmatmul.mubr.bf16.gmra.mrb[0].mxu0 %v5737
      %v5849 = vpop.f32.mrb[0].mxu0
      %v5850 = vadd.f32 0.0, %v5849
      %v5851 = vpop.f32.mrb[0].mxu0
      %v5852 = vpop.f32.mrb[0].mxu0
      %v5853 = vadd.f32 0.0, %v5852
      %v5854 = vpop.f32.mrb[0].mxu0
      %5855 = vmatprep.mubr.bf16.mxu0 0
      %5856 = vmatmul.mubr.bf16.gmra.mrb[0].mxu0 %v5738
      %v5857 = vpop.f32.mrb[0].mxu0
      %v5858 = vadd.f32 0.0, %v5857
      %v5859 = vpop.f32.mrb[0].mxu0
      %v5860 = vpop.f32.mrb[0].mxu0
      %v5861 = vadd.f32 0.0, %v5860
      %v5862 = vpop.f32.mrb[0].mxu0
      %5863 = vmatprep.mubr.bf16.mxu0 0
      %5864 = vmatmul.mubr.bf16.gmra.mrb[0].mxu0 %v5739
      %v5865 = vpop.f32.mrb[0].mxu0
      %v5866 = vadd.f32 0.0, %v5865
      %v5867 = vpop.f32.mrb[0].mxu0
      %v5868 = vpop.f32.mrb[0].mxu0
      %v5869 = vadd.f32 0.0, %v5868
      %v5870 = vpop.f32.mrb[0].mxu0
      %5871 = vmatprep.mubr.bf16.mxu0 0
      %5872 = vmatmul.mubr.bf16.gmra.mrb[0].mxu0 %v5740
      %v5873 = vpop.f32.mrb[0].mxu0
      %v5874 = vadd.f32 0.0, %v5873
      %v5875 = vpop.f32.mrb[0].mxu0
      %v5876 = vpop.f32.mrb[0].mxu0
      %v5877 = vadd.f32 0.0, %v5876
      %v5878 = vpop.f32.mrb[0].mxu0
      %5879 = vmatprep.mubr.bf16.mxu0 0
      %5880 = vmatmul.mubr.bf16.gmra.mrb[0].mxu0 %v5741
      %v5881 = vpop.f32.mrb[0].mxu0
      %v5882 = vadd.f32 0.0, %v5881
      %v5883 = vpop.f32.mrb[0].mxu0
      %v5884 = vpop.f32.mrb[0].mxu0
      %v5885 = vadd.f32 0.0, %v5884
      %v5886 = vpop.f32.mrb[0].mxu0
      %5887 = vmatprep.mubr.bf16.mxu0 0
      %5888 = vmatmul.mubr.bf16.gmra.mrb[0].mxu0 %v5742
      %v5889 = vpop.f32.mrb[0].mxu0
      %v5890 = vadd.f32 0.0, %v5889
      %v5891 = vpop.f32.mrb[0].mxu0
      %v5892 = vpop.f32.mrb[0].mxu0
      %v5893 = vadd.f32 0.0, %v5892
      %v5894 = vpop.f32.mrb[0].mxu0
      %5895 = vdwg.mxu0
      %v5896 = vadd.f32 %v5598, %v5834
      %v5897 = vadd.f32 %v5599, %v5837
      %v5898 = vadd.f32 %v5600, %v5842
      %v5899 = vadd.f32 %v5601, %v5845
      %v5900 = vadd.f32 %v5602, %v5850
      %v5901 = vadd.f32 %v5603, %v5853
      %v5902 = vadd.f32 %v5604, %v5858
      %v5903 = vadd.f32 %v5605, %v5861
      %v5904 = vadd.f32 %v5606, %v5866
      %v5905 = vadd.f32 %v5607, %v5869
      %v5906 = vadd.f32 %v5608, %v5874
      %v5907 = vadd.f32 %v5609, %v5877
      %v5908 = vadd.f32 %v5610, %v5882
      %v5909 = vadd.f32 %v5611, %v5885
      %v5910 = vadd.f32 %v5612, %v5890
      %v5911 = vadd.f32 %v5613, %v5893
      %s5912 = scalar_lea.vmem [#allocation3], 24
      %v5913 = vld [vmem:[%s5912] sm:$0xf]
      %v5914 = vld [vmem:[%s5912 + $0x4] sm:$0xf]
      %v5915 = vld [vmem:[%s5912 + $0xc] sm:$0xf]
      %v5916 = vld [vmem:[%s5912 + $0x10] sm:$0xf]
      %v5917 = vld [vmem:[%s5912 + $0x18] sm:$0xf]
      %v5918 = vld [vmem:[%s5912 + $0x1c] sm:$0xf]
      %v5919 = vld [vmem:[%s5912 + $0x24] sm:$0xf]
      %v5920 = vld [vmem:[%s5912 + $0x28] sm:$0xf]
      %v5921 = vld [vmem:[%s5912 + $0x30] sm:$0xf]
      %v5922 = vld [vmem:[%s5912 + $0x34] sm:$0xf]
      %v5923 = vld [vmem:[%s5912 + $0x3c] sm:$0xf]
      %v5924 = vld [vmem:[%s5912 + $0x40] sm:$0xf]
      %v5925 = vld [vmem:[%s5912 + $0x48] sm:$0xf]
      %v5926 = vld [vmem:[%s5912 + $0x4c] sm:$0xf]
      %v5927 = vld [vmem:[%s5912 + $0x54] sm:$0xf]
      %v5928 = vld [vmem:[%s5912 + $0x58] sm:$0xf]
      %s5929 = scalar_lea.vmem %s7, 384
      %v5930 = vld [vmem:[%s5929] sm:$0xf]
      %v5931 = vld [vmem:[%s5929 + $0x4] sm:$0xf]
      %v5932 = vld [vmem:[%s5929 + $0x8] sm:$0xf]
      %v5933 = vld [vmem:[%s5929 + $0xc] sm:$0xf]
      %v5934 = vld [vmem:[%s5929 + $0x10] sm:$0xf]
      %v5935 = vld [vmem:[%s5929 + $0x14] sm:$0xf]
      %v5936 = vld [vmem:[%s5929 + $0x18] sm:$0xf]
      %v5937 = vld [vmem:[%s5929 + $0x1c] sm:$0xf]
      %v5938 = vld [vmem:[%s5929 + $0x20] sm:$0xf]
      %v5939 = vld [vmem:[%s5929 + $0x24] sm:$0xf]
      %v5940 = vld [vmem:[%s5929 + $0x28] sm:$0xf]
      %v5941 = vld [vmem:[%s5929 + $0x2c] sm:$0xf]
      %v5942 = vld [vmem:[%s5929 + $0x30] sm:$0xf]
      %v5943 = vld [vmem:[%s5929 + $0x34] sm:$0xf]
      %v5944 = vld [vmem:[%s5929 + $0x38] sm:$0xf]
      %v5945 = vld [vmem:[%s5929 + $0x3c] sm:$0xf]
      %v5962 = vunpack.c.l.b16 %v5913
      %v5963 = vunpack.c.l.b16 %v5914
      %v5964 = vunpack.c.l.b16 %v5915
      %v5965 = vunpack.c.l.b16 %v5916
      %v5966 = vunpack.c.l.b16 %v5917
      %v5967 = vunpack.c.l.b16 %v5918
      %v5968 = vunpack.c.l.b16 %v5919
      %v5969 = vunpack.c.l.b16 %v5920
      %v5970 = vunpack.c.l.b16 %v5921
      %v5971 = vunpack.c.l.b16 %v5922
      %v5972 = vunpack.c.l.b16 %v5923
      %v5973 = vunpack.c.l.b16 %v5924
      %v5974 = vunpack.c.l.b16 %v5925
      %v5975 = vunpack.c.l.b16 %v5926
      %v5976 = vunpack.c.l.b16 %v5927
      %v5977 = vunpack.c.l.b16 %v5928
      %v5978 = vpack.c.b16 %v5963, %v5962
      %v5979 = vpack.c.b16 %v5965, %v5964
      %v5980 = vpack.c.b16 %v5967, %v5966
      %v5981 = vpack.c.b16 %v5969, %v5968
      %v5982 = vpack.c.b16 %v5971, %v5970
      %v5983 = vpack.c.b16 %v5973, %v5972
      %v5984 = vpack.c.b16 %v5975, %v5974
      %v5985 = vpack.c.b16 %v5977, %v5976
      %v6010 = vunpack.c.l.b16 %v5930
      %v6011 = vunpack.c.l.b16 %v5931
      %v6012 = vunpack.c.l.b16 %v5932
      %v6013 = vunpack.c.l.b16 %v5933
      %v6014 = vunpack.c.l.b16 %v5934
      %v6015 = vunpack.c.l.b16 %v5935
      %v6016 = vunpack.c.l.b16 %v5936
      %v6017 = vunpack.c.l.b16 %v5937
      %v6018 = vunpack.c.l.b16 %v5938
      %v6019 = vunpack.c.l.b16 %v5939
      %v6020 = vunpack.c.l.b16 %v5940
      %v6021 = vunpack.c.l.b16 %v5941
      %v6022 = vunpack.c.l.b16 %v5942
      %v6023 = vunpack.c.l.b16 %v5943
      %v6024 = vunpack.c.l.b16 %v5944
      %v6025 = vunpack.c.l.b16 %v5945
      %v6026 = vpack.c.b16 %v6011, %v6010
      %v6027 = vpack.c.b16 %v6013, %v6012
      %v6028 = vpack.c.b16 %v6015, %v6014
      %v6029 = vpack.c.b16 %v6017, %v6016
      %v6030 = vpack.c.b16 %v6019, %v6018
      %v6031 = vpack.c.b16 %v6021, %v6020
      %v6032 = vpack.c.b16 %v6023, %v6022
      %v6033 = vpack.c.b16 %v6025, %v6024
      %6042 = vmatprep.subr.bf16.mxu0 0
      %6043 = vmatpush1.bf16.msra.mxu0 %v6026
      %6044 = vmatprep.subr.bf16.mxu0 0
      %6045 = vmatpush1.bf16.msra.mxu0 %v6027
      %6046 = vmatprep.subr.bf16.mxu0 0
      %6047 = vmatpush1.bf16.msra.mxu0 %v6028
      %6048 = vmatprep.subr.bf16.mxu0 0
      %6049 = vmatpush1.bf16.msra.mxu0 %v6029
      %6050 = vmatprep.subr.bf16.mxu0 0
      %6051 = vmatpush1.bf16.msra.mxu0 %v6030
      %6052 = vmatprep.subr.bf16.mxu0 0
      %6053 = vmatpush1.bf16.msra.mxu0 %v6031
      %6054 = vmatprep.subr.bf16.mxu0 0
      %6055 = vmatpush1.bf16.msra.mxu0 %v6032
      %6056 = vmatprep.subr.bf16.mxu0 0
      %6057 = vmatpush1.bf16.msra.mxu0 %v6033
      %6058 = vmatprep.subr.bf16.mxu0 0
      %6059 = vmatpush1.bf16.msra.mxu0 0
      %6060 = vmatprep.subr.bf16.mxu0 0
      %6061 = vmatpush1.bf16.msra.mxu0 0
      %6062 = vmatprep.subr.bf16.mxu0 0
      %6063 = vmatpush1.bf16.msra.mxu0 0
      %6064 = vmatprep.subr.bf16.mxu0 0
      %6065 = vmatpush1.bf16.msra.mxu0 0
      %6066 = vmatprep.subr.bf16.mxu0 0
      %6067 = vmatpush1.bf16.msra.mxu0 0
      %6068 = vmatprep.subr.bf16.mxu0 0
      %6069 = vmatpush1.bf16.msra.mxu0 0
      %6070 = vmatprep.subr.bf16.mxu0 0
      %6071 = vmatpush1.bf16.msra.mxu0 0
      %6072 = vmatprep.subr.bf16.mxu0 0
      %6073 = vmatpush1.bf16.msra.mxu0 0
      %6074 = vmatprep.mubr.bf16.mxu0 0
      %6075 = vmatmul.mubr.bf16.gmra.mrb[0].mxu0 %v5978
      %v6076 = vpop.f32.mrb[0].mxu0
      %v6077 = vadd.f32 0.0, %v6076
      %v6078 = vpop.f32.mrb[0].mxu0
      %v6079 = vpop.f32.mrb[0].mxu0
      %v6080 = vadd.f32 0.0, %v6079
      %v6081 = vpop.f32.mrb[0].mxu0
      %6082 = vmatprep.mubr.bf16.mxu0 0
      %6083 = vmatmul.mubr.bf16.gmra.mrb[0].mxu0 %v5979
      %v6084 = vpop.f32.mrb[0].mxu0
      %v6085 = vadd.f32 0.0, %v6084
      %v6086 = vpop.f32.mrb[0].mxu0
      %v6087 = vpop.f32.mrb[0].mxu0
      %v6088 = vadd.f32 0.0, %v6087
      %v6089 = vpop.f32.mrb[0].mxu0
      %6090 = vmatprep.mubr.bf16.mxu0 0
      %6091 = vmatmul.mubr.bf16.gmra.mrb[0].mxu0 %v5980
      %v6092 = vpop.f32.mrb[0].mxu0
      %v6093 = vadd.f32 0.0, %v6092
      %v6094 = vpop.f32.mrb[0].mxu0
      %v6095 = vpop.f32.mrb[0].mxu0
      %v6096 = vadd.f32 0.0, %v6095
      %v6097 = vpop.f32.mrb[0].mxu0
      %6098 = vmatprep.mubr.bf16.mxu0 0
      %6099 = vmatmul.mubr.bf16.gmra.mrb[0].mxu0 %v5981
      %v6100 = vpop.f32.mrb[0].mxu0
      %v6101 = vadd.f32 0.0, %v6100
      %v6102 = vpop.f32.mrb[0].mxu0
      %v6103 = vpop.f32.mrb[0].mxu0
      %v6104 = vadd.f32 0.0, %v6103
      %v6105 = vpop.f32.mrb[0].mxu0
      %6106 = vmatprep.mubr.bf16.mxu0 0
      %6107 = vmatmul.mubr.bf16.gmra.mrb[0].mxu0 %v5982
      %v6108 = vpop.f32.mrb[0].mxu0
      %v6109 = vadd.f32 0.0, %v6108
      %v6110 = vpop.f32.mrb[0].mxu0
      %v6111 = vpop.f32.mrb[0].mxu0
      %v6112 = vadd.f32 0.0, %v6111
      %v6113 = vpop.f32.mrb[0].mxu0
      %6114 = vmatprep.mubr.bf16.mxu0 0
      %6115 = vmatmul.mubr.bf16.gmra.mrb[0].mxu0 %v5983
      %v6116 = vpop.f32.mrb[0].mxu0
      %v6117 = vadd.f32 0.0, %v6116
      %v6118 = vpop.f32.mrb[0].mxu0
      %v6119 = vpop.f32.mrb[0].mxu0
      %v6120 = vadd.f32 0.0, %v6119
      %v6121 = vpop.f32.mrb[0].mxu0
      %6122 = vmatprep.mubr.bf16.mxu0 0
      %6123 = vmatmul.mubr.bf16.gmra.mrb[0].mxu0 %v5984
      %v6124 = vpop.f32.mrb[0].mxu0
      %v6125 = vadd.f32 0.0, %v6124
      %v6126 = vpop.f32.mrb[0].mxu0
      %v6127 = vpop.f32.mrb[0].mxu0
      %v6128 = vadd.f32 0.0, %v6127
      %v6129 = vpop.f32.mrb[0].mxu0
      %6130 = vmatprep.mubr.bf16.mxu0 0
      %6131 = vmatmul.mubr.bf16.gmra.mrb[0].mxu0 %v5985
      %v6132 = vpop.f32.mrb[0].mxu0
      %v6133 = vadd.f32 0.0, %v6132
      %v6134 = vpop.f32.mrb[0].mxu0
      %v6135 = vpop.f32.mrb[0].mxu0
      %v6136 = vadd.f32 0.0, %v6135
      %v6137 = vpop.f32.mrb[0].mxu0
      %6138 = vdwg.mxu0
      %v6139 = vadd.f32 %v5896, %v6077
      %v6140 = vadd.f32 %v5897, %v6080
      %v6141 = vadd.f32 %v5898, %v6085
      %v6142 = vadd.f32 %v5899, %v6088
      %v6143 = vadd.f32 %v5900, %v6093
      %v6144 = vadd.f32 %v5901, %v6096
      %v6145 = vadd.f32 %v5902, %v6101
      %v6146 = vadd.f32 %v5903, %v6104
      %v6147 = vadd.f32 %v5904, %v6109
      %v6148 = vadd.f32 %v5905, %v6112
      %v6149 = vadd.f32 %v5906, %v6117
      %v6150 = vadd.f32 %v5907, %v6120
      %v6151 = vadd.f32 %v5908, %v6125
      %v6152 = vadd.f32 %v5909, %v6128
      %v6153 = vadd.f32 %v5910, %v6133
      %v6154 = vadd.f32 %v5911, %v6136
      %v6155 = vld [vmem:[%s5912] sm:$0xf]
      %v6156 = vld [vmem:[%s5912 + $0x4] sm:$0xf]
      %v6157 = vld [vmem:[%s5912 + $0x8] sm:$0x1]
      %v6158 = vld [vmem:[%s5912 + $0xc] sm:$0xf]
      %v6159 = vld [vmem:[%s5912 + $0x10] sm:$0xf]
      %v6160 = vld [vmem:[%s5912 + $0x14] sm:$0x1]
      %v6161 = vld [vmem:[%s5912 + $0x18] sm:$0xf]
      %v6162 = vld [vmem:[%s5912 + $0x1c] sm:$0xf]
      %v6163 = vld [vmem:[%s5912 + $0x20] sm:$0x1]
      %v6164 = vld [vmem:[%s5912 + $0x24] sm:$0xf]
      %v6165 = vld [vmem:[%s5912 + $0x28] sm:$0xf]
      %v6166 = vld [vmem:[%s5912 + $0x2c] sm:$0x1]
      %v6167 = vld [vmem:[%s5912 + $0x30] sm:$0xf]
      %v6168 = vld [vmem:[%s5912 + $0x34] sm:$0xf]
      %v6169 = vld [vmem:[%s5912 + $0x38] sm:$0x1]
      %v6170 = vld [vmem:[%s5912 + $0x3c] sm:$0xf]
      %v6171 = vld [vmem:[%s5912 + $0x40] sm:$0xf]
      %v6172 = vld [vmem:[%s5912 + $0x44] sm:$0x1]
      %v6173 = vld [vmem:[%s5912 + $0x48] sm:$0xf]
      %v6174 = vld [vmem:[%s5912 + $0x4c] sm:$0xf]
      %v6175 = vld [vmem:[%s5912 + $0x50] sm:$0x1]
      %v6176 = vld [vmem:[%s5912 + $0x54] sm:$0xf]
      %v6177 = vld [vmem:[%s5912 + $0x58] sm:$0xf]
      %v6178 = vld [vmem:[%s5912 + $0x5c] sm:$0x1]
      %v6180 = vshrl.u32 %v6155, 16
      %v6182 = vrot.slane %v6180, 4
      %v6183 = vshll.u32 %v6155, 16
      %v6185 = vrot.slane %v6183, 5
      %v6186 = vor.u32 %v6182, %v6185
      %v6187 = vrot.slane %v6186, 4
      %v6189 = vshll.u32 %v6156, 16
      %v6191 = vrot.slane %v6189, 5
      %v6192 = vsel %vm624, %v6187, %v6191
      %v6193 = vshrl.u32 %v6156, 16
      %v6195 = vrot.slane %v6193, 4
      %v6196 = vor.u32 %v6195, %v6191
      %v6197 = vrot.slane %v6196, 4
      %v6199 = vshll.u32 %v6157, 16
      %v6201 = vrot.slane %v6199, 5
      %v6202 = vsel %vm624, %v6197, %v6201
      %v6204 = vshrl.u32 %v6158, 16
      %v6206 = vrot.slane %v6204, 4
      %v6207 = vshll.u32 %v6158, 16
      %v6209 = vrot.slane %v6207, 5
      %v6210 = vor.u32 %v6206, %v6209
      %v6211 = vrot.slane %v6210, 4
      %v6213 = vshll.u32 %v6159, 16
      %v6215 = vrot.slane %v6213, 5
      %v6216 = vsel %vm624, %v6211, %v6215
      %v6217 = vshrl.u32 %v6159, 16
      %v6219 = vrot.slane %v6217, 4
      %v6220 = vor.u32 %v6219, %v6215
      %v6221 = vrot.slane %v6220, 4
      %v6223 = vshll.u32 %v6160, 16
      %v6225 = vrot.slane %v6223, 5
      %v6226 = vsel %vm624, %v6221, %v6225
      %v6228 = vshrl.u32 %v6161, 16
      %v6230 = vrot.slane %v6228, 4
      %v6231 = vshll.u32 %v6161, 16
      %v6233 = vrot.slane %v6231, 5
      %v6234 = vor.u32 %v6230, %v6233
      %v6235 = vrot.slane %v6234, 4
      %v6237 = vshll.u32 %v6162, 16
      %v6239 = vrot.slane %v6237, 5
      %v6240 = vsel %vm624, %v6235, %v6239
      %v6241 = vshrl.u32 %v6162, 16
      %v6243 = vrot.slane %v6241, 4
      %v6244 = vor.u32 %v6243, %v6239
      %v6245 = vrot.slane %v6244, 4
      %v6247 = vshll.u32 %v6163, 16
      %v6249 = vrot.slane %v6247, 5
      %v6250 = vsel %vm624, %v6245, %v6249
      %v6252 = vshrl.u32 %v6164, 16
      %v6254 = vrot.slane %v6252, 4
      %v6255 = vshll.u32 %v6164, 16
      %v6257 = vrot.slane %v6255, 5
      %v6258 = vor.u32 %v6254, %v6257
      %v6259 = vrot.slane %v6258, 4
      %v6261 = vshll.u32 %v6165, 16
      %v6263 = vrot.slane %v6261, 5
      %v6264 = vsel %vm624, %v6259, %v6263
      %v6265 = vshrl.u32 %v6165, 16
      %v6267 = vrot.slane %v6265, 4
      %v6268 = vor.u32 %v6267, %v6263
      %v6269 = vrot.slane %v6268, 4
      %v6271 = vshll.u32 %v6166, 16
      %v6273 = vrot.slane %v6271, 5
      %v6274 = vsel %vm624, %v6269, %v6273
      %v6276 = vshrl.u32 %v6167, 16
      %v6278 = vrot.slane %v6276, 4
      %v6279 = vshll.u32 %v6167, 16
      %v6281 = vrot.slane %v6279, 5
      %v6282 = vor.u32 %v6278, %v6281
      %v6283 = vrot.slane %v6282, 4
      %v6285 = vshll.u32 %v6168, 16
      %v6287 = vrot.slane %v6285, 5
      %v6288 = vsel %vm624, %v6283, %v6287
      %v6289 = vshrl.u32 %v6168, 16
      %v6291 = vrot.slane %v6289, 4
      %v6292 = vor.u32 %v6291, %v6287
      %v6293 = vrot.slane %v6292, 4
      %v6295 = vshll.u32 %v6169, 16
      %v6297 = vrot.slane %v6295, 5
      %v6298 = vsel %vm624, %v6293, %v6297
      %v6300 = vshrl.u32 %v6170, 16
      %v6302 = vrot.slane %v6300, 4
      %v6303 = vshll.u32 %v6170, 16
      %v6305 = vrot.slane %v6303, 5
      %v6306 = vor.u32 %v6302, %v6305
      %v6307 = vrot.slane %v6306, 4
      %v6309 = vshll.u32 %v6171, 16
      %v6311 = vrot.slane %v6309, 5
      %v6312 = vsel %vm624, %v6307, %v6311
      %v6313 = vshrl.u32 %v6171, 16
      %v6315 = vrot.slane %v6313, 4
      %v6316 = vor.u32 %v6315, %v6311
      %v6317 = vrot.slane %v6316, 4
      %v6319 = vshll.u32 %v6172, 16
      %v6321 = vrot.slane %v6319, 5
      %v6322 = vsel %vm624, %v6317, %v6321
      %v6324 = vshrl.u32 %v6173, 16
      %v6326 = vrot.slane %v6324, 4
      %v6327 = vshll.u32 %v6173, 16
      %v6329 = vrot.slane %v6327, 5
      %v6330 = vor.u32 %v6326, %v6329
      %v6331 = vrot.slane %v6330, 4
      %v6333 = vshll.u32 %v6174, 16
      %v6335 = vrot.slane %v6333, 5
      %v6336 = vsel %vm624, %v6331, %v6335
      %v6337 = vshrl.u32 %v6174, 16
      %v6339 = vrot.slane %v6337, 4
      %v6340 = vor.u32 %v6339, %v6335
      %v6341 = vrot.slane %v6340, 4
      %v6343 = vshll.u32 %v6175, 16
      %v6345 = vrot.slane %v6343, 5
      %v6346 = vsel %vm624, %v6341, %v6345
      %v6348 = vshrl.u32 %v6176, 16
      %v6350 = vrot.slane %v6348, 4
      %v6351 = vshll.u32 %v6176, 16
      %v6353 = vrot.slane %v6351, 5
      %v6354 = vor.u32 %v6350, %v6353
      %v6355 = vrot.slane %v6354, 4
      %v6357 = vshll.u32 %v6177, 16
      %v6359 = vrot.slane %v6357, 5
      %v6360 = vsel %vm624, %v6355, %v6359
      %v6361 = vshrl.u32 %v6177, 16
      %v6363 = vrot.slane %v6361, 4
      %v6364 = vor.u32 %v6363, %v6359
      %v6365 = vrot.slane %v6364, 4
      %v6367 = vshll.u32 %v6178, 16
      %v6369 = vrot.slane %v6367, 5
      %v6370 = vsel %vm624, %v6365, %v6369
      %s6371 = scalar_lea.vmem %s7, 448
      %v6372 = vld [vmem:[%s6371] sm:$0xf]
      %v6373 = vld [vmem:[%s6371 + $0x4] sm:$0xf]
      %v6374 = vld [vmem:[%s6371 + $0x8] sm:$0xf]
      %v6375 = vld [vmem:[%s6371 + $0xc] sm:$0xf]
      %v6376 = vld [vmem:[%s6371 + $0x10] sm:$0xf]
      %v6377 = vld [vmem:[%s6371 + $0x14] sm:$0xf]
      %v6378 = vld [vmem:[%s6371 + $0x18] sm:$0xf]
      %v6379 = vld [vmem:[%s6371 + $0x1c] sm:$0xf]
      %v6380 = vld [vmem:[%s6371 + $0x20] sm:$0xf]
      %v6381 = vld [vmem:[%s6371 + $0x24] sm:$0xf]
      %v6382 = vld [vmem:[%s6371 + $0x28] sm:$0xf]
      %v6383 = vld [vmem:[%s6371 + $0x2c] sm:$0xf]
      %v6384 = vld [vmem:[%s6371 + $0x30] sm:$0xf]
      %v6385 = vld [vmem:[%s6371 + $0x34] sm:$0xf]
      %v6386 = vld [vmem:[%s6371 + $0x38] sm:$0xf]
      %v6387 = vld [vmem:[%s6371 + $0x3c] sm:$0xf]
      %v6388 = vunpack.c.l.b16 %v6192
      %v6389 = vunpack.c.l.b16 %v6202
      %v6390 = vunpack.c.l.b16 %v6216
      %v6391 = vunpack.c.l.b16 %v6226
      %v6392 = vunpack.c.l.b16 %v6240
      %v6393 = vunpack.c.l.b16 %v6250
      %v6394 = vunpack.c.l.b16 %v6264
      %v6395 = vunpack.c.l.b16 %v6274
      %v6396 = vunpack.c.l.b16 %v6288
      %v6397 = vunpack.c.l.b16 %v6298
      %v6398 = vunpack.c.l.b16 %v6312
      %v6399 = vunpack.c.l.b16 %v6322
      %v6400 = vunpack.c.l.b16 %v6336
      %v6401 = vunpack.c.l.b16 %v6346
      %v6402 = vunpack.c.l.b16 %v6360
      %v6403 = vunpack.c.l.b16 %v6370
      %v6404 = vpack.c.b16 %v6389, %v6388
      %v6405 = vpack.c.b16 %v6391, %v6390
      %v6406 = vpack.c.b16 %v6393, %v6392
      %v6407 = vpack.c.b16 %v6395, %v6394
      %v6408 = vpack.c.b16 %v6397, %v6396
      %v6409 = vpack.c.b16 %v6399, %v6398
      %v6410 = vpack.c.b16 %v6401, %v6400
      %v6411 = vpack.c.b16 %v6403, %v6402
      %v6436 = vunpack.c.l.b16 %v6372
      %v6437 = vunpack.c.l.b16 %v6373
      %v6438 = vunpack.c.l.b16 %v6374
      %v6439 = vunpack.c.l.b16 %v6375
      %v6440 = vunpack.c.l.b16 %v6376
      %v6441 = vunpack.c.l.b16 %v6377
      %v6442 = vunpack.c.l.b16 %v6378
      %v6443 = vunpack.c.l.b16 %v6379
      %v6444 = vunpack.c.l.b16 %v6380
      %v6445 = vunpack.c.l.b16 %v6381
      %v6446 = vunpack.c.l.b16 %v6382
      %v6447 = vunpack.c.l.b16 %v6383
      %v6448 = vunpack.c.l.b16 %v6384
      %v6449 = vunpack.c.l.b16 %v6385
      %v6450 = vunpack.c.l.b16 %v6386
      %v6451 = vunpack.c.l.b16 %v6387
      %v6452 = vpack.c.b16 %v6437, %v6436
      %v6453 = vpack.c.b16 %v6439, %v6438
      %v6454 = vpack.c.b16 %v6441, %v6440
      %v6455 = vpack.c.b16 %v6443, %v6442
      %v6456 = vpack.c.b16 %v6445, %v6444
      %v6457 = vpack.c.b16 %v6447, %v6446
      %v6458 = vpack.c.b16 %v6449, %v6448
      %v6459 = vpack.c.b16 %v6451, %v6450
      %6468 = vmatprep.subr.bf16.mxu0 0
      %6469 = vmatpush1.bf16.msra.mxu0 %v6452
      %6470 = vmatprep.subr.bf16.mxu0 0
      %6471 = vmatpush1.bf16.msra.mxu0 %v6453
      %6472 = vmatprep.subr.bf16.mxu0 0
      %6473 = vmatpush1.bf16.msra.mxu0 %v6454
      %6474 = vmatprep.subr.bf16.mxu0 0
      %6475 = vmatpush1.bf16.msra.mxu0 %v6455
      %6476 = vmatprep.subr.bf16.mxu0 0
      %6477 = vmatpush1.bf16.msra.mxu0 %v6456
      %6478 = vmatprep.subr.bf16.mxu0 0
      %6479 = vmatpush1.bf16.msra.mxu0 %v6457
      %6480 = vmatprep.subr.bf16.mxu0 0
      %6481 = vmatpush1.bf16.msra.mxu0 %v6458
      %6482 = vmatprep.subr.bf16.mxu0 0
      %6483 = vmatpush1.bf16.msra.mxu0 %v6459
      %6484 = vmatprep.subr.bf16.mxu0 0
      %6485 = vmatpush1.bf16.msra.mxu0 0
      %6486 = vmatprep.subr.bf16.mxu0 0
      %6487 = vmatpush1.bf16.msra.mxu0 0
      %6488 = vmatprep.subr.bf16.mxu0 0
      %6489 = vmatpush1.bf16.msra.mxu0 0
      %6490 = vmatprep.subr.bf16.mxu0 0
      %6491 = vmatpush1.bf16.msra.mxu0 0
      %6492 = vmatprep.subr.bf16.mxu0 0
      %6493 = vmatpush1.bf16.msra.mxu0 0
      %6494 = vmatprep.subr.bf16.mxu0 0
      %6495 = vmatpush1.bf16.msra.mxu0 0
      %6496 = vmatprep.subr.bf16.mxu0 0
      %6497 = vmatpush1.bf16.msra.mxu0 0
      %6498 = vmatprep.subr.bf16.mxu0 0
      %6499 = vmatpush1.bf16.msra.mxu0 0
      %6500 = vmatprep.mubr.bf16.mxu0 0
      %6501 = vmatmul.mubr.bf16.gmra.mrb[0].mxu0 %v6404
      %v6502 = vpop.f32.mrb[0].mxu0
      %v6503 = vadd.f32 0.0, %v6502
      %v6504 = vpop.f32.mrb[0].mxu0
      %v6505 = vpop.f32.mrb[0].mxu0
      %v6506 = vadd.f32 0.0, %v6505
      %v6507 = vpop.f32.mrb[0].mxu0
      %6508 = vmatprep.mubr.bf16.mxu0 0
      %6509 = vmatmul.mubr.bf16.gmra.mrb[0].mxu0 %v6405
      %v6510 = vpop.f32.mrb[0].mxu0
      %v6511 = vadd.f32 0.0, %v6510
      %v6512 = vpop.f32.mrb[0].mxu0
      %v6513 = vpop.f32.mrb[0].mxu0
      %v6514 = vadd.f32 0.0, %v6513
      %v6515 = vpop.f32.mrb[0].mxu0
      %6516 = vmatprep.mubr.bf16.mxu0 0
      %6517 = vmatmul.mubr.bf16.gmra.mrb[0].mxu0 %v6406
      %v6518 = vpop.f32.mrb[0].mxu0
      %v6519 = vadd.f32 0.0, %v6518
      %v6520 = vpop.f32.mrb[0].mxu0
      %v6521 = vpop.f32.mrb[0].mxu0
      %v6522 = vadd.f32 0.0, %v6521
      %v6523 = vpop.f32.mrb[0].mxu0
      %6524 = vmatprep.mubr.bf16.mxu0 0
      %6525 = vmatmul.mubr.bf16.gmra.mrb[0].mxu0 %v6407
      %v6526 = vpop.f32.mrb[0].mxu0
      %v6527 = vadd.f32 0.0, %v6526
      %v6528 = vpop.f32.mrb[0].mxu0
      %v6529 = vpop.f32.mrb[0].mxu0
      %v6530 = vadd.f32 0.0, %v6529
      %v6531 = vpop.f32.mrb[0].mxu0
      %6532 = vmatprep.mubr.bf16.mxu0 0
      %6533 = vmatmul.mubr.bf16.gmra.mrb[0].mxu0 %v6408
      %v6534 = vpop.f32.mrb[0].mxu0
      %v6535 = vadd.f32 0.0, %v6534
      %v6536 = vpop.f32.mrb[0].mxu0
      %v6537 = vpop.f32.mrb[0].mxu0
      %v6538 = vadd.f32 0.0, %v6537
      %v6539 = vpop.f32.mrb[0].mxu0
      %6540 = vmatprep.mubr.bf16.mxu0 0
      %6541 = vmatmul.mubr.bf16.gmra.mrb[0].mxu0 %v6409
      %v6542 = vpop.f32.mrb[0].mxu0
      %v6543 = vadd.f32 0.0, %v6542
      %v6544 = vpop.f32.mrb[0].mxu0
      %v6545 = vpop.f32.mrb[0].mxu0
      %v6546 = vadd.f32 0.0, %v6545
      %v6547 = vpop.f32.mrb[0].mxu0
      %6548 = vmatprep.mubr.bf16.mxu0 0
      %6549 = vmatmul.mubr.bf16.gmra.mrb[0].mxu0 %v6410
      %v6550 = vpop.f32.mrb[0].mxu0
      %v6551 = vadd.f32 0.0, %v6550
      %v6552 = vpop.f32.mrb[0].mxu0
      %v6553 = vpop.f32.mrb[0].mxu0
      %v6554 = vadd.f32 0.0, %v6553
      %v6555 = vpop.f32.mrb[0].mxu0
      %6556 = vmatprep.mubr.bf16.mxu0 0
      %6557 = vmatmul.mubr.bf16.gmra.mrb[0].mxu0 %v6411
      %v6558 = vpop.f32.mrb[0].mxu0
      %v6559 = vadd.f32 0.0, %v6558
      %v6560 = vpop.f32.mrb[0].mxu0
      %v6561 = vpop.f32.mrb[0].mxu0
      %v6562 = vadd.f32 0.0, %v6561
      %v6563 = vpop.f32.mrb[0].mxu0
      %6564 = vdwg.mxu0
      %v6565 = vadd.f32 %v6139, %v6503
      %v6566 = vadd.f32 %v6140, %v6506
      %v6567 = vadd.f32 %v6141, %v6511
      %v6568 = vadd.f32 %v6142, %v6514
      %v6569 = vadd.f32 %v6143, %v6519
      %v6570 = vadd.f32 %v6144, %v6522
      %v6571 = vadd.f32 %v6145, %v6527
      %v6572 = vadd.f32 %v6146, %v6530
      %v6573 = vadd.f32 %v6147, %v6535
      %v6574 = vadd.f32 %v6148, %v6538
      %v6575 = vadd.f32 %v6149, %v6543
      %v6576 = vadd.f32 %v6150, %v6546
      %v6577 = vadd.f32 %v6151, %v6551
      %v6578 = vadd.f32 %v6152, %v6554
      %v6579 = vadd.f32 %v6153, %v6559
      %v6580 = vadd.f32 %v6154, %v6562
      %v6581 = vld [vmem:[%s5912] sm:$0xe]
      %v6582 = vld [vmem:[%s5912 + $0xc] sm:$0xe]
      %v6583 = vld [vmem:[%s5912 + $0x18] sm:$0xe]
      %v6584 = vld [vmem:[%s5912 + $0x24] sm:$0xe]
      %v6585 = vld [vmem:[%s5912 + $0x30] sm:$0xe]
      %v6586 = vld [vmem:[%s5912 + $0x3c] sm:$0xe]
      %v6587 = vld [vmem:[%s5912 + $0x48] sm:$0xe]
      %v6588 = vld [vmem:[%s5912 + $0x54] sm:$0xe]
      %v6613 = vrot.slane %v6581, 5
      %v6614 = vrot.slane %v6613, 4
      %v6615 = vrot.slane %v6156, 5
      %v6616 = vsel %vm1276, %v6614, %v6615
      %v6617 = vrot.slane %v6615, 4
      %v6618 = vrot.slane %v6157, 5
      %v6619 = vsel %vm1276, %v6617, %v6618
      %v6620 = vrot.slane %v6582, 5
      %v6621 = vrot.slane %v6620, 4
      %v6622 = vrot.slane %v6159, 5
      %v6623 = vsel %vm1276, %v6621, %v6622
      %v6624 = vrot.slane %v6622, 4
      %v6625 = vrot.slane %v6160, 5
      %v6626 = vsel %vm1276, %v6624, %v6625
      %v6627 = vrot.slane %v6583, 5
      %v6628 = vrot.slane %v6627, 4
      %v6629 = vrot.slane %v6162, 5
      %v6630 = vsel %vm1276, %v6628, %v6629
      %v6631 = vrot.slane %v6629, 4
      %v6632 = vrot.slane %v6163, 5
      %v6633 = vsel %vm1276, %v6631, %v6632
      %v6634 = vrot.slane %v6584, 5
      %v6635 = vrot.slane %v6634, 4
      %v6636 = vrot.slane %v6165, 5
      %v6637 = vsel %vm1276, %v6635, %v6636
      %v6638 = vrot.slane %v6636, 4
      %v6639 = vrot.slane %v6166, 5
      %v6640 = vsel %vm1276, %v6638, %v6639
      %v6641 = vrot.slane %v6585, 5
      %v6642 = vrot.slane %v6641, 4
      %v6643 = vrot.slane %v6168, 5
      %v6644 = vsel %vm1276, %v6642, %v6643
      %v6645 = vrot.slane %v6643, 4
      %v6646 = vrot.slane %v6169, 5
      %v6647 = vsel %vm1276, %v6645, %v6646
      %v6648 = vrot.slane %v6586, 5
      %v6649 = vrot.slane %v6648, 4
      %v6650 = vrot.slane %v6171, 5
      %v6651 = vsel %vm1276, %v6649, %v6650
      %v6652 = vrot.slane %v6650, 4
      %v6653 = vrot.slane %v6172, 5
      %v6654 = vsel %vm1276, %v6652, %v6653
      %v6655 = vrot.slane %v6587, 5
      %v6656 = vrot.slane %v6655, 4
      %v6657 = vrot.slane %v6174, 5
      %v6658 = vsel %vm1276, %v6656, %v6657
      %v6659 = vrot.slane %v6657, 4
      %v6660 = vrot.slane %v6175, 5
      %v6661 = vsel %vm1276, %v6659, %v6660
      %v6662 = vrot.slane %v6588, 5
      %v6663 = vrot.slane %v6662, 4
      %v6664 = vrot.slane %v6177, 5
      %v6665 = vsel %vm1276, %v6663, %v6664
      %v6666 = vrot.slane %v6664, 4
      %v6667 = vrot.slane %v6178, 5
      %v6668 = vsel %vm1276, %v6666, %v6667
      %s6669 = scalar_lea.vmem %s7, 512
      %v6670 = vld [vmem:[%s6669] sm:$0xf]
      %v6671 = vld [vmem:[%s6669 + $0x4] sm:$0xf]
      %v6672 = vld [vmem:[%s6669 + $0x8] sm:$0xf]
      %v6673 = vld [vmem:[%s6669 + $0xc] sm:$0xf]
      %v6674 = vld [vmem:[%s6669 + $0x10] sm:$0xf]
      %v6675 = vld [vmem:[%s6669 + $0x14] sm:$0xf]
      %v6676 = vld [vmem:[%s6669 + $0x18] sm:$0xf]
      %v6677 = vld [vmem:[%s6669 + $0x1c] sm:$0xf]
      %v6678 = vld [vmem:[%s6669 + $0x20] sm:$0xf]
      %v6679 = vld [vmem:[%s6669 + $0x24] sm:$0xf]
      %v6680 = vld [vmem:[%s6669 + $0x28] sm:$0xf]
      %v6681 = vld [vmem:[%s6669 + $0x2c] sm:$0xf]
      %v6682 = vld [vmem:[%s6669 + $0x30] sm:$0xf]
      %v6683 = vld [vmem:[%s6669 + $0x34] sm:$0xf]
      %v6684 = vld [vmem:[%s6669 + $0x38] sm:$0xf]
      %v6685 = vld [vmem:[%s6669 + $0x3c] sm:$0xf]
      %v6686 = vunpack.c.l.b16 %v6616
      %v6687 = vunpack.c.l.b16 %v6619
      %v6688 = vunpack.c.l.b16 %v6623
      %v6689 = vunpack.c.l.b16 %v6626
      %v6690 = vunpack.c.l.b16 %v6630
      %v6691 = vunpack.c.l.b16 %v6633
      %v6692 = vunpack.c.l.b16 %v6637
      %v6693 = vunpack.c.l.b16 %v6640
      %v6694 = vunpack.c.l.b16 %v6644
      %v6695 = vunpack.c.l.b16 %v6647
      %v6696 = vunpack.c.l.b16 %v6651
      %v6697 = vunpack.c.l.b16 %v6654
      %v6698 = vunpack.c.l.b16 %v6658
      %v6699 = vunpack.c.l.b16 %v6661
      %v6700 = vunpack.c.l.b16 %v6665
      %v6701 = vunpack.c.l.b16 %v6668
      %v6702 = vpack.c.b16 %v6687, %v6686
      %v6703 = vpack.c.b16 %v6689, %v6688
      %v6704 = vpack.c.b16 %v6691, %v6690
      %v6705 = vpack.c.b16 %v6693, %v6692
      %v6706 = vpack.c.b16 %v6695, %v6694
      %v6707 = vpack.c.b16 %v6697, %v6696
      %v6708 = vpack.c.b16 %v6699, %v6698
      %v6709 = vpack.c.b16 %v6701, %v6700
      %v6734 = vunpack.c.l.b16 %v6670
      %v6735 = vunpack.c.l.b16 %v6671
      %v6736 = vunpack.c.l.b16 %v6672
      %v6737 = vunpack.c.l.b16 %v6673
      %v6738 = vunpack.c.l.b16 %v6674
      %v6739 = vunpack.c.l.b16 %v6675
      %v6740 = vunpack.c.l.b16 %v6676
      %v6741 = vunpack.c.l.b16 %v6677
      %v6742 = vunpack.c.l.b16 %v6678
      %v6743 = vunpack.c.l.b16 %v6679
      %v6744 = vunpack.c.l.b16 %v6680
      %v6745 = vunpack.c.l.b16 %v6681
      %v6746 = vunpack.c.l.b16 %v6682
      %v6747 = vunpack.c.l.b16 %v6683
      %v6748 = vunpack.c.l.b16 %v6684
      %v6749 = vunpack.c.l.b16 %v6685
      %v6750 = vpack.c.b16 %v6735, %v6734
      %v6751 = vpack.c.b16 %v6737, %v6736
      %v6752 = vpack.c.b16 %v6739, %v6738
      %v6753 = vpack.c.b16 %v6741, %v6740
      %v6754 = vpack.c.b16 %v6743, %v6742
      %v6755 = vpack.c.b16 %v6745, %v6744
      %v6756 = vpack.c.b16 %v6747, %v6746
      %v6757 = vpack.c.b16 %v6749, %v6748
      %6766 = vmatprep.subr.bf16.mxu0 0
      %6767 = vmatpush1.bf16.msra.mxu0 %v6750
      %6768 = vmatprep.subr.bf16.mxu0 0
      %6769 = vmatpush1.bf16.msra.mxu0 %v6751
      %6770 = vmatprep.subr.bf16.mxu0 0
      %6771 = vmatpush1.bf16.msra.mxu0 %v6752
      %6772 = vmatprep.subr.bf16.mxu0 0
      %6773 = vmatpush1.bf16.msra.mxu0 %v6753
      %6774 = vmatprep.subr.bf16.mxu0 0
      %6775 = vmatpush1.bf16.msra.mxu0 %v6754
      %6776 = vmatprep.subr.bf16.mxu0 0
      %6777 = vmatpush1.bf16.msra.mxu0 %v6755
      %6778 = vmatprep.subr.bf16.mxu0 0
      %6779 = vmatpush1.bf16.msra.mxu0 %v6756
      %6780 = vmatprep.subr.bf16.mxu0 0
      %6781 = vmatpush1.bf16.msra.mxu0 %v6757
      %6782 = vmatprep.subr.bf16.mxu0 0
      %6783 = vmatpush1.bf16.msra.mxu0 0
      %6784 = vmatprep.subr.bf16.mxu0 0
      %6785 = vmatpush1.bf16.msra.mxu0 0
      %6786 = vmatprep.subr.bf16.mxu0 0
      %6787 = vmatpush1.bf16.msra.mxu0 0
      %6788 = vmatprep.subr.bf16.mxu0 0
      %6789 = vmatpush1.bf16.msra.mxu0 0
      %6790 = vmatprep.subr.bf16.mxu0 0
      %6791 = vmatpush1.bf16.msra.mxu0 0
      %6792 = vmatprep.subr.bf16.mxu0 0
      %6793 = vmatpush1.bf16.msra.mxu0 0
      %6794 = vmatprep.subr.bf16.mxu0 0
      %6795 = vmatpush1.bf16.msra.mxu0 0
      %6796 = vmatprep.subr.bf16.mxu0 0
      %6797 = vmatpush1.bf16.msra.mxu0 0
      %6798 = vmatprep.mubr.bf16.mxu0 0
      %6799 = vmatmul.mubr.bf16.gmra.mrb[0].mxu0 %v6702
      %v6800 = vpop.f32.mrb[0].mxu0
      %v6801 = vadd.f32 0.0, %v6800
      %v6802 = vpop.f32.mrb[0].mxu0
      %v6803 = vpop.f32.mrb[0].mxu0
      %v6804 = vadd.f32 0.0, %v6803
      %v6805 = vpop.f32.mrb[0].mxu0
      %6806 = vmatprep.mubr.bf16.mxu0 0
      %6807 = vmatmul.mubr.bf16.gmra.mrb[0].mxu0 %v6703
      %v6808 = vpop.f32.mrb[0].mxu0
      %v6809 = vadd.f32 0.0, %v6808
      %v6810 = vpop.f32.mrb[0].mxu0
      %v6811 = vpop.f32.mrb[0].mxu0
      %v6812 = vadd.f32 0.0, %v6811
      %v6813 = vpop.f32.mrb[0].mxu0
      %6814 = vmatprep.mubr.bf16.mxu0 0
      %6815 = vmatmul.mubr.bf16.gmra.mrb[0].mxu0 %v6704
      %v6816 = vpop.f32.mrb[0].mxu0
      %v6817 = vadd.f32 0.0, %v6816
      %v6818 = vpop.f32.mrb[0].mxu0
      %v6819 = vpop.f32.mrb[0].mxu0
      %v6820 = vadd.f32 0.0, %v6819
      %v6821 = vpop.f32.mrb[0].mxu0
      %6822 = vmatprep.mubr.bf16.mxu0 0
      %6823 = vmatmul.mubr.bf16.gmra.mrb[0].mxu0 %v6705
      %v6824 = vpop.f32.mrb[0].mxu0
      %v6825 = vadd.f32 0.0, %v6824
      %v6826 = vpop.f32.mrb[0].mxu0
      %v6827 = vpop.f32.mrb[0].mxu0
      %v6828 = vadd.f32 0.0, %v6827
      %v6829 = vpop.f32.mrb[0].mxu0
      %6830 = vmatprep.mubr.bf16.mxu0 0
      %6831 = vmatmul.mubr.bf16.gmra.mrb[0].mxu0 %v6706
      %v6832 = vpop.f32.mrb[0].mxu0
      %v6833 = vadd.f32 0.0, %v6832
      %v6834 = vpop.f32.mrb[0].mxu0
      %v6835 = vpop.f32.mrb[0].mxu0
      %v6836 = vadd.f32 0.0, %v6835
      %v6837 = vpop.f32.mrb[0].mxu0
      %6838 = vmatprep.mubr.bf16.mxu0 0
      %6839 = vmatmul.mubr.bf16.gmra.mrb[0].mxu0 %v6707
      %v6840 = vpop.f32.mrb[0].mxu0
      %v6841 = vadd.f32 0.0, %v6840
      %v6842 = vpop.f32.mrb[0].mxu0
      %v6843 = vpop.f32.mrb[0].mxu0
      %v6844 = vadd.f32 0.0, %v6843
      %v6845 = vpop.f32.mrb[0].mxu0
      %6846 = vmatprep.mubr.bf16.mxu0 0
      %6847 = vmatmul.mubr.bf16.gmra.mrb[0].mxu0 %v6708
      %v6848 = vpop.f32.mrb[0].mxu0
      %v6849 = vadd.f32 0.0, %v6848
      %v6850 = vpop.f32.mrb[0].mxu0
      %v6851 = vpop.f32.mrb[0].mxu0
      %v6852 = vadd.f32 0.0, %v6851
      %v6853 = vpop.f32.mrb[0].mxu0
      %6854 = vmatprep.mubr.bf16.mxu0 0
      %6855 = vmatmul.mubr.bf16.gmra.mrb[0].mxu0 %v6709
      %v6856 = vpop.f32.mrb[0].mxu0
      %v6857 = vadd.f32 0.0, %v6856
      %v6858 = vpop.f32.mrb[0].mxu0
      %v6859 = vpop.f32.mrb[0].mxu0
      %v6860 = vadd.f32 0.0, %v6859
      %v6861 = vpop.f32.mrb[0].mxu0
      %6862 = vdwg.mxu0
      %v6863 = vadd.f32 %v6565, %v6801
      %v6864 = vadd.f32 %v6566, %v6804
      %v6865 = vadd.f32 %v6567, %v6809
      %v6866 = vadd.f32 %v6568, %v6812
      %v6867 = vadd.f32 %v6569, %v6817
      %v6868 = vadd.f32 %v6570, %v6820
      %v6869 = vadd.f32 %v6571, %v6825
      %v6870 = vadd.f32 %v6572, %v6828
      %v6871 = vadd.f32 %v6573, %v6833
      %v6872 = vadd.f32 %v6574, %v6836
      %v6873 = vadd.f32 %v6575, %v6841
      %v6874 = vadd.f32 %v6576, %v6844
      %v6875 = vadd.f32 %v6577, %v6849
      %v6876 = vadd.f32 %v6578, %v6852
      %v6877 = vadd.f32 %v6579, %v6857
      %v6878 = vadd.f32 %v6580, %v6860
      %v6879 = vld [vmem:[%s8] sm:$0x1]
      %v6881 = vlaneseq
      %v6882 = vshrl.u32 %v6881, 7
      %v6883 = vsub.s32 0, %v6882
      %v6884 = vrot.slane %v6879, %v6883
      %v6886 = vadd.f32 %v6863, %v6884
      %v6887 = vadd.f32 %v6864, %v6884
      %v6888 = vadd.f32 %v6865, %v6884
      %v6889 = vadd.f32 %v6866, %v6884
      %v6890 = vadd.f32 %v6867, %v6884
      %v6891 = vadd.f32 %v6868, %v6884
      %v6892 = vadd.f32 %v6869, %v6884
      %v6893 = vadd.f32 %v6870, %v6884
      %v6894 = vadd.f32 %v6871, %v6884
      %v6895 = vadd.f32 %v6872, %v6884
      %v6896 = vadd.f32 %v6873, %v6884
      %v6897 = vadd.f32 %v6874, %v6884
      %v6898 = vadd.f32 %v6875, %v6884
      %v6899 = vadd.f32 %v6876, %v6884
      %v6900 = vadd.f32 %v6877, %v6884
      %v6901 = vadd.f32 %v6878, %v6884
      %6902 = vxpose.xlu0.b32.start [1/16] %v6886, 128
      %6903 = vxpose.xlu0.b32.cont [2/16] %v6887, 128
      %6904 = vxpose.xlu0.b32.cont [3/16] %v6888, 128
      %6905 = vxpose.xlu0.b32.cont [4/16] %v6889, 128
      %6906 = vxpose.xlu0.b32.cont [5/16] %v6890, 128
      %6907 = vxpose.xlu0.b32.cont [6/16] %v6891, 128
      %6908 = vxpose.xlu0.b32.cont [7/16] %v6892, 128
      %6909 = vxpose.xlu0.b32.cont [8/16] %v6893, 128
      %6910 = vxpose.xlu0.b32.cont [9/16] %v6894, 128
      %6911 = vxpose.xlu0.b32.cont [10/16] %v6895, 128
      %6912 = vxpose.xlu0.b32.cont [11/16] %v6896, 128
      %6913 = vxpose.xlu0.b32.cont [12/16] %v6897, 128
      %6914 = vxpose.xlu0.b32.cont [13/16] %v6898, 128
      %6915 = vxpose.xlu0.b32.cont [14/16] %v6899, 128
      %6916 = vxpose.xlu0.b32.cont [15/16] %v6900, 128
      %6917 = vxpose.xlu0.b32.end [16/16] %v6901, 128
      %v6918 = vpop.trf.xlu0
      %v6919 = vpop.trf.xlu0
      %v6920 = vpop.trf.xlu0
      %v6921 = vpop.trf.xlu0
      %v6922 = vpop.trf.xlu0
      %v6923 = vpop.trf.xlu0
      %v6924 = vpop.trf.xlu0
      %v6925 = vpop.trf.xlu0
      %v6926 = vpop.trf.xlu0
      %v6927 = vpop.trf.xlu0
      %v6928 = vpop.trf.xlu0
      %v6929 = vpop.trf.xlu0
      %v6930 = vpop.trf.xlu0
      %v6931 = vpop.trf.xlu0
      %v6932 = vpop.trf.xlu0
      %v6933 = vpop.trf.xlu0
      %v6934 = vld [vmem:[%s462] sm:$0xf]
      %v6935 = vld [vmem:[%s466] sm:$0xf]
      %6937 = vset.pattern.permute.xlu0 0
      %6938 = vperm.xlu0 %6937, %v6935
      %v6939 = vpop.permute.xlu0 %6938
      %v6941 = vsub.f32 %v6934, %v6939
      %v6942 = vld [vmem:[%s470] sm:$0xf]
      %6944 = vset.pattern.permute.xlu0 0
      %6945 = vperm.xlu0 %6944, %v6942
      %v6946 = vpop.permute.xlu0 %6945
      %v6948 = vmul.f32 %v6941, %v6946
      %v6949 = vadd.f32 %v6918, 1.0
      %v6950 = vmul.f32 %v6948, %v6949
      %v6951 = vadd.f32 %v6950, %v6919
      %6952 = vst [vmem:[%s514] sm:$0xf] %v6951
      %p6953 = scmp.lt.s32.totalorder %s24, 1
      %s6954 = scalar_select %p6953, %s24, 1
      %p6955 = scmp.lt.s32.totalorder %s25, 1
      %s6956 = scalar_select %p6955, %s25, 1
      %s6957 = smul.addr %s6954, 2
      %s6958 = sadd.s32 %s6956, %s6957
      %s6959 = smul.addr %s6958, 4
      %s6960 = scalar_lea.vmem %s9, %s6959
      // Predicated region
      $region65: #{spade_forward.1} parent=55 // pred_check
        %p6961 = pneg %p276
      $region66: #{spade_forward.1} parent=55 // pred_check_branch
        %6963 = sbr.rel (%p6961) target = $region68
      $region67: #{spade_forward.1} parent=55 // pred_region
        _
      $region68: #{spade_forward.1} parent=55 // pred_fallthru
        _
    $region56: #{spade_forward.1} parent=5 // pred_fallthru
      _
    %p6964 = scmp.le.s32.totalorder 2, %s15
    // Predicated region
    $region69: #{spade_forward.1} parent=5 // pred_check
      %p6965 = pneg %p6964
    $region70: #{spade_forward.1} parent=5 // pred_check_branch
      %6967 = sbr.rel (%p6965) target = $region72
    $region71: #{spade_forward.1} parent=5 // pred_region
      %s6968 = ssub.s32 %s15, 2
      // Predicated region
      $region73: #{spade_forward.1} parent=71 // pred_check
        %p6969 = pneg %p282
      $region74: #{spade_forward.1} parent=71 // pred_check_branch
        %6971 = sbr.rel (%p6969) target = $region76
      $region75: #{spade_forward.1} parent=71 // pred_region
        %p6972 = scmp.lt.s32.totalorder %s26, 1
        %s6973 = scalar_select %p6972, %s26, 1
        %p6974 = scmp.lt.s32.totalorder %s27, 1
        %s6975 = scalar_select %p6974, %s27, 1
        %s6976 = smul.addr %s6973, 2
        %s6977 = sadd.s32 %s6975, %s6976
        %s6978 = smul.addr %s6977, 4
        %s6979 = scalar_lea.vmem %s9, %s6978
      $region76: #{spade_forward.1} parent=71 // pred_fallthru
        _
    $region72: #{spade_forward.1} parent=5 // pred_fallthru
      _
  $region6: #{spade_forward.1} parent=0 // loop_footer
    %s19 = sadd.s32 1, %s15
  $region7: #{spade_forward.1} parent=0 // loop_footer_branch
    %14 = sbr.rel target = $region3
  $region8: #{spade_forward.1} parent=0 // loop_exit
    _

</llo_original>
